<compile_context>
chip_gen: v7x
topology: tpu7x:2x2x1
jax: 0.10.0
libtpu: 0.0.40
codegen_flags: <defaults>
</compile_context>

<pallas_src>
import numpy as np
import jax
import jax.numpy as jnp
from jax.experimental import pallas as pl
from jax.experimental.pallas import tpu as pltpu


# ----------------------------- static geometry ----------------------------
H0 = W0 = 28              # input image
K = 5                     # conv kernel size
C1 = 32                   # conv1 out channels
H1 = W1 = H0 - K + 1      # 24 : conv1 output
P1H = P1W = H1 // 2       # 12 : pooled conv1
C2 = 64                   # conv2 out channels
H2 = W2 = P1H - K + 1     # 8  : conv2 output
P2H = P2W = H2 // 2       # 4  : pooled conv2
FC1_IN = C2 * P2H * P2W   # 1024
FC1_OUT = 1024
FC2_OUT = 10
FC2_PAD = 128             # lane-dense fc2 output (sliced to 10 in the wrapper)

L1 = 2 * P1W * C1         # 768 conv1 lane width (dw, pw, c)
L2 = 2 * P2W * C2         # 512 conv2 lane width (dw, pw, c)
HALF1 = P1W * C1          # 384 pooled conv1 lane width (pw, c)
HALF2 = P2W * C2          # 256 pooled conv2 lane width (pw, c)


# ------------------------------ fused kernel ------------------------------

def _cnn1_kernel(x_ref, b1w_ref, b1b_ref, b2w_ref, b2b_ref,
                 w1_ref, fb1_ref, w2_ref, fb2_ref,
                 out_ref, p1_ref, p2_ref):
    """Whole-network forward for one batch block of tb samples.

    x_ref   : (28, tb, 28)   bf16   h-major input block
    b1w_ref : (5, 28, 768)   bf16   conv1 banded weights
    b1b_ref : (1, 768)       f32    conv1 bias (tiled per (dw,pw))
    b2w_ref : (5, 384, 512)  bf16   conv2 banded weights
    b2b_ref : (1, 512)       f32
    w1_ref  : (1024, 1024)   bf16   fc1 weights (NCHW-flatten perm folded in)
    fb1_ref : (1, 1024)      f32
    w2_ref  : (1024, 128)    bf16   fc2 weights (zero-padded to 128 lanes)
    fb2_ref : (1, 128)       f32
    out_ref : (tb, 128)      f32
    p1_ref  : (12, tb, 384)  bf16   scratch: pooled conv1
    p2_ref  : (tb, 1024)     bf16   scratch: pooled conv2 (pooled-h at lane h*256)
    """
    tb = x_ref.shape[1]
    f32 = jnp.float32
    bf16 = jnp.bfloat16

    # ---- conv1 + bias + ReLU: 5 banded matmuls, batched over the block ----
    # LHS rows are (h_out, sample); output lanes are dw*384 + pw*32 + c.
    acc1 = jnp.dot(x_ref[0:H1].reshape(H1 * tb, W0), b1w_ref[0],
                   preferred_element_type=f32)
    for kh in range(1, K):
        acc1 = acc1 + jnp.dot(x_ref[kh:kh + H1].reshape(H1 * tb, W0),
                              b1w_ref[kh], preferred_element_type=f32)
    a1 = jnp.maximum(acc1 + b1b_ref[...], 0.0)                    # (24*tb, 768)

    # fused 2x2 max-pool: width via lane halves, height via even/odd row blocks
    wmax1 = jnp.maximum(a1[:, :HALF1], a1[:, HALF1:])             # (24*tb, 384)
    w3 = wmax1.reshape(P1H, 2 * tb, HALF1)
    p1_ref[...] = jnp.maximum(w3[:, :tb, :], w3[:, tb:, :]).astype(bf16)

    # ---- conv2 + bias + ReLU: 5 banded matmuls on pooled conv1 ----
    acc2 = jnp.dot(p1_ref[0:H2].reshape(H2 * tb, HALF1), b2w_ref[0],
                   preferred_element_type=f32)
    for kh in range(1, K):
        acc2 = acc2 + jnp.dot(p1_ref[kh:kh + H2].reshape(H2 * tb, HALF1),
                              b2w_ref[kh], preferred_element_type=f32)
    a2 = jnp.maximum(acc2 + b2b_ref[...], 0.0)                    # (8*tb, 512)

    wmax2 = jnp.maximum(a2[:, :HALF2], a2[:, HALF2:])             # (8*tb, 256)
    v3 = wmax2.reshape(P2H, 2 * tb, HALF2)
    pooled2 = jnp.maximum(v3[:, :tb, :], v3[:, tb:, :]).astype(bf16)  # (4, tb, 256)
    for ph in range(P2H):   # unmasked 256-lane stores into the (tb, 1024) slab
        p2_ref[:, ph * HALF2:(ph + 1) * HALF2] = pooled2[ph]

    # ---- fc1 + ReLU: single (tb, 1024) x (1024, 1024) dot ----
    h_fc1 = jnp.dot(p2_ref[...], w1_ref[...], preferred_element_type=f32)
    h_fc1 = jnp.maximum(h_fc1 + fb1_ref[...], 0.0).astype(bf16)   # (tb, 1024)

    # ---- fc2 (lane-dense 128-wide output; sliced to 10 outside) ----
    logits = jnp.dot(h_fc1, w2_ref[...], preferred_element_type=f32) + fb2_ref[...]
    out_ref[...] = logits.astype(out_ref.dtype)


# ------------------------- one-time parameter packing ----------------------

def prepare_params(params):
    """Pack PyTorch-layout params into kernel layouts. Runs once, off the hot path."""
    w1c = np.asarray(params['conv1_w'], np.float32)   # (32, 1, 5, 5)  OIHW
    b1c = np.asarray(params['conv1_b'], np.float32)
    w2c = np.asarray(params['conv2_w'], np.float32)   # (64, 32, 5, 5) OIHW
    b2c = np.asarray(params['conv2_b'], np.float32)
    wf1 = np.asarray(params['fc1_w'], np.float32)     # (1024, 1024)  (out, in)
    bf1 = np.asarray(params['fc1_b'], np.float32)
    wf2 = np.asarray(params['fc2_w'], np.float32)     # (10, 1024)
    bf2 = np.asarray(params['fc2_b'], np.float32)

    # conv1 band: B1[kh, j, dw*384 + pw*32 + c] = w1[c, 0, kh, j - ow], ow = 2*pw+dw
    B1 = np.zeros((K, W0, L1), np.float32)
    for kh in range(K):
        for ow in range(W1):
            pw, dw = ow // 2, ow % 2
            col = dw * HALF1 + pw * C1
            for kw in range(K):
                B1[kh, ow + kw, col:col + C1] = w1c[:, 0, kh, kw]

    # conv2 band: B2[kh, w_in*32 + ci, dw*256 + pw*64 + co] = w2[co, ci, kh, w_in - ow]
    B2 = np.zeros((K, HALF1, L2), np.float32)
    for kh in range(K):
        for ow in range(W2):
            pw, dw = ow // 2, ow % 2
            col = dw * HALF2 + pw * C2
            for kw in range(K):
                w_in = ow + kw
                B2[kh, w_in * C1:(w_in + 1) * C1, col:col + C2] = w2c[:, :, kh, kw].T

    # fc1: fold transpose + the PyTorch NCHW flatten permutation into the weight
    # so it matches the kernel's p2 slab layout: feature = h2*256 + w2*64 + c2.
    Wfc1 = wf1.reshape(FC1_OUT, C2, P2H, P2W).transpose(2, 3, 1, 0)
    Wfc1 = Wfc1.reshape(FC1_IN, FC1_OUT)                            # (1024, 1024)

    # fc2: transpose + zero-pad outputs to 128 lanes
    Wfc2 = np.zeros((FC1_OUT, FC2_PAD), np.float32)
    Wfc2[:, :FC2_OUT] = wf2.T
    Bfc2 = np.zeros((FC2_PAD,), np.float32)
    Bfc2[:FC2_OUT] = bf2

    return {
        'b1w': jnp.asarray(B1, jnp.bfloat16),
        'b1b': jnp.asarray(np.tile(b1c, 2 * P1W)[None, :], jnp.float32),   # (1, 768)
        'b2w': jnp.asarray(B2, jnp.bfloat16),
        'b2b': jnp.asarray(np.tile(b2c, 2 * P2W)[None, :], jnp.float32),   # (1, 512)
        'w1': jnp.asarray(Wfc1, jnp.bfloat16),
        'fb1': jnp.asarray(bf1[None, :], jnp.float32),                     # (1, 1024)
        'w2': jnp.asarray(Wfc2, jnp.bfloat16),
        'fb2': jnp.asarray(Bfc2[None, :], jnp.float32),                    # (1, 128)
    }


# ------------------------------- forward ----------------------------------

def _round_up(n, m):
    return ((n + m - 1) // m) * m


def _block_size(n):
    """Samples per grid step: multiple of 8, capped at 32 for VMEM, and for
    larger batches small enough that the grid has >= 2 steps (so both v7x
    TensorCores get work via dimension_semantics=("parallel",))."""
    n8 = _round_up(n, 8)
    if n8 <= 16:
        return n8
    return min(32, _round_up(n8 // 2, 8))


def cnn1_forward(prep, x_nchw):
    n = x_nchw.shape[0]
    assert x_nchw.shape[1:] == (1, H0, W0)
    tb = _block_size(n)
    n_pad = _round_up(n, tb)

    # h-major bf16 layout: (H, batch, W) so each conv band slice is a
    # contiguous (H1*tb, W0) matmul LHS and the 2x2 pools are full-tile maxes.
    x = x_nchw.reshape(n, H0, W0).astype(jnp.bfloat16)
    x = jnp.transpose(x, (1, 0, 2))                                 # (28, n, 28)
    if n_pad != n:
        x = jnp.pad(x, ((0, 0), (0, n_pad - n), (0, 0)))

    def full(shape):
        return pl.BlockSpec(shape, lambda i, _n=len(shape): (0,) * _n)

    # TODO(synk): pipeline_mode=pl.Buffered(1) on the constant weight specs
    # would save ~4.5 MiB of double-buffered VMEM; omitted for API safety.
    # TODO(synk): for batch<=8 the kernel is weight-DMA bound (~4.5 MiB);
    # hide it behind a cross-call weight prefetch in a prior pallas_call.
    out = pl.pallas_call(
        _cnn1_kernel,
        out_shape=jax.ShapeDtypeStruct((n_pad, FC2_PAD), jnp.float32),
        grid_spec=pltpu.PrefetchScalarGridSpec(
            num_scalar_prefetch=0,
            grid=(n_pad // tb,),
            in_specs=[
                pl.BlockSpec((H0, tb, W0), lambda i: (0, i, 0)),    # x (h-major)
                full((K, W0, L1)),                                  # conv1 band
                full((1, L1)),                                      # conv1 bias
                full((K, HALF1, L2)),                               # conv2 band
                full((1, L2)),                                      # conv2 bias
                full((FC1_IN, FC1_OUT)),                            # fc1 weights
                full((1, FC1_OUT)),                                 # fc1 bias
                full((FC1_OUT, FC2_PAD)),                           # fc2 weights
                full((1, FC2_PAD)),                                 # fc2 bias
            ],
            out_specs=pl.BlockSpec((tb, FC2_PAD), lambda i: (i, 0)),
            scratch_shapes=[
                pltpu.VMEM((P1H, tb, HALF1), jnp.bfloat16),         # pooled conv1
                pltpu.VMEM((tb, FC1_IN), jnp.bfloat16),             # pooled conv2
            ],
        ),
        compiler_params=pltpu.CompilerParams(
            dimension_semantics=("parallel",),
            vmem_limit_bytes=40 * 1024 * 1024),
    )(x, prep['b1w'], prep['b1b'], prep['b2w'], prep['b2b'],
      prep['w1'], prep['fb1'], prep['w2'], prep['fb2'])
    return out[:n, :FC2_OUT]


# -------------------------- deterministic params ---------------------------

def init_params(key):
    ks = jax.random.split(key, 8)

    def u(k, shape, fan_in):  # PyTorch-style uniform(-1/sqrt(fan_in), +)
        bound = 1.0 / jnp.sqrt(jnp.float32(fan_in))
        return jax.random.uniform(k, shape, jnp.float32, -bound, bound)

    return {
        'conv1_w': u(ks[0], (C1, 1, K, K), 1 * K * K),       # OIHW
        'conv1_b': u(ks[1], (C1,), 1 * K * K),
        'conv2_w': u(ks[2], (C2, C1, K, K), C1 * K * K),     # OIHW
        'conv2_b': u(ks[3], (C2,), C1 * K * K),
        'fc1_w': u(ks[4], (FC1_OUT, FC1_IN), FC1_IN),        # (out, in) like nn.Linear
        'fc1_b': u(ks[5], (FC1_OUT,), FC1_IN),
        'fc2_w': u(ks[6], (FC2_OUT, FC1_OUT), FC1_OUT),
        'fc2_b': u(ks[7], (FC2_OUT,), FC1_OUT),
    }


if __name__ == "__main__":
    key = jax.random.PRNGKey(0)
    pkey, xkey = jax.random.split(key)
    params = init_params(pkey)
    prep = prepare_params(params)          # one-time layout packing (off the hot path)
    # forward implies MNIST-shaped input: NCHW (batch=2, 1 channel, 28x28)
    x = jax.random.normal(xkey, (2, 1, 28, 28), jnp.float32)
    out = jax.jit(cnn1_forward)(prep, x)
    out = jax.block_until_ready(out)
    assert out.shape == (2, FC2_OUT) and out.dtype == jnp.float32
    print("KERNEL_OK")
</pallas_src>

<mosaic_0001>
module attributes {stable_mosaic.version = 11 : i64} {
  func.func @_cnn1_kernel(%arg0: i32, %arg1: memref<28x8x28xbf16, #tpu.memory_space<vmem>>, %arg2: memref<5x28x768xbf16, #tpu.memory_space<vmem>>, %arg3: memref<1x768xf32, #tpu.memory_space<vmem>>, %arg4: memref<5x384x512xbf16, #tpu.memory_space<vmem>>, %arg5: memref<1x512xf32, #tpu.memory_space<vmem>>, %arg6: memref<1024x1024xbf16, #tpu.memory_space<vmem>>, %arg7: memref<1x1024xf32, #tpu.memory_space<vmem>>, %arg8: memref<1024x128xbf16, #tpu.memory_space<vmem>>, %arg9: memref<1x128xf32, #tpu.memory_space<vmem>>, %arg10: memref<8x128xf32, #tpu.memory_space<vmem>>, %arg11: memref<12x8x384xbf16, #tpu.memory_space<vmem>>, %arg12: memref<8x1024xbf16, #tpu.memory_space<vmem>>) attributes {dimension_semantics = [#tpu.dimension_semantics<parallel>], iteration_bounds = array<i64: 1>, scalar_prefetch = 0 : i64, scratch_operands = 2 : i64, tpu.core_type = #tpu.core_type<tc>, window_params = [{transform_indices = @transform_0, window_bounds = array<i64: 28, 8, 28>}, {pipeline_mode = #tpu.pipeline_mode<synchronous>, transform_indices = @transform_1, window_bounds = array<i64: 5, 28, 768>}, {pipeline_mode = #tpu.pipeline_mode<synchronous>, transform_indices = @transform_2, window_bounds = array<i64: 1, 768>}, {pipeline_mode = #tpu.pipeline_mode<synchronous>, transform_indices = @transform_3, window_bounds = array<i64: 5, 384, 512>}, {pipeline_mode = #tpu.pipeline_mode<synchronous>, transform_indices = @transform_4, window_bounds = array<i64: 1, 512>}, {pipeline_mode = #tpu.pipeline_mode<synchronous>, transform_indices = @transform_5, window_bounds = array<i64: 1024, 1024>}, {pipeline_mode = #tpu.pipeline_mode<synchronous>, transform_indices = @transform_6, window_bounds = array<i64: 1, 1024>}, {pipeline_mode = #tpu.pipeline_mode<synchronous>, transform_indices = @transform_7, window_bounds = array<i64: 1024, 128>}, {pipeline_mode = #tpu.pipeline_mode<synchronous>, transform_indices = @transform_8, window_bounds = array<i64: 1, 128>}, {transform_indices = @transform_9, window_bounds = array<i64: 8, 128>}]} {
    %c0 = arith.constant 0 : index
    %c0_0 = arith.constant 0 : index
    %c0_1 = arith.constant 0 : index
    %0 = vector.load %arg1[%c0, %c0_0, %c0_1] : memref<28x8x28xbf16, #tpu.memory_space<vmem>>, vector<24x8x28xbf16>
    %1 = vector.shape_cast %0 : vector<24x8x28xbf16> to vector<192x28xbf16>
    %c0_2 = arith.constant 0 : index
    %c0_3 = arith.constant 0 : index
    %c0_4 = arith.constant 0 : index
    %2 = vector.load %arg2[%c0_2, %c0_3, %c0_4] : memref<5x28x768xbf16, #tpu.memory_space<vmem>>, vector<1x28x768xbf16>
    %3 = vector.shape_cast %2 : vector<1x28x768xbf16> to vector<28x768xbf16>
    %cst = arith.constant dense<0.000000e+00> : vector<192x768xf32>
    %4 = tpu.matmul %1, %3, %cst {dimension_numbers = #tpu.dot_dimension_numbers<[1], [0], [0], [1], [0, 0, 1, 1], [], []>} : vector<192x28xbf16>, vector<28x768xbf16>, vector<192x768xf32> -> vector<192x768xf32>
    %c1 = arith.constant 1 : index
    %c0_5 = arith.constant 0 : index
    %c0_6 = arith.constant 0 : index
    %5 = vector.load %arg1[%c1, %c0_5, %c0_6] : memref<28x8x28xbf16, #tpu.memory_space<vmem>>, vector<24x8x28xbf16>
    %6 = vector.shape_cast %5 : vector<24x8x28xbf16> to vector<192x28xbf16>
    %c1_7 = arith.constant 1 : index
    %c0_8 = arith.constant 0 : index
    %c0_9 = arith.constant 0 : index
    %7 = vector.load %arg2[%c1_7, %c0_8, %c0_9] : memref<5x28x768xbf16, #tpu.memory_space<vmem>>, vector<1x28x768xbf16>
    %8 = vector.shape_cast %7 : vector<1x28x768xbf16> to vector<28x768xbf16>
    %cst_10 = arith.constant dense<0.000000e+00> : vector<192x768xf32>
    %9 = tpu.matmul %6, %8, %cst_10 {dimension_numbers = #tpu.dot_dimension_numbers<[1], [0], [0], [1], [0, 0, 1, 1], [], []>} : vector<192x28xbf16>, vector<28x768xbf16>, vector<192x768xf32> -> vector<192x768xf32>
    %10 = arith.addf %4, %9 : vector<192x768xf32>
    %c2 = arith.constant 2 : index
    %c0_11 = arith.constant 0 : index
    %c0_12 = arith.constant 0 : index
    %11 = vector.load %arg1[%c2, %c0_11, %c0_12] : memref<28x8x28xbf16, #tpu.memory_space<vmem>>, vector<24x8x28xbf16>
    %12 = vector.shape_cast %11 : vector<24x8x28xbf16> to vector<192x28xbf16>
    %c2_13 = arith.constant 2 : index
    %c0_14 = arith.constant 0 : index
    %c0_15 = arith.constant 0 : index
    %13 = vector.load %arg2[%c2_13, %c0_14, %c0_15] : memref<5x28x768xbf16, #tpu.memory_space<vmem>>, vector<1x28x768xbf16>
    %14 = vector.shape_cast %13 : vector<1x28x768xbf16> to vector<28x768xbf16>
    %cst_16 = arith.constant dense<0.000000e+00> : vector<192x768xf32>
    %15 = tpu.matmul %12, %14, %cst_16 {dimension_numbers = #tpu.dot_dimension_numbers<[1], [0], [0], [1], [0, 0, 1, 1], [], []>} : vector<192x28xbf16>, vector<28x768xbf16>, vector<192x768xf32> -> vector<192x768xf32>
    %16 = arith.addf %10, %15 : vector<192x768xf32>
    %c3 = arith.constant 3 : index
    %c0_17 = arith.constant 0 : index
    %c0_18 = arith.constant 0 : index
    %17 = vector.load %arg1[%c3, %c0_17, %c0_18] : memref<28x8x28xbf16, #tpu.memory_space<vmem>>, vector<24x8x28xbf16>
    %18 = vector.shape_cast %17 : vector<24x8x28xbf16> to vector<192x28xbf16>
    %c3_19 = arith.constant 3 : index
    %c0_20 = arith.constant 0 : index
    %c0_21 = arith.constant 0 : index
    %19 = vector.load %arg2[%c3_19, %c0_20, %c0_21] : memref<5x28x768xbf16, #tpu.memory_space<vmem>>, vector<1x28x768xbf16>
    %20 = vector.shape_cast %19 : vector<1x28x768xbf16> to vector<28x768xbf16>
    %cst_22 = arith.constant dense<0.000000e+00> : vector<192x768xf32>
    %21 = tpu.matmul %18, %20, %cst_22 {dimension_numbers = #tpu.dot_dimension_numbers<[1], [0], [0], [1], [0, 0, 1, 1], [], []>} : vector<192x28xbf16>, vector<28x768xbf16>, vector<192x768xf32> -> vector<192x768xf32>
    %22 = arith.addf %16, %21 : vector<192x768xf32>
    %c4 = arith.constant 4 : index
    %c0_23 = arith.constant 0 : index
    %c0_24 = arith.constant 0 : index
    %23 = vector.load %arg1[%c4, %c0_23, %c0_24] : memref<28x8x28xbf16, #tpu.memory_space<vmem>>, vector<24x8x28xbf16>
    %24 = vector.shape_cast %23 : vector<24x8x28xbf16> to vector<192x28xbf16>
    %c4_25 = arith.constant 4 : index
    %c0_26 = arith.constant 0 : index
    %c0_27 = arith.constant 0 : index
    %25 = vector.load %arg2[%c4_25, %c0_26, %c0_27] : memref<5x28x768xbf16, #tpu.memory_space<vmem>>, vector<1x28x768xbf16>
    %26 = vector.shape_cast %25 : vector<1x28x768xbf16> to vector<28x768xbf16>
    %cst_28 = arith.constant dense<0.000000e+00> : vector<192x768xf32>
    %27 = tpu.matmul %24, %26, %cst_28 {dimension_numbers = #tpu.dot_dimension_numbers<[1], [0], [0], [1], [0, 0, 1, 1], [], []>} : vector<192x28xbf16>, vector<28x768xbf16>, vector<192x768xf32> -> vector<192x768xf32>
    %28 = arith.addf %22, %27 : vector<192x768xf32>
    %c0_29 = arith.constant 0 : index
    %c0_30 = arith.constant 0 : index
    %29 = vector.load %arg3[%c0_29, %c0_30] : memref<1x768xf32, #tpu.memory_space<vmem>>, vector<1x768xf32>
    %30 = vector.broadcast %29 : vector<1x768xf32> to vector<192x768xf32>
    %31 = arith.addf %28, %30 : vector<192x768xf32>
    %cst_31 = arith.constant 0.000000e+00 : f32
    %32 = vector.broadcast %cst_31 : f32 to vector<192x768xf32>
    %33 = arith.maximumf %31, %32 : vector<192x768xf32>
    %34 = vector.extract_strided_slice %33 {offsets = [0, 0], sizes = [192, 384], strides = [1, 1]} : vector<192x768xf32> to vector<192x384xf32>
    %35 = vector.extract_strided_slice %33 {offsets = [0, 384], sizes = [192, 384], strides = [1, 1]} : vector<192x768xf32> to vector<192x384xf32>
    %36 = arith.maximumf %34, %35 : vector<192x384xf32>
    %37 = vector.shape_cast %36 : vector<192x384xf32> to vector<12x16x384xf32>
    %38 = vector.extract_strided_slice %37 {offsets = [0, 0, 0], sizes = [12, 8, 384], strides = [1, 1, 1]} : vector<12x16x384xf32> to vector<12x8x384xf32>
    %39 = vector.extract_strided_slice %37 {offsets = [0, 8, 0], sizes = [12, 8, 384], strides = [1, 1, 1]} : vector<12x16x384xf32> to vector<12x8x384xf32>
    %40 = arith.maximumf %38, %39 : vector<12x8x384xf32>
    %41 = arith.truncf %40 : vector<12x8x384xf32> to vector<12x8x384xbf16>
    %c0_32 = arith.constant 0 : index
    %c0_33 = arith.constant 0 : index
    %c0_34 = arith.constant 0 : index
    %42 = vector.load %arg11[%c0_32, %c0_33, %c0_34] : memref<12x8x384xbf16, #tpu.memory_space<vmem>>, vector<12x8x384xbf16>
    tpu.vector_store %arg11[%c0_32, %c0_33, %c0_34], %41 {strides = array<i32>} : memref<12x8x384xbf16, #tpu.memory_space<vmem>>, vector<12x8x384xbf16>,
    %c0_35 = arith.constant 0 : index
    %c0_36 = arith.constant 0 : index
    %c0_37 = arith.constant 0 : index
    %43 = vector.load %arg11[%c0_35, %c0_36, %c0_37] : memref<12x8x384xbf16, #tpu.memory_space<vmem>>, vector<8x8x384xbf16>
    %44 = vector.shape_cast %43 : vector<8x8x384xbf16> to vector<64x384xbf16>
    %c0_38 = arith.constant 0 : index
    %c0_39 = arith.constant 0 : index
    %c0_40 = arith.constant 0 : index
    %45 = vector.load %arg4[%c0_38, %c0_39, %c0_40] : memref<5x384x512xbf16, #tpu.memory_space<vmem>>, vector<1x384x512xbf16>
    %46 = vector.shape_cast %45 : vector<1x384x512xbf16> to vector<384x512xbf16>
    %cst_41 = arith.constant dense<0.000000e+00> : vector<64x512xf32>
    %47 = tpu.matmul %44, %46, %cst_41 {dimension_numbers = #tpu.dot_dimension_numbers<[1], [0], [0], [1], [0, 0, 1, 1], [], []>} : vector<64x384xbf16>, vector<384x512xbf16>, vector<64x512xf32> -> vector<64x512xf32>
    %c1_42 = arith.constant 1 : index
    %c0_43 = arith.constant 0 : index
    %c0_44 = arith.constant 0 : index
    %48 = vector.load %arg11[%c1_42, %c0_43, %c0_44] : memref<12x8x384xbf16, #tpu.memory_space<vmem>>, vector<8x8x384xbf16>
    %49 = vector.shape_cast %48 : vector<8x8x384xbf16> to vector<64x384xbf16>
    %c1_45 = arith.constant 1 : index
    %c0_46 = arith.constant 0 : index
    %c0_47 = arith.constant 0 : index
    %50 = vector.load %arg4[%c1_45, %c0_46, %c0_47] : memref<5x384x512xbf16, #tpu.memory_space<vmem>>, vector<1x384x512xbf16>
    %51 = vector.shape_cast %50 : vector<1x384x512xbf16> to vector<384x512xbf16>
    %cst_48 = arith.constant dense<0.000000e+00> : vector<64x512xf32>
    %52 = tpu.matmul %49, %51, %cst_48 {dimension_numbers = #tpu.dot_dimension_numbers<[1], [0], [0], [1], [0, 0, 1, 1], [], []>} : vector<64x384xbf16>, vector<384x512xbf16>, vector<64x512xf32> -> vector<64x512xf32>
    %53 = arith.addf %47, %52 : vector<64x512xf32>
    %c2_49 = arith.constant 2 : index
    %c0_50 = arith.constant 0 : index
    %c0_51 = arith.constant 0 : index
    %54 = vector.load %arg11[%c2_49, %c0_50, %c0_51] : memref<12x8x384xbf16, #tpu.memory_space<vmem>>, vector<8x8x384xbf16>
    %55 = vector.shape_cast %54 : vector<8x8x384xbf16> to vector<64x384xbf16>
    %c2_52 = arith.constant 2 : index
    %c0_53 = arith.constant 0 : index
    %c0_54 = arith.constant 0 : index
    %56 = vector.load %arg4[%c2_52, %c0_53, %c0_54] : memref<5x384x512xbf16, #tpu.memory_space<vmem>>, vector<1x384x512xbf16>
    %57 = vector.shape_cast %56 : vector<1x384x512xbf16> to vector<384x512xbf16>
    %cst_55 = arith.constant dense<0.000000e+00> : vector<64x512xf32>
    %58 = tpu.matmul %55, %57, %cst_55 {dimension_numbers = #tpu.dot_dimension_numbers<[1], [0], [0], [1], [0, 0, 1, 1], [], []>} : vector<64x384xbf16>, vector<384x512xbf16>, vector<64x512xf32> -> vector<64x512xf32>
    %59 = arith.addf %53, %58 : vector<64x512xf32>
    %c3_56 = arith.constant 3 : index
    %c0_57 = arith.constant 0 : index
    %c0_58 = arith.constant 0 : index
    %60 = vector.load %arg11[%c3_56, %c0_57, %c0_58] : memref<12x8x384xbf16, #tpu.memory_space<vmem>>, vector<8x8x384xbf16>
    %61 = vector.shape_cast %60 : vector<8x8x384xbf16> to vector<64x384xbf16>
    %c3_59 = arith.constant 3 : index
    %c0_60 = arith.constant 0 : index
    %c0_61 = arith.constant 0 : index
    %62 = vector.load %arg4[%c3_59, %c0_60, %c0_61] : memref<5x384x512xbf16, #tpu.memory_space<vmem>>, vector<1x384x512xbf16>
    %63 = vector.shape_cast %62 : vector<1x384x512xbf16> to vector<384x512xbf16>
    %cst_62 = arith.constant dense<0.000000e+00> : vector<64x512xf32>
    %64 = tpu.matmul %61, %63, %cst_62 {dimension_numbers = #tpu.dot_dimension_numbers<[1], [0], [0], [1], [0, 0, 1, 1], [], []>} : vector<64x384xbf16>, vector<384x512xbf16>, vector<64x512xf32> -> vector<64x512xf32>
    %65 = arith.addf %59, %64 : vector<64x512xf32>
    %c4_63 = arith.constant 4 : index
    %c0_64 = arith.constant 0 : index
    %c0_65 = arith.constant 0 : index
    %66 = vector.load %arg11[%c4_63, %c0_64, %c0_65] : memref<12x8x384xbf16, #tpu.memory_space<vmem>>, vector<8x8x384xbf16>
    %67 = vector.shape_cast %66 : vector<8x8x384xbf16> to vector<64x384xbf16>
    %c4_66 = arith.constant 4 : index
    %c0_67 = arith.constant 0 : index
    %c0_68 = arith.constant 0 : index
    %68 = vector.load %arg4[%c4_66, %c0_67, %c0_68] : memref<5x384x512xbf16, #tpu.memory_space<vmem>>, vector<1x384x512xbf16>
    %69 = vector.shape_cast %68 : vector<1x384x512xbf16> to vector<384x512xbf16>
    %cst_69 = arith.constant dense<0.000000e+00> : vector<64x512xf32>
    %70 = tpu.matmul %67, %69, %cst_69 {dimension_numbers = #tpu.dot_dimension_numbers<[1], [0], [0], [1], [0, 0, 1, 1], [], []>} : vector<64x384xbf16>, vector<384x512xbf16>, vector<64x512xf32> -> vector<64x512xf32>
    %71 = arith.addf %65, %70 : vector<64x512xf32>
    %c0_70 = arith.constant 0 : index
    %c0_71 = arith.constant 0 : index
    %72 = vector.load %arg5[%c0_70, %c0_71] : memref<1x512xf32, #tpu.memory_space<vmem>>, vector<1x512xf32>
    %73 = vector.broadcast %72 : vector<1x512xf32> to vector<64x512xf32>
    %74 = arith.addf %71, %73 : vector<64x512xf32>
    %cst_72 = arith.constant 0.000000e+00 : f32
    %75 = vector.broadcast %cst_72 : f32 to vector<64x512xf32>
    %76 = arith.maximumf %74, %75 : vector<64x512xf32>
    %77 = vector.extract_strided_slice %76 {offsets = [0, 0], sizes = [64, 256], strides = [1, 1]} : vector<64x512xf32> to vector<64x256xf32>
    %78 = vector.extract_strided_slice %76 {offsets = [0, 256], sizes = [64, 256], strides = [1, 1]} : vector<64x512xf32> to vector<64x256xf32>
    %79 = arith.maximumf %77, %78 : vector<64x256xf32>
    %80 = vector.shape_cast %79 : vector<64x256xf32> to vector<4x16x256xf32>
    %81 = vector.extract_strided_slice %80 {offsets = [0, 0, 0], sizes = [4, 8, 256], strides = [1, 1, 1]} : vector<4x16x256xf32> to vector<4x8x256xf32>
    %82 = vector.extract_strided_slice %80 {offsets = [0, 8, 0], sizes = [4, 8, 256], strides = [1, 1, 1]} : vector<4x16x256xf32> to vector<4x8x256xf32>
    %83 = arith.maximumf %81, %82 : vector<4x8x256xf32>
    %84 = arith.truncf %83 : vector<4x8x256xf32> to vector<4x8x256xbf16>
    %85 = vector.extract_strided_slice %84 {offsets = [0, 0, 0], sizes = [1, 8, 256], strides = [1, 1, 1]} : vector<4x8x256xbf16> to vector<1x8x256xbf16>
    %86 = vector.shape_cast %85 : vector<1x8x256xbf16> to vector<8x256xbf16>
    %c0_73 = arith.constant 0 : index
    %c0_74 = arith.constant 0 : index
    %87 = vector.load %arg12[%c0_73, %c0_74] : memref<8x1024xbf16, #tpu.memory_space<vmem>>, vector<8x256xbf16>
    tpu.vector_store %arg12[%c0_73, %c0_74], %86 {strides = array<i32>} : memref<8x1024xbf16, #tpu.memory_space<vmem>>, vector<8x256xbf16>,
    %88 = vector.extract_strided_slice %84 {offsets = [1, 0, 0], sizes = [1, 8, 256], strides = [1, 1, 1]} : vector<4x8x256xbf16> to vector<1x8x256xbf16>
    %89 = vector.shape_cast %88 : vector<1x8x256xbf16> to vector<8x256xbf16>
    %c0_75 = arith.constant 0 : index
    %c256 = arith.constant 256 : index
    %90 = vector.load %arg12[%c0_75, %c256] : memref<8x1024xbf16, #tpu.memory_space<vmem>>, vector<8x256xbf16>
    tpu.vector_store %arg12[%c0_75, %c256], %89 {strides = array<i32>} : memref<8x1024xbf16, #tpu.memory_space<vmem>>, vector<8x256xbf16>,
    %91 = vector.extract_strided_slice %84 {offsets = [2, 0, 0], sizes = [1, 8, 256], strides = [1, 1, 1]} : vector<4x8x256xbf16> to vector<1x8x256xbf16>
    %92 = vector.shape_cast %91 : vector<1x8x256xbf16> to vector<8x256xbf16>
    %c0_76 = arith.constant 0 : index
    %c512 = arith.constant 512 : index
    %93 = vector.load %arg12[%c0_76, %c512] : memref<8x1024xbf16, #tpu.memory_space<vmem>>, vector<8x256xbf16>
    tpu.vector_store %arg12[%c0_76, %c512], %92 {strides = array<i32>} : memref<8x1024xbf16, #tpu.memory_space<vmem>>, vector<8x256xbf16>,
    %94 = vector.extract_strided_slice %84 {offsets = [3, 0, 0], sizes = [1, 8, 256], strides = [1, 1, 1]} : vector<4x8x256xbf16> to vector<1x8x256xbf16>
    %95 = vector.shape_cast %94 : vector<1x8x256xbf16> to vector<8x256xbf16>
    %c0_77 = arith.constant 0 : index
    %c768 = arith.constant 768 : index
    %96 = vector.load %arg12[%c0_77, %c768] : memref<8x1024xbf16, #tpu.memory_space<vmem>>, vector<8x256xbf16>
    tpu.vector_store %arg12[%c0_77, %c768], %95 {strides = array<i32>} : memref<8x1024xbf16, #tpu.memory_space<vmem>>, vector<8x256xbf16>,
    %c0_78 = arith.constant 0 : index
    %c0_79 = arith.constant 0 : index
    %97 = vector.load %arg12[%c0_78, %c0_79] : memref<8x1024xbf16, #tpu.memory_space<vmem>>, vector<8x1024xbf16>
    %c0_80 = arith.constant 0 : index
    %c0_81 = arith.constant 0 : index
    %98 = vector.load %arg6[%c0_80, %c0_81] : memref<1024x1024xbf16, #tpu.memory_space<vmem>>, vector<1024x1024xbf16>
    %cst_82 = arith.constant dense<0.000000e+00> : vector<8x1024xf32>
    %99 = tpu.matmul %97, %98, %cst_82 {dimension_numbers = #tpu.dot_dimension_numbers<[1], [0], [0], [1], [0, 0, 1, 1], [], []>} : vector<8x1024xbf16>, vector<1024x1024xbf16>, vector<8x1024xf32> -> vector<8x1024xf32>
    %c0_83 = arith.constant 0 : index
    %c0_84 = arith.constant 0 : index
    %100 = vector.load %arg7[%c0_83, %c0_84] : memref<1x1024xf32, #tpu.memory_space<vmem>>, vector<1x1024xf32>
    %101 = vector.broadcast %100 : vector<1x1024xf32> to vector<8x1024xf32>
    %102 = arith.addf %99, %101 : vector<8x1024xf32>
    %cst_85 = arith.constant 0.000000e+00 : f32
    %103 = vector.broadcast %cst_85 : f32 to vector<8x1024xf32>
    %104 = arith.maximumf %102, %103 : vector<8x1024xf32>
    %105 = arith.truncf %104 : vector<8x1024xf32> to vector<8x1024xbf16>
    %c0_86 = arith.constant 0 : index
    %c0_87 = arith.constant 0 : index
    %106 = vector.load %arg8[%c0_86, %c0_87] : memref<1024x128xbf16, #tpu.memory_space<vmem>>, vector<1024x128xbf16>
    %cst_88 = arith.constant dense<0.000000e+00> : vector<8x128xf32>
    %107 = tpu.matmul %105, %106, %cst_88 {dimension_numbers = #tpu.dot_dimension_numbers<[1], [0], [0], [1], [0, 0, 1, 1], [], []>} : vector<8x1024xbf16>, vector<1024x128xbf16>, vector<8x128xf32> -> vector<8x128xf32>
    %c0_89 = arith.constant 0 : index
    %c0_90 = arith.constant 0 : index
    %108 = vector.load %arg9[%c0_89, %c0_90] : memref<1x128xf32, #tpu.memory_space<vmem>>, vector<1x128xf32>
    %109 = vector.broadcast %108 : vector<1x128xf32> to vector<8x128xf32>
    %110 = arith.addf %107, %109 : vector<8x128xf32>
    %c0_91 = arith.constant 0 : index
    %c0_92 = arith.constant 0 : index
    %111 = vector.load %arg10[%c0_91, %c0_92] : memref<8x128xf32, #tpu.memory_space<vmem>>, vector<8x128xf32>
    tpu.vector_store %arg10[%c0_91, %c0_92], %110 {strides = array<i32>} : memref<8x128xf32, #tpu.memory_space<vmem>>, vector<8x128xf32>,
    return
  }
  func.func @transform_0(%arg0: i32) -> (i32, i32, i32) {
    %c0_i32 = arith.constant 0 : i32
    %c0_i32_0 = arith.constant 0 : i32
    %c0_i32_1 = arith.constant 0 : i32
    return %c0_i32, %arg0, %c0_i32_0 : i32, i32, i32
  }
  func.func @transform_1(%arg0: i32) -> (i32, i32, i32) {
    %c0_i32 = arith.constant 0 : i32
    %c0_i32_0 = arith.constant 0 : i32
    %c0_i32_1 = arith.constant 0 : i32
    %c0_i32_2 = arith.constant 0 : i32
    return %c0_i32, %c0_i32_0, %c0_i32_1 : i32, i32, i32
  }
  func.func @transform_2(%arg0: i32) -> (i32, i32) {
    %c0_i32 = arith.constant 0 : i32
    %c0_i32_0 = arith.constant 0 : i32
    %c0_i32_1 = arith.constant 0 : i32
    return %c0_i32, %c0_i32_0 : i32, i32
  }
  func.func @transform_3(%arg0: i32) -> (i32, i32, i32) {
    %c0_i32 = arith.constant 0 : i32
    %c0_i32_0 = arith.constant 0 : i32
    %c0_i32_1 = arith.constant 0 : i32
    %c0_i32_2 = arith.constant 0 : i32
    return %c0_i32, %c0_i32_0, %c0_i32_1 : i32, i32, i32
  }
  func.func @transform_4(%arg0: i32) -> (i32, i32) {
    %c0_i32 = arith.constant 0 : i32
    %c0_i32_0 = arith.constant 0 : i32
    %c0_i32_1 = arith.constant 0 : i32
    return %c0_i32, %c0_i32_0 : i32, i32
  }
  func.func @transform_5(%arg0: i32) -> (i32, i32) {
    %c0_i32 = arith.constant 0 : i32
    %c0_i32_0 = arith.constant 0 : i32
    %c0_i32_1 = arith.constant 0 : i32
    return %c0_i32, %c0_i32_0 : i32, i32
  }
  func.func @transform_6(%arg0: i32) -> (i32, i32) {
    %c0_i32 = arith.constant 0 : i32
    %c0_i32_0 = arith.constant 0 : i32
    %c0_i32_1 = arith.constant 0 : i32
    return %c0_i32, %c0_i32_0 : i32, i32
  }
  func.func @transform_7(%arg0: i32) -> (i32, i32) {
    %c0_i32 = arith.constant 0 : i32
    %c0_i32_0 = arith.constant 0 : i32
    %c0_i32_1 = arith.constant 0 : i32
    return %c0_i32, %c0_i32_0 : i32, i32
  }
  func.func @transform_8(%arg0: i32) -> (i32, i32) {
    %c0_i32 = arith.constant 0 : i32
    %c0_i32_0 = arith.constant 0 : i32
    %c0_i32_1 = arith.constant 0 : i32
    return %c0_i32, %c0_i32_0 : i32, i32
  }
  func.func @transform_9(%arg0: i32) -> (i32, i32) {
    %c0_i32 = arith.constant 0 : i32
    %c0_i32_0 = arith.constant 0 : i32
    return %arg0, %c0_i32 : i32, i32
  }
}

</mosaic_0001>

<llo_original>
// kernel: cnn1_forward.1
$region0: #{cnn1_forward.1}
  #allocation0 [shape = 'u32[]', space=smem, size = 0x4, offset = 0x4, fixed_abs, tag = 'smem constant byte address 0x4 - core index']
  #allocation1 [shape = 'u32[144,128]{1,0:T(1,128)}', space=vmem, size = 0x12000, scoped, tag = 'internal scratch']
  #allocation2 [shape = 'bf16[12,8,384]{2,1,0:T(8,128)(2,1)}', space=vmem, size = 0x12000, scoped, tag = 'scratch operand']
  #allocation3 [shape = 'bf16[8,1024]{1,0:T(8,128)(2,1)}', space=vmem, size = 0x4000, scoped, tag = 'scratch operand']
  %s0 = inlined_call_operand.vmem [shape: bf16[28,8,28], index: 0, kind: input, shape index: {}]
  %s1 = inlined_call_operand.hbm [shape: bf16[5,28,768], index: 1, kind: input, shape index: {}]
  %s2 = inlined_call_operand.hbm [shape: f32[1,768], index: 2, kind: input, shape index: {}]
  %s3 = inlined_call_operand.hbm [shape: bf16[5,384,512], index: 3, kind: input, shape index: {}]
  %s4 = inlined_call_operand.hbm [shape: f32[1,512], index: 4, kind: input, shape index: {}]
  %s5 = inlined_call_operand.hbm [shape: bf16[1024,1024], index: 5, kind: input, shape index: {}]
  %s6 = inlined_call_operand.hbm [shape: f32[1,1024], index: 6, kind: input, shape index: {}]
  %s7 = inlined_call_operand.hbm [shape: bf16[1024,128], index: 7, kind: input, shape index: {}]
  %s8 = inlined_call_operand.hbm [shape: f32[1,128], index: 8, kind: input, shape index: {}]
  %s9 = inlined_call_operand.vmem [shape: f32[8,128], index: 9, kind: output, shape index: {}]
  %s10 = sld [smem:[#allocation0]]
  $region78: #{cnn1_forward.1} parent=0
    _
  %s12 = ssub.s32 1, %s10
  %s13 = scalar_select 0, %s12, %s10
  $region1: #{cnn1_forward.1} parent=0
    #allocation4 [shape = 'u8[245760]{0}', space=vmem, size = 0x3c000, scoped, tag = 'input window, operand 1, single buffered']
    #allocation5 [shape = 's32[1]{0}', space=sflag, size = 0x4, scoped, tag = 'scoped memory for cnn1_forward.1']
    #allocation6 [shape = 'u8[3072]{0}', space=vmem, size = 0xc00, scoped, tag = 'input window, operand 2, single buffered']
    #allocation7 [shape = 's32[1]{0}', space=sflag, size = 0x4, scoped, tag = 'scoped memory for cnn1_forward.1']
    #allocation8 [shape = 'u8[1966080]{0}', space=vmem, size = 0x1e0000, scoped, tag = 'input window, operand 3, single buffered']
    #allocation9 [shape = 'u8[2048]{0}', space=vmem, size = 0x800, scoped, tag = 'input window, operand 4, single buffered']
    #allocation10 [shape = 's32[1]{0}', space=sflag, size = 0x4, scoped, tag = 'scoped memory for cnn1_forward.1']
    #allocation11 [shape = 'u8[2097152]{0}', space=vmem, size = 0x200000, scoped, tag = 'input window, operand 5, single buffered']
    #allocation12 [shape = 'u8[4096]{0}', space=vmem, size = 0x1000, scoped, tag = 'input window, operand 6, single buffered']
    #allocation13 [shape = 's32[1]{0}', space=sflag, size = 0x4, scoped, tag = 'scoped memory for cnn1_forward.1']
    #allocation14 [shape = 'u8[262144]{0}', space=vmem, size = 0x40000, scoped, tag = 'input window, operand 7, single buffered']
    #allocation15 [shape = 'u8[512]{0}', space=vmem, size = 0x400, scoped, tag = 'input window, operand 8, single buffered']
    #allocation16 [shape = 's32[1]{0}', space=sflag, size = 0x4, scoped, tag = 'scoped memory for cnn1_forward.1']
    %14 = vsyncpa [#allocation5], 0
    %15 = vsyncpa [#allocation7], 0
    %16 = vsyncpa [#allocation10], 0
    %17 = vsyncpa [#allocation13], 0
    %18 = vsyncpa [#allocation16], 0
    // Predicated region
    $region2: #{cnn1_forward.1} parent=1 // pred_check
      _
    $region3: #{cnn1_forward.1} parent=1 // pred_check_branch
      %20 = sbr.rel (0) target = $region5
    $region4: #{cnn1_forward.1} parent=1 // pred_region
      _
    $region5: #{cnn1_forward.1} parent=1 // pred_fallthru
      _
    // Predicated region
    $region6: #{cnn1_forward.1} parent=1 // pred_check
      _
    $region7: #{cnn1_forward.1} parent=1 // pred_check_branch
      %22 = sbr.rel (0) target = $region9
    $region8: #{cnn1_forward.1} parent=1 // pred_region
      %s24 = ssub.s32 7680, 7680
      %25 = vsyncadd [#allocation5], %s24
      %s26 = sshll.u32 [#allocation4], 4
      %s27 = int_to_ptr.vmem [resolvable:$true] %s26
      %32 = dma.hbm_to_vmem [thread:$0]  %s1, 7680, %s27, [#allocation5], 384, 384, 24
    $region9: #{cnn1_forward.1} parent=1 // pred_fallthru
      _
    // Predicated region
    $region10: #{cnn1_forward.1} parent=1 // pred_check
      _
    $region11: #{cnn1_forward.1} parent=1 // pred_check_branch
      %34 = sbr.rel (0) target = $region13
    $region12: #{cnn1_forward.1} parent=1 // pred_region
      %s36 = ssub.s32 96, 96
      %37 = vsyncadd [#allocation7], %s36
      %s39 = sshll.u32 [#allocation6], 4
      %s40 = int_to_ptr.vmem [resolvable:$true] %s39
      %42 = dma.hbm_to_vmem [thread:$0]  %s2, 96, %s40, [#allocation7]
    $region13: #{cnn1_forward.1} parent=1 // pred_fallthru
      _
    // Predicated region
    $region14: #{cnn1_forward.1} parent=1 // pred_check
      _
    $region15: #{cnn1_forward.1} parent=1 // pred_check_branch
      %44 = sbr.rel (0) target = $region17
    $region16: #{cnn1_forward.1} parent=1 // pred_region
      %s46 = ssub.s32 61440, 61440
      %47 = vsyncadd [#allocation7], %s46
      %s48 = sshll.u32 [#allocation8], 4
      %s49 = int_to_ptr.vmem [resolvable:$true] %s48
      %54 = dma.hbm_to_vmem [thread:$0]  %s3, 61440, %s49, [#allocation7], 256, 256, 16
    $region17: #{cnn1_forward.1} parent=1 // pred_fallthru
      _
    // Predicated region
    $region18: #{cnn1_forward.1} parent=1 // pred_check
      _
    $region19: #{cnn1_forward.1} parent=1 // pred_check_branch
      %56 = sbr.rel (0) target = $region21
    $region20: #{cnn1_forward.1} parent=1 // pred_region
      %s58 = ssub.s32 64, 64
      %59 = vsyncadd [#allocation10], %s58
      %s61 = sshll.u32 [#allocation9], 4
      %s62 = int_to_ptr.vmem [resolvable:$true] %s61
      %64 = dma.hbm_to_vmem [thread:$0]  %s4, 64, %s62, [#allocation10]
    $region21: #{cnn1_forward.1} parent=1 // pred_fallthru
      _
    // Predicated region
    $region22: #{cnn1_forward.1} parent=1 // pred_check
      _
    $region23: #{cnn1_forward.1} parent=1 // pred_check_branch
      %66 = sbr.rel (0) target = $region25
    $region24: #{cnn1_forward.1} parent=1 // pred_region
      %s68 = ssub.s32 65536, 65536
      %69 = vsyncadd [#allocation10], %s68
      %s70 = sshll.u32 [#allocation11], 4
      %s71 = int_to_ptr.vmem [resolvable:$true] %s70
      %76 = dma.hbm_to_vmem [thread:$0]  %s5, 65536, %s71, [#allocation10], 512, 512, 32
    $region25: #{cnn1_forward.1} parent=1 // pred_fallthru
      _
    // Predicated region
    $region26: #{cnn1_forward.1} parent=1 // pred_check
      _
    $region27: #{cnn1_forward.1} parent=1 // pred_check_branch
      %78 = sbr.rel (0) target = $region29
    $region28: #{cnn1_forward.1} parent=1 // pred_region
      %s80 = ssub.s32 128, 128
      %81 = vsyncadd [#allocation13], %s80
      %s83 = sshll.u32 [#allocation12], 4
      %s84 = int_to_ptr.vmem [resolvable:$true] %s83
      %86 = dma.hbm_to_vmem [thread:$0]  %s6, 128, %s84, [#allocation13]
    $region29: #{cnn1_forward.1} parent=1 // pred_fallthru
      _
    // Predicated region
    $region30: #{cnn1_forward.1} parent=1 // pred_check
      _
    $region31: #{cnn1_forward.1} parent=1 // pred_check_branch
      %88 = sbr.rel (0) target = $region33
    $region32: #{cnn1_forward.1} parent=1 // pred_region
      %s90 = ssub.s32 8192, 8192
      %91 = vsyncadd [#allocation13], %s90
      %s92 = sshll.u32 [#allocation14], 4
      %s93 = int_to_ptr.vmem [resolvable:$true] %s92
      %98 = dma.hbm_to_vmem [thread:$0]  %s7, 8192, %s93, [#allocation13], 64, 64, 4
    $region33: #{cnn1_forward.1} parent=1 // pred_fallthru
      _
    // Predicated region
    $region34: #{cnn1_forward.1} parent=1 // pred_check
      _
    $region35: #{cnn1_forward.1} parent=1 // pred_check_branch
      %100 = sbr.rel (0) target = $region37
    $region36: #{cnn1_forward.1} parent=1 // pred_region
      %s102 = ssub.s32 16, 16
      %103 = vsyncadd [#allocation16], %s102
      %s105 = sshll.u32 [#allocation15], 4
      %s106 = int_to_ptr.vmem [resolvable:$true] %s105
      %108 = dma.hbm_to_vmem [thread:$0]  %s8, 16, %s106, [#allocation16]
    $region37: #{cnn1_forward.1} parent=1 // pred_fallthru
      _
    // Predicated region
    $region38: #{cnn1_forward.1} parent=1 // pred_check
      _
    $region39: #{cnn1_forward.1} parent=1 // pred_check_branch
      %110 = sbr.rel (0) target = $region41
    $region40: #{cnn1_forward.1} parent=1 // pred_region
      %111 = dma.done [#allocation5], 7680
    $region41: #{cnn1_forward.1} parent=1 // pred_fallthru
      _
    // Predicated region
    $region42: #{cnn1_forward.1} parent=1 // pred_check
      _
    $region43: #{cnn1_forward.1} parent=1 // pred_check_branch
      %113 = sbr.rel (0) target = $region45
    $region44: #{cnn1_forward.1} parent=1 // pred_region
      %114 = dma.done [#allocation7], 96
    $region45: #{cnn1_forward.1} parent=1 // pred_fallthru
      _
    // Predicated region
    $region46: #{cnn1_forward.1} parent=1 // pred_check
      _
    $region47: #{cnn1_forward.1} parent=1 // pred_check_branch
      %116 = sbr.rel (0) target = $region49
    $region48: #{cnn1_forward.1} parent=1 // pred_region
      %117 = dma.done [#allocation7], 61440
    $region49: #{cnn1_forward.1} parent=1 // pred_fallthru
      _
    // Predicated region
    $region50: #{cnn1_forward.1} parent=1 // pred_check
      _
    $region51: #{cnn1_forward.1} parent=1 // pred_check_branch
      %119 = sbr.rel (0) target = $region53
    $region52: #{cnn1_forward.1} parent=1 // pred_region
      %120 = dma.done [#allocation10], 64
    $region53: #{cnn1_forward.1} parent=1 // pred_fallthru
      _
    // Predicated region
    $region54: #{cnn1_forward.1} parent=1 // pred_check
      _
    $region55: #{cnn1_forward.1} parent=1 // pred_check_branch
      %122 = sbr.rel (0) target = $region57
    $region56: #{cnn1_forward.1} parent=1 // pred_region
      %123 = dma.done [#allocation10], 65536
    $region57: #{cnn1_forward.1} parent=1 // pred_fallthru
      _
    // Predicated region
    $region58: #{cnn1_forward.1} parent=1 // pred_check
      _
    $region59: #{cnn1_forward.1} parent=1 // pred_check_branch
      %125 = sbr.rel (0) target = $region61
    $region60: #{cnn1_forward.1} parent=1 // pred_region
      %126 = dma.done [#allocation13], 128
    $region61: #{cnn1_forward.1} parent=1 // pred_fallthru
      _
    // Predicated region
    $region62: #{cnn1_forward.1} parent=1 // pred_check
      _
    $region63: #{cnn1_forward.1} parent=1 // pred_check_branch
      %128 = sbr.rel (0) target = $region65
    $region64: #{cnn1_forward.1} parent=1 // pred_region
      %129 = dma.done [#allocation13], 8192
    $region65: #{cnn1_forward.1} parent=1 // pred_fallthru
      _
    // Predicated region
    $region66: #{cnn1_forward.1} parent=1 // pred_check
      _
    $region67: #{cnn1_forward.1} parent=1 // pred_check_branch
      %131 = sbr.rel (0) target = $region69
    $region68: #{cnn1_forward.1} parent=1 // pred_region
      %132 = dma.done [#allocation16], 16
    $region69: #{cnn1_forward.1} parent=1 // pred_fallthru
      _
    %v134 = vld [vmem:[%s0] sm:$0xf]
    %v135 = vld [vmem:[%s0 + $0x4] sm:$0xf]
    %v136 = vld [vmem:[%s0 + $0x8] sm:$0xf]
    %v137 = vld [vmem:[%s0 + $0xc] sm:$0xf]
    %v138 = vld [vmem:[%s0 + $0x10] sm:$0xf]
    %v139 = vld [vmem:[%s0 + $0x14] sm:$0xf]
    %v140 = vld [vmem:[%s0 + $0x18] sm:$0xf]
    %v141 = vld [vmem:[%s0 + $0x1c] sm:$0xf]
    %v142 = vld [vmem:[%s0 + $0x20] sm:$0xf]
    %v143 = vld [vmem:[%s0 + $0x24] sm:$0xf]
    %v144 = vld [vmem:[%s0 + $0x28] sm:$0xf]
    %v145 = vld [vmem:[%s0 + $0x2c] sm:$0xf]
    %v146 = vld [vmem:[%s0 + $0x30] sm:$0xf]
    %v147 = vld [vmem:[%s0 + $0x34] sm:$0xf]
    %v148 = vld [vmem:[%s0 + $0x38] sm:$0xf]
    %v149 = vld [vmem:[%s0 + $0x3c] sm:$0xf]
    %v150 = vld [vmem:[%s0 + $0x40] sm:$0xf]
    %v151 = vld [vmem:[%s0 + $0x44] sm:$0xf]
    %v152 = vld [vmem:[%s0 + $0x48] sm:$0xf]
    %v153 = vld [vmem:[%s0 + $0x4c] sm:$0xf]
    %v154 = vld [vmem:[%s0 + $0x50] sm:$0xf]
    %v155 = vld [vmem:[%s0 + $0x54] sm:$0xf]
    %v156 = vld [vmem:[%s0 + $0x58] sm:$0xf]
    %v157 = vld [vmem:[%s0 + $0x5c] sm:$0xf]
    %v158 = vld [vmem:[#allocation4] sm:$0xff]
    %v159 = vld [vmem:[#allocation4 + $0x8] sm:$0xff]
    %v160 = vld [vmem:[#allocation4 + $0x10] sm:$0xff]
    %v161 = vld [vmem:[#allocation4 + $0x18] sm:$0xff]
    %v162 = vld [vmem:[#allocation4 + $0x20] sm:$0xff]
    %v163 = vld [vmem:[#allocation4 + $0x28] sm:$0xff]
    %v164 = vld [vmem:[#allocation4 + $0x30] sm:$0xff]
    %v165 = vld [vmem:[#allocation4 + $0x38] sm:$0xff]
    %v166 = vld [vmem:[#allocation4 + $0x40] sm:$0xff]
    %v167 = vld [vmem:[#allocation4 + $0x48] sm:$0x33]
    %v168 = vld [vmem:[#allocation4 + $0x50] sm:$0x33]
    %v169 = vld [vmem:[#allocation4 + $0x58] sm:$0x33]
    %s170 = scalar_lea.vmem %s0, 4
    %v171 = vld [vmem:[%s170] sm:$0xf]
    %v172 = vld [vmem:[%s170 + $0x4] sm:$0xf]
    %v173 = vld [vmem:[%s170 + $0x8] sm:$0xf]
    %v174 = vld [vmem:[%s170 + $0xc] sm:$0xf]
    %v175 = vld [vmem:[%s170 + $0x10] sm:$0xf]
    %v176 = vld [vmem:[%s170 + $0x14] sm:$0xf]
    %v177 = vld [vmem:[%s170 + $0x18] sm:$0xf]
    %v178 = vld [vmem:[%s170 + $0x1c] sm:$0xf]
    %v179 = vld [vmem:[%s170 + $0x20] sm:$0xf]
    %v180 = vld [vmem:[%s170 + $0x24] sm:$0xf]
    %v181 = vld [vmem:[%s170 + $0x28] sm:$0xf]
    %v182 = vld [vmem:[%s170 + $0x2c] sm:$0xf]
    %v183 = vld [vmem:[%s170 + $0x30] sm:$0xf]
    %v184 = vld [vmem:[%s170 + $0x34] sm:$0xf]
    %v185 = vld [vmem:[%s170 + $0x38] sm:$0xf]
    %v186 = vld [vmem:[%s170 + $0x3c] sm:$0xf]
    %v187 = vld [vmem:[%s170 + $0x40] sm:$0xf]
    %v188 = vld [vmem:[%s170 + $0x44] sm:$0xf]
    %v189 = vld [vmem:[%s170 + $0x48] sm:$0xf]
    %v190 = vld [vmem:[%s170 + $0x4c] sm:$0xf]
    %v191 = vld [vmem:[%s170 + $0x50] sm:$0xf]
    %v192 = vld [vmem:[%s170 + $0x54] sm:$0xf]
    %v193 = vld [vmem:[%s170 + $0x58] sm:$0xf]
    %v194 = vld [vmem:[%s170 + $0x5c] sm:$0xf]
    %s195 = scalar_lea.vmem [#allocation4], 96
    %v196 = vld [vmem:[%s195] sm:$0xff]
    %v197 = vld [vmem:[%s195 + $0x8] sm:$0xff]
    %v198 = vld [vmem:[%s195 + $0x10] sm:$0xff]
    %v199 = vld [vmem:[%s195 + $0x18] sm:$0xff]
    %v200 = vld [vmem:[%s195 + $0x20] sm:$0xff]
    %v201 = vld [vmem:[%s195 + $0x28] sm:$0xff]
    %v202 = vld [vmem:[%s195 + $0x30] sm:$0xff]
    %v203 = vld [vmem:[%s195 + $0x38] sm:$0xff]
    %v204 = vld [vmem:[%s195 + $0x40] sm:$0xff]
    %v205 = vld [vmem:[%s195 + $0x48] sm:$0x33]
    %v206 = vld [vmem:[%s195 + $0x50] sm:$0x33]
    %v207 = vld [vmem:[%s195 + $0x58] sm:$0x33]
    %v232 = vunpack.c.l.b16 %v171
    %v233 = vunpack.c.l.b16 %v172
    %v234 = vunpack.c.l.b16 %v173
    %v235 = vunpack.c.l.b16 %v174
    %v236 = vunpack.c.l.b16 %v175
    %v237 = vunpack.c.l.b16 %v176
    %v238 = vunpack.c.l.b16 %v177
    %v239 = vunpack.c.l.b16 %v178
    %v240 = vunpack.c.l.b16 %v179
    %v241 = vunpack.c.l.b16 %v180
    %v242 = vunpack.c.l.b16 %v181
    %v243 = vunpack.c.l.b16 %v182
    %v244 = vunpack.c.l.b16 %v183
    %v245 = vunpack.c.l.b16 %v184
    %v246 = vunpack.c.l.b16 %v185
    %v247 = vunpack.c.l.b16 %v186
    %v248 = vunpack.c.l.b16 %v187
    %v249 = vunpack.c.l.b16 %v188
    %v250 = vunpack.c.l.b16 %v189
    %v251 = vunpack.c.l.b16 %v190
    %v252 = vunpack.c.l.b16 %v191
    %v253 = vunpack.c.l.b16 %v192
    %v254 = vunpack.c.l.b16 %v193
    %v255 = vunpack.c.l.b16 %v194
    %v256 = vpack.c.b16 %v233, %v232
    %v257 = vpack.c.b16 %v235, %v234
    %v258 = vpack.c.b16 %v237, %v236
    %v259 = vpack.c.b16 %v239, %v238
    %v260 = vpack.c.b16 %v241, %v240
    %v261 = vpack.c.b16 %v243, %v242
    %v262 = vpack.c.b16 %v245, %v244
    %v263 = vpack.c.b16 %v247, %v246
    %v264 = vpack.c.b16 %v249, %v248
    %v265 = vpack.c.b16 %v251, %v250
    %v266 = vpack.c.b16 %v253, %v252
    %v267 = vpack.c.b16 %v255, %v254
    %v280 = vunpack.c.l.b16 %v196
    %v281 = vunpack.c.h.b16 %v196
    %v282 = vunpack.c.l.b16 %v197
    %v283 = vunpack.c.h.b16 %v197
    %v284 = vunpack.c.l.b16 %v198
    %v285 = vunpack.c.h.b16 %v198
    %v286 = vunpack.c.l.b16 %v199
    %v287 = vunpack.c.h.b16 %v199
    %v288 = vunpack.c.l.b16 %v200
    %v289 = vunpack.c.h.b16 %v200
    %v290 = vunpack.c.l.b16 %v201
    %v291 = vunpack.c.h.b16 %v201
    %v292 = vunpack.c.l.b16 %v202
    %v293 = vunpack.c.h.b16 %v202
    %v294 = vunpack.c.l.b16 %v203
    %v295 = vunpack.c.h.b16 %v203
    %v296 = vunpack.c.l.b16 %v204
    %v297 = vunpack.c.h.b16 %v204
    %v298 = vunpack.c.l.b16 %v205
    %v299 = vunpack.c.h.b16 %v205
    %v300 = vunpack.c.l.b16 %v206
    %v301 = vunpack.c.h.b16 %v206
    %v302 = vunpack.c.l.b16 %v207
    %v303 = vunpack.c.h.b16 %v207
    %v304 = vpack.c.b16 %v286, %v280
    %v305 = vpack.c.b16 %v287, %v281
    %v306 = vpack.c.b16 %v288, %v282
    %v307 = vpack.c.b16 %v289, %v283
    %v308 = vpack.c.b16 %v290, %v284
    %v309 = vpack.c.b16 %v291, %v285
    %v310 = vpack.c.b16 %v298, %v292
    %v311 = vpack.c.b16 %v299, %v293
    %v312 = vpack.c.b16 %v300, %v294
    %v313 = vpack.c.b16 %v301, %v295
    %v314 = vpack.c.b16 %v302, %v296
    %v315 = vpack.c.b16 %v303, %v297
    %vm322 = vcmask 228352
    %v324 = vsel %vm322, %v256, 0
    %v327 = vsel %vm322, %v257, 0
    %v330 = vsel %vm322, %v258, 0
    %v333 = vsel %vm322, %v259, 0
    %v336 = vsel %vm322, %v260, 0
    %v339 = vsel %vm322, %v261, 0
    %v342 = vsel %vm322, %v262, 0
    %v345 = vsel %vm322, %v263, 0
    %v348 = vsel %vm322, %v264, 0
    %v351 = vsel %vm322, %v265, 0
    %v354 = vsel %vm322, %v266, 0
    %v357 = vsel %vm322, %v267, 0
    %vm359 = vcmask 1045504
    %v361 = vsel %vm359, %v310, 0
    %v364 = vsel %vm359, %v311, 0
    %v367 = vsel %vm359, %v312, 0
    %v370 = vsel %vm359, %v313, 0
    %v373 = vsel %vm359, %v314, 0
    %v376 = vsel %vm359, %v315, 0
    %378 = vmatprep.subr.bf16.mxu0 %v305
    %379 = vmatpush1.bf16.msra.mxu0 %v304
    %380 = vmatprep.subr.bf16.mxu0 %v364
    %381 = vmatpush1.bf16.msra.mxu0 %v361
    %382 = vmatprep.subr.bf16.mxu0 0
    %383 = vmatpush1.bf16.msra.mxu0 0
    %384 = vmatprep.subr.bf16.mxu0 0
    %385 = vmatpush1.bf16.msra.mxu0 0
    %386 = vmatprep.subr.bf16.mxu0 0
    %387 = vmatpush1.bf16.msra.mxu0 0
    %388 = vmatprep.subr.bf16.mxu0 0
    %389 = vmatpush1.bf16.msra.mxu0 0
    %390 = vmatprep.subr.bf16.mxu0 0
    %391 = vmatpush1.bf16.msra.mxu0 0
    %392 = vmatprep.subr.bf16.mxu0 0
    %393 = vmatpush1.bf16.msra.mxu0 0
    %394 = vmatprep.subr.bf16.mxu0 0
    %395 = vmatpush1.bf16.msra.mxu0 0
    %396 = vmatprep.subr.bf16.mxu0 0
    %397 = vmatpush1.bf16.msra.mxu0 0
    %398 = vmatprep.subr.bf16.mxu0 0
    %399 = vmatpush1.bf16.msra.mxu0 0
    %400 = vmatprep.subr.bf16.mxu0 0
    %401 = vmatpush1.bf16.msra.mxu0 0
    %402 = vmatprep.subr.bf16.mxu0 0
    %403 = vmatpush1.bf16.msra.mxu0 0
    %404 = vmatprep.subr.bf16.mxu0 0
    %405 = vmatpush1.bf16.msra.mxu0 0
    %406 = vmatprep.subr.bf16.mxu0 0
    %407 = vmatpush1.bf16.msra.mxu0 0
    %408 = vmatprep.subr.bf16.mxu0 0
    %409 = vmatpush1.bf16.msra.mxu0 0
    %410 = vmatprep.mubr.bf16.mxu0 0
    %411 = vmatmul.mubr.bf16.gmra.mrb[0].mxu0 %v324
    %v412 = vpop.f32.mrb[0].mxu0
    %v413 = vadd.f32 0.0, %v412
    %v414 = vpop.f32.mrb[0].mxu0
    %v415 = vadd.f32 0.0, %v414
    %v416 = vpop.f32.mrb[0].mxu0
    %v417 = vadd.f32 0.0, %v416
    %v418 = vpop.f32.mrb[0].mxu0
    %v419 = vadd.f32 0.0, %v418
    %420 = vmatprep.mubr.bf16.mxu0 0
    %421 = vmatmul.mubr.bf16.gmra.mrb[0].mxu0 %v327
    %v422 = vpop.f32.mrb[0].mxu0
    %v423 = vadd.f32 0.0, %v422
    %v424 = vpop.f32.mrb[0].mxu0
    %v425 = vadd.f32 0.0, %v424
    %v426 = vpop.f32.mrb[0].mxu0
    %v427 = vadd.f32 0.0, %v426
    %v428 = vpop.f32.mrb[0].mxu0
    %v429 = vadd.f32 0.0, %v428
    %430 = vmatprep.mubr.bf16.mxu0 0
    %431 = vmatmul.mubr.bf16.gmra.mrb[0].mxu0 %v330
    %v432 = vpop.f32.mrb[0].mxu0
    %v433 = vadd.f32 0.0, %v432
    %v434 = vpop.f32.mrb[0].mxu0
    %v435 = vadd.f32 0.0, %v434
    %v436 = vpop.f32.mrb[0].mxu0
    %v437 = vadd.f32 0.0, %v436
    %v438 = vpop.f32.mrb[0].mxu0
    %v439 = vadd.f32 0.0, %v438
    %440 = vmatprep.mubr.bf16.mxu0 0
    %441 = vmatmul.mubr.bf16.gmra.mrb[0].mxu0 %v333
    %v442 = vpop.f32.mrb[0].mxu0
    %v443 = vadd.f32 0.0, %v442
    %v444 = vpop.f32.mrb[0].mxu0
    %v445 = vadd.f32 0.0, %v444
    %v446 = vpop.f32.mrb[0].mxu0
    %v447 = vadd.f32 0.0, %v446
    %v448 = vpop.f32.mrb[0].mxu0
    %v449 = vadd.f32 0.0, %v448
    %450 = vmatprep.mubr.bf16.mxu0 0
    %451 = vmatmul.mubr.bf16.gmra.mrb[0].mxu0 %v336
    %v452 = vpop.f32.mrb[0].mxu0
    %v453 = vadd.f32 0.0, %v452
    %v454 = vpop.f32.mrb[0].mxu0
    %v455 = vadd.f32 0.0, %v454
    %v456 = vpop.f32.mrb[0].mxu0
    %v457 = vadd.f32 0.0, %v456
    %v458 = vpop.f32.mrb[0].mxu0
    %v459 = vadd.f32 0.0, %v458
    %460 = vmatprep.mubr.bf16.mxu0 0
    %461 = vmatmul.mubr.bf16.gmra.mrb[0].mxu0 %v339
    %v462 = vpop.f32.mrb[0].mxu0
    %v463 = vadd.f32 0.0, %v462
    %v464 = vpop.f32.mrb[0].mxu0
    %v465 = vadd.f32 0.0, %v464
    %v466 = vpop.f32.mrb[0].mxu0
    %v467 = vadd.f32 0.0, %v466
    %v468 = vpop.f32.mrb[0].mxu0
    %v469 = vadd.f32 0.0, %v468
    %470 = vmatprep.mubr.bf16.mxu0 0
    %471 = vmatmul.mubr.bf16.gmra.mrb[0].mxu0 %v342
    %v472 = vpop.f32.mrb[0].mxu0
    %v473 = vadd.f32 0.0, %v472
    %v474 = vpop.f32.mrb[0].mxu0
    %v475 = vadd.f32 0.0, %v474
    %v476 = vpop.f32.mrb[0].mxu0
    %v477 = vadd.f32 0.0, %v476
    %v478 = vpop.f32.mrb[0].mxu0
    %v479 = vadd.f32 0.0, %v478
    %480 = vmatprep.mubr.bf16.mxu0 0
    %481 = vmatmul.mubr.bf16.gmra.mrb[0].mxu0 %v345
    %v482 = vpop.f32.mrb[0].mxu0
    %v483 = vadd.f32 0.0, %v482
    %v484 = vpop.f32.mrb[0].mxu0
    %v485 = vadd.f32 0.0, %v484
    %v486 = vpop.f32.mrb[0].mxu0
    %v487 = vadd.f32 0.0, %v486
    %v488 = vpop.f32.mrb[0].mxu0
    %v489 = vadd.f32 0.0, %v488
    %490 = vmatprep.mubr.bf16.mxu0 0
    %491 = vmatmul.mubr.bf16.gmra.mrb[0].mxu0 %v348
    %v492 = vpop.f32.mrb[0].mxu0
    %v493 = vadd.f32 0.0, %v492
    %v494 = vpop.f32.mrb[0].mxu0
    %v495 = vadd.f32 0.0, %v494
    %v496 = vpop.f32.mrb[0].mxu0
    %v497 = vadd.f32 0.0, %v496
    %v498 = vpop.f32.mrb[0].mxu0
    %v499 = vadd.f32 0.0, %v498
    %500 = vmatprep.mubr.bf16.mxu0 0
    %501 = vmatmul.mubr.bf16.gmra.mrb[0].mxu0 %v351
    %v502 = vpop.f32.mrb[0].mxu0
    %v503 = vadd.f32 0.0, %v502
    %v504 = vpop.f32.mrb[0].mxu0
    %v505 = vadd.f32 0.0, %v504
    %v506 = vpop.f32.mrb[0].mxu0
    %v507 = vadd.f32 0.0, %v506
    %v508 = vpop.f32.mrb[0].mxu0
    %v509 = vadd.f32 0.0, %v508
    %510 = vmatprep.mubr.bf16.mxu0 0
    %511 = vmatmul.mubr.bf16.gmra.mrb[0].mxu0 %v354
    %v512 = vpop.f32.mrb[0].mxu0
    %v513 = vadd.f32 0.0, %v512
    %v514 = vpop.f32.mrb[0].mxu0
    %v515 = vadd.f32 0.0, %v514
    %v516 = vpop.f32.mrb[0].mxu0
    %v517 = vadd.f32 0.0, %v516
    %v518 = vpop.f32.mrb[0].mxu0
    %v519 = vadd.f32 0.0, %v518
    %520 = vmatprep.mubr.bf16.mxu0 0
    %521 = vmatmul.mubr.bf16.gmra.mrb[0].mxu0 %v357
    %v522 = vpop.f32.mrb[0].mxu0
    %v523 = vadd.f32 0.0, %v522
    %v524 = vpop.f32.mrb[0].mxu0
    %v525 = vadd.f32 0.0, %v524
    %v526 = vpop.f32.mrb[0].mxu0
    %v527 = vadd.f32 0.0, %v526
    %v528 = vpop.f32.mrb[0].mxu0
    %v529 = vadd.f32 0.0, %v528
    %530 = vdwg.mxu0
    %531 = vmatprep.subr.bf16.mxu0 %v307
    %532 = vmatpush1.bf16.msra.mxu0 %v306
    %533 = vmatprep.subr.bf16.mxu0 %v370
    %534 = vmatpush1.bf16.msra.mxu0 %v367
    %535 = vmatprep.subr.bf16.mxu0 0
    %536 = vmatpush1.bf16.msra.mxu0 0
    %537 = vmatprep.subr.bf16.mxu0 0
    %538 = vmatpush1.bf16.msra.mxu0 0
    %539 = vmatprep.subr.bf16.mxu0 0
    %540 = vmatpush1.bf16.msra.mxu0 0
    %541 = vmatprep.subr.bf16.mxu0 0
    %542 = vmatpush1.bf16.msra.mxu0 0
    %543 = vmatprep.subr.bf16.mxu0 0
    %544 = vmatpush1.bf16.msra.mxu0 0
    %545 = vmatprep.subr.bf16.mxu0 0
    %546 = vmatpush1.bf16.msra.mxu0 0
    %547 = vmatprep.subr.bf16.mxu0 0
    %548 = vmatpush1.bf16.msra.mxu0 0
    %549 = vmatprep.subr.bf16.mxu0 0
    %550 = vmatpush1.bf16.msra.mxu0 0
    %551 = vmatprep.subr.bf16.mxu0 0
    %552 = vmatpush1.bf16.msra.mxu0 0
    %553 = vmatprep.subr.bf16.mxu0 0
    %554 = vmatpush1.bf16.msra.mxu0 0
    %555 = vmatprep.subr.bf16.mxu0 0
    %556 = vmatpush1.bf16.msra.mxu0 0
    %557 = vmatprep.subr.bf16.mxu0 0
    %558 = vmatpush1.bf16.msra.mxu0 0
    %559 = vmatprep.subr.bf16.mxu0 0
    %560 = vmatpush1.bf16.msra.mxu0 0
    %561 = vmatprep.subr.bf16.mxu0 0
    %562 = vmatpush1.bf16.msra.mxu0 0
    %563 = vmatprep.mubr.bf16.mxu0 0
    %564 = vmatmul.mubr.bf16.gmra.mrb[0].mxu0 %v324
    %v565 = vpop.f32.mrb[0].mxu0
    %v566 = vadd.f32 0.0, %v565
    %v567 = vpop.f32.mrb[0].mxu0
    %v568 = vadd.f32 0.0, %v567
    %v569 = vpop.f32.mrb[0].mxu0
    %v570 = vadd.f32 0.0, %v569
    %v571 = vpop.f32.mrb[0].mxu0
    %v572 = vadd.f32 0.0, %v571
    %573 = vmatprep.mubr.bf16.mxu0 0
    %574 = vmatmul.mubr.bf16.gmra.mrb[0].mxu0 %v327
    %v575 = vpop.f32.mrb[0].mxu0
    %v576 = vadd.f32 0.0, %v575
    %v577 = vpop.f32.mrb[0].mxu0
    %v578 = vadd.f32 0.0, %v577
    %v579 = vpop.f32.mrb[0].mxu0
    %v580 = vadd.f32 0.0, %v579
    %v581 = vpop.f32.mrb[0].mxu0
    %v582 = vadd.f32 0.0, %v581
    %583 = vmatprep.mubr.bf16.mxu0 0
    %584 = vmatmul.mubr.bf16.gmra.mrb[0].mxu0 %v330
    %v585 = vpop.f32.mrb[0].mxu0
    %v586 = vadd.f32 0.0, %v585
    %v587 = vpop.f32.mrb[0].mxu0
    %v588 = vadd.f32 0.0, %v587
    %v589 = vpop.f32.mrb[0].mxu0
    %v590 = vadd.f32 0.0, %v589
    %v591 = vpop.f32.mrb[0].mxu0
    %v592 = vadd.f32 0.0, %v591
    %593 = vmatprep.mubr.bf16.mxu0 0
    %594 = vmatmul.mubr.bf16.gmra.mrb[0].mxu0 %v333
    %v595 = vpop.f32.mrb[0].mxu0
    %v596 = vadd.f32 0.0, %v595
    %v597 = vpop.f32.mrb[0].mxu0
    %v598 = vadd.f32 0.0, %v597
    %v599 = vpop.f32.mrb[0].mxu0
    %v600 = vadd.f32 0.0, %v599
    %v601 = vpop.f32.mrb[0].mxu0
    %v602 = vadd.f32 0.0, %v601
    %603 = vmatprep.mubr.bf16.mxu0 0
    %604 = vmatmul.mubr.bf16.gmra.mrb[0].mxu0 %v336
    %v605 = vpop.f32.mrb[0].mxu0
    %v606 = vadd.f32 0.0, %v605
    %v607 = vpop.f32.mrb[0].mxu0
    %v608 = vadd.f32 0.0, %v607
    %v609 = vpop.f32.mrb[0].mxu0
    %v610 = vadd.f32 0.0, %v609
    %v611 = vpop.f32.mrb[0].mxu0
    %v612 = vadd.f32 0.0, %v611
    %613 = vmatprep.mubr.bf16.mxu0 0
    %614 = vmatmul.mubr.bf16.gmra.mrb[0].mxu0 %v339
    %v615 = vpop.f32.mrb[0].mxu0
    %v616 = vadd.f32 0.0, %v615
    %v617 = vpop.f32.mrb[0].mxu0
    %v618 = vadd.f32 0.0, %v617
    %v619 = vpop.f32.mrb[0].mxu0
    %v620 = vadd.f32 0.0, %v619
    %v621 = vpop.f32.mrb[0].mxu0
    %v622 = vadd.f32 0.0, %v621
    %623 = vmatprep.mubr.bf16.mxu0 0
    %624 = vmatmul.mubr.bf16.gmra.mrb[0].mxu0 %v342
    %v625 = vpop.f32.mrb[0].mxu0
    %v626 = vadd.f32 0.0, %v625
    %v627 = vpop.f32.mrb[0].mxu0
    %v628 = vadd.f32 0.0, %v627
    %v629 = vpop.f32.mrb[0].mxu0
    %v630 = vadd.f32 0.0, %v629
    %v631 = vpop.f32.mrb[0].mxu0
    %v632 = vadd.f32 0.0, %v631
    %633 = vmatprep.mubr.bf16.mxu0 0
    %634 = vmatmul.mubr.bf16.gmra.mrb[0].mxu0 %v345
    %v635 = vpop.f32.mrb[0].mxu0
    %v636 = vadd.f32 0.0, %v635
    %v637 = vpop.f32.mrb[0].mxu0
    %v638 = vadd.f32 0.0, %v637
    %v639 = vpop.f32.mrb[0].mxu0
    %v640 = vadd.f32 0.0, %v639
    %v641 = vpop.f32.mrb[0].mxu0
    %v642 = vadd.f32 0.0, %v641
    %643 = vmatprep.mubr.bf16.mxu0 0
    %644 = vmatmul.mubr.bf16.gmra.mrb[0].mxu0 %v348
    %v645 = vpop.f32.mrb[0].mxu0
    %v646 = vadd.f32 0.0, %v645
    %v647 = vpop.f32.mrb[0].mxu0
    %v648 = vadd.f32 0.0, %v647
    %v649 = vpop.f32.mrb[0].mxu0
    %v650 = vadd.f32 0.0, %v649
    %v651 = vpop.f32.mrb[0].mxu0
    %v652 = vadd.f32 0.0, %v651
    %653 = vmatprep.mubr.bf16.mxu0 0
    %654 = vmatmul.mubr.bf16.gmra.mrb[0].mxu0 %v351
    %v655 = vpop.f32.mrb[0].mxu0
    %v656 = vadd.f32 0.0, %v655
    %v657 = vpop.f32.mrb[0].mxu0
    %v658 = vadd.f32 0.0, %v657
    %v659 = vpop.f32.mrb[0].mxu0
    %v660 = vadd.f32 0.0, %v659
    %v661 = vpop.f32.mrb[0].mxu0
    %v662 = vadd.f32 0.0, %v661
    %663 = vmatprep.mubr.bf16.mxu0 0
    %664 = vmatmul.mubr.bf16.gmra.mrb[0].mxu0 %v354
    %v665 = vpop.f32.mrb[0].mxu0
    %v666 = vadd.f32 0.0, %v665
    %v667 = vpop.f32.mrb[0].mxu0
    %v668 = vadd.f32 0.0, %v667
    %v669 = vpop.f32.mrb[0].mxu0
    %v670 = vadd.f32 0.0, %v669
    %v671 = vpop.f32.mrb[0].mxu0
    %v672 = vadd.f32 0.0, %v671
    %673 = vmatprep.mubr.bf16.mxu0 0
    %674 = vmatmul.mubr.bf16.gmra.mrb[0].mxu0 %v357
    %v675 = vpop.f32.mrb[0].mxu0
    %v676 = vadd.f32 0.0, %v675
    %v677 = vpop.f32.mrb[0].mxu0
    %v678 = vadd.f32 0.0, %v677
    %v679 = vpop.f32.mrb[0].mxu0
    %v680 = vadd.f32 0.0, %v679
    %v681 = vpop.f32.mrb[0].mxu0
    %v682 = vadd.f32 0.0, %v681
    %683 = vdwg.mxu0
    %684 = vmatprep.subr.bf16.mxu0 %v309
    %685 = vmatpush1.bf16.msra.mxu0 %v308
    %686 = vmatprep.subr.bf16.mxu0 %v376
    %687 = vmatpush1.bf16.msra.mxu0 %v373
    %688 = vmatprep.subr.bf16.mxu0 0
    %689 = vmatpush1.bf16.msra.mxu0 0
    %690 = vmatprep.subr.bf16.mxu0 0
    %691 = vmatpush1.bf16.msra.mxu0 0
    %692 = vmatprep.subr.bf16.mxu0 0
    %693 = vmatpush1.bf16.msra.mxu0 0
    %694 = vmatprep.subr.bf16.mxu0 0
    %695 = vmatpush1.bf16.msra.mxu0 0
    %696 = vmatprep.subr.bf16.mxu0 0
    %697 = vmatpush1.bf16.msra.mxu0 0
    %698 = vmatprep.subr.bf16.mxu0 0
    %699 = vmatpush1.bf16.msra.mxu0 0
    %700 = vmatprep.subr.bf16.mxu0 0
    %701 = vmatpush1.bf16.msra.mxu0 0
    %702 = vmatprep.subr.bf16.mxu0 0
    %703 = vmatpush1.bf16.msra.mxu0 0
    %704 = vmatprep.subr.bf16.mxu0 0
    %705 = vmatpush1.bf16.msra.mxu0 0
    %706 = vmatprep.subr.bf16.mxu0 0
    %707 = vmatpush1.bf16.msra.mxu0 0
    %708 = vmatprep.subr.bf16.mxu0 0
    %709 = vmatpush1.bf16.msra.mxu0 0
    %710 = vmatprep.subr.bf16.mxu0 0
    %711 = vmatpush1.bf16.msra.mxu0 0
    %712 = vmatprep.subr.bf16.mxu0 0
    %713 = vmatpush1.bf16.msra.mxu0 0
    %714 = vmatprep.subr.bf16.mxu0 0
    %715 = vmatpush1.bf16.msra.mxu0 0
    %716 = vmatprep.mubr.bf16.mxu0 0
    %717 = vmatmul.mubr.bf16.gmra.mrb[0].mxu0 %v324
    %v718 = vpop.f32.mrb[0].mxu0
    %v719 = vadd.f32 0.0, %v718
    %v720 = vpop.f32.mrb[0].mxu0
    %v721 = vadd.f32 0.0, %v720
    %v722 = vpop.f32.mrb[0].mxu0
    %v723 = vadd.f32 0.0, %v722
    %v724 = vpop.f32.mrb[0].mxu0
    %v725 = vadd.f32 0.0, %v724
    %726 = vmatprep.mubr.bf16.mxu0 0
    %727 = vmatmul.mubr.bf16.gmra.mrb[0].mxu0 %v327
    %v728 = vpop.f32.mrb[0].mxu0
    %v729 = vadd.f32 0.0, %v728
    %v730 = vpop.f32.mrb[0].mxu0
    %v731 = vadd.f32 0.0, %v730
    %v732 = vpop.f32.mrb[0].mxu0
    %v733 = vadd.f32 0.0, %v732
    %v734 = vpop.f32.mrb[0].mxu0
    %v735 = vadd.f32 0.0, %v734
    %736 = vmatprep.mubr.bf16.mxu0 0
    %737 = vmatmul.mubr.bf16.gmra.mrb[0].mxu0 %v330
    %v738 = vpop.f32.mrb[0].mxu0
    %v739 = vadd.f32 0.0, %v738
    %v740 = vpop.f32.mrb[0].mxu0
    %v741 = vadd.f32 0.0, %v740
    %v742 = vpop.f32.mrb[0].mxu0
    %v743 = vadd.f32 0.0, %v742
    %v744 = vpop.f32.mrb[0].mxu0
    %v745 = vadd.f32 0.0, %v744
    %746 = vmatprep.mubr.bf16.mxu0 0
    %747 = vmatmul.mubr.bf16.gmra.mrb[0].mxu0 %v333
    %v748 = vpop.f32.mrb[0].mxu0
    %v749 = vadd.f32 0.0, %v748
    %v750 = vpop.f32.mrb[0].mxu0
    %v751 = vadd.f32 0.0, %v750
    %v752 = vpop.f32.mrb[0].mxu0
    %v753 = vadd.f32 0.0, %v752
    %v754 = vpop.f32.mrb[0].mxu0
    %v755 = vadd.f32 0.0, %v754
    %756 = vmatprep.mubr.bf16.mxu0 0
    %757 = vmatmul.mubr.bf16.gmra.mrb[0].mxu0 %v336
    %v758 = vpop.f32.mrb[0].mxu0
    %v759 = vadd.f32 0.0, %v758
    %v760 = vpop.f32.mrb[0].mxu0
    %v761 = vadd.f32 0.0, %v760
    %v762 = vpop.f32.mrb[0].mxu0
    %v763 = vadd.f32 0.0, %v762
    %v764 = vpop.f32.mrb[0].mxu0
    %v765 = vadd.f32 0.0, %v764
    %766 = vmatprep.mubr.bf16.mxu0 0
    %767 = vmatmul.mubr.bf16.gmra.mrb[0].mxu0 %v339
    %v768 = vpop.f32.mrb[0].mxu0
    %v769 = vadd.f32 0.0, %v768
    %v770 = vpop.f32.mrb[0].mxu0
    %v771 = vadd.f32 0.0, %v770
    %v772 = vpop.f32.mrb[0].mxu0
    %v773 = vadd.f32 0.0, %v772
    %v774 = vpop.f32.mrb[0].mxu0
    %v775 = vadd.f32 0.0, %v774
    %776 = vmatprep.mubr.bf16.mxu0 0
    %777 = vmatmul.mubr.bf16.gmra.mrb[0].mxu0 %v342
    %v778 = vpop.f32.mrb[0].mxu0
    %v779 = vadd.f32 0.0, %v778
    %v780 = vpop.f32.mrb[0].mxu0
    %v781 = vadd.f32 0.0, %v780
    %v782 = vpop.f32.mrb[0].mxu0
    %v783 = vadd.f32 0.0, %v782
    %v784 = vpop.f32.mrb[0].mxu0
    %v785 = vadd.f32 0.0, %v784
    %786 = vmatprep.mubr.bf16.mxu0 0
    %787 = vmatmul.mubr.bf16.gmra.mrb[0].mxu0 %v345
    %v788 = vpop.f32.mrb[0].mxu0
    %v789 = vadd.f32 0.0, %v788
    %v790 = vpop.f32.mrb[0].mxu0
    %v791 = vadd.f32 0.0, %v790
    %v792 = vpop.f32.mrb[0].mxu0
    %v793 = vadd.f32 0.0, %v792
    %v794 = vpop.f32.mrb[0].mxu0
    %v795 = vadd.f32 0.0, %v794
    %796 = vmatprep.mubr.bf16.mxu0 0
    %797 = vmatmul.mubr.bf16.gmra.mrb[0].mxu0 %v348
    %v798 = vpop.f32.mrb[0].mxu0
    %v799 = vadd.f32 0.0, %v798
    %v800 = vpop.f32.mrb[0].mxu0
    %v801 = vadd.f32 0.0, %v800
    %v802 = vpop.f32.mrb[0].mxu0
    %v803 = vadd.f32 0.0, %v802
    %v804 = vpop.f32.mrb[0].mxu0
    %v805 = vadd.f32 0.0, %v804
    %806 = vmatprep.mubr.bf16.mxu0 0
    %807 = vmatmul.mubr.bf16.gmra.mrb[0].mxu0 %v351
    %v808 = vpop.f32.mrb[0].mxu0
    %v809 = vadd.f32 0.0, %v808
    %v810 = vpop.f32.mrb[0].mxu0
    %v811 = vadd.f32 0.0, %v810
    %v812 = vpop.f32.mrb[0].mxu0
    %v813 = vadd.f32 0.0, %v812
    %v814 = vpop.f32.mrb[0].mxu0
    %v815 = vadd.f32 0.0, %v814
    %816 = vmatprep.mubr.bf16.mxu0 0
    %817 = vmatmul.mubr.bf16.gmra.mrb[0].mxu0 %v354
    %v818 = vpop.f32.mrb[0].mxu0
    %v819 = vadd.f32 0.0, %v818
    %v820 = vpop.f32.mrb[0].mxu0
    %v821 = vadd.f32 0.0, %v820
    %v822 = vpop.f32.mrb[0].mxu0
    %v823 = vadd.f32 0.0, %v822
    %v824 = vpop.f32.mrb[0].mxu0
    %v825 = vadd.f32 0.0, %v824
    %826 = vmatprep.mubr.bf16.mxu0 0
    %827 = vmatmul.mubr.bf16.gmra.mrb[0].mxu0 %v357
    %v828 = vpop.f32.mrb[0].mxu0
    %v829 = vadd.f32 0.0, %v828
    %v830 = vpop.f32.mrb[0].mxu0
    %v831 = vadd.f32 0.0, %v830
    %v832 = vpop.f32.mrb[0].mxu0
    %v833 = vadd.f32 0.0, %v832
    %v834 = vpop.f32.mrb[0].mxu0
    %v835 = vadd.f32 0.0, %v834
    %836 = vdwg.mxu0
    %v861 = vunpack.c.l.b16 %v134
    %v862 = vunpack.c.l.b16 %v135
    %v863 = vunpack.c.l.b16 %v136
    %v864 = vunpack.c.l.b16 %v137
    %v865 = vunpack.c.l.b16 %v138
    %v866 = vunpack.c.l.b16 %v139
    %v867 = vunpack.c.l.b16 %v140
    %v868 = vunpack.c.l.b16 %v141
    %v869 = vunpack.c.l.b16 %v142
    %v870 = vunpack.c.l.b16 %v143
    %v871 = vunpack.c.l.b16 %v144
    %v872 = vunpack.c.l.b16 %v145
    %v873 = vunpack.c.l.b16 %v146
    %v874 = vunpack.c.l.b16 %v147
    %v875 = vunpack.c.l.b16 %v148
    %v876 = vunpack.c.l.b16 %v149
    %v877 = vunpack.c.l.b16 %v150
    %v878 = vunpack.c.l.b16 %v151
    %v879 = vunpack.c.l.b16 %v152
    %v880 = vunpack.c.l.b16 %v153
    %v881 = vunpack.c.l.b16 %v154
    %v882 = vunpack.c.l.b16 %v155
    %v883 = vunpack.c.l.b16 %v156
    %v884 = vunpack.c.l.b16 %v157
    %v885 = vpack.c.b16 %v862, %v861
    %v886 = vpack.c.b16 %v864, %v863
    %v887 = vpack.c.b16 %v866, %v865
    %v888 = vpack.c.b16 %v868, %v867
    %v889 = vpack.c.b16 %v870, %v869
    %v890 = vpack.c.b16 %v872, %v871
    %v891 = vpack.c.b16 %v874, %v873
    %v892 = vpack.c.b16 %v876, %v875
    %v893 = vpack.c.b16 %v878, %v877
    %v894 = vpack.c.b16 %v880, %v879
    %v895 = vpack.c.b16 %v882, %v881
    %v896 = vpack.c.b16 %v884, %v883
    %v909 = vunpack.c.l.b16 %v158
    %v910 = vunpack.c.h.b16 %v158
    %v911 = vunpack.c.l.b16 %v159
    %v912 = vunpack.c.h.b16 %v159
    %v913 = vunpack.c.l.b16 %v160
    %v914 = vunpack.c.h.b16 %v160
    %v915 = vunpack.c.l.b16 %v161
    %v916 = vunpack.c.h.b16 %v161
    %v917 = vunpack.c.l.b16 %v162
    %v918 = vunpack.c.h.b16 %v162
    %v919 = vunpack.c.l.b16 %v163
    %v920 = vunpack.c.h.b16 %v163
    %v921 = vunpack.c.l.b16 %v164
    %v922 = vunpack.c.h.b16 %v164
    %v923 = vunpack.c.l.b16 %v165
    %v924 = vunpack.c.h.b16 %v165
    %v925 = vunpack.c.l.b16 %v166
    %v926 = vunpack.c.h.b16 %v166
    %v927 = vunpack.c.l.b16 %v167
    %v928 = vunpack.c.h.b16 %v167
    %v929 = vunpack.c.l.b16 %v168
    %v930 = vunpack.c.h.b16 %v168
    %v931 = vunpack.c.l.b16 %v169
    %v932 = vunpack.c.h.b16 %v169
    %v933 = vpack.c.b16 %v915, %v909
    %v934 = vpack.c.b16 %v916, %v910
    %v935 = vpack.c.b16 %v917, %v911
    %v936 = vpack.c.b16 %v918, %v912
    %v937 = vpack.c.b16 %v919, %v913
    %v938 = vpack.c.b16 %v920, %v914
    %v939 = vpack.c.b16 %v927, %v921
    %v940 = vpack.c.b16 %v928, %v922
    %v941 = vpack.c.b16 %v929, %v923
    %v942 = vpack.c.b16 %v930, %v924
    %v943 = vpack.c.b16 %v931, %v925
    %v944 = vpack.c.b16 %v932, %v926
    %v952 = vsel %vm322, %v885, 0
    %v955 = vsel %vm322, %v886, 0
    %v958 = vsel %vm322, %v887, 0
    %v961 = vsel %vm322, %v888, 0
    %v964 = vsel %vm322, %v889, 0
    %v967 = vsel %vm322, %v890, 0
    %v970 = vsel %vm322, %v891, 0
    %v973 = vsel %vm322, %v892, 0
    %v976 = vsel %vm322, %v893, 0
    %v979 = vsel %vm322, %v894, 0
    %v982 = vsel %vm322, %v895, 0
    %v985 = vsel %vm322, %v896, 0
    %v988 = vsel %vm359, %v939, 0
    %v991 = vsel %vm359, %v940, 0
    %v994 = vsel %vm359, %v941, 0
    %v997 = vsel %vm359, %v942, 0
    %v1000 = vsel %vm359, %v943, 0
    %v1003 = vsel %vm359, %v944, 0
    %1005 = vmatprep.subr.bf16.mxu0 %v934
    %1006 = vmatpush1.bf16.msra.mxu0 %v933
    %1007 = vmatprep.subr.bf16.mxu0 %v991
    %1008 = vmatpush1.bf16.msra.mxu0 %v988
    %1009 = vmatprep.subr.bf16.mxu0 0
    %1010 = vmatpush1.bf16.msra.mxu0 0
    %1011 = vmatprep.subr.bf16.mxu0 0
    %1012 = vmatpush1.bf16.msra.mxu0 0
    %1013 = vmatprep.subr.bf16.mxu0 0
    %1014 = vmatpush1.bf16.msra.mxu0 0
    %1015 = vmatprep.subr.bf16.mxu0 0
    %1016 = vmatpush1.bf16.msra.mxu0 0
    %1017 = vmatprep.subr.bf16.mxu0 0
    %1018 = vmatpush1.bf16.msra.mxu0 0
    %1019 = vmatprep.subr.bf16.mxu0 0
    %1020 = vmatpush1.bf16.msra.mxu0 0
    %1021 = vmatprep.subr.bf16.mxu0 0
    %1022 = vmatpush1.bf16.msra.mxu0 0
    %1023 = vmatprep.subr.bf16.mxu0 0
    %1024 = vmatpush1.bf16.msra.mxu0 0
    %1025 = vmatprep.subr.bf16.mxu0 0
    %1026 = vmatpush1.bf16.msra.mxu0 0
    %1027 = vmatprep.subr.bf16.mxu0 0
    %1028 = vmatpush1.bf16.msra.mxu0 0
    %1029 = vmatprep.subr.bf16.mxu0 0
    %1030 = vmatpush1.bf16.msra.mxu0 0
    %1031 = vmatprep.subr.bf16.mxu0 0
    %1032 = vmatpush1.bf16.msra.mxu0 0
    %1033 = vmatprep.subr.bf16.mxu0 0
    %1034 = vmatpush1.bf16.msra.mxu0 0
    %1035 = vmatprep.subr.bf16.mxu0 0
    %1036 = vmatpush1.bf16.msra.mxu0 0
    %1037 = vmatprep.mubr.bf16.mxu0 0
    %1038 = vmatmul.mubr.bf16.gmra.mrb[0].mxu0 %v952
    %v1039 = vpop.f32.mrb[0].mxu0
    %v1040 = vadd.f32 %v413, %v1039
    %v1041 = vpop.f32.mrb[0].mxu0
    %v1042 = vadd.f32 %v415, %v1041
    %v1043 = vpop.f32.mrb[0].mxu0
    %v1044 = vadd.f32 %v417, %v1043
    %v1045 = vpop.f32.mrb[0].mxu0
    %v1046 = vadd.f32 %v419, %v1045
    %1047 = vmatprep.mubr.bf16.mxu0 0
    %1048 = vmatmul.mubr.bf16.gmra.mrb[0].mxu0 %v955
    %v1049 = vpop.f32.mrb[0].mxu0
    %v1050 = vadd.f32 %v423, %v1049
    %v1051 = vpop.f32.mrb[0].mxu0
    %v1052 = vadd.f32 %v425, %v1051
    %v1053 = vpop.f32.mrb[0].mxu0
    %v1054 = vadd.f32 %v427, %v1053
    %v1055 = vpop.f32.mrb[0].mxu0
    %v1056 = vadd.f32 %v429, %v1055
    %1057 = vmatprep.mubr.bf16.mxu0 0
    %1058 = vmatmul.mubr.bf16.gmra.mrb[0].mxu0 %v958
    %v1059 = vpop.f32.mrb[0].mxu0
    %v1060 = vadd.f32 %v433, %v1059
    %v1061 = vpop.f32.mrb[0].mxu0
    %v1062 = vadd.f32 %v435, %v1061
    %v1063 = vpop.f32.mrb[0].mxu0
    %v1064 = vadd.f32 %v437, %v1063
    %v1065 = vpop.f32.mrb[0].mxu0
    %v1066 = vadd.f32 %v439, %v1065
    %1067 = vmatprep.mubr.bf16.mxu0 0
    %1068 = vmatmul.mubr.bf16.gmra.mrb[0].mxu0 %v961
    %v1069 = vpop.f32.mrb[0].mxu0
    %v1070 = vadd.f32 %v443, %v1069
    %v1071 = vpop.f32.mrb[0].mxu0
    %v1072 = vadd.f32 %v445, %v1071
    %v1073 = vpop.f32.mrb[0].mxu0
    %v1074 = vadd.f32 %v447, %v1073
    %v1075 = vpop.f32.mrb[0].mxu0
    %v1076 = vadd.f32 %v449, %v1075
    %1077 = vmatprep.mubr.bf16.mxu0 0
    %1078 = vmatmul.mubr.bf16.gmra.mrb[0].mxu0 %v964
    %v1079 = vpop.f32.mrb[0].mxu0
    %v1080 = vadd.f32 %v453, %v1079
    %v1081 = vpop.f32.mrb[0].mxu0
    %v1082 = vadd.f32 %v455, %v1081
    %v1083 = vpop.f32.mrb[0].mxu0
    %v1084 = vadd.f32 %v457, %v1083
    %v1085 = vpop.f32.mrb[0].mxu0
    %v1086 = vadd.f32 %v459, %v1085
    %1087 = vmatprep.mubr.bf16.mxu0 0
    %1088 = vmatmul.mubr.bf16.gmra.mrb[0].mxu0 %v967
    %v1089 = vpop.f32.mrb[0].mxu0
    %v1090 = vadd.f32 %v463, %v1089
    %v1091 = vpop.f32.mrb[0].mxu0
    %v1092 = vadd.f32 %v465, %v1091
    %v1093 = vpop.f32.mrb[0].mxu0
    %v1094 = vadd.f32 %v467, %v1093
    %v1095 = vpop.f32.mrb[0].mxu0
    %v1096 = vadd.f32 %v469, %v1095
    %1097 = vmatprep.mubr.bf16.mxu0 0
    %1098 = vmatmul.mubr.bf16.gmra.mrb[0].mxu0 %v970
    %v1099 = vpop.f32.mrb[0].mxu0
    %v1100 = vadd.f32 %v473, %v1099
    %v1101 = vpop.f32.mrb[0].mxu0
    %v1102 = vadd.f32 %v475, %v1101
    %v1103 = vpop.f32.mrb[0].mxu0
    %v1104 = vadd.f32 %v477, %v1103
    %v1105 = vpop.f32.mrb[0].mxu0
    %v1106 = vadd.f32 %v479, %v1105
    %1107 = vmatprep.mubr.bf16.mxu0 0
    %1108 = vmatmul.mubr.bf16.gmra.mrb[0].mxu0 %v973
    %v1109 = vpop.f32.mrb[0].mxu0
    %v1110 = vadd.f32 %v483, %v1109
    %v1111 = vpop.f32.mrb[0].mxu0
    %v1112 = vadd.f32 %v485, %v1111
    %v1113 = vpop.f32.mrb[0].mxu0
    %v1114 = vadd.f32 %v487, %v1113
    %v1115 = vpop.f32.mrb[0].mxu0
    %v1116 = vadd.f32 %v489, %v1115
    %1117 = vmatprep.mubr.bf16.mxu0 0
    %1118 = vmatmul.mubr.bf16.gmra.mrb[0].mxu0 %v976
    %v1119 = vpop.f32.mrb[0].mxu0
    %v1120 = vadd.f32 %v493, %v1119
    %v1121 = vpop.f32.mrb[0].mxu0
    %v1122 = vadd.f32 %v495, %v1121
    %v1123 = vpop.f32.mrb[0].mxu0
    %v1124 = vadd.f32 %v497, %v1123
    %v1125 = vpop.f32.mrb[0].mxu0
    %v1126 = vadd.f32 %v499, %v1125
    %1127 = vmatprep.mubr.bf16.mxu0 0
    %1128 = vmatmul.mubr.bf16.gmra.mrb[0].mxu0 %v979
    %v1129 = vpop.f32.mrb[0].mxu0
    %v1130 = vadd.f32 %v503, %v1129
    %v1131 = vpop.f32.mrb[0].mxu0
    %v1132 = vadd.f32 %v505, %v1131
    %v1133 = vpop.f32.mrb[0].mxu0
    %v1134 = vadd.f32 %v507, %v1133
    %v1135 = vpop.f32.mrb[0].mxu0
    %v1136 = vadd.f32 %v509, %v1135
    %1137 = vmatprep.mubr.bf16.mxu0 0
    %1138 = vmatmul.mubr.bf16.gmra.mrb[0].mxu0 %v982
    %v1139 = vpop.f32.mrb[0].mxu0
    %v1140 = vadd.f32 %v513, %v1139
    %v1141 = vpop.f32.mrb[0].mxu0
    %v1142 = vadd.f32 %v515, %v1141
    %v1143 = vpop.f32.mrb[0].mxu0
    %v1144 = vadd.f32 %v517, %v1143
    %v1145 = vpop.f32.mrb[0].mxu0
    %v1146 = vadd.f32 %v519, %v1145
    %1147 = vmatprep.mubr.bf16.mxu0 0
    %1148 = vmatmul.mubr.bf16.gmra.mrb[0].mxu0 %v985
    %v1149 = vpop.f32.mrb[0].mxu0
    %v1150 = vadd.f32 %v523, %v1149
    %v1151 = vpop.f32.mrb[0].mxu0
    %v1152 = vadd.f32 %v525, %v1151
    %v1153 = vpop.f32.mrb[0].mxu0
    %v1154 = vadd.f32 %v527, %v1153
    %v1155 = vpop.f32.mrb[0].mxu0
    %v1156 = vadd.f32 %v529, %v1155
    %1157 = vdwg.mxu0
    %1158 = vmatprep.subr.bf16.mxu0 %v936
    %1159 = vmatpush1.bf16.msra.mxu0 %v935
    %1160 = vmatprep.subr.bf16.mxu0 %v997
    %1161 = vmatpush1.bf16.msra.mxu0 %v994
    %1162 = vmatprep.subr.bf16.mxu0 0
    %1163 = vmatpush1.bf16.msra.mxu0 0
    %1164 = vmatprep.subr.bf16.mxu0 0
    %1165 = vmatpush1.bf16.msra.mxu0 0
    %1166 = vmatprep.subr.bf16.mxu0 0
    %1167 = vmatpush1.bf16.msra.mxu0 0
    %1168 = vmatprep.subr.bf16.mxu0 0
    %1169 = vmatpush1.bf16.msra.mxu0 0
    %1170 = vmatprep.subr.bf16.mxu0 0
    %1171 = vmatpush1.bf16.msra.mxu0 0
    %1172 = vmatprep.subr.bf16.mxu0 0
    %1173 = vmatpush1.bf16.msra.mxu0 0
    %1174 = vmatprep.subr.bf16.mxu0 0
    %1175 = vmatpush1.bf16.msra.mxu0 0
    %1176 = vmatprep.subr.bf16.mxu0 0
    %1177 = vmatpush1.bf16.msra.mxu0 0
    %1178 = vmatprep.subr.bf16.mxu0 0
    %1179 = vmatpush1.bf16.msra.mxu0 0
    %1180 = vmatprep.subr.bf16.mxu0 0
    %1181 = vmatpush1.bf16.msra.mxu0 0
    %1182 = vmatprep.subr.bf16.mxu0 0
    %1183 = vmatpush1.bf16.msra.mxu0 0
    %1184 = vmatprep.subr.bf16.mxu0 0
    %1185 = vmatpush1.bf16.msra.mxu0 0
    %1186 = vmatprep.subr.bf16.mxu0 0
    %1187 = vmatpush1.bf16.msra.mxu0 0
    %1188 = vmatprep.subr.bf16.mxu0 0
    %1189 = vmatpush1.bf16.msra.mxu0 0
    %1190 = vmatprep.mubr.bf16.mxu0 0
    %1191 = vmatmul.mubr.bf16.gmra.mrb[0].mxu0 %v952
    %v1192 = vpop.f32.mrb[0].mxu0
    %v1193 = vadd.f32 %v566, %v1192
    %v1194 = vpop.f32.mrb[0].mxu0
    %v1195 = vadd.f32 %v568, %v1194
    %v1196 = vpop.f32.mrb[0].mxu0
    %v1197 = vadd.f32 %v570, %v1196
    %v1198 = vpop.f32.mrb[0].mxu0
    %v1199 = vadd.f32 %v572, %v1198
    %1200 = vmatprep.mubr.bf16.mxu0 0
    %1201 = vmatmul.mubr.bf16.gmra.mrb[0].mxu0 %v955
    %v1202 = vpop.f32.mrb[0].mxu0
    %v1203 = vadd.f32 %v576, %v1202
    %v1204 = vpop.f32.mrb[0].mxu0
    %v1205 = vadd.f32 %v578, %v1204
    %v1206 = vpop.f32.mrb[0].mxu0
    %v1207 = vadd.f32 %v580, %v1206
    %v1208 = vpop.f32.mrb[0].mxu0
    %v1209 = vadd.f32 %v582, %v1208
    %1210 = vmatprep.mubr.bf16.mxu0 0
    %1211 = vmatmul.mubr.bf16.gmra.mrb[0].mxu0 %v958
    %v1212 = vpop.f32.mrb[0].mxu0
    %v1213 = vadd.f32 %v586, %v1212
    %v1214 = vpop.f32.mrb[0].mxu0
    %v1215 = vadd.f32 %v588, %v1214
    %v1216 = vpop.f32.mrb[0].mxu0
    %v1217 = vadd.f32 %v590, %v1216
    %v1218 = vpop.f32.mrb[0].mxu0
    %v1219 = vadd.f32 %v592, %v1218
    %1220 = vmatprep.mubr.bf16.mxu0 0
    %1221 = vmatmul.mubr.bf16.gmra.mrb[0].mxu0 %v961
    %v1222 = vpop.f32.mrb[0].mxu0
    %v1223 = vadd.f32 %v596, %v1222
    %v1224 = vpop.f32.mrb[0].mxu0
    %v1225 = vadd.f32 %v598, %v1224
    %v1226 = vpop.f32.mrb[0].mxu0
    %v1227 = vadd.f32 %v600, %v1226
    %v1228 = vpop.f32.mrb[0].mxu0
    %v1229 = vadd.f32 %v602, %v1228
    %1230 = vmatprep.mubr.bf16.mxu0 0
    %1231 = vmatmul.mubr.bf16.gmra.mrb[0].mxu0 %v964
    %v1232 = vpop.f32.mrb[0].mxu0
    %v1233 = vadd.f32 %v606, %v1232
    %v1234 = vpop.f32.mrb[0].mxu0
    %v1235 = vadd.f32 %v608, %v1234
    %v1236 = vpop.f32.mrb[0].mxu0
    %v1237 = vadd.f32 %v610, %v1236
    %v1238 = vpop.f32.mrb[0].mxu0
    %v1239 = vadd.f32 %v612, %v1238
    %1240 = vmatprep.mubr.bf16.mxu0 0
    %1241 = vmatmul.mubr.bf16.gmra.mrb[0].mxu0 %v967
    %v1242 = vpop.f32.mrb[0].mxu0
    %v1243 = vadd.f32 %v616, %v1242
    %v1244 = vpop.f32.mrb[0].mxu0
    %v1245 = vadd.f32 %v618, %v1244
    %v1246 = vpop.f32.mrb[0].mxu0
    %v1247 = vadd.f32 %v620, %v1246
    %v1248 = vpop.f32.mrb[0].mxu0
    %v1249 = vadd.f32 %v622, %v1248
    %1250 = vmatprep.mubr.bf16.mxu0 0
    %1251 = vmatmul.mubr.bf16.gmra.mrb[0].mxu0 %v970
    %v1252 = vpop.f32.mrb[0].mxu0
    %v1253 = vadd.f32 %v626, %v1252
    %v1254 = vpop.f32.mrb[0].mxu0
    %v1255 = vadd.f32 %v628, %v1254
    %v1256 = vpop.f32.mrb[0].mxu0
    %v1257 = vadd.f32 %v630, %v1256
    %v1258 = vpop.f32.mrb[0].mxu0
    %v1259 = vadd.f32 %v632, %v1258
    %1260 = vmatprep.mubr.bf16.mxu0 0
    %1261 = vmatmul.mubr.bf16.gmra.mrb[0].mxu0 %v973
    %v1262 = vpop.f32.mrb[0].mxu0
    %v1263 = vadd.f32 %v636, %v1262
    %v1264 = vpop.f32.mrb[0].mxu0
    %v1265 = vadd.f32 %v638, %v1264
    %v1266 = vpop.f32.mrb[0].mxu0
    %v1267 = vadd.f32 %v640, %v1266
    %v1268 = vpop.f32.mrb[0].mxu0
    %v1269 = vadd.f32 %v642, %v1268
    %1270 = vmatprep.mubr.bf16.mxu0 0
    %1271 = vmatmul.mubr.bf16.gmra.mrb[0].mxu0 %v976
    %v1272 = vpop.f32.mrb[0].mxu0
    %v1273 = vadd.f32 %v646, %v1272
    %v1274 = vpop.f32.mrb[0].mxu0
    %v1275 = vadd.f32 %v648, %v1274
    %v1276 = vpop.f32.mrb[0].mxu0
    %v1277 = vadd.f32 %v650, %v1276
    %v1278 = vpop.f32.mrb[0].mxu0
    %v1279 = vadd.f32 %v652, %v1278
    %1280 = vmatprep.mubr.bf16.mxu0 0
    %1281 = vmatmul.mubr.bf16.gmra.mrb[0].mxu0 %v979
    %v1282 = vpop.f32.mrb[0].mxu0
    %v1283 = vadd.f32 %v656, %v1282
    %v1284 = vpop.f32.mrb[0].mxu0
    %v1285 = vadd.f32 %v658, %v1284
    %v1286 = vpop.f32.mrb[0].mxu0
    %v1287 = vadd.f32 %v660, %v1286
    %v1288 = vpop.f32.mrb[0].mxu0
    %v1289 = vadd.f32 %v662, %v1288
    %1290 = vmatprep.mubr.bf16.mxu0 0
    %1291 = vmatmul.mubr.bf16.gmra.mrb[0].mxu0 %v982
    %v1292 = vpop.f32.mrb[0].mxu0
    %v1293 = vadd.f32 %v666, %v1292
    %v1294 = vpop.f32.mrb[0].mxu0
    %v1295 = vadd.f32 %v668, %v1294
    %v1296 = vpop.f32.mrb[0].mxu0
    %v1297 = vadd.f32 %v670, %v1296
    %v1298 = vpop.f32.mrb[0].mxu0
    %v1299 = vadd.f32 %v672, %v1298
    %1300 = vmatprep.mubr.bf16.mxu0 0
    %1301 = vmatmul.mubr.bf16.gmra.mrb[0].mxu0 %v985
    %v1302 = vpop.f32.mrb[0].mxu0
    %v1303 = vadd.f32 %v676, %v1302
    %v1304 = vpop.f32.mrb[0].mxu0
    %v1305 = vadd.f32 %v678, %v1304
    %v1306 = vpop.f32.mrb[0].mxu0
    %v1307 = vadd.f32 %v680, %v1306
    %v1308 = vpop.f32.mrb[0].mxu0
    %v1309 = vadd.f32 %v682, %v1308
    %1310 = vdwg.mxu0
    %1311 = vmatprep.subr.bf16.mxu0 %v938
    %1312 = vmatpush1.bf16.msra.mxu0 %v937
    %1313 = vmatprep.subr.bf16.mxu0 %v1003
    %1314 = vmatpush1.bf16.msra.mxu0 %v1000
    %1315 = vmatprep.subr.bf16.mxu0 0
    %1316 = vmatpush1.bf16.msra.mxu0 0
    %1317 = vmatprep.subr.bf16.mxu0 0
    %1318 = vmatpush1.bf16.msra.mxu0 0
    %1319 = vmatprep.subr.bf16.mxu0 0
    %1320 = vmatpush1.bf16.msra.mxu0 0
    %1321 = vmatprep.subr.bf16.mxu0 0
    %1322 = vmatpush1.bf16.msra.mxu0 0
    %1323 = vmatprep.subr.bf16.mxu0 0
    %1324 = vmatpush1.bf16.msra.mxu0 0
    %1325 = vmatprep.subr.bf16.mxu0 0
    %1326 = vmatpush1.bf16.msra.mxu0 0
    %1327 = vmatprep.subr.bf16.mxu0 0
    %1328 = vmatpush1.bf16.msra.mxu0 0
    %1329 = vmatprep.subr.bf16.mxu0 0
    %1330 = vmatpush1.bf16.msra.mxu0 0
    %1331 = vmatprep.subr.bf16.mxu0 0
    %1332 = vmatpush1.bf16.msra.mxu0 0
    %1333 = vmatprep.subr.bf16.mxu0 0
    %1334 = vmatpush1.bf16.msra.mxu0 0
    %1335 = vmatprep.subr.bf16.mxu0 0
    %1336 = vmatpush1.bf16.msra.mxu0 0
    %1337 = vmatprep.subr.bf16.mxu0 0
    %1338 = vmatpush1.bf16.msra.mxu0 0
    %1339 = vmatprep.subr.bf16.mxu0 0
    %1340 = vmatpush1.bf16.msra.mxu0 0
    %1341 = vmatprep.subr.bf16.mxu0 0
    %1342 = vmatpush1.bf16.msra.mxu0 0
    %1343 = vmatprep.mubr.bf16.mxu0 0
    %1344 = vmatmul.mubr.bf16.gmra.mrb[0].mxu0 %v952
    %v1345 = vpop.f32.mrb[0].mxu0
    %v1346 = vadd.f32 %v719, %v1345
    %v1347 = vpop.f32.mrb[0].mxu0
    %v1348 = vadd.f32 %v721, %v1347
    %v1349 = vpop.f32.mrb[0].mxu0
    %v1350 = vadd.f32 %v723, %v1349
    %v1351 = vpop.f32.mrb[0].mxu0
    %v1352 = vadd.f32 %v725, %v1351
    %1353 = vmatprep.mubr.bf16.mxu0 0
    %1354 = vmatmul.mubr.bf16.gmra.mrb[0].mxu0 %v955
    %v1355 = vpop.f32.mrb[0].mxu0
    %v1356 = vadd.f32 %v729, %v1355
    %v1357 = vpop.f32.mrb[0].mxu0
    %v1358 = vadd.f32 %v731, %v1357
    %v1359 = vpop.f32.mrb[0].mxu0
    %v1360 = vadd.f32 %v733, %v1359
    %v1361 = vpop.f32.mrb[0].mxu0
    %v1362 = vadd.f32 %v735, %v1361
    %1363 = vmatprep.mubr.bf16.mxu0 0
    %1364 = vmatmul.mubr.bf16.gmra.mrb[0].mxu0 %v958
    %v1365 = vpop.f32.mrb[0].mxu0
    %v1366 = vadd.f32 %v739, %v1365
    %v1367 = vpop.f32.mrb[0].mxu0
    %v1368 = vadd.f32 %v741, %v1367
    %v1369 = vpop.f32.mrb[0].mxu0
    %v1370 = vadd.f32 %v743, %v1369
    %v1371 = vpop.f32.mrb[0].mxu0
    %v1372 = vadd.f32 %v745, %v1371
    %1373 = vmatprep.mubr.bf16.mxu0 0
    %1374 = vmatmul.mubr.bf16.gmra.mrb[0].mxu0 %v961
    %v1375 = vpop.f32.mrb[0].mxu0
    %v1376 = vadd.f32 %v749, %v1375
    %v1377 = vpop.f32.mrb[0].mxu0
    %v1378 = vadd.f32 %v751, %v1377
    %v1379 = vpop.f32.mrb[0].mxu0
    %v1380 = vadd.f32 %v753, %v1379
    %v1381 = vpop.f32.mrb[0].mxu0
    %v1382 = vadd.f32 %v755, %v1381
    %1383 = vmatprep.mubr.bf16.mxu0 0
    %1384 = vmatmul.mubr.bf16.gmra.mrb[0].mxu0 %v964
    %v1385 = vpop.f32.mrb[0].mxu0
    %v1386 = vadd.f32 %v759, %v1385
    %v1387 = vpop.f32.mrb[0].mxu0
    %v1388 = vadd.f32 %v761, %v1387
    %v1389 = vpop.f32.mrb[0].mxu0
    %v1390 = vadd.f32 %v763, %v1389
    %v1391 = vpop.f32.mrb[0].mxu0
    %v1392 = vadd.f32 %v765, %v1391
    %1393 = vmatprep.mubr.bf16.mxu0 0
    %1394 = vmatmul.mubr.bf16.gmra.mrb[0].mxu0 %v967
    %v1395 = vpop.f32.mrb[0].mxu0
    %v1396 = vadd.f32 %v769, %v1395
    %v1397 = vpop.f32.mrb[0].mxu0
    %v1398 = vadd.f32 %v771, %v1397
    %v1399 = vpop.f32.mrb[0].mxu0
    %v1400 = vadd.f32 %v773, %v1399
    %v1401 = vpop.f32.mrb[0].mxu0
    %v1402 = vadd.f32 %v775, %v1401
    %1403 = vmatprep.mubr.bf16.mxu0 0
    %1404 = vmatmul.mubr.bf16.gmra.mrb[0].mxu0 %v970
    %v1405 = vpop.f32.mrb[0].mxu0
    %v1406 = vadd.f32 %v779, %v1405
    %v1407 = vpop.f32.mrb[0].mxu0
    %v1408 = vadd.f32 %v781, %v1407
    %v1409 = vpop.f32.mrb[0].mxu0
    %v1410 = vadd.f32 %v783, %v1409
    %v1411 = vpop.f32.mrb[0].mxu0
    %v1412 = vadd.f32 %v785, %v1411
    %1413 = vmatprep.mubr.bf16.mxu0 0
    %1414 = vmatmul.mubr.bf16.gmra.mrb[0].mxu0 %v973
    %v1415 = vpop.f32.mrb[0].mxu0
    %v1416 = vadd.f32 %v789, %v1415
    %v1417 = vpop.f32.mrb[0].mxu0
    %v1418 = vadd.f32 %v791, %v1417
    %v1419 = vpop.f32.mrb[0].mxu0
    %v1420 = vadd.f32 %v793, %v1419
    %v1421 = vpop.f32.mrb[0].mxu0
    %v1422 = vadd.f32 %v795, %v1421
    %1423 = vmatprep.mubr.bf16.mxu0 0
    %1424 = vmatmul.mubr.bf16.gmra.mrb[0].mxu0 %v976
    %v1425 = vpop.f32.mrb[0].mxu0
    %v1426 = vadd.f32 %v799, %v1425
    %v1427 = vpop.f32.mrb[0].mxu0
    %v1428 = vadd.f32 %v801, %v1427
    %v1429 = vpop.f32.mrb[0].mxu0
    %v1430 = vadd.f32 %v803, %v1429
    %v1431 = vpop.f32.mrb[0].mxu0
    %v1432 = vadd.f32 %v805, %v1431
    %1433 = vmatprep.mubr.bf16.mxu0 0
    %1434 = vmatmul.mubr.bf16.gmra.mrb[0].mxu0 %v979
    %v1435 = vpop.f32.mrb[0].mxu0
    %v1436 = vadd.f32 %v809, %v1435
    %v1437 = vpop.f32.mrb[0].mxu0
    %v1438 = vadd.f32 %v811, %v1437
    %v1439 = vpop.f32.mrb[0].mxu0
    %v1440 = vadd.f32 %v813, %v1439
    %v1441 = vpop.f32.mrb[0].mxu0
    %v1442 = vadd.f32 %v815, %v1441
    %1443 = vmatprep.mubr.bf16.mxu0 0
    %1444 = vmatmul.mubr.bf16.gmra.mrb[0].mxu0 %v982
    %v1445 = vpop.f32.mrb[0].mxu0
    %v1446 = vadd.f32 %v819, %v1445
    %v1447 = vpop.f32.mrb[0].mxu0
    %v1448 = vadd.f32 %v821, %v1447
    %v1449 = vpop.f32.mrb[0].mxu0
    %v1450 = vadd.f32 %v823, %v1449
    %v1451 = vpop.f32.mrb[0].mxu0
    %v1452 = vadd.f32 %v825, %v1451
    %1453 = vmatprep.mubr.bf16.mxu0 0
    %1454 = vmatmul.mubr.bf16.gmra.mrb[0].mxu0 %v985
    %v1455 = vpop.f32.mrb[0].mxu0
    %v1456 = vadd.f32 %v829, %v1455
    %v1457 = vpop.f32.mrb[0].mxu0
    %v1458 = vadd.f32 %v831, %v1457
    %v1459 = vpop.f32.mrb[0].mxu0
    %v1460 = vadd.f32 %v833, %v1459
    %v1461 = vpop.f32.mrb[0].mxu0
    %v1462 = vadd.f32 %v835, %v1461
    %1463 = vdwg.mxu0
    %s1464 = scalar_lea.vmem %s0, 8
    %v1465 = vld [vmem:[%s1464] sm:$0xf]
    %v1466 = vld [vmem:[%s1464 + $0x4] sm:$0xf]
    %v1467 = vld [vmem:[%s1464 + $0x8] sm:$0xf]
    %v1468 = vld [vmem:[%s1464 + $0xc] sm:$0xf]
    %v1469 = vld [vmem:[%s1464 + $0x10] sm:$0xf]
    %v1470 = vld [vmem:[%s1464 + $0x14] sm:$0xf]
    %v1471 = vld [vmem:[%s1464 + $0x18] sm:$0xf]
    %v1472 = vld [vmem:[%s1464 + $0x1c] sm:$0xf]
    %v1473 = vld [vmem:[%s1464 + $0x20] sm:$0xf]
    %v1474 = vld [vmem:[%s1464 + $0x24] sm:$0xf]
    %v1475 = vld [vmem:[%s1464 + $0x28] sm:$0xf]
    %v1476 = vld [vmem:[%s1464 + $0x2c] sm:$0xf]
    %v1477 = vld [vmem:[%s1464 + $0x30] sm:$0xf]
    %v1478 = vld [vmem:[%s1464 + $0x34] sm:$0xf]
    %v1479 = vld [vmem:[%s1464 + $0x38] sm:$0xf]
    %v1480 = vld [vmem:[%s1464 + $0x3c] sm:$0xf]
    %v1481 = vld [vmem:[%s1464 + $0x40] sm:$0xf]
    %v1482 = vld [vmem:[%s1464 + $0x44] sm:$0xf]
    %v1483 = vld [vmem:[%s1464 + $0x48] sm:$0xf]
    %v1484 = vld [vmem:[%s1464 + $0x4c] sm:$0xf]
    %v1485 = vld [vmem:[%s1464 + $0x50] sm:$0xf]
    %v1486 = vld [vmem:[%s1464 + $0x54] sm:$0xf]
    %v1487 = vld [vmem:[%s1464 + $0x58] sm:$0xf]
    %v1488 = vld [vmem:[%s1464 + $0x5c] sm:$0xf]
    %s1489 = scalar_lea.vmem [#allocation4], 192
    %v1490 = vld [vmem:[%s1489] sm:$0xff]
    %v1491 = vld [vmem:[%s1489 + $0x8] sm:$0xff]
    %v1492 = vld [vmem:[%s1489 + $0x10] sm:$0xff]
    %v1493 = vld [vmem:[%s1489 + $0x18] sm:$0xff]
    %v1494 = vld [vmem:[%s1489 + $0x20] sm:$0xff]
    %v1495 = vld [vmem:[%s1489 + $0x28] sm:$0xff]
    %v1496 = vld [vmem:[%s1489 + $0x30] sm:$0xff]
    %v1497 = vld [vmem:[%s1489 + $0x38] sm:$0xff]
    %v1498 = vld [vmem:[%s1489 + $0x40] sm:$0xff]
    %v1499 = vld [vmem:[%s1489 + $0x48] sm:$0x33]
    %v1500 = vld [vmem:[%s1489 + $0x50] sm:$0x33]
    %v1501 = vld [vmem:[%s1489 + $0x58] sm:$0x33]
    %v1526 = vunpack.c.l.b16 %v1465
    %v1527 = vunpack.c.l.b16 %v1466
    %v1528 = vunpack.c.l.b16 %v1467
    %v1529 = vunpack.c.l.b16 %v1468
    %v1530 = vunpack.c.l.b16 %v1469
    %v1531 = vunpack.c.l.b16 %v1470
    %v1532 = vunpack.c.l.b16 %v1471
    %v1533 = vunpack.c.l.b16 %v1472
    %v1534 = vunpack.c.l.b16 %v1473
    %v1535 = vunpack.c.l.b16 %v1474
    %v1536 = vunpack.c.l.b16 %v1475
    %v1537 = vunpack.c.l.b16 %v1476
    %v1538 = vunpack.c.l.b16 %v1477
    %v1539 = vunpack.c.l.b16 %v1478
    %v1540 = vunpack.c.l.b16 %v1479
    %v1541 = vunpack.c.l.b16 %v1480
    %v1542 = vunpack.c.l.b16 %v1481
    %v1543 = vunpack.c.l.b16 %v1482
    %v1544 = vunpack.c.l.b16 %v1483
    %v1545 = vunpack.c.l.b16 %v1484
    %v1546 = vunpack.c.l.b16 %v1485
    %v1547 = vunpack.c.l.b16 %v1486
    %v1548 = vunpack.c.l.b16 %v1487
    %v1549 = vunpack.c.l.b16 %v1488
    %v1550 = vpack.c.b16 %v1527, %v1526
    %v1551 = vpack.c.b16 %v1529, %v1528
    %v1552 = vpack.c.b16 %v1531, %v1530
    %v1553 = vpack.c.b16 %v1533, %v1532
    %v1554 = vpack.c.b16 %v1535, %v1534
    %v1555 = vpack.c.b16 %v1537, %v1536
    %v1556 = vpack.c.b16 %v1539, %v1538
    %v1557 = vpack.c.b16 %v1541, %v1540
    %v1558 = vpack.c.b16 %v1543, %v1542
    %v1559 = vpack.c.b16 %v1545, %v1544
    %v1560 = vpack.c.b16 %v1547, %v1546
    %v1561 = vpack.c.b16 %v1549, %v1548
    %v1574 = vunpack.c.l.b16 %v1490
    %v1575 = vunpack.c.h.b16 %v1490
    %v1576 = vunpack.c.l.b16 %v1491
    %v1577 = vunpack.c.h.b16 %v1491
    %v1578 = vunpack.c.l.b16 %v1492
    %v1579 = vunpack.c.h.b16 %v1492
    %v1580 = vunpack.c.l.b16 %v1493
    %v1581 = vunpack.c.h.b16 %v1493
    %v1582 = vunpack.c.l.b16 %v1494
    %v1583 = vunpack.c.h.b16 %v1494
    %v1584 = vunpack.c.l.b16 %v1495
    %v1585 = vunpack.c.h.b16 %v1495
    %v1586 = vunpack.c.l.b16 %v1496
    %v1587 = vunpack.c.h.b16 %v1496
    %v1588 = vunpack.c.l.b16 %v1497
    %v1589 = vunpack.c.h.b16 %v1497
    %v1590 = vunpack.c.l.b16 %v1498
    %v1591 = vunpack.c.h.b16 %v1498
    %v1592 = vunpack.c.l.b16 %v1499
    %v1593 = vunpack.c.h.b16 %v1499
    %v1594 = vunpack.c.l.b16 %v1500
    %v1595 = vunpack.c.h.b16 %v1500
    %v1596 = vunpack.c.l.b16 %v1501
    %v1597 = vunpack.c.h.b16 %v1501
    %v1598 = vpack.c.b16 %v1580, %v1574
    %v1599 = vpack.c.b16 %v1581, %v1575
    %v1600 = vpack.c.b16 %v1582, %v1576
    %v1601 = vpack.c.b16 %v1583, %v1577
    %v1602 = vpack.c.b16 %v1584, %v1578
    %v1603 = vpack.c.b16 %v1585, %v1579
    %v1604 = vpack.c.b16 %v1592, %v1586
    %v1605 = vpack.c.b16 %v1593, %v1587
    %v1606 = vpack.c.b16 %v1594, %v1588
    %v1607 = vpack.c.b16 %v1595, %v1589
    %v1608 = vpack.c.b16 %v1596, %v1590
    %v1609 = vpack.c.b16 %v1597, %v1591
    %v1617 = vsel %vm322, %v1550, 0
    %v1620 = vsel %vm322, %v1551, 0
    %v1623 = vsel %vm322, %v1552, 0
    %v1626 = vsel %vm322, %v1553, 0
    %v1629 = vsel %vm322, %v1554, 0
    %v1632 = vsel %vm322, %v1555, 0
    %v1635 = vsel %vm322, %v1556, 0
    %v1638 = vsel %vm322, %v1557, 0
    %v1641 = vsel %vm322, %v1558, 0
    %v1644 = vsel %vm322, %v1559, 0
    %v1647 = vsel %vm322, %v1560, 0
    %v1650 = vsel %vm322, %v1561, 0
    %v1653 = vsel %vm359, %v1604, 0
    %v1656 = vsel %vm359, %v1605, 0
    %v1659 = vsel %vm359, %v1606, 0
    %v1662 = vsel %vm359, %v1607, 0
    %v1665 = vsel %vm359, %v1608, 0
    %v1668 = vsel %vm359, %v1609, 0
    %1670 = vmatprep.subr.bf16.mxu0 %v1599
    %1671 = vmatpush1.bf16.msra.mxu0 %v1598
    %1672 = vmatprep.subr.bf16.mxu0 %v1656
    %1673 = vmatpush1.bf16.msra.mxu0 %v1653
    %1674 = vmatprep.subr.bf16.mxu0 0
    %1675 = vmatpush1.bf16.msra.mxu0 0
    %1676 = vmatprep.subr.bf16.mxu0 0
    %1677 = vmatpush1.bf16.msra.mxu0 0
    %1678 = vmatprep.subr.bf16.mxu0 0
    %1679 = vmatpush1.bf16.msra.mxu0 0
    %1680 = vmatprep.subr.bf16.mxu0 0
    %1681 = vmatpush1.bf16.msra.mxu0 0
    %1682 = vmatprep.subr.bf16.mxu0 0
    %1683 = vmatpush1.bf16.msra.mxu0 0
    %1684 = vmatprep.subr.bf16.mxu0 0
    %1685 = vmatpush1.bf16.msra.mxu0 0
    %1686 = vmatprep.subr.bf16.mxu0 0
    %1687 = vmatpush1.bf16.msra.mxu0 0
    %1688 = vmatprep.subr.bf16.mxu0 0
    %1689 = vmatpush1.bf16.msra.mxu0 0
    %1690 = vmatprep.subr.bf16.mxu0 0
    %1691 = vmatpush1.bf16.msra.mxu0 0
    %1692 = vmatprep.subr.bf16.mxu0 0
    %1693 = vmatpush1.bf16.msra.mxu0 0
    %1694 = vmatprep.subr.bf16.mxu0 0
    %1695 = vmatpush1.bf16.msra.mxu0 0
    %1696 = vmatprep.subr.bf16.mxu0 0
    %1697 = vmatpush1.bf16.msra.mxu0 0
    %1698 = vmatprep.subr.bf16.mxu0 0
    %1699 = vmatpush1.bf16.msra.mxu0 0
    %1700 = vmatprep.subr.bf16.mxu0 0
    %1701 = vmatpush1.bf16.msra.mxu0 0
    %1702 = vmatprep.mubr.bf16.mxu0 0
    %1703 = vmatmul.mubr.bf16.gmra.mrb[0].mxu0 %v1617
    %v1704 = vpop.f32.mrb[0].mxu0
    %v1705 = vadd.f32 0.0, %v1704
    %v1706 = vpop.f32.mrb[0].mxu0
    %v1707 = vadd.f32 0.0, %v1706
    %v1708 = vpop.f32.mrb[0].mxu0
    %v1709 = vadd.f32 0.0, %v1708
    %v1710 = vpop.f32.mrb[0].mxu0
    %v1711 = vadd.f32 0.0, %v1710
    %1712 = vmatprep.mubr.bf16.mxu0 0
    %1713 = vmatmul.mubr.bf16.gmra.mrb[0].mxu0 %v1620
    %v1714 = vpop.f32.mrb[0].mxu0
    %v1715 = vadd.f32 0.0, %v1714
    %v1716 = vpop.f32.mrb[0].mxu0
    %v1717 = vadd.f32 0.0, %v1716
    %v1718 = vpop.f32.mrb[0].mxu0
    %v1719 = vadd.f32 0.0, %v1718
    %v1720 = vpop.f32.mrb[0].mxu0
    %v1721 = vadd.f32 0.0, %v1720
    %1722 = vmatprep.mubr.bf16.mxu0 0
    %1723 = vmatmul.mubr.bf16.gmra.mrb[0].mxu0 %v1623
    %v1724 = vpop.f32.mrb[0].mxu0
    %v1725 = vadd.f32 0.0, %v1724
    %v1726 = vpop.f32.mrb[0].mxu0
    %v1727 = vadd.f32 0.0, %v1726
    %v1728 = vpop.f32.mrb[0].mxu0
    %v1729 = vadd.f32 0.0, %v1728
    %v1730 = vpop.f32.mrb[0].mxu0
    %v1731 = vadd.f32 0.0, %v1730
    %1732 = vmatprep.mubr.bf16.mxu0 0
    %1733 = vmatmul.mubr.bf16.gmra.mrb[0].mxu0 %v1626
    %v1734 = vpop.f32.mrb[0].mxu0
    %v1735 = vadd.f32 0.0, %v1734
    %v1736 = vpop.f32.mrb[0].mxu0
    %v1737 = vadd.f32 0.0, %v1736
    %v1738 = vpop.f32.mrb[0].mxu0
    %v1739 = vadd.f32 0.0, %v1738
    %v1740 = vpop.f32.mrb[0].mxu0
    %v1741 = vadd.f32 0.0, %v1740
    %1742 = vmatprep.mubr.bf16.mxu0 0
    %1743 = vmatmul.mubr.bf16.gmra.mrb[0].mxu0 %v1629
    %v1744 = vpop.f32.mrb[0].mxu0
    %v1745 = vadd.f32 0.0, %v1744
    %v1746 = vpop.f32.mrb[0].mxu0
    %v1747 = vadd.f32 0.0, %v1746
    %v1748 = vpop.f32.mrb[0].mxu0
    %v1749 = vadd.f32 0.0, %v1748
    %v1750 = vpop.f32.mrb[0].mxu0
    %v1751 = vadd.f32 0.0, %v1750
    %1752 = vmatprep.mubr.bf16.mxu0 0
    %1753 = vmatmul.mubr.bf16.gmra.mrb[0].mxu0 %v1632
    %v1754 = vpop.f32.mrb[0].mxu0
    %v1755 = vadd.f32 0.0, %v1754
    %v1756 = vpop.f32.mrb[0].mxu0
    %v1757 = vadd.f32 0.0, %v1756
    %v1758 = vpop.f32.mrb[0].mxu0
    %v1759 = vadd.f32 0.0, %v1758
    %v1760 = vpop.f32.mrb[0].mxu0
    %v1761 = vadd.f32 0.0, %v1760
    %1762 = vmatprep.mubr.bf16.mxu0 0
    %1763 = vmatmul.mubr.bf16.gmra.mrb[0].mxu0 %v1635
    %v1764 = vpop.f32.mrb[0].mxu0
    %v1765 = vadd.f32 0.0, %v1764
    %v1766 = vpop.f32.mrb[0].mxu0
    %v1767 = vadd.f32 0.0, %v1766
    %v1768 = vpop.f32.mrb[0].mxu0
    %v1769 = vadd.f32 0.0, %v1768
    %v1770 = vpop.f32.mrb[0].mxu0
    %v1771 = vadd.f32 0.0, %v1770
    %1772 = vmatprep.mubr.bf16.mxu0 0
    %1773 = vmatmul.mubr.bf16.gmra.mrb[0].mxu0 %v1638
    %v1774 = vpop.f32.mrb[0].mxu0
    %v1775 = vadd.f32 0.0, %v1774
    %v1776 = vpop.f32.mrb[0].mxu0
    %v1777 = vadd.f32 0.0, %v1776
    %v1778 = vpop.f32.mrb[0].mxu0
    %v1779 = vadd.f32 0.0, %v1778
    %v1780 = vpop.f32.mrb[0].mxu0
    %v1781 = vadd.f32 0.0, %v1780
    %1782 = vmatprep.mubr.bf16.mxu0 0
    %1783 = vmatmul.mubr.bf16.gmra.mrb[0].mxu0 %v1641
    %v1784 = vpop.f32.mrb[0].mxu0
    %v1785 = vadd.f32 0.0, %v1784
    %v1786 = vpop.f32.mrb[0].mxu0
    %v1787 = vadd.f32 0.0, %v1786
    %v1788 = vpop.f32.mrb[0].mxu0
    %v1789 = vadd.f32 0.0, %v1788
    %v1790 = vpop.f32.mrb[0].mxu0
    %v1791 = vadd.f32 0.0, %v1790
    %1792 = vmatprep.mubr.bf16.mxu0 0
    %1793 = vmatmul.mubr.bf16.gmra.mrb[0].mxu0 %v1644
    %v1794 = vpop.f32.mrb[0].mxu0
    %v1795 = vadd.f32 0.0, %v1794
    %v1796 = vpop.f32.mrb[0].mxu0
    %v1797 = vadd.f32 0.0, %v1796
    %v1798 = vpop.f32.mrb[0].mxu0
    %v1799 = vadd.f32 0.0, %v1798
    %v1800 = vpop.f32.mrb[0].mxu0
    %v1801 = vadd.f32 0.0, %v1800
    %1802 = vmatprep.mubr.bf16.mxu0 0
    %1803 = vmatmul.mubr.bf16.gmra.mrb[0].mxu0 %v1647
    %v1804 = vpop.f32.mrb[0].mxu0
    %v1805 = vadd.f32 0.0, %v1804
    %v1806 = vpop.f32.mrb[0].mxu0
    %v1807 = vadd.f32 0.0, %v1806
    %v1808 = vpop.f32.mrb[0].mxu0
    %v1809 = vadd.f32 0.0, %v1808
    %v1810 = vpop.f32.mrb[0].mxu0
    %v1811 = vadd.f32 0.0, %v1810
    %1812 = vmatprep.mubr.bf16.mxu0 0
    %1813 = vmatmul.mubr.bf16.gmra.mrb[0].mxu0 %v1650
    %v1814 = vpop.f32.mrb[0].mxu0
    %v1815 = vadd.f32 0.0, %v1814
    %v1816 = vpop.f32.mrb[0].mxu0
    %v1817 = vadd.f32 0.0, %v1816
    %v1818 = vpop.f32.mrb[0].mxu0
    %v1819 = vadd.f32 0.0, %v1818
    %v1820 = vpop.f32.mrb[0].mxu0
    %v1821 = vadd.f32 0.0, %v1820
    %1822 = vdwg.mxu0
    %1823 = vmatprep.subr.bf16.mxu0 %v1601
    %1824 = vmatpush1.bf16.msra.mxu0 %v1600
    %1825 = vmatprep.subr.bf16.mxu0 %v1662
    %1826 = vmatpush1.bf16.msra.mxu0 %v1659
    %1827 = vmatprep.subr.bf16.mxu0 0
    %1828 = vmatpush1.bf16.msra.mxu0 0
    %1829 = vmatprep.subr.bf16.mxu0 0
    %1830 = vmatpush1.bf16.msra.mxu0 0
    %1831 = vmatprep.subr.bf16.mxu0 0
    %1832 = vmatpush1.bf16.msra.mxu0 0
    %1833 = vmatprep.subr.bf16.mxu0 0
    %1834 = vmatpush1.bf16.msra.mxu0 0
    %1835 = vmatprep.subr.bf16.mxu0 0
    %1836 = vmatpush1.bf16.msra.mxu0 0
    %1837 = vmatprep.subr.bf16.mxu0 0
    %1838 = vmatpush1.bf16.msra.mxu0 0
    %1839 = vmatprep.subr.bf16.mxu0 0
    %1840 = vmatpush1.bf16.msra.mxu0 0
    %1841 = vmatprep.subr.bf16.mxu0 0
    %1842 = vmatpush1.bf16.msra.mxu0 0
    %1843 = vmatprep.subr.bf16.mxu0 0
    %1844 = vmatpush1.bf16.msra.mxu0 0
    %1845 = vmatprep.subr.bf16.mxu0 0
    %1846 = vmatpush1.bf16.msra.mxu0 0
    %1847 = vmatprep.subr.bf16.mxu0 0
    %1848 = vmatpush1.bf16.msra.mxu0 0
    %1849 = vmatprep.subr.bf16.mxu0 0
    %1850 = vmatpush1.bf16.msra.mxu0 0
    %1851 = vmatprep.subr.bf16.mxu0 0
    %1852 = vmatpush1.bf16.msra.mxu0 0
    %1853 = vmatprep.subr.bf16.mxu0 0
    %1854 = vmatpush1.bf16.msra.mxu0 0
    %1855 = vmatprep.mubr.bf16.mxu0 0
    %1856 = vmatmul.mubr.bf16.gmra.mrb[0].mxu0 %v1617
    %v1857 = vpop.f32.mrb[0].mxu0
    %v1858 = vadd.f32 0.0, %v1857
    %v1859 = vpop.f32.mrb[0].mxu0
    %v1860 = vadd.f32 0.0, %v1859
    %v1861 = vpop.f32.mrb[0].mxu0
    %v1862 = vadd.f32 0.0, %v1861
    %v1863 = vpop.f32.mrb[0].mxu0
    %v1864 = vadd.f32 0.0, %v1863
    %1865 = vmatprep.mubr.bf16.mxu0 0
    %1866 = vmatmul.mubr.bf16.gmra.mrb[0].mxu0 %v1620
    %v1867 = vpop.f32.mrb[0].mxu0
    %v1868 = vadd.f32 0.0, %v1867
    %v1869 = vpop.f32.mrb[0].mxu0
    %v1870 = vadd.f32 0.0, %v1869
    %v1871 = vpop.f32.mrb[0].mxu0
    %v1872 = vadd.f32 0.0, %v1871
    %v1873 = vpop.f32.mrb[0].mxu0
    %v1874 = vadd.f32 0.0, %v1873
    %1875 = vmatprep.mubr.bf16.mxu0 0
    %1876 = vmatmul.mubr.bf16.gmra.mrb[0].mxu0 %v1623
    %v1877 = vpop.f32.mrb[0].mxu0
    %v1878 = vadd.f32 0.0, %v1877
    %v1879 = vpop.f32.mrb[0].mxu0
    %v1880 = vadd.f32 0.0, %v1879
    %v1881 = vpop.f32.mrb[0].mxu0
    %v1882 = vadd.f32 0.0, %v1881
    %v1883 = vpop.f32.mrb[0].mxu0
    %v1884 = vadd.f32 0.0, %v1883
    %1885 = vmatprep.mubr.bf16.mxu0 0
    %1886 = vmatmul.mubr.bf16.gmra.mrb[0].mxu0 %v1626
    %v1887 = vpop.f32.mrb[0].mxu0
    %v1888 = vadd.f32 0.0, %v1887
    %v1889 = vpop.f32.mrb[0].mxu0
    %v1890 = vadd.f32 0.0, %v1889
    %v1891 = vpop.f32.mrb[0].mxu0
    %v1892 = vadd.f32 0.0, %v1891
    %v1893 = vpop.f32.mrb[0].mxu0
    %v1894 = vadd.f32 0.0, %v1893
    %1895 = vmatprep.mubr.bf16.mxu0 0
    %1896 = vmatmul.mubr.bf16.gmra.mrb[0].mxu0 %v1629
    %v1897 = vpop.f32.mrb[0].mxu0
    %v1898 = vadd.f32 0.0, %v1897
    %v1899 = vpop.f32.mrb[0].mxu0
    %v1900 = vadd.f32 0.0, %v1899
    %v1901 = vpop.f32.mrb[0].mxu0
    %v1902 = vadd.f32 0.0, %v1901
    %v1903 = vpop.f32.mrb[0].mxu0
    %v1904 = vadd.f32 0.0, %v1903
    %1905 = vmatprep.mubr.bf16.mxu0 0
    %1906 = vmatmul.mubr.bf16.gmra.mrb[0].mxu0 %v1632
    %v1907 = vpop.f32.mrb[0].mxu0
    %v1908 = vadd.f32 0.0, %v1907
    %v1909 = vpop.f32.mrb[0].mxu0
    %v1910 = vadd.f32 0.0, %v1909
    %v1911 = vpop.f32.mrb[0].mxu0
    %v1912 = vadd.f32 0.0, %v1911
    %v1913 = vpop.f32.mrb[0].mxu0
    %v1914 = vadd.f32 0.0, %v1913
    %1915 = vmatprep.mubr.bf16.mxu0 0
    %1916 = vmatmul.mubr.bf16.gmra.mrb[0].mxu0 %v1635
    %v1917 = vpop.f32.mrb[0].mxu0
    %v1918 = vadd.f32 0.0, %v1917
    %v1919 = vpop.f32.mrb[0].mxu0
    %v1920 = vadd.f32 0.0, %v1919
    %v1921 = vpop.f32.mrb[0].mxu0
    %v1922 = vadd.f32 0.0, %v1921
    %v1923 = vpop.f32.mrb[0].mxu0
    %v1924 = vadd.f32 0.0, %v1923
    %1925 = vmatprep.mubr.bf16.mxu0 0
    %1926 = vmatmul.mubr.bf16.gmra.mrb[0].mxu0 %v1638
    %v1927 = vpop.f32.mrb[0].mxu0
    %v1928 = vadd.f32 0.0, %v1927
    %v1929 = vpop.f32.mrb[0].mxu0
    %v1930 = vadd.f32 0.0, %v1929
    %v1931 = vpop.f32.mrb[0].mxu0
    %v1932 = vadd.f32 0.0, %v1931
    %v1933 = vpop.f32.mrb[0].mxu0
    %v1934 = vadd.f32 0.0, %v1933
    %1935 = vmatprep.mubr.bf16.mxu0 0
    %1936 = vmatmul.mubr.bf16.gmra.mrb[0].mxu0 %v1641
    %v1937 = vpop.f32.mrb[0].mxu0
    %v1938 = vadd.f32 0.0, %v1937
    %v1939 = vpop.f32.mrb[0].mxu0
    %v1940 = vadd.f32 0.0, %v1939
    %v1941 = vpop.f32.mrb[0].mxu0
    %v1942 = vadd.f32 0.0, %v1941
    %v1943 = vpop.f32.mrb[0].mxu0
    %v1944 = vadd.f32 0.0, %v1943
    %1945 = vmatprep.mubr.bf16.mxu0 0
    %1946 = vmatmul.mubr.bf16.gmra.mrb[0].mxu0 %v1644
    %v1947 = vpop.f32.mrb[0].mxu0
    %v1948 = vadd.f32 0.0, %v1947
    %v1949 = vpop.f32.mrb[0].mxu0
    %v1950 = vadd.f32 0.0, %v1949
    %v1951 = vpop.f32.mrb[0].mxu0
    %v1952 = vadd.f32 0.0, %v1951
    %v1953 = vpop.f32.mrb[0].mxu0
    %v1954 = vadd.f32 0.0, %v1953
    %1955 = vmatprep.mubr.bf16.mxu0 0
    %1956 = vmatmul.mubr.bf16.gmra.mrb[0].mxu0 %v1647
    %v1957 = vpop.f32.mrb[0].mxu0
    %v1958 = vadd.f32 0.0, %v1957
    %v1959 = vpop.f32.mrb[0].mxu0
    %v1960 = vadd.f32 0.0, %v1959
    %v1961 = vpop.f32.mrb[0].mxu0
    %v1962 = vadd.f32 0.0, %v1961
    %v1963 = vpop.f32.mrb[0].mxu0
    %v1964 = vadd.f32 0.0, %v1963
    %1965 = vmatprep.mubr.bf16.mxu0 0
    %1966 = vmatmul.mubr.bf16.gmra.mrb[0].mxu0 %v1650
    %v1967 = vpop.f32.mrb[0].mxu0
    %v1968 = vadd.f32 0.0, %v1967
    %v1969 = vpop.f32.mrb[0].mxu0
    %v1970 = vadd.f32 0.0, %v1969
    %v1971 = vpop.f32.mrb[0].mxu0
    %v1972 = vadd.f32 0.0, %v1971
    %v1973 = vpop.f32.mrb[0].mxu0
    %v1974 = vadd.f32 0.0, %v1973
    %1975 = vdwg.mxu0
    %1976 = vmatprep.subr.bf16.mxu0 %v1603
    %1977 = vmatpush1.bf16.msra.mxu0 %v1602
    %1978 = vmatprep.subr.bf16.mxu0 %v1668
    %1979 = vmatpush1.bf16.msra.mxu0 %v1665
    %1980 = vmatprep.subr.bf16.mxu0 0
    %1981 = vmatpush1.bf16.msra.mxu0 0
    %1982 = vmatprep.subr.bf16.mxu0 0
    %1983 = vmatpush1.bf16.msra.mxu0 0
    %1984 = vmatprep.subr.bf16.mxu0 0
    %1985 = vmatpush1.bf16.msra.mxu0 0
    %1986 = vmatprep.subr.bf16.mxu0 0
    %1987 = vmatpush1.bf16.msra.mxu0 0
    %1988 = vmatprep.subr.bf16.mxu0 0
    %1989 = vmatpush1.bf16.msra.mxu0 0
    %1990 = vmatprep.subr.bf16.mxu0 0
    %1991 = vmatpush1.bf16.msra.mxu0 0
    %1992 = vmatprep.subr.bf16.mxu0 0
    %1993 = vmatpush1.bf16.msra.mxu0 0
    %1994 = vmatprep.subr.bf16.mxu0 0
    %1995 = vmatpush1.bf16.msra.mxu0 0
    %1996 = vmatprep.subr.bf16.mxu0 0
    %1997 = vmatpush1.bf16.msra.mxu0 0
    %1998 = vmatprep.subr.bf16.mxu0 0
    %1999 = vmatpush1.bf16.msra.mxu0 0
    %2000 = vmatprep.subr.bf16.mxu0 0
    %2001 = vmatpush1.bf16.msra.mxu0 0
    %2002 = vmatprep.subr.bf16.mxu0 0
    %2003 = vmatpush1.bf16.msra.mxu0 0
    %2004 = vmatprep.subr.bf16.mxu0 0
    %2005 = vmatpush1.bf16.msra.mxu0 0
    %2006 = vmatprep.subr.bf16.mxu0 0
    %2007 = vmatpush1.bf16.msra.mxu0 0
    %2008 = vmatprep.mubr.bf16.mxu0 0
    %2009 = vmatmul.mubr.bf16.gmra.mrb[0].mxu0 %v1617
    %v2010 = vpop.f32.mrb[0].mxu0
    %v2011 = vadd.f32 0.0, %v2010
    %v2012 = vpop.f32.mrb[0].mxu0
    %v2013 = vadd.f32 0.0, %v2012
    %v2014 = vpop.f32.mrb[0].mxu0
    %v2015 = vadd.f32 0.0, %v2014
    %v2016 = vpop.f32.mrb[0].mxu0
    %v2017 = vadd.f32 0.0, %v2016
    %2018 = vmatprep.mubr.bf16.mxu0 0
    %2019 = vmatmul.mubr.bf16.gmra.mrb[0].mxu0 %v1620
    %v2020 = vpop.f32.mrb[0].mxu0
    %v2021 = vadd.f32 0.0, %v2020
    %v2022 = vpop.f32.mrb[0].mxu0
    %v2023 = vadd.f32 0.0, %v2022
    %v2024 = vpop.f32.mrb[0].mxu0
    %v2025 = vadd.f32 0.0, %v2024
    %v2026 = vpop.f32.mrb[0].mxu0
    %v2027 = vadd.f32 0.0, %v2026
    %2028 = vmatprep.mubr.bf16.mxu0 0
    %2029 = vmatmul.mubr.bf16.gmra.mrb[0].mxu0 %v1623
    %v2030 = vpop.f32.mrb[0].mxu0
    %v2031 = vadd.f32 0.0, %v2030
    %v2032 = vpop.f32.mrb[0].mxu0
    %v2033 = vadd.f32 0.0, %v2032
    %v2034 = vpop.f32.mrb[0].mxu0
    %v2035 = vadd.f32 0.0, %v2034
    %v2036 = vpop.f32.mrb[0].mxu0
    %v2037 = vadd.f32 0.0, %v2036
    %2038 = vmatprep.mubr.bf16.mxu0 0
    %2039 = vmatmul.mubr.bf16.gmra.mrb[0].mxu0 %v1626
    %v2040 = vpop.f32.mrb[0].mxu0
    %v2041 = vadd.f32 0.0, %v2040
    %v2042 = vpop.f32.mrb[0].mxu0
    %v2043 = vadd.f32 0.0, %v2042
    %v2044 = vpop.f32.mrb[0].mxu0
    %v2045 = vadd.f32 0.0, %v2044
    %v2046 = vpop.f32.mrb[0].mxu0
    %v2047 = vadd.f32 0.0, %v2046
    %2048 = vmatprep.mubr.bf16.mxu0 0
    %2049 = vmatmul.mubr.bf16.gmra.mrb[0].mxu0 %v1629
    %v2050 = vpop.f32.mrb[0].mxu0
    %v2051 = vadd.f32 0.0, %v2050
    %v2052 = vpop.f32.mrb[0].mxu0
    %v2053 = vadd.f32 0.0, %v2052
    %v2054 = vpop.f32.mrb[0].mxu0
    %v2055 = vadd.f32 0.0, %v2054
    %v2056 = vpop.f32.mrb[0].mxu0
    %v2057 = vadd.f32 0.0, %v2056
    %2058 = vmatprep.mubr.bf16.mxu0 0
    %2059 = vmatmul.mubr.bf16.gmra.mrb[0].mxu0 %v1632
    %v2060 = vpop.f32.mrb[0].mxu0
    %v2061 = vadd.f32 0.0, %v2060
    %v2062 = vpop.f32.mrb[0].mxu0
    %v2063 = vadd.f32 0.0, %v2062
    %v2064 = vpop.f32.mrb[0].mxu0
    %v2065 = vadd.f32 0.0, %v2064
    %v2066 = vpop.f32.mrb[0].mxu0
    %v2067 = vadd.f32 0.0, %v2066
    %2068 = vmatprep.mubr.bf16.mxu0 0
    %2069 = vmatmul.mubr.bf16.gmra.mrb[0].mxu0 %v1635
    %v2070 = vpop.f32.mrb[0].mxu0
    %v2071 = vadd.f32 0.0, %v2070
    %v2072 = vpop.f32.mrb[0].mxu0
    %v2073 = vadd.f32 0.0, %v2072
    %v2074 = vpop.f32.mrb[0].mxu0
    %v2075 = vadd.f32 0.0, %v2074
    %v2076 = vpop.f32.mrb[0].mxu0
    %v2077 = vadd.f32 0.0, %v2076
    %2078 = vmatprep.mubr.bf16.mxu0 0
    %2079 = vmatmul.mubr.bf16.gmra.mrb[0].mxu0 %v1638
    %v2080 = vpop.f32.mrb[0].mxu0
    %v2081 = vadd.f32 0.0, %v2080
    %v2082 = vpop.f32.mrb[0].mxu0
    %v2083 = vadd.f32 0.0, %v2082
    %v2084 = vpop.f32.mrb[0].mxu0
    %v2085 = vadd.f32 0.0, %v2084
    %v2086 = vpop.f32.mrb[0].mxu0
    %v2087 = vadd.f32 0.0, %v2086
    %2088 = vmatprep.mubr.bf16.mxu0 0
    %2089 = vmatmul.mubr.bf16.gmra.mrb[0].mxu0 %v1641
    %v2090 = vpop.f32.mrb[0].mxu0
    %v2091 = vadd.f32 0.0, %v2090
    %v2092 = vpop.f32.mrb[0].mxu0
    %v2093 = vadd.f32 0.0, %v2092
    %v2094 = vpop.f32.mrb[0].mxu0
    %v2095 = vadd.f32 0.0, %v2094
    %v2096 = vpop.f32.mrb[0].mxu0
    %v2097 = vadd.f32 0.0, %v2096
    %2098 = vmatprep.mubr.bf16.mxu0 0
    %2099 = vmatmul.mubr.bf16.gmra.mrb[0].mxu0 %v1644
    %v2100 = vpop.f32.mrb[0].mxu0
    %v2101 = vadd.f32 0.0, %v2100
    %v2102 = vpop.f32.mrb[0].mxu0
    %v2103 = vadd.f32 0.0, %v2102
    %v2104 = vpop.f32.mrb[0].mxu0
    %v2105 = vadd.f32 0.0, %v2104
    %v2106 = vpop.f32.mrb[0].mxu0
    %v2107 = vadd.f32 0.0, %v2106
    %2108 = vmatprep.mubr.bf16.mxu0 0
    %2109 = vmatmul.mubr.bf16.gmra.mrb[0].mxu0 %v1647
    %v2110 = vpop.f32.mrb[0].mxu0
    %v2111 = vadd.f32 0.0, %v2110
    %v2112 = vpop.f32.mrb[0].mxu0
    %v2113 = vadd.f32 0.0, %v2112
    %v2114 = vpop.f32.mrb[0].mxu0
    %v2115 = vadd.f32 0.0, %v2114
    %v2116 = vpop.f32.mrb[0].mxu0
    %v2117 = vadd.f32 0.0, %v2116
    %2118 = vmatprep.mubr.bf16.mxu0 0
    %2119 = vmatmul.mubr.bf16.gmra.mrb[0].mxu0 %v1650
    %v2120 = vpop.f32.mrb[0].mxu0
    %v2121 = vadd.f32 0.0, %v2120
    %v2122 = vpop.f32.mrb[0].mxu0
    %v2123 = vadd.f32 0.0, %v2122
    %v2124 = vpop.f32.mrb[0].mxu0
    %v2125 = vadd.f32 0.0, %v2124
    %v2126 = vpop.f32.mrb[0].mxu0
    %v2127 = vadd.f32 0.0, %v2126
    %2128 = vdwg.mxu0
    %v2129 = vadd.f32 %v1040, %v1705
    %v2130 = vadd.f32 %v1042, %v1707
    %v2131 = vadd.f32 %v1193, %v1858
    %v2132 = vadd.f32 %v1195, %v1860
    %v2133 = vadd.f32 %v1346, %v2011
    %v2134 = vadd.f32 %v1348, %v2013
    %v2135 = vadd.f32 %v1044, %v1709
    %v2136 = vadd.f32 %v1046, %v1711
    %v2137 = vadd.f32 %v1197, %v1862
    %v2138 = vadd.f32 %v1199, %v1864
    %v2139 = vadd.f32 %v1350, %v2015
    %v2140 = vadd.f32 %v1352, %v2017
    %v2141 = vadd.f32 %v1050, %v1715
    %v2142 = vadd.f32 %v1052, %v1717
    %v2143 = vadd.f32 %v1203, %v1868
    %v2144 = vadd.f32 %v1205, %v1870
    %v2145 = vadd.f32 %v1356, %v2021
    %v2146 = vadd.f32 %v1358, %v2023
    %v2147 = vadd.f32 %v1054, %v1719
    %v2148 = vadd.f32 %v1056, %v1721
    %v2149 = vadd.f32 %v1207, %v1872
    %v2150 = vadd.f32 %v1209, %v1874
    %v2151 = vadd.f32 %v1360, %v2025
    %v2152 = vadd.f32 %v1362, %v2027
    %v2153 = vadd.f32 %v1060, %v1725
    %v2154 = vadd.f32 %v1062, %v1727
    %v2155 = vadd.f32 %v1213, %v1878
    %v2156 = vadd.f32 %v1215, %v1880
    %v2157 = vadd.f32 %v1366, %v2031
    %v2158 = vadd.f32 %v1368, %v2033
    %v2159 = vadd.f32 %v1064, %v1729
    %v2160 = vadd.f32 %v1066, %v1731
    %v2161 = vadd.f32 %v1217, %v1882
    %v2162 = vadd.f32 %v1219, %v1884
    %v2163 = vadd.f32 %v1370, %v2035
    %v2164 = vadd.f32 %v1372, %v2037
    %v2165 = vadd.f32 %v1070, %v1735
    %v2166 = vadd.f32 %v1072, %v1737
    %v2167 = vadd.f32 %v1223, %v1888
    %v2168 = vadd.f32 %v1225, %v1890
    %v2169 = vadd.f32 %v1376, %v2041
    %v2170 = vadd.f32 %v1378, %v2043
    %v2171 = vadd.f32 %v1074, %v1739
    %v2172 = vadd.f32 %v1076, %v1741
    %v2173 = vadd.f32 %v1227, %v1892
    %v2174 = vadd.f32 %v1229, %v1894
    %v2175 = vadd.f32 %v1380, %v2045
    %v2176 = vadd.f32 %v1382, %v2047
    %v2177 = vadd.f32 %v1080, %v1745
    %v2178 = vadd.f32 %v1082, %v1747
    %v2179 = vadd.f32 %v1233, %v1898
    %v2180 = vadd.f32 %v1235, %v1900
    %v2181 = vadd.f32 %v1386, %v2051
    %v2182 = vadd.f32 %v1388, %v2053
    %v2183 = vadd.f32 %v1084, %v1749
    %v2184 = vadd.f32 %v1086, %v1751
    %v2185 = vadd.f32 %v1237, %v1902
    %v2186 = vadd.f32 %v1239, %v1904
    %v2187 = vadd.f32 %v1390, %v2055
    %v2188 = vadd.f32 %v1392, %v2057
    %v2189 = vadd.f32 %v1090, %v1755
    %v2190 = vadd.f32 %v1092, %v1757
    %v2191 = vadd.f32 %v1243, %v1908
    %v2192 = vadd.f32 %v1245, %v1910
    %v2193 = vadd.f32 %v1396, %v2061
    %v2194 = vadd.f32 %v1398, %v2063
    %v2195 = vadd.f32 %v1094, %v1759
    %v2196 = vadd.f32 %v1096, %v1761
    %v2197 = vadd.f32 %v1247, %v1912
    %v2198 = vadd.f32 %v1249, %v1914
    %v2199 = vadd.f32 %v1400, %v2065
    %v2200 = vadd.f32 %v1402, %v2067
    %v2201 = vadd.f32 %v1100, %v1765
    %v2202 = vadd.f32 %v1102, %v1767
    %v2203 = vadd.f32 %v1253, %v1918
    %v2204 = vadd.f32 %v1255, %v1920
    %v2205 = vadd.f32 %v1406, %v2071
    %v2206 = vadd.f32 %v1408, %v2073
    %v2207 = vadd.f32 %v1104, %v1769
    %v2208 = vadd.f32 %v1106, %v1771
    %v2209 = vadd.f32 %v1257, %v1922
    %v2210 = vadd.f32 %v1259, %v1924
    %v2211 = vadd.f32 %v1410, %v2075
    %v2212 = vadd.f32 %v1412, %v2077
    %v2213 = vadd.f32 %v1110, %v1775
    %v2214 = vadd.f32 %v1112, %v1777
    %v2215 = vadd.f32 %v1263, %v1928
    %v2216 = vadd.f32 %v1265, %v1930
    %v2217 = vadd.f32 %v1416, %v2081
    %v2218 = vadd.f32 %v1418, %v2083
    %v2219 = vadd.f32 %v1114, %v1779
    %v2220 = vadd.f32 %v1116, %v1781
    %v2221 = vadd.f32 %v1267, %v1932
    %v2222 = vadd.f32 %v1269, %v1934
    %v2223 = vadd.f32 %v1420, %v2085
    %v2224 = vadd.f32 %v1422, %v2087
    %v2225 = vadd.f32 %v1120, %v1785
    %v2226 = vadd.f32 %v1122, %v1787
    %v2227 = vadd.f32 %v1273, %v1938
    %v2228 = vadd.f32 %v1275, %v1940
    %v2229 = vadd.f32 %v1426, %v2091
    %v2230 = vadd.f32 %v1428, %v2093
    %v2231 = vadd.f32 %v1124, %v1789
    %v2232 = vadd.f32 %v1126, %v1791
    %v2233 = vadd.f32 %v1277, %v1942
    %v2234 = vadd.f32 %v1279, %v1944
    %v2235 = vadd.f32 %v1430, %v2095
    %v2236 = vadd.f32 %v1432, %v2097
    %v2237 = vadd.f32 %v1130, %v1795
    %v2238 = vadd.f32 %v1132, %v1797
    %v2239 = vadd.f32 %v1283, %v1948
    %v2240 = vadd.f32 %v1285, %v1950
    %v2241 = vadd.f32 %v1436, %v2101
    %v2242 = vadd.f32 %v1438, %v2103
    %v2243 = vadd.f32 %v1134, %v1799
    %v2244 = vadd.f32 %v1136, %v1801
    %v2245 = vadd.f32 %v1287, %v1952
    %v2246 = vadd.f32 %v1289, %v1954
    %v2247 = vadd.f32 %v1440, %v2105
    %v2248 = vadd.f32 %v1442, %v2107
    %v2249 = vadd.f32 %v1140, %v1805
    %v2250 = vadd.f32 %v1142, %v1807
    %v2251 = vadd.f32 %v1293, %v1958
    %v2252 = vadd.f32 %v1295, %v1960
    %v2253 = vadd.f32 %v1446, %v2111
    %v2254 = vadd.f32 %v1448, %v2113
    %v2255 = vadd.f32 %v1144, %v1809
    %v2256 = vadd.f32 %v1146, %v1811
    %v2257 = vadd.f32 %v1297, %v1962
    %v2258 = vadd.f32 %v1299, %v1964
    %v2259 = vadd.f32 %v1450, %v2115
    %v2260 = vadd.f32 %v1452, %v2117
    %v2261 = vadd.f32 %v1150, %v1815
    %v2262 = vadd.f32 %v1152, %v1817
    %v2263 = vadd.f32 %v1303, %v1968
    %v2264 = vadd.f32 %v1305, %v1970
    %v2265 = vadd.f32 %v1456, %v2121
    %v2266 = vadd.f32 %v1458, %v2123
    %v2267 = vadd.f32 %v1154, %v1819
    %v2268 = vadd.f32 %v1156, %v1821
    %v2269 = vadd.f32 %v1307, %v1972
    %v2270 = vadd.f32 %v1309, %v1974
    %v2271 = vadd.f32 %v1460, %v2125
    %v2272 = vadd.f32 %v1462, %v2127
    %s2273 = scalar_lea.vmem %s0, 12
    %v2274 = vld [vmem:[%s2273] sm:$0xf]
    %v2275 = vld [vmem:[%s2273 + $0x4] sm:$0xf]
    %v2276 = vld [vmem:[%s2273 + $0x8] sm:$0xf]
    %v2277 = vld [vmem:[%s2273 + $0xc] sm:$0xf]
    %v2278 = vld [vmem:[%s2273 + $0x10] sm:$0xf]
    %v2279 = vld [vmem:[%s2273 + $0x14] sm:$0xf]
    %v2280 = vld [vmem:[%s2273 + $0x18] sm:$0xf]
    %v2281 = vld [vmem:[%s2273 + $0x1c] sm:$0xf]
    %v2282 = vld [vmem:[%s2273 + $0x20] sm:$0xf]
    %v2283 = vld [vmem:[%s2273 + $0x24] sm:$0xf]
    %v2284 = vld [vmem:[%s2273 + $0x28] sm:$0xf]
    %v2285 = vld [vmem:[%s2273 + $0x2c] sm:$0xf]
    %v2286 = vld [vmem:[%s2273 + $0x30] sm:$0xf]
    %v2287 = vld [vmem:[%s2273 + $0x34] sm:$0xf]
    %v2288 = vld [vmem:[%s2273 + $0x38] sm:$0xf]
    %v2289 = vld [vmem:[%s2273 + $0x3c] sm:$0xf]
    %v2290 = vld [vmem:[%s2273 + $0x40] sm:$0xf]
    %v2291 = vld [vmem:[%s2273 + $0x44] sm:$0xf]
    %v2292 = vld [vmem:[%s2273 + $0x48] sm:$0xf]
    %v2293 = vld [vmem:[%s2273 + $0x4c] sm:$0xf]
    %v2294 = vld [vmem:[%s2273 + $0x50] sm:$0xf]
    %v2295 = vld [vmem:[%s2273 + $0x54] sm:$0xf]
    %v2296 = vld [vmem:[%s2273 + $0x58] sm:$0xf]
    %v2297 = vld [vmem:[%s2273 + $0x5c] sm:$0xf]
    %s2298 = scalar_lea.vmem [#allocation4], 288
    %v2299 = vld [vmem:[%s2298] sm:$0xff]
    %v2300 = vld [vmem:[%s2298 + $0x8] sm:$0xff]
    %v2301 = vld [vmem:[%s2298 + $0x10] sm:$0xff]
    %v2302 = vld [vmem:[%s2298 + $0x18] sm:$0xff]
    %v2303 = vld [vmem:[%s2298 + $0x20] sm:$0xff]
    %v2304 = vld [vmem:[%s2298 + $0x28] sm:$0xff]
    %v2305 = vld [vmem:[%s2298 + $0x30] sm:$0xff]
    %v2306 = vld [vmem:[%s2298 + $0x38] sm:$0xff]
    %v2307 = vld [vmem:[%s2298 + $0x40] sm:$0xff]
    %v2308 = vld [vmem:[%s2298 + $0x48] sm:$0x33]
    %v2309 = vld [vmem:[%s2298 + $0x50] sm:$0x33]
    %v2310 = vld [vmem:[%s2298 + $0x58] sm:$0x33]
    %v2335 = vunpack.c.l.b16 %v2274
    %v2336 = vunpack.c.l.b16 %v2275
    %v2337 = vunpack.c.l.b16 %v2276
    %v2338 = vunpack.c.l.b16 %v2277
    %v2339 = vunpack.c.l.b16 %v2278
    %v2340 = vunpack.c.l.b16 %v2279
    %v2341 = vunpack.c.l.b16 %v2280
    %v2342 = vunpack.c.l.b16 %v2281
    %v2343 = vunpack.c.l.b16 %v2282
    %v2344 = vunpack.c.l.b16 %v2283
    %v2345 = vunpack.c.l.b16 %v2284
    %v2346 = vunpack.c.l.b16 %v2285
    %v2347 = vunpack.c.l.b16 %v2286
    %v2348 = vunpack.c.l.b16 %v2287
    %v2349 = vunpack.c.l.b16 %v2288
    %v2350 = vunpack.c.l.b16 %v2289
    %v2351 = vunpack.c.l.b16 %v2290
    %v2352 = vunpack.c.l.b16 %v2291
    %v2353 = vunpack.c.l.b16 %v2292
    %v2354 = vunpack.c.l.b16 %v2293
    %v2355 = vunpack.c.l.b16 %v2294
    %v2356 = vunpack.c.l.b16 %v2295
    %v2357 = vunpack.c.l.b16 %v2296
    %v2358 = vunpack.c.l.b16 %v2297
    %v2359 = vpack.c.b16 %v2336, %v2335
    %v2360 = vpack.c.b16 %v2338, %v2337
    %v2361 = vpack.c.b16 %v2340, %v2339
    %v2362 = vpack.c.b16 %v2342, %v2341
    %v2363 = vpack.c.b16 %v2344, %v2343
    %v2364 = vpack.c.b16 %v2346, %v2345
    %v2365 = vpack.c.b16 %v2348, %v2347
    %v2366 = vpack.c.b16 %v2350, %v2349
    %v2367 = vpack.c.b16 %v2352, %v2351
    %v2368 = vpack.c.b16 %v2354, %v2353
    %v2369 = vpack.c.b16 %v2356, %v2355
    %v2370 = vpack.c.b16 %v2358, %v2357
    %v2383 = vunpack.c.l.b16 %v2299
    %v2384 = vunpack.c.h.b16 %v2299
    %v2385 = vunpack.c.l.b16 %v2300
    %v2386 = vunpack.c.h.b16 %v2300
    %v2387 = vunpack.c.l.b16 %v2301
    %v2388 = vunpack.c.h.b16 %v2301
    %v2389 = vunpack.c.l.b16 %v2302
    %v2390 = vunpack.c.h.b16 %v2302
    %v2391 = vunpack.c.l.b16 %v2303
    %v2392 = vunpack.c.h.b16 %v2303
    %v2393 = vunpack.c.l.b16 %v2304
    %v2394 = vunpack.c.h.b16 %v2304
    %v2395 = vunpack.c.l.b16 %v2305
    %v2396 = vunpack.c.h.b16 %v2305
    %v2397 = vunpack.c.l.b16 %v2306
    %v2398 = vunpack.c.h.b16 %v2306
    %v2399 = vunpack.c.l.b16 %v2307
    %v2400 = vunpack.c.h.b16 %v2307
    %v2401 = vunpack.c.l.b16 %v2308
    %v2402 = vunpack.c.h.b16 %v2308
    %v2403 = vunpack.c.l.b16 %v2309
    %v2404 = vunpack.c.h.b16 %v2309
    %v2405 = vunpack.c.l.b16 %v2310
    %v2406 = vunpack.c.h.b16 %v2310
    %v2407 = vpack.c.b16 %v2389, %v2383
    %v2408 = vpack.c.b16 %v2390, %v2384
    %v2409 = vpack.c.b16 %v2391, %v2385
    %v2410 = vpack.c.b16 %v2392, %v2386
    %v2411 = vpack.c.b16 %v2393, %v2387
    %v2412 = vpack.c.b16 %v2394, %v2388
    %v2413 = vpack.c.b16 %v2401, %v2395
    %v2414 = vpack.c.b16 %v2402, %v2396
    %v2415 = vpack.c.b16 %v2403, %v2397
    %v2416 = vpack.c.b16 %v2404, %v2398
    %v2417 = vpack.c.b16 %v2405, %v2399
    %v2418 = vpack.c.b16 %v2406, %v2400
    %v2426 = vsel %vm322, %v2359, 0
    %v2429 = vsel %vm322, %v2360, 0
    %v2432 = vsel %vm322, %v2361, 0
    %v2435 = vsel %vm322, %v2362, 0
    %v2438 = vsel %vm322, %v2363, 0
    %v2441 = vsel %vm322, %v2364, 0
    %v2444 = vsel %vm322, %v2365, 0
    %v2447 = vsel %vm322, %v2366, 0
    %v2450 = vsel %vm322, %v2367, 0
    %v2453 = vsel %vm322, %v2368, 0
    %v2456 = vsel %vm322, %v2369, 0
    %v2459 = vsel %vm322, %v2370, 0
    %v2462 = vsel %vm359, %v2413, 0
    %v2465 = vsel %vm359, %v2414, 0
    %v2468 = vsel %vm359, %v2415, 0
    %v2471 = vsel %vm359, %v2416, 0
    %v2474 = vsel %vm359, %v2417, 0
    %v2477 = vsel %vm359, %v2418, 0
    %2479 = vmatprep.subr.bf16.mxu0 %v2408
    %2480 = vmatpush1.bf16.msra.mxu0 %v2407
    %2481 = vmatprep.subr.bf16.mxu0 %v2465
    %2482 = vmatpush1.bf16.msra.mxu0 %v2462
    %2483 = vmatprep.subr.bf16.mxu0 0
    %2484 = vmatpush1.bf16.msra.mxu0 0
    %2485 = vmatprep.subr.bf16.mxu0 0
    %2486 = vmatpush1.bf16.msra.mxu0 0
    %2487 = vmatprep.subr.bf16.mxu0 0
    %2488 = vmatpush1.bf16.msra.mxu0 0
    %2489 = vmatprep.subr.bf16.mxu0 0
    %2490 = vmatpush1.bf16.msra.mxu0 0
    %2491 = vmatprep.subr.bf16.mxu0 0
    %2492 = vmatpush1.bf16.msra.mxu0 0
    %2493 = vmatprep.subr.bf16.mxu0 0
    %2494 = vmatpush1.bf16.msra.mxu0 0
    %2495 = vmatprep.subr.bf16.mxu0 0
    %2496 = vmatpush1.bf16.msra.mxu0 0
    %2497 = vmatprep.subr.bf16.mxu0 0
    %2498 = vmatpush1.bf16.msra.mxu0 0
    %2499 = vmatprep.subr.bf16.mxu0 0
    %2500 = vmatpush1.bf16.msra.mxu0 0
    %2501 = vmatprep.subr.bf16.mxu0 0
    %2502 = vmatpush1.bf16.msra.mxu0 0
    %2503 = vmatprep.subr.bf16.mxu0 0
    %2504 = vmatpush1.bf16.msra.mxu0 0
    %2505 = vmatprep.subr.bf16.mxu0 0
    %2506 = vmatpush1.bf16.msra.mxu0 0
    %2507 = vmatprep.subr.bf16.mxu0 0
    %2508 = vmatpush1.bf16.msra.mxu0 0
    %2509 = vmatprep.subr.bf16.mxu0 0
    %2510 = vmatpush1.bf16.msra.mxu0 0
    %2511 = vmatprep.mubr.bf16.mxu0 0
    %2512 = vmatmul.mubr.bf16.gmra.mrb[0].mxu0 %v2426
    %v2513 = vpop.f32.mrb[0].mxu0
    %v2514 = vadd.f32 0.0, %v2513
    %v2515 = vpop.f32.mrb[0].mxu0
    %v2516 = vadd.f32 0.0, %v2515
    %v2517 = vpop.f32.mrb[0].mxu0
    %v2518 = vadd.f32 0.0, %v2517
    %v2519 = vpop.f32.mrb[0].mxu0
    %v2520 = vadd.f32 0.0, %v2519
    %2521 = vmatprep.mubr.bf16.mxu0 0
    %2522 = vmatmul.mubr.bf16.gmra.mrb[0].mxu0 %v2429
    %v2523 = vpop.f32.mrb[0].mxu0
    %v2524 = vadd.f32 0.0, %v2523
    %v2525 = vpop.f32.mrb[0].mxu0
    %v2526 = vadd.f32 0.0, %v2525
    %v2527 = vpop.f32.mrb[0].mxu0
    %v2528 = vadd.f32 0.0, %v2527
    %v2529 = vpop.f32.mrb[0].mxu0
    %v2530 = vadd.f32 0.0, %v2529
    %2531 = vmatprep.mubr.bf16.mxu0 0
    %2532 = vmatmul.mubr.bf16.gmra.mrb[0].mxu0 %v2432
    %v2533 = vpop.f32.mrb[0].mxu0
    %v2534 = vadd.f32 0.0, %v2533
    %v2535 = vpop.f32.mrb[0].mxu0
    %v2536 = vadd.f32 0.0, %v2535
    %v2537 = vpop.f32.mrb[0].mxu0
    %v2538 = vadd.f32 0.0, %v2537
    %v2539 = vpop.f32.mrb[0].mxu0
    %v2540 = vadd.f32 0.0, %v2539
    %2541 = vmatprep.mubr.bf16.mxu0 0
    %2542 = vmatmul.mubr.bf16.gmra.mrb[0].mxu0 %v2435
    %v2543 = vpop.f32.mrb[0].mxu0
    %v2544 = vadd.f32 0.0, %v2543
    %v2545 = vpop.f32.mrb[0].mxu0
    %v2546 = vadd.f32 0.0, %v2545
    %v2547 = vpop.f32.mrb[0].mxu0
    %v2548 = vadd.f32 0.0, %v2547
    %v2549 = vpop.f32.mrb[0].mxu0
    %v2550 = vadd.f32 0.0, %v2549
    %2551 = vmatprep.mubr.bf16.mxu0 0
    %2552 = vmatmul.mubr.bf16.gmra.mrb[0].mxu0 %v2438
    %v2553 = vpop.f32.mrb[0].mxu0
    %v2554 = vadd.f32 0.0, %v2553
    %v2555 = vpop.f32.mrb[0].mxu0
    %v2556 = vadd.f32 0.0, %v2555
    %v2557 = vpop.f32.mrb[0].mxu0
    %v2558 = vadd.f32 0.0, %v2557
    %v2559 = vpop.f32.mrb[0].mxu0
    %v2560 = vadd.f32 0.0, %v2559
    %2561 = vmatprep.mubr.bf16.mxu0 0
    %2562 = vmatmul.mubr.bf16.gmra.mrb[0].mxu0 %v2441
    %v2563 = vpop.f32.mrb[0].mxu0
    %v2564 = vadd.f32 0.0, %v2563
    %v2565 = vpop.f32.mrb[0].mxu0
    %v2566 = vadd.f32 0.0, %v2565
    %v2567 = vpop.f32.mrb[0].mxu0
    %v2568 = vadd.f32 0.0, %v2567
    %v2569 = vpop.f32.mrb[0].mxu0
    %v2570 = vadd.f32 0.0, %v2569
    %2571 = vmatprep.mubr.bf16.mxu0 0
    %2572 = vmatmul.mubr.bf16.gmra.mrb[0].mxu0 %v2444
    %v2573 = vpop.f32.mrb[0].mxu0
    %v2574 = vadd.f32 0.0, %v2573
    %v2575 = vpop.f32.mrb[0].mxu0
    %v2576 = vadd.f32 0.0, %v2575
    %v2577 = vpop.f32.mrb[0].mxu0
    %v2578 = vadd.f32 0.0, %v2577
    %v2579 = vpop.f32.mrb[0].mxu0
    %v2580 = vadd.f32 0.0, %v2579
    %2581 = vmatprep.mubr.bf16.mxu0 0
    %2582 = vmatmul.mubr.bf16.gmra.mrb[0].mxu0 %v2447
    %v2583 = vpop.f32.mrb[0].mxu0
    %v2584 = vadd.f32 0.0, %v2583
    %v2585 = vpop.f32.mrb[0].mxu0
    %v2586 = vadd.f32 0.0, %v2585
    %v2587 = vpop.f32.mrb[0].mxu0
    %v2588 = vadd.f32 0.0, %v2587
    %v2589 = vpop.f32.mrb[0].mxu0
    %v2590 = vadd.f32 0.0, %v2589
    %2591 = vmatprep.mubr.bf16.mxu0 0
    %2592 = vmatmul.mubr.bf16.gmra.mrb[0].mxu0 %v2450
    %v2593 = vpop.f32.mrb[0].mxu0
    %v2594 = vadd.f32 0.0, %v2593
    %v2595 = vpop.f32.mrb[0].mxu0
    %v2596 = vadd.f32 0.0, %v2595
    %v2597 = vpop.f32.mrb[0].mxu0
    %v2598 = vadd.f32 0.0, %v2597
    %v2599 = vpop.f32.mrb[0].mxu0
    %v2600 = vadd.f32 0.0, %v2599
    %2601 = vmatprep.mubr.bf16.mxu0 0
    %2602 = vmatmul.mubr.bf16.gmra.mrb[0].mxu0 %v2453
    %v2603 = vpop.f32.mrb[0].mxu0
    %v2604 = vadd.f32 0.0, %v2603
    %v2605 = vpop.f32.mrb[0].mxu0
    %v2606 = vadd.f32 0.0, %v2605
    %v2607 = vpop.f32.mrb[0].mxu0
    %v2608 = vadd.f32 0.0, %v2607
    %v2609 = vpop.f32.mrb[0].mxu0
    %v2610 = vadd.f32 0.0, %v2609
    %2611 = vmatprep.mubr.bf16.mxu0 0
    %2612 = vmatmul.mubr.bf16.gmra.mrb[0].mxu0 %v2456
    %v2613 = vpop.f32.mrb[0].mxu0
    %v2614 = vadd.f32 0.0, %v2613
    %v2615 = vpop.f32.mrb[0].mxu0
    %v2616 = vadd.f32 0.0, %v2615
    %v2617 = vpop.f32.mrb[0].mxu0
    %v2618 = vadd.f32 0.0, %v2617
    %v2619 = vpop.f32.mrb[0].mxu0
    %v2620 = vadd.f32 0.0, %v2619
    %2621 = vmatprep.mubr.bf16.mxu0 0
    %2622 = vmatmul.mubr.bf16.gmra.mrb[0].mxu0 %v2459
    %v2623 = vpop.f32.mrb[0].mxu0
    %v2624 = vadd.f32 0.0, %v2623
    %v2625 = vpop.f32.mrb[0].mxu0
    %v2626 = vadd.f32 0.0, %v2625
    %v2627 = vpop.f32.mrb[0].mxu0
    %v2628 = vadd.f32 0.0, %v2627
    %v2629 = vpop.f32.mrb[0].mxu0
    %v2630 = vadd.f32 0.0, %v2629
    %2631 = vdwg.mxu0
    %2632 = vmatprep.subr.bf16.mxu0 %v2410
    %2633 = vmatpush1.bf16.msra.mxu0 %v2409
    %2634 = vmatprep.subr.bf16.mxu0 %v2471
    %2635 = vmatpush1.bf16.msra.mxu0 %v2468
    %2636 = vmatprep.subr.bf16.mxu0 0
    %2637 = vmatpush1.bf16.msra.mxu0 0
    %2638 = vmatprep.subr.bf16.mxu0 0
    %2639 = vmatpush1.bf16.msra.mxu0 0
    %2640 = vmatprep.subr.bf16.mxu0 0
    %2641 = vmatpush1.bf16.msra.mxu0 0
    %2642 = vmatprep.subr.bf16.mxu0 0
    %2643 = vmatpush1.bf16.msra.mxu0 0
    %2644 = vmatprep.subr.bf16.mxu0 0
    %2645 = vmatpush1.bf16.msra.mxu0 0
    %2646 = vmatprep.subr.bf16.mxu0 0
    %2647 = vmatpush1.bf16.msra.mxu0 0
    %2648 = vmatprep.subr.bf16.mxu0 0
    %2649 = vmatpush1.bf16.msra.mxu0 0
    %2650 = vmatprep.subr.bf16.mxu0 0
    %2651 = vmatpush1.bf16.msra.mxu0 0
    %2652 = vmatprep.subr.bf16.mxu0 0
    %2653 = vmatpush1.bf16.msra.mxu0 0
    %2654 = vmatprep.subr.bf16.mxu0 0
    %2655 = vmatpush1.bf16.msra.mxu0 0
    %2656 = vmatprep.subr.bf16.mxu0 0
    %2657 = vmatpush1.bf16.msra.mxu0 0
    %2658 = vmatprep.subr.bf16.mxu0 0
    %2659 = vmatpush1.bf16.msra.mxu0 0
    %2660 = vmatprep.subr.bf16.mxu0 0
    %2661 = vmatpush1.bf16.msra.mxu0 0
    %2662 = vmatprep.subr.bf16.mxu0 0
    %2663 = vmatpush1.bf16.msra.mxu0 0
    %2664 = vmatprep.mubr.bf16.mxu0 0
    %2665 = vmatmul.mubr.bf16.gmra.mrb[0].mxu0 %v2426
    %v2666 = vpop.f32.mrb[0].mxu0
    %v2667 = vadd.f32 0.0, %v2666
    %v2668 = vpop.f32.mrb[0].mxu0
    %v2669 = vadd.f32 0.0, %v2668
    %v2670 = vpop.f32.mrb[0].mxu0
    %v2671 = vadd.f32 0.0, %v2670
    %v2672 = vpop.f32.mrb[0].mxu0
    %v2673 = vadd.f32 0.0, %v2672
    %2674 = vmatprep.mubr.bf16.mxu0 0
    %2675 = vmatmul.mubr.bf16.gmra.mrb[0].mxu0 %v2429
    %v2676 = vpop.f32.mrb[0].mxu0
    %v2677 = vadd.f32 0.0, %v2676
    %v2678 = vpop.f32.mrb[0].mxu0
    %v2679 = vadd.f32 0.0, %v2678
    %v2680 = vpop.f32.mrb[0].mxu0
    %v2681 = vadd.f32 0.0, %v2680
    %v2682 = vpop.f32.mrb[0].mxu0
    %v2683 = vadd.f32 0.0, %v2682
    %2684 = vmatprep.mubr.bf16.mxu0 0
    %2685 = vmatmul.mubr.bf16.gmra.mrb[0].mxu0 %v2432
    %v2686 = vpop.f32.mrb[0].mxu0
    %v2687 = vadd.f32 0.0, %v2686
    %v2688 = vpop.f32.mrb[0].mxu0
    %v2689 = vadd.f32 0.0, %v2688
    %v2690 = vpop.f32.mrb[0].mxu0
    %v2691 = vadd.f32 0.0, %v2690
    %v2692 = vpop.f32.mrb[0].mxu0
    %v2693 = vadd.f32 0.0, %v2692
    %2694 = vmatprep.mubr.bf16.mxu0 0
    %2695 = vmatmul.mubr.bf16.gmra.mrb[0].mxu0 %v2435
    %v2696 = vpop.f32.mrb[0].mxu0
    %v2697 = vadd.f32 0.0, %v2696
    %v2698 = vpop.f32.mrb[0].mxu0
    %v2699 = vadd.f32 0.0, %v2698
    %v2700 = vpop.f32.mrb[0].mxu0
    %v2701 = vadd.f32 0.0, %v2700
    %v2702 = vpop.f32.mrb[0].mxu0
    %v2703 = vadd.f32 0.0, %v2702
    %2704 = vmatprep.mubr.bf16.mxu0 0
    %2705 = vmatmul.mubr.bf16.gmra.mrb[0].mxu0 %v2438
    %v2706 = vpop.f32.mrb[0].mxu0
    %v2707 = vadd.f32 0.0, %v2706
    %v2708 = vpop.f32.mrb[0].mxu0
    %v2709 = vadd.f32 0.0, %v2708
    %v2710 = vpop.f32.mrb[0].mxu0
    %v2711 = vadd.f32 0.0, %v2710
    %v2712 = vpop.f32.mrb[0].mxu0
    %v2713 = vadd.f32 0.0, %v2712
    %2714 = vmatprep.mubr.bf16.mxu0 0
    %2715 = vmatmul.mubr.bf16.gmra.mrb[0].mxu0 %v2441
    %v2716 = vpop.f32.mrb[0].mxu0
    %v2717 = vadd.f32 0.0, %v2716
    %v2718 = vpop.f32.mrb[0].mxu0
    %v2719 = vadd.f32 0.0, %v2718
    %v2720 = vpop.f32.mrb[0].mxu0
    %v2721 = vadd.f32 0.0, %v2720
    %v2722 = vpop.f32.mrb[0].mxu0
    %v2723 = vadd.f32 0.0, %v2722
    %2724 = vmatprep.mubr.bf16.mxu0 0
    %2725 = vmatmul.mubr.bf16.gmra.mrb[0].mxu0 %v2444
    %v2726 = vpop.f32.mrb[0].mxu0
    %v2727 = vadd.f32 0.0, %v2726
    %v2728 = vpop.f32.mrb[0].mxu0
    %v2729 = vadd.f32 0.0, %v2728
    %v2730 = vpop.f32.mrb[0].mxu0
    %v2731 = vadd.f32 0.0, %v2730
    %v2732 = vpop.f32.mrb[0].mxu0
    %v2733 = vadd.f32 0.0, %v2732
    %2734 = vmatprep.mubr.bf16.mxu0 0
    %2735 = vmatmul.mubr.bf16.gmra.mrb[0].mxu0 %v2447
    %v2736 = vpop.f32.mrb[0].mxu0
    %v2737 = vadd.f32 0.0, %v2736
    %v2738 = vpop.f32.mrb[0].mxu0
    %v2739 = vadd.f32 0.0, %v2738
    %v2740 = vpop.f32.mrb[0].mxu0
    %v2741 = vadd.f32 0.0, %v2740
    %v2742 = vpop.f32.mrb[0].mxu0
    %v2743 = vadd.f32 0.0, %v2742
    %2744 = vmatprep.mubr.bf16.mxu0 0
    %2745 = vmatmul.mubr.bf16.gmra.mrb[0].mxu0 %v2450
    %v2746 = vpop.f32.mrb[0].mxu0
    %v2747 = vadd.f32 0.0, %v2746
    %v2748 = vpop.f32.mrb[0].mxu0
    %v2749 = vadd.f32 0.0, %v2748
    %v2750 = vpop.f32.mrb[0].mxu0
    %v2751 = vadd.f32 0.0, %v2750
    %v2752 = vpop.f32.mrb[0].mxu0
    %v2753 = vadd.f32 0.0, %v2752
    %2754 = vmatprep.mubr.bf16.mxu0 0
    %2755 = vmatmul.mubr.bf16.gmra.mrb[0].mxu0 %v2453
    %v2756 = vpop.f32.mrb[0].mxu0
    %v2757 = vadd.f32 0.0, %v2756
    %v2758 = vpop.f32.mrb[0].mxu0
    %v2759 = vadd.f32 0.0, %v2758
    %v2760 = vpop.f32.mrb[0].mxu0
    %v2761 = vadd.f32 0.0, %v2760
    %v2762 = vpop.f32.mrb[0].mxu0
    %v2763 = vadd.f32 0.0, %v2762
    %2764 = vmatprep.mubr.bf16.mxu0 0
    %2765 = vmatmul.mubr.bf16.gmra.mrb[0].mxu0 %v2456
    %v2766 = vpop.f32.mrb[0].mxu0
    %v2767 = vadd.f32 0.0, %v2766
    %v2768 = vpop.f32.mrb[0].mxu0
    %v2769 = vadd.f32 0.0, %v2768
    %v2770 = vpop.f32.mrb[0].mxu0
    %v2771 = vadd.f32 0.0, %v2770
    %v2772 = vpop.f32.mrb[0].mxu0
    %v2773 = vadd.f32 0.0, %v2772
    %2774 = vmatprep.mubr.bf16.mxu0 0
    %2775 = vmatmul.mubr.bf16.gmra.mrb[0].mxu0 %v2459
    %v2776 = vpop.f32.mrb[0].mxu0
    %v2777 = vadd.f32 0.0, %v2776
    %v2778 = vpop.f32.mrb[0].mxu0
    %v2779 = vadd.f32 0.0, %v2778
    %v2780 = vpop.f32.mrb[0].mxu0
    %v2781 = vadd.f32 0.0, %v2780
    %v2782 = vpop.f32.mrb[0].mxu0
    %v2783 = vadd.f32 0.0, %v2782
    %2784 = vdwg.mxu0
    %2785 = vmatprep.subr.bf16.mxu0 %v2412
    %2786 = vmatpush1.bf16.msra.mxu0 %v2411
    %2787 = vmatprep.subr.bf16.mxu0 %v2477
    %2788 = vmatpush1.bf16.msra.mxu0 %v2474
    %2789 = vmatprep.subr.bf16.mxu0 0
    %2790 = vmatpush1.bf16.msra.mxu0 0
    %2791 = vmatprep.subr.bf16.mxu0 0
    %2792 = vmatpush1.bf16.msra.mxu0 0
    %2793 = vmatprep.subr.bf16.mxu0 0
    %2794 = vmatpush1.bf16.msra.mxu0 0
    %2795 = vmatprep.subr.bf16.mxu0 0
    %2796 = vmatpush1.bf16.msra.mxu0 0
    %2797 = vmatprep.subr.bf16.mxu0 0
    %2798 = vmatpush1.bf16.msra.mxu0 0
    %2799 = vmatprep.subr.bf16.mxu0 0
    %2800 = vmatpush1.bf16.msra.mxu0 0
    %2801 = vmatprep.subr.bf16.mxu0 0
    %2802 = vmatpush1.bf16.msra.mxu0 0
    %2803 = vmatprep.subr.bf16.mxu0 0
    %2804 = vmatpush1.bf16.msra.mxu0 0
    %2805 = vmatprep.subr.bf16.mxu0 0
    %2806 = vmatpush1.bf16.msra.mxu0 0
    %2807 = vmatprep.subr.bf16.mxu0 0
    %2808 = vmatpush1.bf16.msra.mxu0 0
    %2809 = vmatprep.subr.bf16.mxu0 0
    %2810 = vmatpush1.bf16.msra.mxu0 0
    %2811 = vmatprep.subr.bf16.mxu0 0
    %2812 = vmatpush1.bf16.msra.mxu0 0
    %2813 = vmatprep.subr.bf16.mxu0 0
    %2814 = vmatpush1.bf16.msra.mxu0 0
    %2815 = vmatprep.subr.bf16.mxu0 0
    %2816 = vmatpush1.bf16.msra.mxu0 0
    %2817 = vmatprep.mubr.bf16.mxu0 0
    %2818 = vmatmul.mubr.bf16.gmra.mrb[0].mxu0 %v2426
    %v2819 = vpop.f32.mrb[0].mxu0
    %v2820 = vadd.f32 0.0, %v2819
    %v2821 = vpop.f32.mrb[0].mxu0
    %v2822 = vadd.f32 0.0, %v2821
    %v2823 = vpop.f32.mrb[0].mxu0
    %v2824 = vadd.f32 0.0, %v2823
    %v2825 = vpop.f32.mrb[0].mxu0
    %v2826 = vadd.f32 0.0, %v2825
    %2827 = vmatprep.mubr.bf16.mxu0 0
    %2828 = vmatmul.mubr.bf16.gmra.mrb[0].mxu0 %v2429
    %v2829 = vpop.f32.mrb[0].mxu0
    %v2830 = vadd.f32 0.0, %v2829
    %v2831 = vpop.f32.mrb[0].mxu0
    %v2832 = vadd.f32 0.0, %v2831
    %v2833 = vpop.f32.mrb[0].mxu0
    %v2834 = vadd.f32 0.0, %v2833
    %v2835 = vpop.f32.mrb[0].mxu0
    %v2836 = vadd.f32 0.0, %v2835
    %2837 = vmatprep.mubr.bf16.mxu0 0
    %2838 = vmatmul.mubr.bf16.gmra.mrb[0].mxu0 %v2432
    %v2839 = vpop.f32.mrb[0].mxu0
    %v2840 = vadd.f32 0.0, %v2839
    %v2841 = vpop.f32.mrb[0].mxu0
    %v2842 = vadd.f32 0.0, %v2841
    %v2843 = vpop.f32.mrb[0].mxu0
    %v2844 = vadd.f32 0.0, %v2843
    %v2845 = vpop.f32.mrb[0].mxu0
    %v2846 = vadd.f32 0.0, %v2845
    %2847 = vmatprep.mubr.bf16.mxu0 0
    %2848 = vmatmul.mubr.bf16.gmra.mrb[0].mxu0 %v2435
    %v2849 = vpop.f32.mrb[0].mxu0
    %v2850 = vadd.f32 0.0, %v2849
    %v2851 = vpop.f32.mrb[0].mxu0
    %v2852 = vadd.f32 0.0, %v2851
    %v2853 = vpop.f32.mrb[0].mxu0
    %v2854 = vadd.f32 0.0, %v2853
    %v2855 = vpop.f32.mrb[0].mxu0
    %v2856 = vadd.f32 0.0, %v2855
    %2857 = vmatprep.mubr.bf16.mxu0 0
    %2858 = vmatmul.mubr.bf16.gmra.mrb[0].mxu0 %v2438
    %v2859 = vpop.f32.mrb[0].mxu0
    %v2860 = vadd.f32 0.0, %v2859
    %v2861 = vpop.f32.mrb[0].mxu0
    %v2862 = vadd.f32 0.0, %v2861
    %v2863 = vpop.f32.mrb[0].mxu0
    %v2864 = vadd.f32 0.0, %v2863
    %v2865 = vpop.f32.mrb[0].mxu0
    %v2866 = vadd.f32 0.0, %v2865
    %2867 = vmatprep.mubr.bf16.mxu0 0
    %2868 = vmatmul.mubr.bf16.gmra.mrb[0].mxu0 %v2441
    %v2869 = vpop.f32.mrb[0].mxu0
    %v2870 = vadd.f32 0.0, %v2869
    %v2871 = vpop.f32.mrb[0].mxu0
    %v2872 = vadd.f32 0.0, %v2871
    %v2873 = vpop.f32.mrb[0].mxu0
    %v2874 = vadd.f32 0.0, %v2873
    %v2875 = vpop.f32.mrb[0].mxu0
    %v2876 = vadd.f32 0.0, %v2875
    %2877 = vmatprep.mubr.bf16.mxu0 0
    %2878 = vmatmul.mubr.bf16.gmra.mrb[0].mxu0 %v2444
    %v2879 = vpop.f32.mrb[0].mxu0
    %v2880 = vadd.f32 0.0, %v2879
    %v2881 = vpop.f32.mrb[0].mxu0
    %v2882 = vadd.f32 0.0, %v2881
    %v2883 = vpop.f32.mrb[0].mxu0
    %v2884 = vadd.f32 0.0, %v2883
    %v2885 = vpop.f32.mrb[0].mxu0
    %v2886 = vadd.f32 0.0, %v2885
    %2887 = vmatprep.mubr.bf16.mxu0 0
    %2888 = vmatmul.mubr.bf16.gmra.mrb[0].mxu0 %v2447
    %v2889 = vpop.f32.mrb[0].mxu0
    %v2890 = vadd.f32 0.0, %v2889
    %v2891 = vpop.f32.mrb[0].mxu0
    %v2892 = vadd.f32 0.0, %v2891
    %v2893 = vpop.f32.mrb[0].mxu0
    %v2894 = vadd.f32 0.0, %v2893
    %v2895 = vpop.f32.mrb[0].mxu0
    %v2896 = vadd.f32 0.0, %v2895
    %2897 = vmatprep.mubr.bf16.mxu0 0
    %2898 = vmatmul.mubr.bf16.gmra.mrb[0].mxu0 %v2450
    %v2899 = vpop.f32.mrb[0].mxu0
    %v2900 = vadd.f32 0.0, %v2899
    %v2901 = vpop.f32.mrb[0].mxu0
    %v2902 = vadd.f32 0.0, %v2901
    %v2903 = vpop.f32.mrb[0].mxu0
    %v2904 = vadd.f32 0.0, %v2903
    %v2905 = vpop.f32.mrb[0].mxu0
    %v2906 = vadd.f32 0.0, %v2905
    %2907 = vmatprep.mubr.bf16.mxu0 0
    %2908 = vmatmul.mubr.bf16.gmra.mrb[0].mxu0 %v2453
    %v2909 = vpop.f32.mrb[0].mxu0
    %v2910 = vadd.f32 0.0, %v2909
    %v2911 = vpop.f32.mrb[0].mxu0
    %v2912 = vadd.f32 0.0, %v2911
    %v2913 = vpop.f32.mrb[0].mxu0
    %v2914 = vadd.f32 0.0, %v2913
    %v2915 = vpop.f32.mrb[0].mxu0
    %v2916 = vadd.f32 0.0, %v2915
    %2917 = vmatprep.mubr.bf16.mxu0 0
    %2918 = vmatmul.mubr.bf16.gmra.mrb[0].mxu0 %v2456
    %v2919 = vpop.f32.mrb[0].mxu0
    %v2920 = vadd.f32 0.0, %v2919
    %v2921 = vpop.f32.mrb[0].mxu0
    %v2922 = vadd.f32 0.0, %v2921
    %v2923 = vpop.f32.mrb[0].mxu0
    %v2924 = vadd.f32 0.0, %v2923
    %v2925 = vpop.f32.mrb[0].mxu0
    %v2926 = vadd.f32 0.0, %v2925
    %2927 = vmatprep.mubr.bf16.mxu0 0
    %2928 = vmatmul.mubr.bf16.gmra.mrb[0].mxu0 %v2459
    %v2929 = vpop.f32.mrb[0].mxu0
    %v2930 = vadd.f32 0.0, %v2929
    %v2931 = vpop.f32.mrb[0].mxu0
    %v2932 = vadd.f32 0.0, %v2931
    %v2933 = vpop.f32.mrb[0].mxu0
    %v2934 = vadd.f32 0.0, %v2933
    %v2935 = vpop.f32.mrb[0].mxu0
    %v2936 = vadd.f32 0.0, %v2935
    %2937 = vdwg.mxu0
    %v2938 = vadd.f32 %v2129, %v2514
    %v2939 = vadd.f32 %v2130, %v2516
    %v2940 = vadd.f32 %v2131, %v2667
    %v2941 = vadd.f32 %v2132, %v2669
    %v2942 = vadd.f32 %v2133, %v2820
    %v2943 = vadd.f32 %v2134, %v2822
    %v2944 = vadd.f32 %v2135, %v2518
    %v2945 = vadd.f32 %v2136, %v2520
    %v2946 = vadd.f32 %v2137, %v2671
    %v2947 = vadd.f32 %v2138, %v2673
    %v2948 = vadd.f32 %v2139, %v2824
    %v2949 = vadd.f32 %v2140, %v2826
    %v2950 = vadd.f32 %v2141, %v2524
    %v2951 = vadd.f32 %v2142, %v2526
    %v2952 = vadd.f32 %v2143, %v2677
    %v2953 = vadd.f32 %v2144, %v2679
    %v2954 = vadd.f32 %v2145, %v2830
    %v2955 = vadd.f32 %v2146, %v2832
    %v2956 = vadd.f32 %v2147, %v2528
    %v2957 = vadd.f32 %v2148, %v2530
    %v2958 = vadd.f32 %v2149, %v2681
    %v2959 = vadd.f32 %v2150, %v2683
    %v2960 = vadd.f32 %v2151, %v2834
    %v2961 = vadd.f32 %v2152, %v2836
    %v2962 = vadd.f32 %v2153, %v2534
    %v2963 = vadd.f32 %v2154, %v2536
    %v2964 = vadd.f32 %v2155, %v2687
    %v2965 = vadd.f32 %v2156, %v2689
    %v2966 = vadd.f32 %v2157, %v2840
    %v2967 = vadd.f32 %v2158, %v2842
    %v2968 = vadd.f32 %v2159, %v2538
    %v2969 = vadd.f32 %v2160, %v2540
    %v2970 = vadd.f32 %v2161, %v2691
    %v2971 = vadd.f32 %v2162, %v2693
    %v2972 = vadd.f32 %v2163, %v2844
    %v2973 = vadd.f32 %v2164, %v2846
    %v2974 = vadd.f32 %v2165, %v2544
    %v2975 = vadd.f32 %v2166, %v2546
    %v2976 = vadd.f32 %v2167, %v2697
    %v2977 = vadd.f32 %v2168, %v2699
    %v2978 = vadd.f32 %v2169, %v2850
    %v2979 = vadd.f32 %v2170, %v2852
    %v2980 = vadd.f32 %v2171, %v2548
    %v2981 = vadd.f32 %v2172, %v2550
    %v2982 = vadd.f32 %v2173, %v2701
    %v2983 = vadd.f32 %v2174, %v2703
    %v2984 = vadd.f32 %v2175, %v2854
    %v2985 = vadd.f32 %v2176, %v2856
    %v2986 = vadd.f32 %v2177, %v2554
    %v2987 = vadd.f32 %v2178, %v2556
    %v2988 = vadd.f32 %v2179, %v2707
    %v2989 = vadd.f32 %v2180, %v2709
    %v2990 = vadd.f32 %v2181, %v2860
    %v2991 = vadd.f32 %v2182, %v2862
    %v2992 = vadd.f32 %v2183, %v2558
    %v2993 = vadd.f32 %v2184, %v2560
    %v2994 = vadd.f32 %v2185, %v2711
    %v2995 = vadd.f32 %v2186, %v2713
    %v2996 = vadd.f32 %v2187, %v2864
    %v2997 = vadd.f32 %v2188, %v2866
    %v2998 = vadd.f32 %v2189, %v2564
    %v2999 = vadd.f32 %v2190, %v2566
    %v3000 = vadd.f32 %v2191, %v2717
    %v3001 = vadd.f32 %v2192, %v2719
    %v3002 = vadd.f32 %v2193, %v2870
    %v3003 = vadd.f32 %v2194, %v2872
    %v3004 = vadd.f32 %v2195, %v2568
    %v3005 = vadd.f32 %v2196, %v2570
    %v3006 = vadd.f32 %v2197, %v2721
    %v3007 = vadd.f32 %v2198, %v2723
    %v3008 = vadd.f32 %v2199, %v2874
    %v3009 = vadd.f32 %v2200, %v2876
    %v3010 = vadd.f32 %v2201, %v2574
    %v3011 = vadd.f32 %v2202, %v2576
    %v3012 = vadd.f32 %v2203, %v2727
    %v3013 = vadd.f32 %v2204, %v2729
    %v3014 = vadd.f32 %v2205, %v2880
    %v3015 = vadd.f32 %v2206, %v2882
    %v3016 = vadd.f32 %v2207, %v2578
    %v3017 = vadd.f32 %v2208, %v2580
    %v3018 = vadd.f32 %v2209, %v2731
    %v3019 = vadd.f32 %v2210, %v2733
    %v3020 = vadd.f32 %v2211, %v2884
    %v3021 = vadd.f32 %v2212, %v2886
    %v3022 = vadd.f32 %v2213, %v2584
    %v3023 = vadd.f32 %v2214, %v2586
    %v3024 = vadd.f32 %v2215, %v2737
    %v3025 = vadd.f32 %v2216, %v2739
    %v3026 = vadd.f32 %v2217, %v2890
    %v3027 = vadd.f32 %v2218, %v2892
    %v3028 = vadd.f32 %v2219, %v2588
    %v3029 = vadd.f32 %v2220, %v2590
    %v3030 = vadd.f32 %v2221, %v2741
    %v3031 = vadd.f32 %v2222, %v2743
    %v3032 = vadd.f32 %v2223, %v2894
    %v3033 = vadd.f32 %v2224, %v2896
    %v3034 = vadd.f32 %v2225, %v2594
    %v3035 = vadd.f32 %v2226, %v2596
    %v3036 = vadd.f32 %v2227, %v2747
    %v3037 = vadd.f32 %v2228, %v2749
    %v3038 = vadd.f32 %v2229, %v2900
    %v3039 = vadd.f32 %v2230, %v2902
    %v3040 = vadd.f32 %v2231, %v2598
    %v3041 = vadd.f32 %v2232, %v2600
    %v3042 = vadd.f32 %v2233, %v2751
    %v3043 = vadd.f32 %v2234, %v2753
    %v3044 = vadd.f32 %v2235, %v2904
    %v3045 = vadd.f32 %v2236, %v2906
    %v3046 = vadd.f32 %v2237, %v2604
    %v3047 = vadd.f32 %v2238, %v2606
    %v3048 = vadd.f32 %v2239, %v2757
    %v3049 = vadd.f32 %v2240, %v2759
    %v3050 = vadd.f32 %v2241, %v2910
    %v3051 = vadd.f32 %v2242, %v2912
    %v3052 = vadd.f32 %v2243, %v2608
    %v3053 = vadd.f32 %v2244, %v2610
    %v3054 = vadd.f32 %v2245, %v2761
    %v3055 = vadd.f32 %v2246, %v2763
    %v3056 = vadd.f32 %v2247, %v2914
    %v3057 = vadd.f32 %v2248, %v2916
    %v3058 = vadd.f32 %v2249, %v2614
    %v3059 = vadd.f32 %v2250, %v2616
    %v3060 = vadd.f32 %v2251, %v2767
    %v3061 = vadd.f32 %v2252, %v2769
    %v3062 = vadd.f32 %v2253, %v2920
    %v3063 = vadd.f32 %v2254, %v2922
    %v3064 = vadd.f32 %v2255, %v2618
    %v3065 = vadd.f32 %v2256, %v2620
    %v3066 = vadd.f32 %v2257, %v2771
    %v3067 = vadd.f32 %v2258, %v2773
    %v3068 = vadd.f32 %v2259, %v2924
    %v3069 = vadd.f32 %v2260, %v2926
    %v3070 = vadd.f32 %v2261, %v2624
    %v3071 = vadd.f32 %v2262, %v2626
    %v3072 = vadd.f32 %v2263, %v2777
    %v3073 = vadd.f32 %v2264, %v2779
    %v3074 = vadd.f32 %v2265, %v2930
    %v3075 = vadd.f32 %v2266, %v2932
    %v3076 = vadd.f32 %v2267, %v2628
    %v3077 = vadd.f32 %v2268, %v2630
    %v3078 = vadd.f32 %v2269, %v2781
    %v3079 = vadd.f32 %v2270, %v2783
    %v3080 = vadd.f32 %v2271, %v2934
    %v3081 = vadd.f32 %v2272, %v2936
    %s3082 = scalar_lea.vmem %s0, 16
    %v3083 = vld [vmem:[%s3082] sm:$0xf]
    %v3084 = vld [vmem:[%s3082 + $0x4] sm:$0xf]
    %v3085 = vld [vmem:[%s3082 + $0x8] sm:$0xf]
    %v3086 = vld [vmem:[%s3082 + $0xc] sm:$0xf]
    %v3087 = vld [vmem:[%s3082 + $0x10] sm:$0xf]
    %v3088 = vld [vmem:[%s3082 + $0x14] sm:$0xf]
    %v3089 = vld [vmem:[%s3082 + $0x18] sm:$0xf]
    %v3090 = vld [vmem:[%s3082 + $0x1c] sm:$0xf]
    %v3091 = vld [vmem:[%s3082 + $0x20] sm:$0xf]
    %v3092 = vld [vmem:[%s3082 + $0x24] sm:$0xf]
    %v3093 = vld [vmem:[%s3082 + $0x28] sm:$0xf]
    %v3094 = vld [vmem:[%s3082 + $0x2c] sm:$0xf]
    %v3095 = vld [vmem:[%s3082 + $0x30] sm:$0xf]
    %v3096 = vld [vmem:[%s3082 + $0x34] sm:$0xf]
    %v3097 = vld [vmem:[%s3082 + $0x38] sm:$0xf]
    %v3098 = vld [vmem:[%s3082 + $0x3c] sm:$0xf]
    %v3099 = vld [vmem:[%s3082 + $0x40] sm:$0xf]
    %v3100 = vld [vmem:[%s3082 + $0x44] sm:$0xf]
    %v3101 = vld [vmem:[%s3082 + $0x48] sm:$0xf]
    %v3102 = vld [vmem:[%s3082 + $0x4c] sm:$0xf]
    %v3103 = vld [vmem:[%s3082 + $0x50] sm:$0xf]
    %v3104 = vld [vmem:[%s3082 + $0x54] sm:$0xf]
    %v3105 = vld [vmem:[%s3082 + $0x58] sm:$0xf]
    %v3106 = vld [vmem:[%s3082 + $0x5c] sm:$0xf]
    %s3107 = scalar_lea.vmem [#allocation4], 384
    %v3108 = vld [vmem:[%s3107] sm:$0xff]
    %v3109 = vld [vmem:[%s3107 + $0x8] sm:$0xff]
    %v3110 = vld [vmem:[%s3107 + $0x10] sm:$0xff]
    %v3111 = vld [vmem:[%s3107 + $0x18] sm:$0xff]
    %v3112 = vld [vmem:[%s3107 + $0x20] sm:$0xff]
    %v3113 = vld [vmem:[%s3107 + $0x28] sm:$0xff]
    %v3114 = vld [vmem:[%s3107 + $0x30] sm:$0xff]
    %v3115 = vld [vmem:[%s3107 + $0x38] sm:$0xff]
    %v3116 = vld [vmem:[%s3107 + $0x40] sm:$0xff]
    %v3117 = vld [vmem:[%s3107 + $0x48] sm:$0x33]
    %v3118 = vld [vmem:[%s3107 + $0x50] sm:$0x33]
    %v3119 = vld [vmem:[%s3107 + $0x58] sm:$0x33]
    %v3144 = vunpack.c.l.b16 %v3083
    %v3145 = vunpack.c.l.b16 %v3084
    %v3146 = vunpack.c.l.b16 %v3085
    %v3147 = vunpack.c.l.b16 %v3086
    %v3148 = vunpack.c.l.b16 %v3087
    %v3149 = vunpack.c.l.b16 %v3088
    %v3150 = vunpack.c.l.b16 %v3089
    %v3151 = vunpack.c.l.b16 %v3090
    %v3152 = vunpack.c.l.b16 %v3091
    %v3153 = vunpack.c.l.b16 %v3092
    %v3154 = vunpack.c.l.b16 %v3093
    %v3155 = vunpack.c.l.b16 %v3094
    %v3156 = vunpack.c.l.b16 %v3095
    %v3157 = vunpack.c.l.b16 %v3096
    %v3158 = vunpack.c.l.b16 %v3097
    %v3159 = vunpack.c.l.b16 %v3098
    %v3160 = vunpack.c.l.b16 %v3099
    %v3161 = vunpack.c.l.b16 %v3100
    %v3162 = vunpack.c.l.b16 %v3101
    %v3163 = vunpack.c.l.b16 %v3102
    %v3164 = vunpack.c.l.b16 %v3103
    %v3165 = vunpack.c.l.b16 %v3104
    %v3166 = vunpack.c.l.b16 %v3105
    %v3167 = vunpack.c.l.b16 %v3106
    %v3168 = vpack.c.b16 %v3145, %v3144
    %v3169 = vpack.c.b16 %v3147, %v3146
    %v3170 = vpack.c.b16 %v3149, %v3148
    %v3171 = vpack.c.b16 %v3151, %v3150
    %v3172 = vpack.c.b16 %v3153, %v3152
    %v3173 = vpack.c.b16 %v3155, %v3154
    %v3174 = vpack.c.b16 %v3157, %v3156
    %v3175 = vpack.c.b16 %v3159, %v3158
    %v3176 = vpack.c.b16 %v3161, %v3160
    %v3177 = vpack.c.b16 %v3163, %v3162
    %v3178 = vpack.c.b16 %v3165, %v3164
    %v3179 = vpack.c.b16 %v3167, %v3166
    %v3192 = vunpack.c.l.b16 %v3108
    %v3193 = vunpack.c.h.b16 %v3108
    %v3194 = vunpack.c.l.b16 %v3109
    %v3195 = vunpack.c.h.b16 %v3109
    %v3196 = vunpack.c.l.b16 %v3110
    %v3197 = vunpack.c.h.b16 %v3110
    %v3198 = vunpack.c.l.b16 %v3111
    %v3199 = vunpack.c.h.b16 %v3111
    %v3200 = vunpack.c.l.b16 %v3112
    %v3201 = vunpack.c.h.b16 %v3112
    %v3202 = vunpack.c.l.b16 %v3113
    %v3203 = vunpack.c.h.b16 %v3113
    %v3204 = vunpack.c.l.b16 %v3114
    %v3205 = vunpack.c.h.b16 %v3114
    %v3206 = vunpack.c.l.b16 %v3115
    %v3207 = vunpack.c.h.b16 %v3115
    %v3208 = vunpack.c.l.b16 %v3116
    %v3209 = vunpack.c.h.b16 %v3116
    %v3210 = vunpack.c.l.b16 %v3117
    %v3211 = vunpack.c.h.b16 %v3117
    %v3212 = vunpack.c.l.b16 %v3118
    %v3213 = vunpack.c.h.b16 %v3118
    %v3214 = vunpack.c.l.b16 %v3119
    %v3215 = vunpack.c.h.b16 %v3119
    %v3216 = vpack.c.b16 %v3198, %v3192
    %v3217 = vpack.c.b16 %v3199, %v3193
    %v3218 = vpack.c.b16 %v3200, %v3194
    %v3219 = vpack.c.b16 %v3201, %v3195
    %v3220 = vpack.c.b16 %v3202, %v3196
    %v3221 = vpack.c.b16 %v3203, %v3197
    %v3222 = vpack.c.b16 %v3210, %v3204
    %v3223 = vpack.c.b16 %v3211, %v3205
    %v3224 = vpack.c.b16 %v3212, %v3206
    %v3225 = vpack.c.b16 %v3213, %v3207
    %v3226 = vpack.c.b16 %v3214, %v3208
    %v3227 = vpack.c.b16 %v3215, %v3209
    %v3235 = vsel %vm322, %v3168, 0
    %v3238 = vsel %vm322, %v3169, 0
    %v3241 = vsel %vm322, %v3170, 0
    %v3244 = vsel %vm322, %v3171, 0
    %v3247 = vsel %vm322, %v3172, 0
    %v3250 = vsel %vm322, %v3173, 0
    %v3253 = vsel %vm322, %v3174, 0
    %v3256 = vsel %vm322, %v3175, 0
    %v3259 = vsel %vm322, %v3176, 0
    %v3262 = vsel %vm322, %v3177, 0
    %v3265 = vsel %vm322, %v3178, 0
    %v3268 = vsel %vm322, %v3179, 0
    %v3271 = vsel %vm359, %v3222, 0
    %v3274 = vsel %vm359, %v3223, 0
    %v3277 = vsel %vm359, %v3224, 0
    %v3280 = vsel %vm359, %v3225, 0
    %v3283 = vsel %vm359, %v3226, 0
    %v3286 = vsel %vm359, %v3227, 0
    %3288 = vmatprep.subr.bf16.mxu0 %v3217
    %3289 = vmatpush1.bf16.msra.mxu0 %v3216
    %3290 = vmatprep.subr.bf16.mxu0 %v3274
    %3291 = vmatpush1.bf16.msra.mxu0 %v3271
    %3292 = vmatprep.subr.bf16.mxu0 0
    %3293 = vmatpush1.bf16.msra.mxu0 0
    %3294 = vmatprep.subr.bf16.mxu0 0
    %3295 = vmatpush1.bf16.msra.mxu0 0
    %3296 = vmatprep.subr.bf16.mxu0 0
    %3297 = vmatpush1.bf16.msra.mxu0 0
    %3298 = vmatprep.subr.bf16.mxu0 0
    %3299 = vmatpush1.bf16.msra.mxu0 0
    %3300 = vmatprep.subr.bf16.mxu0 0
    %3301 = vmatpush1.bf16.msra.mxu0 0
    %3302 = vmatprep.subr.bf16.mxu0 0
    %3303 = vmatpush1.bf16.msra.mxu0 0
    %3304 = vmatprep.subr.bf16.mxu0 0
    %3305 = vmatpush1.bf16.msra.mxu0 0
    %3306 = vmatprep.subr.bf16.mxu0 0
    %3307 = vmatpush1.bf16.msra.mxu0 0
    %3308 = vmatprep.subr.bf16.mxu0 0
    %3309 = vmatpush1.bf16.msra.mxu0 0
    %3310 = vmatprep.subr.bf16.mxu0 0
    %3311 = vmatpush1.bf16.msra.mxu0 0
    %3312 = vmatprep.subr.bf16.mxu0 0
    %3313 = vmatpush1.bf16.msra.mxu0 0
    %3314 = vmatprep.subr.bf16.mxu0 0
    %3315 = vmatpush1.bf16.msra.mxu0 0
    %3316 = vmatprep.subr.bf16.mxu0 0
    %3317 = vmatpush1.bf16.msra.mxu0 0
    %3318 = vmatprep.subr.bf16.mxu0 0
    %3319 = vmatpush1.bf16.msra.mxu0 0
    %3320 = vmatprep.mubr.bf16.mxu0 0
    %3321 = vmatmul.mubr.bf16.gmra.mrb[0].mxu0 %v3235
    %v3322 = vpop.f32.mrb[0].mxu0
    %v3323 = vadd.f32 0.0, %v3322
    %v3324 = vpop.f32.mrb[0].mxu0
    %v3325 = vadd.f32 0.0, %v3324
    %v3326 = vpop.f32.mrb[0].mxu0
    %v3327 = vadd.f32 0.0, %v3326
    %v3328 = vpop.f32.mrb[0].mxu0
    %v3329 = vadd.f32 0.0, %v3328
    %3330 = vmatprep.mubr.bf16.mxu0 0
    %3331 = vmatmul.mubr.bf16.gmra.mrb[0].mxu0 %v3238
    %v3332 = vpop.f32.mrb[0].mxu0
    %v3333 = vadd.f32 0.0, %v3332
    %v3334 = vpop.f32.mrb[0].mxu0
    %v3335 = vadd.f32 0.0, %v3334
    %v3336 = vpop.f32.mrb[0].mxu0
    %v3337 = vadd.f32 0.0, %v3336
    %v3338 = vpop.f32.mrb[0].mxu0
    %v3339 = vadd.f32 0.0, %v3338
    %3340 = vmatprep.mubr.bf16.mxu0 0
    %3341 = vmatmul.mubr.bf16.gmra.mrb[0].mxu0 %v3241
    %v3342 = vpop.f32.mrb[0].mxu0
    %v3343 = vadd.f32 0.0, %v3342
    %v3344 = vpop.f32.mrb[0].mxu0
    %v3345 = vadd.f32 0.0, %v3344
    %v3346 = vpop.f32.mrb[0].mxu0
    %v3347 = vadd.f32 0.0, %v3346
    %v3348 = vpop.f32.mrb[0].mxu0
    %v3349 = vadd.f32 0.0, %v3348
    %3350 = vmatprep.mubr.bf16.mxu0 0
    %3351 = vmatmul.mubr.bf16.gmra.mrb[0].mxu0 %v3244
    %v3352 = vpop.f32.mrb[0].mxu0
    %v3353 = vadd.f32 0.0, %v3352
    %v3354 = vpop.f32.mrb[0].mxu0
    %v3355 = vadd.f32 0.0, %v3354
    %v3356 = vpop.f32.mrb[0].mxu0
    %v3357 = vadd.f32 0.0, %v3356
    %v3358 = vpop.f32.mrb[0].mxu0
    %v3359 = vadd.f32 0.0, %v3358
    %3360 = vmatprep.mubr.bf16.mxu0 0
    %3361 = vmatmul.mubr.bf16.gmra.mrb[0].mxu0 %v3247
    %v3362 = vpop.f32.mrb[0].mxu0
    %v3363 = vadd.f32 0.0, %v3362
    %v3364 = vpop.f32.mrb[0].mxu0
    %v3365 = vadd.f32 0.0, %v3364
    %v3366 = vpop.f32.mrb[0].mxu0
    %v3367 = vadd.f32 0.0, %v3366
    %v3368 = vpop.f32.mrb[0].mxu0
    %v3369 = vadd.f32 0.0, %v3368
    %3370 = vmatprep.mubr.bf16.mxu0 0
    %3371 = vmatmul.mubr.bf16.gmra.mrb[0].mxu0 %v3250
    %v3372 = vpop.f32.mrb[0].mxu0
    %v3373 = vadd.f32 0.0, %v3372
    %v3374 = vpop.f32.mrb[0].mxu0
    %v3375 = vadd.f32 0.0, %v3374
    %v3376 = vpop.f32.mrb[0].mxu0
    %v3377 = vadd.f32 0.0, %v3376
    %v3378 = vpop.f32.mrb[0].mxu0
    %v3379 = vadd.f32 0.0, %v3378
    %3380 = vmatprep.mubr.bf16.mxu0 0
    %3381 = vmatmul.mubr.bf16.gmra.mrb[0].mxu0 %v3253
    %v3382 = vpop.f32.mrb[0].mxu0
    %v3383 = vadd.f32 0.0, %v3382
    %v3384 = vpop.f32.mrb[0].mxu0
    %v3385 = vadd.f32 0.0, %v3384
    %v3386 = vpop.f32.mrb[0].mxu0
    %v3387 = vadd.f32 0.0, %v3386
    %v3388 = vpop.f32.mrb[0].mxu0
    %v3389 = vadd.f32 0.0, %v3388
    %3390 = vmatprep.mubr.bf16.mxu0 0
    %3391 = vmatmul.mubr.bf16.gmra.mrb[0].mxu0 %v3256
    %v3392 = vpop.f32.mrb[0].mxu0
    %v3393 = vadd.f32 0.0, %v3392
    %v3394 = vpop.f32.mrb[0].mxu0
    %v3395 = vadd.f32 0.0, %v3394
    %v3396 = vpop.f32.mrb[0].mxu0
    %v3397 = vadd.f32 0.0, %v3396
    %v3398 = vpop.f32.mrb[0].mxu0
    %v3399 = vadd.f32 0.0, %v3398
    %3400 = vmatprep.mubr.bf16.mxu0 0
    %3401 = vmatmul.mubr.bf16.gmra.mrb[0].mxu0 %v3259
    %v3402 = vpop.f32.mrb[0].mxu0
    %v3403 = vadd.f32 0.0, %v3402
    %v3404 = vpop.f32.mrb[0].mxu0
    %v3405 = vadd.f32 0.0, %v3404
    %v3406 = vpop.f32.mrb[0].mxu0
    %v3407 = vadd.f32 0.0, %v3406
    %v3408 = vpop.f32.mrb[0].mxu0
    %v3409 = vadd.f32 0.0, %v3408
    %3410 = vmatprep.mubr.bf16.mxu0 0
    %3411 = vmatmul.mubr.bf16.gmra.mrb[0].mxu0 %v3262
    %v3412 = vpop.f32.mrb[0].mxu0
    %v3413 = vadd.f32 0.0, %v3412
    %v3414 = vpop.f32.mrb[0].mxu0
    %v3415 = vadd.f32 0.0, %v3414
    %v3416 = vpop.f32.mrb[0].mxu0
    %v3417 = vadd.f32 0.0, %v3416
    %v3418 = vpop.f32.mrb[0].mxu0
    %v3419 = vadd.f32 0.0, %v3418
    %3420 = vmatprep.mubr.bf16.mxu0 0
    %3421 = vmatmul.mubr.bf16.gmra.mrb[0].mxu0 %v3265
    %v3422 = vpop.f32.mrb[0].mxu0
    %v3423 = vadd.f32 0.0, %v3422
    %v3424 = vpop.f32.mrb[0].mxu0
    %v3425 = vadd.f32 0.0, %v3424
    %v3426 = vpop.f32.mrb[0].mxu0
    %v3427 = vadd.f32 0.0, %v3426
    %v3428 = vpop.f32.mrb[0].mxu0
    %v3429 = vadd.f32 0.0, %v3428
    %3430 = vmatprep.mubr.bf16.mxu0 0
    %3431 = vmatmul.mubr.bf16.gmra.mrb[0].mxu0 %v3268
    %v3432 = vpop.f32.mrb[0].mxu0
    %v3433 = vadd.f32 0.0, %v3432
    %v3434 = vpop.f32.mrb[0].mxu0
    %v3435 = vadd.f32 0.0, %v3434
    %v3436 = vpop.f32.mrb[0].mxu0
    %v3437 = vadd.f32 0.0, %v3436
    %v3438 = vpop.f32.mrb[0].mxu0
    %v3439 = vadd.f32 0.0, %v3438
    %3440 = vdwg.mxu0
    %3441 = vmatprep.subr.bf16.mxu0 %v3219
    %3442 = vmatpush1.bf16.msra.mxu0 %v3218
    %3443 = vmatprep.subr.bf16.mxu0 %v3280
    %3444 = vmatpush1.bf16.msra.mxu0 %v3277
    %3445 = vmatprep.subr.bf16.mxu0 0
    %3446 = vmatpush1.bf16.msra.mxu0 0
    %3447 = vmatprep.subr.bf16.mxu0 0
    %3448 = vmatpush1.bf16.msra.mxu0 0
    %3449 = vmatprep.subr.bf16.mxu0 0
    %3450 = vmatpush1.bf16.msra.mxu0 0
    %3451 = vmatprep.subr.bf16.mxu0 0
    %3452 = vmatpush1.bf16.msra.mxu0 0
    %3453 = vmatprep.subr.bf16.mxu0 0
    %3454 = vmatpush1.bf16.msra.mxu0 0
    %3455 = vmatprep.subr.bf16.mxu0 0
    %3456 = vmatpush1.bf16.msra.mxu0 0
    %3457 = vmatprep.subr.bf16.mxu0 0
    %3458 = vmatpush1.bf16.msra.mxu0 0
    %3459 = vmatprep.subr.bf16.mxu0 0
    %3460 = vmatpush1.bf16.msra.mxu0 0
    %3461 = vmatprep.subr.bf16.mxu0 0
    %3462 = vmatpush1.bf16.msra.mxu0 0
    %3463 = vmatprep.subr.bf16.mxu0 0
    %3464 = vmatpush1.bf16.msra.mxu0 0
    %3465 = vmatprep.subr.bf16.mxu0 0
    %3466 = vmatpush1.bf16.msra.mxu0 0
    %3467 = vmatprep.subr.bf16.mxu0 0
    %3468 = vmatpush1.bf16.msra.mxu0 0
    %3469 = vmatprep.subr.bf16.mxu0 0
    %3470 = vmatpush1.bf16.msra.mxu0 0
    %3471 = vmatprep.subr.bf16.mxu0 0
    %3472 = vmatpush1.bf16.msra.mxu0 0
    %3473 = vmatprep.mubr.bf16.mxu0 0
    %3474 = vmatmul.mubr.bf16.gmra.mrb[0].mxu0 %v3235
    %v3475 = vpop.f32.mrb[0].mxu0
    %v3476 = vadd.f32 0.0, %v3475
    %v3477 = vpop.f32.mrb[0].mxu0
    %v3478 = vadd.f32 0.0, %v3477
    %v3479 = vpop.f32.mrb[0].mxu0
    %v3480 = vadd.f32 0.0, %v3479
    %v3481 = vpop.f32.mrb[0].mxu0
    %v3482 = vadd.f32 0.0, %v3481
    %3483 = vmatprep.mubr.bf16.mxu0 0
    %3484 = vmatmul.mubr.bf16.gmra.mrb[0].mxu0 %v3238
    %v3485 = vpop.f32.mrb[0].mxu0
    %v3486 = vadd.f32 0.0, %v3485
    %v3487 = vpop.f32.mrb[0].mxu0
    %v3488 = vadd.f32 0.0, %v3487
    %v3489 = vpop.f32.mrb[0].mxu0
    %v3490 = vadd.f32 0.0, %v3489
    %v3491 = vpop.f32.mrb[0].mxu0
    %v3492 = vadd.f32 0.0, %v3491
    %3493 = vmatprep.mubr.bf16.mxu0 0
    %3494 = vmatmul.mubr.bf16.gmra.mrb[0].mxu0 %v3241
    %v3495 = vpop.f32.mrb[0].mxu0
    %v3496 = vadd.f32 0.0, %v3495
    %v3497 = vpop.f32.mrb[0].mxu0
    %v3498 = vadd.f32 0.0, %v3497
    %v3499 = vpop.f32.mrb[0].mxu0
    %v3500 = vadd.f32 0.0, %v3499
    %v3501 = vpop.f32.mrb[0].mxu0
    %v3502 = vadd.f32 0.0, %v3501
    %3503 = vmatprep.mubr.bf16.mxu0 0
    %3504 = vmatmul.mubr.bf16.gmra.mrb[0].mxu0 %v3244
    %v3505 = vpop.f32.mrb[0].mxu0
    %v3506 = vadd.f32 0.0, %v3505
    %v3507 = vpop.f32.mrb[0].mxu0
    %v3508 = vadd.f32 0.0, %v3507
    %v3509 = vpop.f32.mrb[0].mxu0
    %v3510 = vadd.f32 0.0, %v3509
    %v3511 = vpop.f32.mrb[0].mxu0
    %v3512 = vadd.f32 0.0, %v3511
    %3513 = vmatprep.mubr.bf16.mxu0 0
    %3514 = vmatmul.mubr.bf16.gmra.mrb[0].mxu0 %v3247
    %v3515 = vpop.f32.mrb[0].mxu0
    %v3516 = vadd.f32 0.0, %v3515
    %v3517 = vpop.f32.mrb[0].mxu0
    %v3518 = vadd.f32 0.0, %v3517
    %v3519 = vpop.f32.mrb[0].mxu0
    %v3520 = vadd.f32 0.0, %v3519
    %v3521 = vpop.f32.mrb[0].mxu0
    %v3522 = vadd.f32 0.0, %v3521
    %3523 = vmatprep.mubr.bf16.mxu0 0
    %3524 = vmatmul.mubr.bf16.gmra.mrb[0].mxu0 %v3250
    %v3525 = vpop.f32.mrb[0].mxu0
    %v3526 = vadd.f32 0.0, %v3525
    %v3527 = vpop.f32.mrb[0].mxu0
    %v3528 = vadd.f32 0.0, %v3527
    %v3529 = vpop.f32.mrb[0].mxu0
    %v3530 = vadd.f32 0.0, %v3529
    %v3531 = vpop.f32.mrb[0].mxu0
    %v3532 = vadd.f32 0.0, %v3531
    %3533 = vmatprep.mubr.bf16.mxu0 0
    %3534 = vmatmul.mubr.bf16.gmra.mrb[0].mxu0 %v3253
    %v3535 = vpop.f32.mrb[0].mxu0
    %v3536 = vadd.f32 0.0, %v3535
    %v3537 = vpop.f32.mrb[0].mxu0
    %v3538 = vadd.f32 0.0, %v3537
    %v3539 = vpop.f32.mrb[0].mxu0
    %v3540 = vadd.f32 0.0, %v3539
    %v3541 = vpop.f32.mrb[0].mxu0
    %v3542 = vadd.f32 0.0, %v3541
    %3543 = vmatprep.mubr.bf16.mxu0 0
    %3544 = vmatmul.mubr.bf16.gmra.mrb[0].mxu0 %v3256
    %v3545 = vpop.f32.mrb[0].mxu0
    %v3546 = vadd.f32 0.0, %v3545
    %v3547 = vpop.f32.mrb[0].mxu0
    %v3548 = vadd.f32 0.0, %v3547
    %v3549 = vpop.f32.mrb[0].mxu0
    %v3550 = vadd.f32 0.0, %v3549
    %v3551 = vpop.f32.mrb[0].mxu0
    %v3552 = vadd.f32 0.0, %v3551
    %3553 = vmatprep.mubr.bf16.mxu0 0
    %3554 = vmatmul.mubr.bf16.gmra.mrb[0].mxu0 %v3259
    %v3555 = vpop.f32.mrb[0].mxu0
    %v3556 = vadd.f32 0.0, %v3555
    %v3557 = vpop.f32.mrb[0].mxu0
    %v3558 = vadd.f32 0.0, %v3557
    %v3559 = vpop.f32.mrb[0].mxu0
    %v3560 = vadd.f32 0.0, %v3559
    %v3561 = vpop.f32.mrb[0].mxu0
    %v3562 = vadd.f32 0.0, %v3561
    %3563 = vmatprep.mubr.bf16.mxu0 0
    %3564 = vmatmul.mubr.bf16.gmra.mrb[0].mxu0 %v3262
    %v3565 = vpop.f32.mrb[0].mxu0
    %v3566 = vadd.f32 0.0, %v3565
    %v3567 = vpop.f32.mrb[0].mxu0
    %v3568 = vadd.f32 0.0, %v3567
    %v3569 = vpop.f32.mrb[0].mxu0
    %v3570 = vadd.f32 0.0, %v3569
    %v3571 = vpop.f32.mrb[0].mxu0
    %v3572 = vadd.f32 0.0, %v3571
    %3573 = vmatprep.mubr.bf16.mxu0 0
    %3574 = vmatmul.mubr.bf16.gmra.mrb[0].mxu0 %v3265
    %v3575 = vpop.f32.mrb[0].mxu0
    %v3576 = vadd.f32 0.0, %v3575
    %v3577 = vpop.f32.mrb[0].mxu0
    %v3578 = vadd.f32 0.0, %v3577
    %v3579 = vpop.f32.mrb[0].mxu0
    %v3580 = vadd.f32 0.0, %v3579
    %v3581 = vpop.f32.mrb[0].mxu0
    %v3582 = vadd.f32 0.0, %v3581
    %3583 = vmatprep.mubr.bf16.mxu0 0
    %3584 = vmatmul.mubr.bf16.gmra.mrb[0].mxu0 %v3268
    %v3585 = vpop.f32.mrb[0].mxu0
    %v3586 = vadd.f32 0.0, %v3585
    %v3587 = vpop.f32.mrb[0].mxu0
    %v3588 = vadd.f32 0.0, %v3587
    %v3589 = vpop.f32.mrb[0].mxu0
    %v3590 = vadd.f32 0.0, %v3589
    %v3591 = vpop.f32.mrb[0].mxu0
    %v3592 = vadd.f32 0.0, %v3591
    %3593 = vdwg.mxu0
    %3594 = vmatprep.subr.bf16.mxu0 %v3221
    %3595 = vmatpush1.bf16.msra.mxu0 %v3220
    %3596 = vmatprep.subr.bf16.mxu0 %v3286
    %3597 = vmatpush1.bf16.msra.mxu0 %v3283
    %3598 = vmatprep.subr.bf16.mxu0 0
    %3599 = vmatpush1.bf16.msra.mxu0 0
    %3600 = vmatprep.subr.bf16.mxu0 0
    %3601 = vmatpush1.bf16.msra.mxu0 0
    %3602 = vmatprep.subr.bf16.mxu0 0
    %3603 = vmatpush1.bf16.msra.mxu0 0
    %3604 = vmatprep.subr.bf16.mxu0 0
    %3605 = vmatpush1.bf16.msra.mxu0 0
    %3606 = vmatprep.subr.bf16.mxu0 0
    %3607 = vmatpush1.bf16.msra.mxu0 0
    %3608 = vmatprep.subr.bf16.mxu0 0
    %3609 = vmatpush1.bf16.msra.mxu0 0
    %3610 = vmatprep.subr.bf16.mxu0 0
    %3611 = vmatpush1.bf16.msra.mxu0 0
    %3612 = vmatprep.subr.bf16.mxu0 0
    %3613 = vmatpush1.bf16.msra.mxu0 0
    %3614 = vmatprep.subr.bf16.mxu0 0
    %3615 = vmatpush1.bf16.msra.mxu0 0
    %3616 = vmatprep.subr.bf16.mxu0 0
    %3617 = vmatpush1.bf16.msra.mxu0 0
    %3618 = vmatprep.subr.bf16.mxu0 0
    %3619 = vmatpush1.bf16.msra.mxu0 0
    %3620 = vmatprep.subr.bf16.mxu0 0
    %3621 = vmatpush1.bf16.msra.mxu0 0
    %3622 = vmatprep.subr.bf16.mxu0 0
    %3623 = vmatpush1.bf16.msra.mxu0 0
    %3624 = vmatprep.subr.bf16.mxu0 0
    %3625 = vmatpush1.bf16.msra.mxu0 0
    %3626 = vmatprep.mubr.bf16.mxu0 0
    %3627 = vmatmul.mubr.bf16.gmra.mrb[0].mxu0 %v3235
    %v3628 = vpop.f32.mrb[0].mxu0
    %v3629 = vadd.f32 0.0, %v3628
    %v3630 = vpop.f32.mrb[0].mxu0
    %v3631 = vadd.f32 0.0, %v3630
    %v3632 = vpop.f32.mrb[0].mxu0
    %v3633 = vadd.f32 0.0, %v3632
    %v3634 = vpop.f32.mrb[0].mxu0
    %v3635 = vadd.f32 0.0, %v3634
    %3636 = vmatprep.mubr.bf16.mxu0 0
    %3637 = vmatmul.mubr.bf16.gmra.mrb[0].mxu0 %v3238
    %v3638 = vpop.f32.mrb[0].mxu0
    %v3639 = vadd.f32 0.0, %v3638
    %v3640 = vpop.f32.mrb[0].mxu0
    %v3641 = vadd.f32 0.0, %v3640
    %v3642 = vpop.f32.mrb[0].mxu0
    %v3643 = vadd.f32 0.0, %v3642
    %v3644 = vpop.f32.mrb[0].mxu0
    %v3645 = vadd.f32 0.0, %v3644
    %3646 = vmatprep.mubr.bf16.mxu0 0
    %3647 = vmatmul.mubr.bf16.gmra.mrb[0].mxu0 %v3241
    %v3648 = vpop.f32.mrb[0].mxu0
    %v3649 = vadd.f32 0.0, %v3648
    %v3650 = vpop.f32.mrb[0].mxu0
    %v3651 = vadd.f32 0.0, %v3650
    %v3652 = vpop.f32.mrb[0].mxu0
    %v3653 = vadd.f32 0.0, %v3652
    %v3654 = vpop.f32.mrb[0].mxu0
    %v3655 = vadd.f32 0.0, %v3654
    %3656 = vmatprep.mubr.bf16.mxu0 0
    %3657 = vmatmul.mubr.bf16.gmra.mrb[0].mxu0 %v3244
    %v3658 = vpop.f32.mrb[0].mxu0
    %v3659 = vadd.f32 0.0, %v3658
    %v3660 = vpop.f32.mrb[0].mxu0
    %v3661 = vadd.f32 0.0, %v3660
    %v3662 = vpop.f32.mrb[0].mxu0
    %v3663 = vadd.f32 0.0, %v3662
    %v3664 = vpop.f32.mrb[0].mxu0
    %v3665 = vadd.f32 0.0, %v3664
    %3666 = vmatprep.mubr.bf16.mxu0 0
    %3667 = vmatmul.mubr.bf16.gmra.mrb[0].mxu0 %v3247
    %v3668 = vpop.f32.mrb[0].mxu0
    %v3669 = vadd.f32 0.0, %v3668
    %v3670 = vpop.f32.mrb[0].mxu0
    %v3671 = vadd.f32 0.0, %v3670
    %v3672 = vpop.f32.mrb[0].mxu0
    %v3673 = vadd.f32 0.0, %v3672
    %v3674 = vpop.f32.mrb[0].mxu0
    %v3675 = vadd.f32 0.0, %v3674
    %3676 = vmatprep.mubr.bf16.mxu0 0
    %3677 = vmatmul.mubr.bf16.gmra.mrb[0].mxu0 %v3250
    %v3678 = vpop.f32.mrb[0].mxu0
    %v3679 = vadd.f32 0.0, %v3678
    %v3680 = vpop.f32.mrb[0].mxu0
    %v3681 = vadd.f32 0.0, %v3680
    %v3682 = vpop.f32.mrb[0].mxu0
    %v3683 = vadd.f32 0.0, %v3682
    %v3684 = vpop.f32.mrb[0].mxu0
    %v3685 = vadd.f32 0.0, %v3684
    %3686 = vmatprep.mubr.bf16.mxu0 0
    %3687 = vmatmul.mubr.bf16.gmra.mrb[0].mxu0 %v3253
    %v3688 = vpop.f32.mrb[0].mxu0
    %v3689 = vadd.f32 0.0, %v3688
    %v3690 = vpop.f32.mrb[0].mxu0
    %v3691 = vadd.f32 0.0, %v3690
    %v3692 = vpop.f32.mrb[0].mxu0
    %v3693 = vadd.f32 0.0, %v3692
    %v3694 = vpop.f32.mrb[0].mxu0
    %v3695 = vadd.f32 0.0, %v3694
    %3696 = vmatprep.mubr.bf16.mxu0 0
    %3697 = vmatmul.mubr.bf16.gmra.mrb[0].mxu0 %v3256
    %v3698 = vpop.f32.mrb[0].mxu0
    %v3699 = vadd.f32 0.0, %v3698
    %v3700 = vpop.f32.mrb[0].mxu0
    %v3701 = vadd.f32 0.0, %v3700
    %v3702 = vpop.f32.mrb[0].mxu0
    %v3703 = vadd.f32 0.0, %v3702
    %v3704 = vpop.f32.mrb[0].mxu0
    %v3705 = vadd.f32 0.0, %v3704
    %3706 = vmatprep.mubr.bf16.mxu0 0
    %3707 = vmatmul.mubr.bf16.gmra.mrb[0].mxu0 %v3259
    %v3708 = vpop.f32.mrb[0].mxu0
    %v3709 = vadd.f32 0.0, %v3708
    %v3710 = vpop.f32.mrb[0].mxu0
    %v3711 = vadd.f32 0.0, %v3710
    %v3712 = vpop.f32.mrb[0].mxu0
    %v3713 = vadd.f32 0.0, %v3712
    %v3714 = vpop.f32.mrb[0].mxu0
    %v3715 = vadd.f32 0.0, %v3714
    %3716 = vmatprep.mubr.bf16.mxu0 0
    %3717 = vmatmul.mubr.bf16.gmra.mrb[0].mxu0 %v3262
    %v3718 = vpop.f32.mrb[0].mxu0
    %v3719 = vadd.f32 0.0, %v3718
    %v3720 = vpop.f32.mrb[0].mxu0
    %v3721 = vadd.f32 0.0, %v3720
    %v3722 = vpop.f32.mrb[0].mxu0
    %v3723 = vadd.f32 0.0, %v3722
    %v3724 = vpop.f32.mrb[0].mxu0
    %v3725 = vadd.f32 0.0, %v3724
    %3726 = vmatprep.mubr.bf16.mxu0 0
    %3727 = vmatmul.mubr.bf16.gmra.mrb[0].mxu0 %v3265
    %v3728 = vpop.f32.mrb[0].mxu0
    %v3729 = vadd.f32 0.0, %v3728
    %v3730 = vpop.f32.mrb[0].mxu0
    %v3731 = vadd.f32 0.0, %v3730
    %v3732 = vpop.f32.mrb[0].mxu0
    %v3733 = vadd.f32 0.0, %v3732
    %v3734 = vpop.f32.mrb[0].mxu0
    %v3735 = vadd.f32 0.0, %v3734
    %3736 = vmatprep.mubr.bf16.mxu0 0
    %3737 = vmatmul.mubr.bf16.gmra.mrb[0].mxu0 %v3268
    %v3738 = vpop.f32.mrb[0].mxu0
    %v3739 = vadd.f32 0.0, %v3738
    %v3740 = vpop.f32.mrb[0].mxu0
    %v3741 = vadd.f32 0.0, %v3740
    %v3742 = vpop.f32.mrb[0].mxu0
    %v3743 = vadd.f32 0.0, %v3742
    %v3744 = vpop.f32.mrb[0].mxu0
    %v3745 = vadd.f32 0.0, %v3744
    %3746 = vdwg.mxu0
    %v3747 = vadd.f32 %v2938, %v3323
    %v3748 = vadd.f32 %v2939, %v3325
    %v3749 = vadd.f32 %v2940, %v3476
    %v3750 = vadd.f32 %v2941, %v3478
    %v3751 = vadd.f32 %v2942, %v3629
    %v3752 = vadd.f32 %v2943, %v3631
    %v3753 = vadd.f32 %v2944, %v3327
    %v3754 = vadd.f32 %v2945, %v3329
    %v3755 = vadd.f32 %v2946, %v3480
    %v3756 = vadd.f32 %v2947, %v3482
    %v3757 = vadd.f32 %v2948, %v3633
    %v3758 = vadd.f32 %v2949, %v3635
    %v3759 = vadd.f32 %v2950, %v3333
    %v3760 = vadd.f32 %v2951, %v3335
    %v3761 = vadd.f32 %v2952, %v3486
    %v3762 = vadd.f32 %v2953, %v3488
    %v3763 = vadd.f32 %v2954, %v3639
    %v3764 = vadd.f32 %v2955, %v3641
    %v3765 = vadd.f32 %v2956, %v3337
    %v3766 = vadd.f32 %v2957, %v3339
    %v3767 = vadd.f32 %v2958, %v3490
    %v3768 = vadd.f32 %v2959, %v3492
    %v3769 = vadd.f32 %v2960, %v3643
    %v3770 = vadd.f32 %v2961, %v3645
    %v3771 = vadd.f32 %v2962, %v3343
    %v3772 = vadd.f32 %v2963, %v3345
    %v3773 = vadd.f32 %v2964, %v3496
    %v3774 = vadd.f32 %v2965, %v3498
    %v3775 = vadd.f32 %v2966, %v3649
    %v3776 = vadd.f32 %v2967, %v3651
    %v3777 = vadd.f32 %v2968, %v3347
    %v3778 = vadd.f32 %v2969, %v3349
    %v3779 = vadd.f32 %v2970, %v3500
    %v3780 = vadd.f32 %v2971, %v3502
    %v3781 = vadd.f32 %v2972, %v3653
    %v3782 = vadd.f32 %v2973, %v3655
    %v3783 = vadd.f32 %v2974, %v3353
    %v3784 = vadd.f32 %v2975, %v3355
    %v3785 = vadd.f32 %v2976, %v3506
    %v3786 = vadd.f32 %v2977, %v3508
    %v3787 = vadd.f32 %v2978, %v3659
    %v3788 = vadd.f32 %v2979, %v3661
    %v3789 = vadd.f32 %v2980, %v3357
    %v3790 = vadd.f32 %v2981, %v3359
    %v3791 = vadd.f32 %v2982, %v3510
    %v3792 = vadd.f32 %v2983, %v3512
    %v3793 = vadd.f32 %v2984, %v3663
    %v3794 = vadd.f32 %v2985, %v3665
    %v3795 = vadd.f32 %v2986, %v3363
    %v3796 = vadd.f32 %v2987, %v3365
    %v3797 = vadd.f32 %v2988, %v3516
    %v3798 = vadd.f32 %v2989, %v3518
    %v3799 = vadd.f32 %v2990, %v3669
    %v3800 = vadd.f32 %v2991, %v3671
    %v3801 = vadd.f32 %v2992, %v3367
    %v3802 = vadd.f32 %v2993, %v3369
    %v3803 = vadd.f32 %v2994, %v3520
    %v3804 = vadd.f32 %v2995, %v3522
    %v3805 = vadd.f32 %v2996, %v3673
    %v3806 = vadd.f32 %v2997, %v3675
    %v3807 = vadd.f32 %v2998, %v3373
    %v3808 = vadd.f32 %v2999, %v3375
    %v3809 = vadd.f32 %v3000, %v3526
    %v3810 = vadd.f32 %v3001, %v3528
    %v3811 = vadd.f32 %v3002, %v3679
    %v3812 = vadd.f32 %v3003, %v3681
    %v3813 = vadd.f32 %v3004, %v3377
    %v3814 = vadd.f32 %v3005, %v3379
    %v3815 = vadd.f32 %v3006, %v3530
    %v3816 = vadd.f32 %v3007, %v3532
    %v3817 = vadd.f32 %v3008, %v3683
    %v3818 = vadd.f32 %v3009, %v3685
    %v3819 = vadd.f32 %v3010, %v3383
    %v3820 = vadd.f32 %v3011, %v3385
    %v3821 = vadd.f32 %v3012, %v3536
    %v3822 = vadd.f32 %v3013, %v3538
    %v3823 = vadd.f32 %v3014, %v3689
    %v3824 = vadd.f32 %v3015, %v3691
    %v3825 = vadd.f32 %v3016, %v3387
    %v3826 = vadd.f32 %v3017, %v3389
    %v3827 = vadd.f32 %v3018, %v3540
    %v3828 = vadd.f32 %v3019, %v3542
    %v3829 = vadd.f32 %v3020, %v3693
    %v3830 = vadd.f32 %v3021, %v3695
    %v3831 = vadd.f32 %v3022, %v3393
    %v3832 = vadd.f32 %v3023, %v3395
    %v3833 = vadd.f32 %v3024, %v3546
    %v3834 = vadd.f32 %v3025, %v3548
    %v3835 = vadd.f32 %v3026, %v3699
    %v3836 = vadd.f32 %v3027, %v3701
    %v3837 = vadd.f32 %v3028, %v3397
    %v3838 = vadd.f32 %v3029, %v3399
    %v3839 = vadd.f32 %v3030, %v3550
    %v3840 = vadd.f32 %v3031, %v3552
    %v3841 = vadd.f32 %v3032, %v3703
    %v3842 = vadd.f32 %v3033, %v3705
    %v3843 = vadd.f32 %v3034, %v3403
    %v3844 = vadd.f32 %v3035, %v3405
    %v3845 = vadd.f32 %v3036, %v3556
    %v3846 = vadd.f32 %v3037, %v3558
    %v3847 = vadd.f32 %v3038, %v3709
    %v3848 = vadd.f32 %v3039, %v3711
    %v3849 = vadd.f32 %v3040, %v3407
    %v3850 = vadd.f32 %v3041, %v3409
    %v3851 = vadd.f32 %v3042, %v3560
    %v3852 = vadd.f32 %v3043, %v3562
    %v3853 = vadd.f32 %v3044, %v3713
    %v3854 = vadd.f32 %v3045, %v3715
    %v3855 = vadd.f32 %v3046, %v3413
    %v3856 = vadd.f32 %v3047, %v3415
    %v3857 = vadd.f32 %v3048, %v3566
    %v3858 = vadd.f32 %v3049, %v3568
    %v3859 = vadd.f32 %v3050, %v3719
    %v3860 = vadd.f32 %v3051, %v3721
    %v3861 = vadd.f32 %v3052, %v3417
    %v3862 = vadd.f32 %v3053, %v3419
    %v3863 = vadd.f32 %v3054, %v3570
    %v3864 = vadd.f32 %v3055, %v3572
    %v3865 = vadd.f32 %v3056, %v3723
    %v3866 = vadd.f32 %v3057, %v3725
    %v3867 = vadd.f32 %v3058, %v3423
    %v3868 = vadd.f32 %v3059, %v3425
    %v3869 = vadd.f32 %v3060, %v3576
    %v3870 = vadd.f32 %v3061, %v3578
    %v3871 = vadd.f32 %v3062, %v3729
    %v3872 = vadd.f32 %v3063, %v3731
    %v3873 = vadd.f32 %v3064, %v3427
    %v3874 = vadd.f32 %v3065, %v3429
    %v3875 = vadd.f32 %v3066, %v3580
    %v3876 = vadd.f32 %v3067, %v3582
    %v3877 = vadd.f32 %v3068, %v3733
    %v3878 = vadd.f32 %v3069, %v3735
    %v3879 = vadd.f32 %v3070, %v3433
    %v3880 = vadd.f32 %v3071, %v3435
    %v3881 = vadd.f32 %v3072, %v3586
    %v3882 = vadd.f32 %v3073, %v3588
    %v3883 = vadd.f32 %v3074, %v3739
    %v3884 = vadd.f32 %v3075, %v3741
    %v3885 = vadd.f32 %v3076, %v3437
    %v3886 = vadd.f32 %v3077, %v3439
    %v3887 = vadd.f32 %v3078, %v3590
    %v3888 = vadd.f32 %v3079, %v3592
    %v3889 = vadd.f32 %v3080, %v3743
    %v3890 = vadd.f32 %v3081, %v3745
    %v3891 = vld [vmem:[#allocation6] sm:$0x3f]
    %v3893 = vlaneseq
    %v3894 = vshrl.u32 %v3893, 7
    %v3895 = vsub.s32 0, %v3894
    %v3896 = vrot.slane %v3891, %v3895
    %v3897 = vlaneseq
    %v3898 = vshrl.u32 %v3897, 7
    %v3899 = vsub.s32 1, %v3898
    %v3900 = vrot.slane %v3891, %v3899
    %v3901 = vlaneseq
    %v3902 = vshrl.u32 %v3901, 7
    %v3903 = vsub.s32 2, %v3902
    %v3904 = vrot.slane %v3891, %v3903
    %v3905 = vlaneseq
    %v3906 = vshrl.u32 %v3905, 7
    %v3907 = vsub.s32 3, %v3906
    %v3908 = vrot.slane %v3891, %v3907
    %v3909 = vlaneseq
    %v3910 = vshrl.u32 %v3909, 7
    %v3911 = vsub.s32 4, %v3910
    %v3912 = vrot.slane %v3891, %v3911
    %v3913 = vlaneseq
    %v3914 = vshrl.u32 %v3913, 7
    %v3915 = vsub.s32 5, %v3914
    %v3916 = vrot.slane %v3891, %v3915
    %v3923 = vadd.f32 %v3747, %v3896
    %v3924 = vadd.f32 %v3748, %v3900
    %v3925 = vadd.f32 %v3749, %v3904
    %v3926 = vadd.f32 %v3750, %v3908
    %v3927 = vadd.f32 %v3751, %v3912
    %v3928 = vadd.f32 %v3752, %v3916
    %v3929 = vadd.f32 %v3753, %v3896
    %v3930 = vadd.f32 %v3754, %v3900
    %v3931 = vadd.f32 %v3755, %v3904
    %v3932 = vadd.f32 %v3756, %v3908
    %v3933 = vadd.f32 %v3757, %v3912
    %v3934 = vadd.f32 %v3758, %v3916
    %v3935 = vadd.f32 %v3759, %v3896
    %v3936 = vadd.f32 %v3760, %v3900
    %v3937 = vadd.f32 %v3761, %v3904
    %v3938 = vadd.f32 %v3762, %v3908
    %v3939 = vadd.f32 %v3763, %v3912
    %v3940 = vadd.f32 %v3764, %v3916
    %v3941 = vadd.f32 %v3765, %v3896
    %v3942 = vadd.f32 %v3766, %v3900
    %v3943 = vadd.f32 %v3767, %v3904
    %v3944 = vadd.f32 %v3768, %v3908
    %v3945 = vadd.f32 %v3769, %v3912
    %v3946 = vadd.f32 %v3770, %v3916
    %v3947 = vadd.f32 %v3771, %v3896
    %v3948 = vadd.f32 %v3772, %v3900
    %v3949 = vadd.f32 %v3773, %v3904
    %v3950 = vadd.f32 %v3774, %v3908
    %v3951 = vadd.f32 %v3775, %v3912
    %v3952 = vadd.f32 %v3776, %v3916
    %v3953 = vadd.f32 %v3777, %v3896
    %v3954 = vadd.f32 %v3778, %v3900
    %v3955 = vadd.f32 %v3779, %v3904
    %v3956 = vadd.f32 %v3780, %v3908
    %v3957 = vadd.f32 %v3781, %v3912
    %v3958 = vadd.f32 %v3782, %v3916
    %v3959 = vadd.f32 %v3783, %v3896
    %v3960 = vadd.f32 %v3784, %v3900
    %v3961 = vadd.f32 %v3785, %v3904
    %v3962 = vadd.f32 %v3786, %v3908
    %v3963 = vadd.f32 %v3787, %v3912
    %v3964 = vadd.f32 %v3788, %v3916
    %v3965 = vadd.f32 %v3789, %v3896
    %v3966 = vadd.f32 %v3790, %v3900
    %v3967 = vadd.f32 %v3791, %v3904
    %v3968 = vadd.f32 %v3792, %v3908
    %v3969 = vadd.f32 %v3793, %v3912
    %v3970 = vadd.f32 %v3794, %v3916
    %v3971 = vadd.f32 %v3795, %v3896
    %v3972 = vadd.f32 %v3796, %v3900
    %v3973 = vadd.f32 %v3797, %v3904
    %v3974 = vadd.f32 %v3798, %v3908
    %v3975 = vadd.f32 %v3799, %v3912
    %v3976 = vadd.f32 %v3800, %v3916
    %v3977 = vadd.f32 %v3801, %v3896
    %v3978 = vadd.f32 %v3802, %v3900
    %v3979 = vadd.f32 %v3803, %v3904
    %v3980 = vadd.f32 %v3804, %v3908
    %v3981 = vadd.f32 %v3805, %v3912
    %v3982 = vadd.f32 %v3806, %v3916
    %v3983 = vadd.f32 %v3807, %v3896
    %v3984 = vadd.f32 %v3808, %v3900
    %v3985 = vadd.f32 %v3809, %v3904
    %v3986 = vadd.f32 %v3810, %v3908
    %v3987 = vadd.f32 %v3811, %v3912
    %v3988 = vadd.f32 %v3812, %v3916
    %v3989 = vadd.f32 %v3813, %v3896
    %v3990 = vadd.f32 %v3814, %v3900
    %v3991 = vadd.f32 %v3815, %v3904
    %v3992 = vadd.f32 %v3816, %v3908
    %v3993 = vadd.f32 %v3817, %v3912
    %v3994 = vadd.f32 %v3818, %v3916
    %v3995 = vadd.f32 %v3819, %v3896
    %v3996 = vadd.f32 %v3820, %v3900
    %v3997 = vadd.f32 %v3821, %v3904
    %v3998 = vadd.f32 %v3822, %v3908
    %v3999 = vadd.f32 %v3823, %v3912
    %v4000 = vadd.f32 %v3824, %v3916
    %v4001 = vadd.f32 %v3825, %v3896
    %v4002 = vadd.f32 %v3826, %v3900
    %v4003 = vadd.f32 %v3827, %v3904
    %v4004 = vadd.f32 %v3828, %v3908
    %v4005 = vadd.f32 %v3829, %v3912
    %v4006 = vadd.f32 %v3830, %v3916
    %v4007 = vadd.f32 %v3831, %v3896
    %v4008 = vadd.f32 %v3832, %v3900
    %v4009 = vadd.f32 %v3833, %v3904
    %v4010 = vadd.f32 %v3834, %v3908
    %v4011 = vadd.f32 %v3835, %v3912
    %v4012 = vadd.f32 %v3836, %v3916
    %v4013 = vadd.f32 %v3837, %v3896
    %v4014 = vadd.f32 %v3838, %v3900
    %v4015 = vadd.f32 %v3839, %v3904
    %v4016 = vadd.f32 %v3840, %v3908
    %v4017 = vadd.f32 %v3841, %v3912
    %v4018 = vadd.f32 %v3842, %v3916
    %v4019 = vadd.f32 %v3843, %v3896
    %v4020 = vadd.f32 %v3844, %v3900
    %v4021 = vadd.f32 %v3845, %v3904
    %v4022 = vadd.f32 %v3846, %v3908
    %v4023 = vadd.f32 %v3847, %v3912
    %v4024 = vadd.f32 %v3848, %v3916
    %v4025 = vadd.f32 %v3849, %v3896
    %v4026 = vadd.f32 %v3850, %v3900
    %v4027 = vadd.f32 %v3851, %v3904
    %v4028 = vadd.f32 %v3852, %v3908
    %v4029 = vadd.f32 %v3853, %v3912
    %v4030 = vadd.f32 %v3854, %v3916
    %v4031 = vadd.f32 %v3855, %v3896
    %v4032 = vadd.f32 %v3856, %v3900
    %v4033 = vadd.f32 %v3857, %v3904
    %v4034 = vadd.f32 %v3858, %v3908
    %v4035 = vadd.f32 %v3859, %v3912
    %v4036 = vadd.f32 %v3860, %v3916
    %v4037 = vadd.f32 %v3861, %v3896
    %v4038 = vadd.f32 %v3862, %v3900
    %v4039 = vadd.f32 %v3863, %v3904
    %v4040 = vadd.f32 %v3864, %v3908
    %v4041 = vadd.f32 %v3865, %v3912
    %v4042 = vadd.f32 %v3866, %v3916
    %v4043 = vadd.f32 %v3867, %v3896
    %v4044 = vadd.f32 %v3868, %v3900
    %v4045 = vadd.f32 %v3869, %v3904
    %v4046 = vadd.f32 %v3870, %v3908
    %v4047 = vadd.f32 %v3871, %v3912
    %v4048 = vadd.f32 %v3872, %v3916
    %v4049 = vadd.f32 %v3873, %v3896
    %v4050 = vadd.f32 %v3874, %v3900
    %v4051 = vadd.f32 %v3875, %v3904
    %v4052 = vadd.f32 %v3876, %v3908
    %v4053 = vadd.f32 %v3877, %v3912
    %v4054 = vadd.f32 %v3878, %v3916
    %v4055 = vadd.f32 %v3879, %v3896
    %v4056 = vadd.f32 %v3880, %v3900
    %v4057 = vadd.f32 %v3881, %v3904
    %v4058 = vadd.f32 %v3882, %v3908
    %v4059 = vadd.f32 %v3883, %v3912
    %v4060 = vadd.f32 %v3884, %v3916
    %v4061 = vadd.f32 %v3885, %v3896
    %v4062 = vadd.f32 %v3886, %v3900
    %v4063 = vadd.f32 %v3887, %v3904
    %v4064 = vadd.f32 %v3888, %v3908
    %v4065 = vadd.f32 %v3889, %v3912
    %v4066 = vadd.f32 %v3890, %v3916
    %v4067 = vmax.f32 %v3923, 0.0
    %v4068 = vmax.f32 %v3924, 0.0
    %v4069 = vmax.f32 %v3925, 0.0
    %v4070 = vmax.f32 %v3926, 0.0
    %v4071 = vmax.f32 %v3927, 0.0
    %v4072 = vmax.f32 %v3928, 0.0
    %v4073 = vmax.f32 %v3929, 0.0
    %v4074 = vmax.f32 %v3930, 0.0
    %v4075 = vmax.f32 %v3931, 0.0
    %v4076 = vmax.f32 %v3932, 0.0
    %v4077 = vmax.f32 %v3933, 0.0
    %v4078 = vmax.f32 %v3934, 0.0
    %v4079 = vmax.f32 %v3935, 0.0
    %v4080 = vmax.f32 %v3936, 0.0
    %v4081 = vmax.f32 %v3937, 0.0
    %v4082 = vmax.f32 %v3938, 0.0
    %v4083 = vmax.f32 %v3939, 0.0
    %v4084 = vmax.f32 %v3940, 0.0
    %v4085 = vmax.f32 %v3941, 0.0
    %v4086 = vmax.f32 %v3942, 0.0
    %v4087 = vmax.f32 %v3943, 0.0
    %v4088 = vmax.f32 %v3944, 0.0
    %v4089 = vmax.f32 %v3945, 0.0
    %v4090 = vmax.f32 %v3946, 0.0
    %v4091 = vmax.f32 %v3947, 0.0
    %v4092 = vmax.f32 %v3948, 0.0
    %v4093 = vmax.f32 %v3949, 0.0
    %v4094 = vmax.f32 %v3950, 0.0
    %v4095 = vmax.f32 %v3951, 0.0
    %v4096 = vmax.f32 %v3952, 0.0
    %v4097 = vmax.f32 %v3953, 0.0
    %v4098 = vmax.f32 %v3954, 0.0
    %v4099 = vmax.f32 %v3955, 0.0
    %v4100 = vmax.f32 %v3956, 0.0
    %v4101 = vmax.f32 %v3957, 0.0
    %v4102 = vmax.f32 %v3958, 0.0
    %v4103 = vmax.f32 %v3959, 0.0
    %v4104 = vmax.f32 %v3960, 0.0
    %v4105 = vmax.f32 %v3961, 0.0
    %v4106 = vmax.f32 %v3962, 0.0
    %v4107 = vmax.f32 %v3963, 0.0
    %v4108 = vmax.f32 %v3964, 0.0
    %v4109 = vmax.f32 %v3965, 0.0
    %v4110 = vmax.f32 %v3966, 0.0
    %v4111 = vmax.f32 %v3967, 0.0
    %v4112 = vmax.f32 %v3968, 0.0
    %v4113 = vmax.f32 %v3969, 0.0
    %v4114 = vmax.f32 %v3970, 0.0
    %v4115 = vmax.f32 %v3971, 0.0
    %v4116 = vmax.f32 %v3972, 0.0
    %v4117 = vmax.f32 %v3973, 0.0
    %v4118 = vmax.f32 %v3974, 0.0
    %v4119 = vmax.f32 %v3975, 0.0
    %v4120 = vmax.f32 %v3976, 0.0
    %v4121 = vmax.f32 %v3977, 0.0
    %v4122 = vmax.f32 %v3978, 0.0
    %v4123 = vmax.f32 %v3979, 0.0
    %v4124 = vmax.f32 %v3980, 0.0
    %v4125 = vmax.f32 %v3981, 0.0
    %v4126 = vmax.f32 %v3982, 0.0
    %v4127 = vmax.f32 %v3983, 0.0
    %v4128 = vmax.f32 %v3984, 0.0
    %v4129 = vmax.f32 %v3985, 0.0
    %v4130 = vmax.f32 %v3986, 0.0
    %v4131 = vmax.f32 %v3987, 0.0
    %v4132 = vmax.f32 %v3988, 0.0
    %v4133 = vmax.f32 %v3989, 0.0
    %v4134 = vmax.f32 %v3990, 0.0
    %v4135 = vmax.f32 %v3991, 0.0
    %v4136 = vmax.f32 %v3992, 0.0
    %v4137 = vmax.f32 %v3993, 0.0
    %v4138 = vmax.f32 %v3994, 0.0
    %v4139 = vmax.f32 %v3995, 0.0
    %v4140 = vmax.f32 %v3996, 0.0
    %v4141 = vmax.f32 %v3997, 0.0
    %v4142 = vmax.f32 %v3998, 0.0
    %v4143 = vmax.f32 %v3999, 0.0
    %v4144 = vmax.f32 %v4000, 0.0
    %v4145 = vmax.f32 %v4001, 0.0
    %v4146 = vmax.f32 %v4002, 0.0
    %v4147 = vmax.f32 %v4003, 0.0
    %v4148 = vmax.f32 %v4004, 0.0
    %v4149 = vmax.f32 %v4005, 0.0
    %v4150 = vmax.f32 %v4006, 0.0
    %v4151 = vmax.f32 %v4007, 0.0
    %v4152 = vmax.f32 %v4008, 0.0
    %v4153 = vmax.f32 %v4009, 0.0
    %v4154 = vmax.f32 %v4010, 0.0
    %v4155 = vmax.f32 %v4011, 0.0
    %v4156 = vmax.f32 %v4012, 0.0
    %v4157 = vmax.f32 %v4013, 0.0
    %v4158 = vmax.f32 %v4014, 0.0
    %v4159 = vmax.f32 %v4015, 0.0
    %v4160 = vmax.f32 %v4016, 0.0
    %v4161 = vmax.f32 %v4017, 0.0
    %v4162 = vmax.f32 %v4018, 0.0
    %v4163 = vmax.f32 %v4019, 0.0
    %v4164 = vmax.f32 %v4020, 0.0
    %v4165 = vmax.f32 %v4021, 0.0
    %v4166 = vmax.f32 %v4022, 0.0
    %v4167 = vmax.f32 %v4023, 0.0
    %v4168 = vmax.f32 %v4024, 0.0
    %v4169 = vmax.f32 %v4025, 0.0
    %v4170 = vmax.f32 %v4026, 0.0
    %v4171 = vmax.f32 %v4027, 0.0
    %v4172 = vmax.f32 %v4028, 0.0
    %v4173 = vmax.f32 %v4029, 0.0
    %v4174 = vmax.f32 %v4030, 0.0
    %v4175 = vmax.f32 %v4031, 0.0
    %v4176 = vmax.f32 %v4032, 0.0
    %v4177 = vmax.f32 %v4033, 0.0
    %v4178 = vmax.f32 %v4034, 0.0
    %v4179 = vmax.f32 %v4035, 0.0
    %v4180 = vmax.f32 %v4036, 0.0
    %v4181 = vmax.f32 %v4037, 0.0
    %v4182 = vmax.f32 %v4038, 0.0
    %v4183 = vmax.f32 %v4039, 0.0
    %v4184 = vmax.f32 %v4040, 0.0
    %v4185 = vmax.f32 %v4041, 0.0
    %v4186 = vmax.f32 %v4042, 0.0
    %v4187 = vmax.f32 %v4043, 0.0
    %v4188 = vmax.f32 %v4044, 0.0
    %v4189 = vmax.f32 %v4045, 0.0
    %v4190 = vmax.f32 %v4046, 0.0
    %v4191 = vmax.f32 %v4047, 0.0
    %v4192 = vmax.f32 %v4048, 0.0
    %v4193 = vmax.f32 %v4049, 0.0
    %v4194 = vmax.f32 %v4050, 0.0
    %v4195 = vmax.f32 %v4051, 0.0
    %v4196 = vmax.f32 %v4052, 0.0
    %v4197 = vmax.f32 %v4053, 0.0
    %v4198 = vmax.f32 %v4054, 0.0
    %v4199 = vmax.f32 %v4055, 0.0
    %v4200 = vmax.f32 %v4056, 0.0
    %v4201 = vmax.f32 %v4057, 0.0
    %v4202 = vmax.f32 %v4058, 0.0
    %v4203 = vmax.f32 %v4059, 0.0
    %v4204 = vmax.f32 %v4060, 0.0
    %v4205 = vmax.f32 %v4061, 0.0
    %v4206 = vmax.f32 %v4062, 0.0
    %v4207 = vmax.f32 %v4063, 0.0
    %v4208 = vmax.f32 %v4064, 0.0
    %v4209 = vmax.f32 %v4065, 0.0
    %v4210 = vmax.f32 %v4066, 0.0
    %v4211 = vmax.f32 %v4067, %v4070
    %v4212 = vmax.f32 %v4068, %v4071
    %v4213 = vmax.f32 %v4069, %v4072
    %v4214 = vmax.f32 %v4073, %v4076
    %v4215 = vmax.f32 %v4074, %v4077
    %v4216 = vmax.f32 %v4075, %v4078
    %v4217 = vmax.f32 %v4079, %v4082
    %v4218 = vmax.f32 %v4080, %v4083
    %v4219 = vmax.f32 %v4081, %v4084
    %v4220 = vmax.f32 %v4085, %v4088
    %v4221 = vmax.f32 %v4086, %v4089
    %v4222 = vmax.f32 %v4087, %v4090
    %v4223 = vmax.f32 %v4091, %v4094
    %v4224 = vmax.f32 %v4092, %v4095
    %v4225 = vmax.f32 %v4093, %v4096
    %v4226 = vmax.f32 %v4097, %v4100
    %v4227 = vmax.f32 %v4098, %v4101
    %v4228 = vmax.f32 %v4099, %v4102
    %v4229 = vmax.f32 %v4103, %v4106
    %v4230 = vmax.f32 %v4104, %v4107
    %v4231 = vmax.f32 %v4105, %v4108
    %v4232 = vmax.f32 %v4109, %v4112
    %v4233 = vmax.f32 %v4110, %v4113
    %v4234 = vmax.f32 %v4111, %v4114
    %v4235 = vmax.f32 %v4115, %v4118
    %v4236 = vmax.f32 %v4116, %v4119
    %v4237 = vmax.f32 %v4117, %v4120
    %v4238 = vmax.f32 %v4121, %v4124
    %v4239 = vmax.f32 %v4122, %v4125
    %v4240 = vmax.f32 %v4123, %v4126
    %v4241 = vmax.f32 %v4127, %v4130
    %v4242 = vmax.f32 %v4128, %v4131
    %v4243 = vmax.f32 %v4129, %v4132
    %v4244 = vmax.f32 %v4133, %v4136
    %v4245 = vmax.f32 %v4134, %v4137
    %v4246 = vmax.f32 %v4135, %v4138
    %v4247 = vmax.f32 %v4139, %v4142
    %v4248 = vmax.f32 %v4140, %v4143
    %v4249 = vmax.f32 %v4141, %v4144
    %v4250 = vmax.f32 %v4145, %v4148
    %v4251 = vmax.f32 %v4146, %v4149
    %v4252 = vmax.f32 %v4147, %v4150
    %v4253 = vmax.f32 %v4151, %v4154
    %v4254 = vmax.f32 %v4152, %v4155
    %v4255 = vmax.f32 %v4153, %v4156
    %v4256 = vmax.f32 %v4157, %v4160
    %v4257 = vmax.f32 %v4158, %v4161
    %v4258 = vmax.f32 %v4159, %v4162
    %v4259 = vmax.f32 %v4163, %v4166
    %v4260 = vmax.f32 %v4164, %v4167
    %v4261 = vmax.f32 %v4165, %v4168
    %v4262 = vmax.f32 %v4169, %v4172
    %v4263 = vmax.f32 %v4170, %v4173
    %v4264 = vmax.f32 %v4171, %v4174
    %v4265 = vmax.f32 %v4175, %v4178
    %v4266 = vmax.f32 %v4176, %v4179
    %v4267 = vmax.f32 %v4177, %v4180
    %v4268 = vmax.f32 %v4181, %v4184
    %v4269 = vmax.f32 %v4182, %v4185
    %v4270 = vmax.f32 %v4183, %v4186
    %v4271 = vmax.f32 %v4187, %v4190
    %v4272 = vmax.f32 %v4188, %v4191
    %v4273 = vmax.f32 %v4189, %v4192
    %v4274 = vmax.f32 %v4193, %v4196
    %v4275 = vmax.f32 %v4194, %v4197
    %v4276 = vmax.f32 %v4195, %v4198
    %v4277 = vmax.f32 %v4199, %v4202
    %v4278 = vmax.f32 %v4200, %v4203
    %v4279 = vmax.f32 %v4201, %v4204
    %v4280 = vmax.f32 %v4205, %v4208
    %v4281 = vmax.f32 %v4206, %v4209
    %v4282 = vmax.f32 %v4207, %v4210
    %v4283 = vmax.f32 %v4211, %v4214
    %v4284 = vmax.f32 %v4212, %v4215
    %v4285 = vmax.f32 %v4213, %v4216
    %v4286 = vmax.f32 %v4217, %v4220
    %v4287 = vmax.f32 %v4218, %v4221
    %v4288 = vmax.f32 %v4219, %v4222
    %v4289 = vmax.f32 %v4223, %v4226
    %v4290 = vmax.f32 %v4224, %v4227
    %v4291 = vmax.f32 %v4225, %v4228
    %v4292 = vmax.f32 %v4229, %v4232
    %v4293 = vmax.f32 %v4230, %v4233
    %v4294 = vmax.f32 %v4231, %v4234
    %v4295 = vmax.f32 %v4235, %v4238
    %v4296 = vmax.f32 %v4236, %v4239
    %v4297 = vmax.f32 %v4237, %v4240
    %v4298 = vmax.f32 %v4241, %v4244
    %v4299 = vmax.f32 %v4242, %v4245
    %v4300 = vmax.f32 %v4243, %v4246
    %v4301 = vmax.f32 %v4247, %v4250
    %v4302 = vmax.f32 %v4248, %v4251
    %v4303 = vmax.f32 %v4249, %v4252
    %v4304 = vmax.f32 %v4253, %v4256
    %v4305 = vmax.f32 %v4254, %v4257
    %v4306 = vmax.f32 %v4255, %v4258
    %v4307 = vmax.f32 %v4259, %v4262
    %v4308 = vmax.f32 %v4260, %v4263
    %v4309 = vmax.f32 %v4261, %v4264
    %v4310 = vmax.f32 %v4265, %v4268
    %v4311 = vmax.f32 %v4266, %v4269
    %v4312 = vmax.f32 %v4267, %v4270
    %v4313 = vmax.f32 %v4271, %v4274
    %v4314 = vmax.f32 %v4272, %v4275
    %v4315 = vmax.f32 %v4273, %v4276
    %v4316 = vmax.f32 %v4277, %v4280
    %v4317 = vmax.f32 %v4278, %v4281
    %v4318 = vmax.f32 %v4279, %v4282
    %v4319 = vpack.c.bf16 %v4283, %v4283
    %v4320 = vpack.c.bf16 %v4284, %v4284
    %v4321 = vpack.c.bf16 %v4285, %v4285
    %v4322 = vpack.c.bf16 %v4286, %v4286
    %v4323 = vpack.c.bf16 %v4287, %v4287
    %v4324 = vpack.c.bf16 %v4288, %v4288
    %v4325 = vpack.c.bf16 %v4289, %v4289
    %v4326 = vpack.c.bf16 %v4290, %v4290
    %v4327 = vpack.c.bf16 %v4291, %v4291
    %v4328 = vpack.c.bf16 %v4292, %v4292
    %v4329 = vpack.c.bf16 %v4293, %v4293
    %v4330 = vpack.c.bf16 %v4294, %v4294
    %v4331 = vpack.c.bf16 %v4295, %v4295
    %v4332 = vpack.c.bf16 %v4296, %v4296
    %v4333 = vpack.c.bf16 %v4297, %v4297
    %v4334 = vpack.c.bf16 %v4298, %v4298
    %v4335 = vpack.c.bf16 %v4299, %v4299
    %v4336 = vpack.c.bf16 %v4300, %v4300
    %v4337 = vpack.c.bf16 %v4301, %v4301
    %v4338 = vpack.c.bf16 %v4302, %v4302
    %v4339 = vpack.c.bf16 %v4303, %v4303
    %v4340 = vpack.c.bf16 %v4304, %v4304
    %v4341 = vpack.c.bf16 %v4305, %v4305
    %v4342 = vpack.c.bf16 %v4306, %v4306
    %v4343 = vpack.c.bf16 %v4307, %v4307
    %v4344 = vpack.c.bf16 %v4308, %v4308
    %v4345 = vpack.c.bf16 %v4309, %v4309
    %v4346 = vpack.c.bf16 %v4310, %v4310
    %v4347 = vpack.c.bf16 %v4311, %v4311
    %v4348 = vpack.c.bf16 %v4312, %v4312
    %v4349 = vpack.c.bf16 %v4313, %v4313
    %v4350 = vpack.c.bf16 %v4314, %v4314
    %v4351 = vpack.c.bf16 %v4315, %v4315
    %v4352 = vpack.c.bf16 %v4316, %v4316
    %v4353 = vpack.c.bf16 %v4317, %v4317
    %v4354 = vpack.c.bf16 %v4318, %v4318
    %v4391 = vunpack.c.l.b16 %v4319
    %v4392 = vunpack.c.l.b16 %v4320
    %v4393 = vunpack.c.l.b16 %v4321
    %v4394 = vunpack.c.l.b16 %v4322
    %v4395 = vunpack.c.l.b16 %v4323
    %v4396 = vunpack.c.l.b16 %v4324
    %v4397 = vunpack.c.l.b16 %v4325
    %v4398 = vunpack.c.l.b16 %v4326
    %v4399 = vunpack.c.l.b16 %v4327
    %v4400 = vunpack.c.l.b16 %v4328
    %v4401 = vunpack.c.l.b16 %v4329
    %v4402 = vunpack.c.l.b16 %v4330
    %v4403 = vunpack.c.l.b16 %v4331
    %v4404 = vunpack.c.l.b16 %v4332
    %v4405 = vunpack.c.l.b16 %v4333
    %v4406 = vunpack.c.l.b16 %v4334
    %v4407 = vunpack.c.l.b16 %v4335
    %v4408 = vunpack.c.l.b16 %v4336
    %v4409 = vunpack.c.l.b16 %v4337
    %v4410 = vunpack.c.l.b16 %v4338
    %v4411 = vunpack.c.l.b16 %v4339
    %v4412 = vunpack.c.l.b16 %v4340
    %v4413 = vunpack.c.l.b16 %v4341
    %v4414 = vunpack.c.l.b16 %v4342
    %v4415 = vunpack.c.l.b16 %v4343
    %v4416 = vunpack.c.l.b16 %v4344
    %v4417 = vunpack.c.l.b16 %v4345
    %v4418 = vunpack.c.l.b16 %v4346
    %v4419 = vunpack.c.l.b16 %v4347
    %v4420 = vunpack.c.l.b16 %v4348
    %v4421 = vunpack.c.l.b16 %v4349
    %v4422 = vunpack.c.l.b16 %v4350
    %v4423 = vunpack.c.l.b16 %v4351
    %v4424 = vunpack.c.l.b16 %v4352
    %v4425 = vunpack.c.l.b16 %v4353
    %v4426 = vunpack.c.l.b16 %v4354
    %v4427 = vpack.c.b16 %v4392, %v4391
    %v4428 = vpack.c.b16 %v4393, %v4393
    %v4429 = vpack.c.b16 %v4395, %v4394
    %v4430 = vpack.c.b16 %v4396, %v4396
    %v4431 = vpack.c.b16 %v4398, %v4397
    %v4432 = vpack.c.b16 %v4399, %v4399
    %v4433 = vpack.c.b16 %v4401, %v4400
    %v4434 = vpack.c.b16 %v4402, %v4402
    %v4435 = vpack.c.b16 %v4404, %v4403
    %v4436 = vpack.c.b16 %v4405, %v4405
    %v4437 = vpack.c.b16 %v4407, %v4406
    %v4438 = vpack.c.b16 %v4408, %v4408
    %v4439 = vpack.c.b16 %v4410, %v4409
    %v4440 = vpack.c.b16 %v4411, %v4411
    %v4441 = vpack.c.b16 %v4413, %v4412
    %v4442 = vpack.c.b16 %v4414, %v4414
    %v4443 = vpack.c.b16 %v4416, %v4415
    %v4444 = vpack.c.b16 %v4417, %v4417
    %v4445 = vpack.c.b16 %v4419, %v4418
    %v4446 = vpack.c.b16 %v4420, %v4420
    %v4447 = vpack.c.b16 %v4422, %v4421
    %v4448 = vpack.c.b16 %v4423, %v4423
    %v4449 = vpack.c.b16 %v4425, %v4424
    %v4450 = vpack.c.b16 %v4426, %v4426
    %4475 = vst [vmem:[#allocation2] sm:$0xff] %v4427
    %4476 = vst [vmem:[#allocation2 + $0x8] sm:$0xf] %v4428
    %4477 = vst [vmem:[#allocation2 + $0xc] sm:$0xff] %v4429
    %4478 = vst [vmem:[#allocation2 + $0x14] sm:$0xf] %v4430
    %4479 = vst [vmem:[#allocation2 + $0x18] sm:$0xff] %v4431
    %4480 = vst [vmem:[#allocation2 + $0x20] sm:$0xf] %v4432
    %4481 = vst [vmem:[#allocation2 + $0x24] sm:$0xff] %v4433
    %4482 = vst [vmem:[#allocation2 + $0x2c] sm:$0xf] %v4434
    %4483 = vst [vmem:[#allocation2 + $0x30] sm:$0xff] %v4435
    %4484 = vst [vmem:[#allocation2 + $0x38] sm:$0xf] %v4436
    %4485 = vst [vmem:[#allocation2 + $0x3c] sm:$0xff] %v4437
    %4486 = vst [vmem:[#allocation2 + $0x44] sm:$0xf] %v4438
    %4487 = vst [vmem:[#allocation2 + $0x48] sm:$0xff] %v4439
    %4488 = vst [vmem:[#allocation2 + $0x50] sm:$0xf] %v4440
    %4489 = vst [vmem:[#allocation2 + $0x54] sm:$0xff] %v4441
    %4490 = vst [vmem:[#allocation2 + $0x5c] sm:$0xf] %v4442
    %4491 = vst [vmem:[#allocation2 + $0x60] sm:$0xff] %v4443
    %4492 = vst [vmem:[#allocation2 + $0x68] sm:$0xf] %v4444
    %4493 = vst [vmem:[#allocation2 + $0x6c] sm:$0xff] %v4445
    %4494 = vst [vmem:[#allocation2 + $0x74] sm:$0xf] %v4446
    %4495 = vst [vmem:[#allocation2 + $0x78] sm:$0xff] %v4447
    %4496 = vst [vmem:[#allocation2 + $0x80] sm:$0xf] %v4448
    %4497 = vst [vmem:[#allocation2 + $0x84] sm:$0xff] %v4449
    %4498 = vst [vmem:[#allocation2 + $0x8c] sm:$0xf] %v4450
    %v4499 = vld [vmem:[#allocation2] sm:$0xff]
    %v4500 = vld [vmem:[#allocation2 + $0x8] sm:$0xf]
    %v4501 = vld [vmem:[#allocation2 + $0xc] sm:$0xff]
    %v4502 = vld [vmem:[#allocation2 + $0x14] sm:$0xf]
    %v4503 = vld [vmem:[#allocation2 + $0x18] sm:$0xff]
    %v4504 = vld [vmem:[#allocation2 + $0x20] sm:$0xf]
    %v4505 = vld [vmem:[#allocation2 + $0x24] sm:$0xff]
    %v4506 = vld [vmem:[#allocation2 + $0x2c] sm:$0xf]
    %v4507 = vld [vmem:[#allocation2 + $0x30] sm:$0xff]
    %v4508 = vld [vmem:[#allocation2 + $0x38] sm:$0xf]
    %v4509 = vld [vmem:[#allocation2 + $0x3c] sm:$0xff]
    %v4510 = vld [vmem:[#allocation2 + $0x44] sm:$0xf]
    %v4511 = vld [vmem:[#allocation2 + $0x48] sm:$0xff]
    %v4512 = vld [vmem:[#allocation2 + $0x50] sm:$0xf]
    %v4513 = vld [vmem:[#allocation2 + $0x54] sm:$0xff]
    %v4514 = vld [vmem:[#allocation2 + $0x5c] sm:$0xf]
    %v4515 = vld [vmem:[#allocation8] sm:$0xff]
    %v4516 = vld [vmem:[#allocation8 + $0x8] sm:$0xff]
    %v4517 = vld [vmem:[#allocation8 + $0x10] sm:$0xff]
    %v4518 = vld [vmem:[#allocation8 + $0x18] sm:$0xff]
    %v4519 = vld [vmem:[#allocation8 + $0x20] sm:$0xff]
    %v4520 = vld [vmem:[#allocation8 + $0x28] sm:$0xff]
    %v4521 = vld [vmem:[#allocation8 + $0x30] sm:$0xff]
    %v4522 = vld [vmem:[#allocation8 + $0x38] sm:$0xff]
    %v4523 = vld [vmem:[#allocation8 + $0x40] sm:$0xff]
    %v4524 = vld [vmem:[#allocation8 + $0x48] sm:$0xff]
    %v4525 = vld [vmem:[#allocation8 + $0x50] sm:$0xff]
    %v4526 = vld [vmem:[#allocation8 + $0x58] sm:$0xff]
    %v4527 = vld [vmem:[#allocation8 + $0x60] sm:$0xff]
    %v4528 = vld [vmem:[#allocation8 + $0x68] sm:$0xff]
    %v4529 = vld [vmem:[#allocation8 + $0x70] sm:$0xff]
    %v4530 = vld [vmem:[#allocation8 + $0x78] sm:$0xff]
    %v4531 = vld [vmem:[#allocation8 + $0x80] sm:$0xff]
    %v4532 = vld [vmem:[#allocation8 + $0x88] sm:$0xff]
    %v4533 = vld [vmem:[#allocation8 + $0x90] sm:$0xff]
    %v4534 = vld [vmem:[#allocation8 + $0x98] sm:$0xff]
    %v4535 = vld [vmem:[#allocation8 + $0xa0] sm:$0xff]
    %v4536 = vld [vmem:[#allocation8 + $0xa8] sm:$0xff]
    %v4537 = vld [vmem:[#allocation8 + $0xb0] sm:$0xff]
    %v4538 = vld [vmem:[#allocation8 + $0xb8] sm:$0xff]
    %v4539 = vld [vmem:[#allocation8 + $0xc0] sm:$0xff]
    %v4540 = vld [vmem:[#allocation8 + $0xc8] sm:$0xff]
    %v4541 = vld [vmem:[#allocation8 + $0xd0] sm:$0xff]
    %v4542 = vld [vmem:[#allocation8 + $0xd8] sm:$0xff]
    %v4543 = vld [vmem:[#allocation8 + $0xe0] sm:$0xff]
    %v4544 = vld [vmem:[#allocation8 + $0xe8] sm:$0xff]
    %v4545 = vld [vmem:[#allocation8 + $0xf0] sm:$0xff]
    %v4546 = vld [vmem:[#allocation8 + $0xf8] sm:$0xff]
    %v4547 = vld [vmem:[#allocation8 + $0x100] sm:$0xff]
    %v4548 = vld [vmem:[#allocation8 + $0x108] sm:$0xff]
    %v4549 = vld [vmem:[#allocation8 + $0x110] sm:$0xff]
    %v4550 = vld [vmem:[#allocation8 + $0x118] sm:$0xff]
    %v4551 = vld [vmem:[#allocation8 + $0x120] sm:$0xff]
    %v4552 = vld [vmem:[#allocation8 + $0x128] sm:$0xff]
    %v4553 = vld [vmem:[#allocation8 + $0x130] sm:$0xff]
    %v4554 = vld [vmem:[#allocation8 + $0x138] sm:$0xff]
    %v4555 = vld [vmem:[#allocation8 + $0x140] sm:$0xff]
    %v4556 = vld [vmem:[#allocation8 + $0x148] sm:$0xff]
    %v4557 = vld [vmem:[#allocation8 + $0x150] sm:$0xff]
    %v4558 = vld [vmem:[#allocation8 + $0x158] sm:$0xff]
    %v4559 = vld [vmem:[#allocation8 + $0x160] sm:$0xff]
    %v4560 = vld [vmem:[#allocation8 + $0x168] sm:$0xff]
    %v4561 = vld [vmem:[#allocation8 + $0x170] sm:$0xff]
    %v4562 = vld [vmem:[#allocation8 + $0x178] sm:$0xff]
    %v4563 = vld [vmem:[#allocation8 + $0x180] sm:$0xff]
    %v4564 = vld [vmem:[#allocation8 + $0x188] sm:$0xff]
    %v4565 = vld [vmem:[#allocation8 + $0x190] sm:$0xff]
    %v4566 = vld [vmem:[#allocation8 + $0x198] sm:$0xff]
    %v4567 = vld [vmem:[#allocation8 + $0x1a0] sm:$0xff]
    %v4568 = vld [vmem:[#allocation8 + $0x1a8] sm:$0xff]
    %v4569 = vld [vmem:[#allocation8 + $0x1b0] sm:$0xff]
    %v4570 = vld [vmem:[#allocation8 + $0x1b8] sm:$0xff]
    %v4571 = vld [vmem:[#allocation8 + $0x1c0] sm:$0xff]
    %v4572 = vld [vmem:[#allocation8 + $0x1c8] sm:$0xff]
    %v4573 = vld [vmem:[#allocation8 + $0x1d0] sm:$0xff]
    %v4574 = vld [vmem:[#allocation8 + $0x1d8] sm:$0xff]
    %v4575 = vld [vmem:[#allocation8 + $0x1e0] sm:$0xff]
    %v4576 = vld [vmem:[#allocation8 + $0x1e8] sm:$0xff]
    %v4577 = vld [vmem:[#allocation8 + $0x1f0] sm:$0xff]
    %v4578 = vld [vmem:[#allocation8 + $0x1f8] sm:$0xff]
    %v4579 = vld [vmem:[#allocation8 + $0x200] sm:$0xff]
    %v4580 = vld [vmem:[#allocation8 + $0x208] sm:$0xff]
    %v4581 = vld [vmem:[#allocation8 + $0x210] sm:$0xff]
    %v4582 = vld [vmem:[#allocation8 + $0x218] sm:$0xff]
    %v4583 = vld [vmem:[#allocation8 + $0x220] sm:$0xff]
    %v4584 = vld [vmem:[#allocation8 + $0x228] sm:$0xff]
    %v4585 = vld [vmem:[#allocation8 + $0x230] sm:$0xff]
    %v4586 = vld [vmem:[#allocation8 + $0x238] sm:$0xff]
    %v4587 = vld [vmem:[#allocation8 + $0x240] sm:$0xff]
    %v4588 = vld [vmem:[#allocation8 + $0x248] sm:$0xff]
    %v4589 = vld [vmem:[#allocation8 + $0x250] sm:$0xff]
    %v4590 = vld [vmem:[#allocation8 + $0x258] sm:$0xff]
    %v4591 = vld [vmem:[#allocation8 + $0x260] sm:$0xff]
    %v4592 = vld [vmem:[#allocation8 + $0x268] sm:$0xff]
    %v4593 = vld [vmem:[#allocation8 + $0x270] sm:$0xff]
    %v4594 = vld [vmem:[#allocation8 + $0x278] sm:$0xff]
    %v4595 = vld [vmem:[#allocation8 + $0x280] sm:$0xff]
    %v4596 = vld [vmem:[#allocation8 + $0x288] sm:$0xff]
    %v4597 = vld [vmem:[#allocation8 + $0x290] sm:$0xff]
    %v4598 = vld [vmem:[#allocation8 + $0x298] sm:$0xff]
    %v4599 = vld [vmem:[#allocation8 + $0x2a0] sm:$0xff]
    %v4600 = vld [vmem:[#allocation8 + $0x2a8] sm:$0xff]
    %v4601 = vld [vmem:[#allocation8 + $0x2b0] sm:$0xff]
    %v4602 = vld [vmem:[#allocation8 + $0x2b8] sm:$0xff]
    %v4603 = vld [vmem:[#allocation8 + $0x2c0] sm:$0xff]
    %v4604 = vld [vmem:[#allocation8 + $0x2c8] sm:$0xff]
    %v4605 = vld [vmem:[#allocation8 + $0x2d0] sm:$0xff]
    %v4606 = vld [vmem:[#allocation8 + $0x2d8] sm:$0xff]
    %v4607 = vld [vmem:[#allocation8 + $0x2e0] sm:$0xff]
    %v4608 = vld [vmem:[#allocation8 + $0x2e8] sm:$0xff]
    %v4609 = vld [vmem:[#allocation8 + $0x2f0] sm:$0xff]
    %v4610 = vld [vmem:[#allocation8 + $0x2f8] sm:$0xff]
    %s4611 = scalar_lea.vmem [#allocation2], 12
    %v4612 = vld [vmem:[%s4611] sm:$0xff]
    %v4613 = vld [vmem:[%s4611 + $0x8] sm:$0xf]
    %v4614 = vld [vmem:[%s4611 + $0xc] sm:$0xff]
    %v4615 = vld [vmem:[%s4611 + $0x14] sm:$0xf]
    %v4616 = vld [vmem:[%s4611 + $0x18] sm:$0xff]
    %v4617 = vld [vmem:[%s4611 + $0x20] sm:$0xf]
    %v4618 = vld [vmem:[%s4611 + $0x24] sm:$0xff]
    %v4619 = vld [vmem:[%s4611 + $0x2c] sm:$0xf]
    %v4620 = vld [vmem:[%s4611 + $0x30] sm:$0xff]
    %v4621 = vld [vmem:[%s4611 + $0x38] sm:$0xf]
    %v4622 = vld [vmem:[%s4611 + $0x3c] sm:$0xff]
    %v4623 = vld [vmem:[%s4611 + $0x44] sm:$0xf]
    %v4624 = vld [vmem:[%s4611 + $0x48] sm:$0xff]
    %v4625 = vld [vmem:[%s4611 + $0x50] sm:$0xf]
    %v4626 = vld [vmem:[%s4611 + $0x54] sm:$0xff]
    %v4627 = vld [vmem:[%s4611 + $0x5c] sm:$0xf]
    %s4628 = scalar_lea.vmem [#allocation8], 768
    %v4629 = vld [vmem:[%s4628] sm:$0xff]
    %v4630 = vld [vmem:[%s4628 + $0x8] sm:$0xff]
    %v4631 = vld [vmem:[%s4628 + $0x10] sm:$0xff]
    %v4632 = vld [vmem:[%s4628 + $0x18] sm:$0xff]
    %v4633 = vld [vmem:[%s4628 + $0x20] sm:$0xff]
    %v4634 = vld [vmem:[%s4628 + $0x28] sm:$0xff]
    %v4635 = vld [vmem:[%s4628 + $0x30] sm:$0xff]
    %v4636 = vld [vmem:[%s4628 + $0x38] sm:$0xff]
    %v4637 = vld [vmem:[%s4628 + $0x40] sm:$0xff]
    %v4638 = vld [vmem:[%s4628 + $0x48] sm:$0xff]
    %v4639 = vld [vmem:[%s4628 + $0x50] sm:$0xff]
    %v4640 = vld [vmem:[%s4628 + $0x58] sm:$0xff]
    %v4641 = vld [vmem:[%s4628 + $0x60] sm:$0xff]
    %v4642 = vld [vmem:[%s4628 + $0x68] sm:$0xff]
    %v4643 = vld [vmem:[%s4628 + $0x70] sm:$0xff]
    %v4644 = vld [vmem:[%s4628 + $0x78] sm:$0xff]
    %v4645 = vld [vmem:[%s4628 + $0x80] sm:$0xff]
    %v4646 = vld [vmem:[%s4628 + $0x88] sm:$0xff]
    %v4647 = vld [vmem:[%s4628 + $0x90] sm:$0xff]
    %v4648 = vld [vmem:[%s4628 + $0x98] sm:$0xff]
    %v4649 = vld [vmem:[%s4628 + $0xa0] sm:$0xff]
    %v4650 = vld [vmem:[%s4628 + $0xa8] sm:$0xff]
    %v4651 = vld [vmem:[%s4628 + $0xb0] sm:$0xff]
    %v4652 = vld [vmem:[%s4628 + $0xb8] sm:$0xff]
    %v4653 = vld [vmem:[%s4628 + $0xc0] sm:$0xff]
    %v4654 = vld [vmem:[%s4628 + $0xc8] sm:$0xff]
    %v4655 = vld [vmem:[%s4628 + $0xd0] sm:$0xff]
    %v4656 = vld [vmem:[%s4628 + $0xd8] sm:$0xff]
    %v4657 = vld [vmem:[%s4628 + $0xe0] sm:$0xff]
    %v4658 = vld [vmem:[%s4628 + $0xe8] sm:$0xff]
    %v4659 = vld [vmem:[%s4628 + $0xf0] sm:$0xff]
    %v4660 = vld [vmem:[%s4628 + $0xf8] sm:$0xff]
    %v4661 = vld [vmem:[%s4628 + $0x100] sm:$0xff]
    %v4662 = vld [vmem:[%s4628 + $0x108] sm:$0xff]
    %v4663 = vld [vmem:[%s4628 + $0x110] sm:$0xff]
    %v4664 = vld [vmem:[%s4628 + $0x118] sm:$0xff]
    %v4665 = vld [vmem:[%s4628 + $0x120] sm:$0xff]
    %v4666 = vld [vmem:[%s4628 + $0x128] sm:$0xff]
    %v4667 = vld [vmem:[%s4628 + $0x130] sm:$0xff]
    %v4668 = vld [vmem:[%s4628 + $0x138] sm:$0xff]
    %v4669 = vld [vmem:[%s4628 + $0x140] sm:$0xff]
    %v4670 = vld [vmem:[%s4628 + $0x148] sm:$0xff]
    %v4671 = vld [vmem:[%s4628 + $0x150] sm:$0xff]
    %v4672 = vld [vmem:[%s4628 + $0x158] sm:$0xff]
    %v4673 = vld [vmem:[%s4628 + $0x160] sm:$0xff]
    %v4674 = vld [vmem:[%s4628 + $0x168] sm:$0xff]
    %v4675 = vld [vmem:[%s4628 + $0x170] sm:$0xff]
    %v4676 = vld [vmem:[%s4628 + $0x178] sm:$0xff]
    %v4677 = vld [vmem:[%s4628 + $0x180] sm:$0xff]
    %v4678 = vld [vmem:[%s4628 + $0x188] sm:$0xff]
    %v4679 = vld [vmem:[%s4628 + $0x190] sm:$0xff]
    %v4680 = vld [vmem:[%s4628 + $0x198] sm:$0xff]
    %v4681 = vld [vmem:[%s4628 + $0x1a0] sm:$0xff]
    %v4682 = vld [vmem:[%s4628 + $0x1a8] sm:$0xff]
    %v4683 = vld [vmem:[%s4628 + $0x1b0] sm:$0xff]
    %v4684 = vld [vmem:[%s4628 + $0x1b8] sm:$0xff]
    %v4685 = vld [vmem:[%s4628 + $0x1c0] sm:$0xff]
    %v4686 = vld [vmem:[%s4628 + $0x1c8] sm:$0xff]
    %v4687 = vld [vmem:[%s4628 + $0x1d0] sm:$0xff]
    %v4688 = vld [vmem:[%s4628 + $0x1d8] sm:$0xff]
    %v4689 = vld [vmem:[%s4628 + $0x1e0] sm:$0xff]
    %v4690 = vld [vmem:[%s4628 + $0x1e8] sm:$0xff]
    %v4691 = vld [vmem:[%s4628 + $0x1f0] sm:$0xff]
    %v4692 = vld [vmem:[%s4628 + $0x1f8] sm:$0xff]
    %v4693 = vld [vmem:[%s4628 + $0x200] sm:$0xff]
    %v4694 = vld [vmem:[%s4628 + $0x208] sm:$0xff]
    %v4695 = vld [vmem:[%s4628 + $0x210] sm:$0xff]
    %v4696 = vld [vmem:[%s4628 + $0x218] sm:$0xff]
    %v4697 = vld [vmem:[%s4628 + $0x220] sm:$0xff]
    %v4698 = vld [vmem:[%s4628 + $0x228] sm:$0xff]
    %v4699 = vld [vmem:[%s4628 + $0x230] sm:$0xff]
    %v4700 = vld [vmem:[%s4628 + $0x238] sm:$0xff]
    %v4701 = vld [vmem:[%s4628 + $0x240] sm:$0xff]
    %v4702 = vld [vmem:[%s4628 + $0x248] sm:$0xff]
    %v4703 = vld [vmem:[%s4628 + $0x250] sm:$0xff]
    %v4704 = vld [vmem:[%s4628 + $0x258] sm:$0xff]
    %v4705 = vld [vmem:[%s4628 + $0x260] sm:$0xff]
    %v4706 = vld [vmem:[%s4628 + $0x268] sm:$0xff]
    %v4707 = vld [vmem:[%s4628 + $0x270] sm:$0xff]
    %v4708 = vld [vmem:[%s4628 + $0x278] sm:$0xff]
    %v4709 = vld [vmem:[%s4628 + $0x280] sm:$0xff]
    %v4710 = vld [vmem:[%s4628 + $0x288] sm:$0xff]
    %v4711 = vld [vmem:[%s4628 + $0x290] sm:$0xff]
    %v4712 = vld [vmem:[%s4628 + $0x298] sm:$0xff]
    %v4713 = vld [vmem:[%s4628 + $0x2a0] sm:$0xff]
    %v4714 = vld [vmem:[%s4628 + $0x2a8] sm:$0xff]
    %v4715 = vld [vmem:[%s4628 + $0x2b0] sm:$0xff]
    %v4716 = vld [vmem:[%s4628 + $0x2b8] sm:$0xff]
    %v4717 = vld [vmem:[%s4628 + $0x2c0] sm:$0xff]
    %v4718 = vld [vmem:[%s4628 + $0x2c8] sm:$0xff]
    %v4719 = vld [vmem:[%s4628 + $0x2d0] sm:$0xff]
    %v4720 = vld [vmem:[%s4628 + $0x2d8] sm:$0xff]
    %v4721 = vld [vmem:[%s4628 + $0x2e0] sm:$0xff]
    %v4722 = vld [vmem:[%s4628 + $0x2e8] sm:$0xff]
    %v4723 = vld [vmem:[%s4628 + $0x2f0] sm:$0xff]
    %v4724 = vld [vmem:[%s4628 + $0x2f8] sm:$0xff]
    %v4741 = vunpack.c.l.b16 %v4612
    %v4742 = vunpack.c.h.b16 %v4612
    %v4743 = vunpack.c.l.b16 %v4613
    %v4744 = vunpack.c.l.b16 %v4614
    %v4745 = vunpack.c.h.b16 %v4614
    %v4746 = vunpack.c.l.b16 %v4615
    %v4747 = vunpack.c.l.b16 %v4616
    %v4748 = vunpack.c.h.b16 %v4616
    %v4749 = vunpack.c.l.b16 %v4617
    %v4750 = vunpack.c.l.b16 %v4618
    %v4751 = vunpack.c.h.b16 %v4618
    %v4752 = vunpack.c.l.b16 %v4619
    %v4753 = vunpack.c.l.b16 %v4620
    %v4754 = vunpack.c.h.b16 %v4620
    %v4755 = vunpack.c.l.b16 %v4621
    %v4756 = vunpack.c.l.b16 %v4622
    %v4757 = vunpack.c.h.b16 %v4622
    %v4758 = vunpack.c.l.b16 %v4623
    %v4759 = vunpack.c.l.b16 %v4624
    %v4760 = vunpack.c.h.b16 %v4624
    %v4761 = vunpack.c.l.b16 %v4625
    %v4762 = vunpack.c.l.b16 %v4626
    %v4763 = vunpack.c.h.b16 %v4626
    %v4764 = vunpack.c.l.b16 %v4627
    %v4765 = vpack.c.b16 %v4744, %v4741
    %v4766 = vpack.c.b16 %v4745, %v4742
    %v4767 = vpack.c.b16 %v4746, %v4743
    %v4768 = vpack.c.b16 %v4750, %v4747
    %v4769 = vpack.c.b16 %v4751, %v4748
    %v4770 = vpack.c.b16 %v4752, %v4749
    %v4771 = vpack.c.b16 %v4756, %v4753
    %v4772 = vpack.c.b16 %v4757, %v4754
    %v4773 = vpack.c.b16 %v4758, %v4755
    %v4774 = vpack.c.b16 %v4762, %v4759
    %v4775 = vpack.c.b16 %v4763, %v4760
    %v4776 = vpack.c.b16 %v4764, %v4761
    %v4885 = vunpack.c.l.b16 %v4629
    %v4886 = vunpack.c.h.b16 %v4629
    %v4887 = vunpack.c.l.b16 %v4630
    %v4888 = vunpack.c.h.b16 %v4630
    %v4889 = vunpack.c.l.b16 %v4631
    %v4890 = vunpack.c.h.b16 %v4631
    %v4891 = vunpack.c.l.b16 %v4632
    %v4892 = vunpack.c.h.b16 %v4632
    %v4893 = vunpack.c.l.b16 %v4633
    %v4894 = vunpack.c.h.b16 %v4633
    %v4895 = vunpack.c.l.b16 %v4634
    %v4896 = vunpack.c.h.b16 %v4634
    %v4897 = vunpack.c.l.b16 %v4635
    %v4898 = vunpack.c.h.b16 %v4635
    %v4899 = vunpack.c.l.b16 %v4636
    %v4900 = vunpack.c.h.b16 %v4636
    %v4901 = vunpack.c.l.b16 %v4637
    %v4902 = vunpack.c.h.b16 %v4637
    %v4903 = vunpack.c.l.b16 %v4638
    %v4904 = vunpack.c.h.b16 %v4638
    %v4905 = vunpack.c.l.b16 %v4639
    %v4906 = vunpack.c.h.b16 %v4639
    %v4907 = vunpack.c.l.b16 %v4640
    %v4908 = vunpack.c.h.b16 %v4640
    %v4909 = vunpack.c.l.b16 %v4641
    %v4910 = vunpack.c.h.b16 %v4641
    %v4911 = vunpack.c.l.b16 %v4642
    %v4912 = vunpack.c.h.b16 %v4642
    %v4913 = vunpack.c.l.b16 %v4643
    %v4914 = vunpack.c.h.b16 %v4643
    %v4915 = vunpack.c.l.b16 %v4644
    %v4916 = vunpack.c.h.b16 %v4644
    %v4917 = vunpack.c.l.b16 %v4645
    %v4918 = vunpack.c.h.b16 %v4645
    %v4919 = vunpack.c.l.b16 %v4646
    %v4920 = vunpack.c.h.b16 %v4646
    %v4921 = vunpack.c.l.b16 %v4647
    %v4922 = vunpack.c.h.b16 %v4647
    %v4923 = vunpack.c.l.b16 %v4648
    %v4924 = vunpack.c.h.b16 %v4648
    %v4925 = vunpack.c.l.b16 %v4649
    %v4926 = vunpack.c.h.b16 %v4649
    %v4927 = vunpack.c.l.b16 %v4650
    %v4928 = vunpack.c.h.b16 %v4650
    %v4929 = vunpack.c.l.b16 %v4651
    %v4930 = vunpack.c.h.b16 %v4651
    %v4931 = vunpack.c.l.b16 %v4652
    %v4932 = vunpack.c.h.b16 %v4652
    %v4933 = vunpack.c.l.b16 %v4653
    %v4934 = vunpack.c.h.b16 %v4653
    %v4935 = vunpack.c.l.b16 %v4654
    %v4936 = vunpack.c.h.b16 %v4654
    %v4937 = vunpack.c.l.b16 %v4655
    %v4938 = vunpack.c.h.b16 %v4655
    %v4939 = vunpack.c.l.b16 %v4656
    %v4940 = vunpack.c.h.b16 %v4656
    %v4941 = vunpack.c.l.b16 %v4657
    %v4942 = vunpack.c.h.b16 %v4657
    %v4943 = vunpack.c.l.b16 %v4658
    %v4944 = vunpack.c.h.b16 %v4658
    %v4945 = vunpack.c.l.b16 %v4659
    %v4946 = vunpack.c.h.b16 %v4659
    %v4947 = vunpack.c.l.b16 %v4660
    %v4948 = vunpack.c.h.b16 %v4660
    %v4949 = vunpack.c.l.b16 %v4661
    %v4950 = vunpack.c.h.b16 %v4661
    %v4951 = vunpack.c.l.b16 %v4662
    %v4952 = vunpack.c.h.b16 %v4662
    %v4953 = vunpack.c.l.b16 %v4663
    %v4954 = vunpack.c.h.b16 %v4663
    %v4955 = vunpack.c.l.b16 %v4664
    %v4956 = vunpack.c.h.b16 %v4664
    %v4957 = vunpack.c.l.b16 %v4665
    %v4958 = vunpack.c.h.b16 %v4665
    %v4959 = vunpack.c.l.b16 %v4666
    %v4960 = vunpack.c.h.b16 %v4666
    %v4961 = vunpack.c.l.b16 %v4667
    %v4962 = vunpack.c.h.b16 %v4667
    %v4963 = vunpack.c.l.b16 %v4668
    %v4964 = vunpack.c.h.b16 %v4668
    %v4965 = vunpack.c.l.b16 %v4669
    %v4966 = vunpack.c.h.b16 %v4669
    %v4967 = vunpack.c.l.b16 %v4670
    %v4968 = vunpack.c.h.b16 %v4670
    %v4969 = vunpack.c.l.b16 %v4671
    %v4970 = vunpack.c.h.b16 %v4671
    %v4971 = vunpack.c.l.b16 %v4672
    %v4972 = vunpack.c.h.b16 %v4672
    %v4973 = vunpack.c.l.b16 %v4673
    %v4974 = vunpack.c.h.b16 %v4673
    %v4975 = vunpack.c.l.b16 %v4674
    %v4976 = vunpack.c.h.b16 %v4674
    %v4977 = vunpack.c.l.b16 %v4675
    %v4978 = vunpack.c.h.b16 %v4675
    %v4979 = vunpack.c.l.b16 %v4676
    %v4980 = vunpack.c.h.b16 %v4676
    %v4981 = vunpack.c.l.b16 %v4677
    %v4982 = vunpack.c.h.b16 %v4677
    %v4983 = vunpack.c.l.b16 %v4678
    %v4984 = vunpack.c.h.b16 %v4678
    %v4985 = vunpack.c.l.b16 %v4679
    %v4986 = vunpack.c.h.b16 %v4679
    %v4987 = vunpack.c.l.b16 %v4680
    %v4988 = vunpack.c.h.b16 %v4680
    %v4989 = vunpack.c.l.b16 %v4681
    %v4990 = vunpack.c.h.b16 %v4681
    %v4991 = vunpack.c.l.b16 %v4682
    %v4992 = vunpack.c.h.b16 %v4682
    %v4993 = vunpack.c.l.b16 %v4683
    %v4994 = vunpack.c.h.b16 %v4683
    %v4995 = vunpack.c.l.b16 %v4684
    %v4996 = vunpack.c.h.b16 %v4684
    %v4997 = vunpack.c.l.b16 %v4685
    %v4998 = vunpack.c.h.b16 %v4685
    %v4999 = vunpack.c.l.b16 %v4686
    %v5000 = vunpack.c.h.b16 %v4686
    %v5001 = vunpack.c.l.b16 %v4687
    %v5002 = vunpack.c.h.b16 %v4687
    %v5003 = vunpack.c.l.b16 %v4688
    %v5004 = vunpack.c.h.b16 %v4688
    %v5005 = vunpack.c.l.b16 %v4689
    %v5006 = vunpack.c.h.b16 %v4689
    %v5007 = vunpack.c.l.b16 %v4690
    %v5008 = vunpack.c.h.b16 %v4690
    %v5009 = vunpack.c.l.b16 %v4691
    %v5010 = vunpack.c.h.b16 %v4691
    %v5011 = vunpack.c.l.b16 %v4692
    %v5012 = vunpack.c.h.b16 %v4692
    %v5013 = vunpack.c.l.b16 %v4693
    %v5014 = vunpack.c.h.b16 %v4693
    %v5015 = vunpack.c.l.b16 %v4694
    %v5016 = vunpack.c.h.b16 %v4694
    %v5017 = vunpack.c.l.b16 %v4695
    %v5018 = vunpack.c.h.b16 %v4695
    %v5019 = vunpack.c.l.b16 %v4696
    %v5020 = vunpack.c.h.b16 %v4696
    %v5021 = vunpack.c.l.b16 %v4697
    %v5022 = vunpack.c.h.b16 %v4697
    %v5023 = vunpack.c.l.b16 %v4698
    %v5024 = vunpack.c.h.b16 %v4698
    %v5025 = vunpack.c.l.b16 %v4699
    %v5026 = vunpack.c.h.b16 %v4699
    %v5027 = vunpack.c.l.b16 %v4700
    %v5028 = vunpack.c.h.b16 %v4700
    %v5029 = vunpack.c.l.b16 %v4701
    %v5030 = vunpack.c.h.b16 %v4701
    %v5031 = vunpack.c.l.b16 %v4702
    %v5032 = vunpack.c.h.b16 %v4702
    %v5033 = vunpack.c.l.b16 %v4703
    %v5034 = vunpack.c.h.b16 %v4703
    %v5035 = vunpack.c.l.b16 %v4704
    %v5036 = vunpack.c.h.b16 %v4704
    %v5037 = vunpack.c.l.b16 %v4705
    %v5038 = vunpack.c.h.b16 %v4705
    %v5039 = vunpack.c.l.b16 %v4706
    %v5040 = vunpack.c.h.b16 %v4706
    %v5041 = vunpack.c.l.b16 %v4707
    %v5042 = vunpack.c.h.b16 %v4707
    %v5043 = vunpack.c.l.b16 %v4708
    %v5044 = vunpack.c.h.b16 %v4708
    %v5045 = vunpack.c.l.b16 %v4709
    %v5046 = vunpack.c.h.b16 %v4709
    %v5047 = vunpack.c.l.b16 %v4710
    %v5048 = vunpack.c.h.b16 %v4710
    %v5049 = vunpack.c.l.b16 %v4711
    %v5050 = vunpack.c.h.b16 %v4711
    %v5051 = vunpack.c.l.b16 %v4712
    %v5052 = vunpack.c.h.b16 %v4712
    %v5053 = vunpack.c.l.b16 %v4713
    %v5054 = vunpack.c.h.b16 %v4713
    %v5055 = vunpack.c.l.b16 %v4714
    %v5056 = vunpack.c.h.b16 %v4714
    %v5057 = vunpack.c.l.b16 %v4715
    %v5058 = vunpack.c.h.b16 %v4715
    %v5059 = vunpack.c.l.b16 %v4716
    %v5060 = vunpack.c.h.b16 %v4716
    %v5061 = vunpack.c.l.b16 %v4717
    %v5062 = vunpack.c.h.b16 %v4717
    %v5063 = vunpack.c.l.b16 %v4718
    %v5064 = vunpack.c.h.b16 %v4718
    %v5065 = vunpack.c.l.b16 %v4719
    %v5066 = vunpack.c.h.b16 %v4719
    %v5067 = vunpack.c.l.b16 %v4720
    %v5068 = vunpack.c.h.b16 %v4720
    %v5069 = vunpack.c.l.b16 %v4721
    %v5070 = vunpack.c.h.b16 %v4721
    %v5071 = vunpack.c.l.b16 %v4722
    %v5072 = vunpack.c.h.b16 %v4722
    %v5073 = vunpack.c.l.b16 %v4723
    %v5074 = vunpack.c.h.b16 %v4723
    %v5075 = vunpack.c.l.b16 %v4724
    %v5076 = vunpack.c.h.b16 %v4724
    %v5077 = vpack.c.b16 %v4889, %v4885
    %v5078 = vpack.c.b16 %v4890, %v4886
    %v5079 = vpack.c.b16 %v4891, %v4887
    %v5080 = vpack.c.b16 %v4892, %v4888
    %v5081 = vpack.c.b16 %v4897, %v4893
    %v5082 = vpack.c.b16 %v4898, %v4894
    %v5083 = vpack.c.b16 %v4899, %v4895
    %v5084 = vpack.c.b16 %v4900, %v4896
    %v5085 = vpack.c.b16 %v4905, %v4901
    %v5086 = vpack.c.b16 %v4906, %v4902
    %v5087 = vpack.c.b16 %v4907, %v4903
    %v5088 = vpack.c.b16 %v4908, %v4904
    %v5089 = vpack.c.b16 %v4913, %v4909
    %v5090 = vpack.c.b16 %v4914, %v4910
    %v5091 = vpack.c.b16 %v4915, %v4911
    %v5092 = vpack.c.b16 %v4916, %v4912
    %v5093 = vpack.c.b16 %v4921, %v4917
    %v5094 = vpack.c.b16 %v4922, %v4918
    %v5095 = vpack.c.b16 %v4923, %v4919
    %v5096 = vpack.c.b16 %v4924, %v4920
    %v5097 = vpack.c.b16 %v4929, %v4925
    %v5098 = vpack.c.b16 %v4930, %v4926
    %v5099 = vpack.c.b16 %v4931, %v4927
    %v5100 = vpack.c.b16 %v4932, %v4928
    %v5101 = vpack.c.b16 %v4937, %v4933
    %v5102 = vpack.c.b16 %v4938, %v4934
    %v5103 = vpack.c.b16 %v4939, %v4935
    %v5104 = vpack.c.b16 %v4940, %v4936
    %v5105 = vpack.c.b16 %v4945, %v4941
    %v5106 = vpack.c.b16 %v4946, %v4942
    %v5107 = vpack.c.b16 %v4947, %v4943
    %v5108 = vpack.c.b16 %v4948, %v4944
    %v5109 = vpack.c.b16 %v4953, %v4949
    %v5110 = vpack.c.b16 %v4954, %v4950
    %v5111 = vpack.c.b16 %v4955, %v4951
    %v5112 = vpack.c.b16 %v4956, %v4952
    %v5113 = vpack.c.b16 %v4961, %v4957
    %v5114 = vpack.c.b16 %v4962, %v4958
    %v5115 = vpack.c.b16 %v4963, %v4959
    %v5116 = vpack.c.b16 %v4964, %v4960
    %v5117 = vpack.c.b16 %v4969, %v4965
    %v5118 = vpack.c.b16 %v4970, %v4966
    %v5119 = vpack.c.b16 %v4971, %v4967
    %v5120 = vpack.c.b16 %v4972, %v4968
    %v5121 = vpack.c.b16 %v4977, %v4973
    %v5122 = vpack.c.b16 %v4978, %v4974
    %v5123 = vpack.c.b16 %v4979, %v4975
    %v5124 = vpack.c.b16 %v4980, %v4976
    %v5125 = vpack.c.b16 %v4985, %v4981
    %v5126 = vpack.c.b16 %v4986, %v4982
    %v5127 = vpack.c.b16 %v4987, %v4983
    %v5128 = vpack.c.b16 %v4988, %v4984
    %v5129 = vpack.c.b16 %v4993, %v4989
    %v5130 = vpack.c.b16 %v4994, %v4990
    %v5131 = vpack.c.b16 %v4995, %v4991
    %v5132 = vpack.c.b16 %v4996, %v4992
    %v5133 = vpack.c.b16 %v5001, %v4997
    %v5134 = vpack.c.b16 %v5002, %v4998
    %v5135 = vpack.c.b16 %v5003, %v4999
    %v5136 = vpack.c.b16 %v5004, %v5000
    %v5137 = vpack.c.b16 %v5009, %v5005
    %v5138 = vpack.c.b16 %v5010, %v5006
    %v5139 = vpack.c.b16 %v5011, %v5007
    %v5140 = vpack.c.b16 %v5012, %v5008
    %v5141 = vpack.c.b16 %v5017, %v5013
    %v5142 = vpack.c.b16 %v5018, %v5014
    %v5143 = vpack.c.b16 %v5019, %v5015
    %v5144 = vpack.c.b16 %v5020, %v5016
    %v5145 = vpack.c.b16 %v5025, %v5021
    %v5146 = vpack.c.b16 %v5026, %v5022
    %v5147 = vpack.c.b16 %v5027, %v5023
    %v5148 = vpack.c.b16 %v5028, %v5024
    %v5149 = vpack.c.b16 %v5033, %v5029
    %v5150 = vpack.c.b16 %v5034, %v5030
    %v5151 = vpack.c.b16 %v5035, %v5031
    %v5152 = vpack.c.b16 %v5036, %v5032
    %v5153 = vpack.c.b16 %v5041, %v5037
    %v5154 = vpack.c.b16 %v5042, %v5038
    %v5155 = vpack.c.b16 %v5043, %v5039
    %v5156 = vpack.c.b16 %v5044, %v5040
    %v5157 = vpack.c.b16 %v5049, %v5045
    %v5158 = vpack.c.b16 %v5050, %v5046
    %v5159 = vpack.c.b16 %v5051, %v5047
    %v5160 = vpack.c.b16 %v5052, %v5048
    %v5161 = vpack.c.b16 %v5057, %v5053
    %v5162 = vpack.c.b16 %v5058, %v5054
    %v5163 = vpack.c.b16 %v5059, %v5055
    %v5164 = vpack.c.b16 %v5060, %v5056
    %v5165 = vpack.c.b16 %v5065, %v5061
    %v5166 = vpack.c.b16 %v5066, %v5062
    %v5167 = vpack.c.b16 %v5067, %v5063
    %v5168 = vpack.c.b16 %v5068, %v5064
    %v5169 = vpack.c.b16 %v5073, %v5069
    %v5170 = vpack.c.b16 %v5074, %v5070
    %v5171 = vpack.c.b16 %v5075, %v5071
    %v5172 = vpack.c.b16 %v5076, %v5072
    %5269 = vmatprep.subr.bf16.mxu0 %v5078
    %5270 = vmatpush1.bf16.msra.mxu0 %v5077
    %5271 = vmatprep.subr.bf16.mxu0 %v5082
    %5272 = vmatpush1.bf16.msra.mxu0 %v5081
    %5273 = vmatprep.subr.bf16.mxu0 %v5086
    %5274 = vmatpush1.bf16.msra.mxu0 %v5085
    %5275 = vmatprep.subr.bf16.mxu0 %v5090
    %5276 = vmatpush1.bf16.msra.mxu0 %v5089
    %5277 = vmatprep.subr.bf16.mxu0 %v5094
    %5278 = vmatpush1.bf16.msra.mxu0 %v5093
    %5279 = vmatprep.subr.bf16.mxu0 %v5098
    %5280 = vmatpush1.bf16.msra.mxu0 %v5097
    %5281 = vmatprep.subr.bf16.mxu0 %v5102
    %5282 = vmatpush1.bf16.msra.mxu0 %v5101
    %5283 = vmatprep.subr.bf16.mxu0 %v5106
    %5284 = vmatpush1.bf16.msra.mxu0 %v5105
    %5285 = vmatprep.subr.bf16.mxu0 %v5110
    %5286 = vmatpush1.bf16.msra.mxu0 %v5109
    %5287 = vmatprep.subr.bf16.mxu0 %v5114
    %5288 = vmatpush1.bf16.msra.mxu0 %v5113
    %5289 = vmatprep.subr.bf16.mxu0 %v5118
    %5290 = vmatpush1.bf16.msra.mxu0 %v5117
    %5291 = vmatprep.subr.bf16.mxu0 %v5122
    %5292 = vmatpush1.bf16.msra.mxu0 %v5121
    %5293 = vmatprep.subr.bf16.mxu0 %v5126
    %5294 = vmatpush1.bf16.msra.mxu0 %v5125
    %5295 = vmatprep.subr.bf16.mxu0 %v5130
    %5296 = vmatpush1.bf16.msra.mxu0 %v5129
    %5297 = vmatprep.subr.bf16.mxu0 %v5134
    %5298 = vmatpush1.bf16.msra.mxu0 %v5133
    %5299 = vmatprep.subr.bf16.mxu0 %v5138
    %5300 = vmatpush1.bf16.msra.mxu0 %v5137
    %5301 = vmatprep.mubr.bf16.mxu0 %v4766
    %5302 = vmatmul.mubr.bf16.gmra.mrb[0].mxu0 %v4765
    %v5303 = vpop.f32.mrb[0].mxu0
    %v5304 = vadd.f32 0.0, %v5303
    %v5305 = vpop.f32.mrb[0].mxu0
    %v5306 = vadd.f32 0.0, %v5305
    %v5307 = vpop.f32.mrb[0].mxu0
    %v5308 = vadd.f32 0.0, %v5307
    %v5309 = vpop.f32.mrb[0].mxu0
    %v5310 = vadd.f32 0.0, %v5309
    %5311 = vmatprep.mubr.bf16.mxu0 %v4769
    %5312 = vmatmul.mubr.bf16.gmra.mrb[0].mxu0 %v4768
    %v5313 = vpop.f32.mrb[0].mxu0
    %v5314 = vadd.f32 0.0, %v5313
    %v5315 = vpop.f32.mrb[0].mxu0
    %v5316 = vadd.f32 0.0, %v5315
    %v5317 = vpop.f32.mrb[0].mxu0
    %v5318 = vadd.f32 0.0, %v5317
    %v5319 = vpop.f32.mrb[0].mxu0
    %v5320 = vadd.f32 0.0, %v5319
    %5321 = vmatprep.mubr.bf16.mxu0 %v4772
    %5322 = vmatmul.mubr.bf16.gmra.mrb[0].mxu0 %v4771
    %v5323 = vpop.f32.mrb[0].mxu0
    %v5324 = vadd.f32 0.0, %v5323
    %v5325 = vpop.f32.mrb[0].mxu0
    %v5326 = vadd.f32 0.0, %v5325
    %v5327 = vpop.f32.mrb[0].mxu0
    %v5328 = vadd.f32 0.0, %v5327
    %v5329 = vpop.f32.mrb[0].mxu0
    %v5330 = vadd.f32 0.0, %v5329
    %5331 = vmatprep.mubr.bf16.mxu0 %v4775
    %5332 = vmatmul.mubr.bf16.gmra.mrb[0].mxu0 %v4774
    %v5333 = vpop.f32.mrb[0].mxu0
    %v5334 = vadd.f32 0.0, %v5333
    %v5335 = vpop.f32.mrb[0].mxu0
    %v5336 = vadd.f32 0.0, %v5335
    %v5337 = vpop.f32.mrb[0].mxu0
    %v5338 = vadd.f32 0.0, %v5337
    %v5339 = vpop.f32.mrb[0].mxu0
    %v5340 = vadd.f32 0.0, %v5339
    %5341 = vdwg.mxu0
    %5342 = vmatprep.subr.bf16.mxu0 %v5142
    %5343 = vmatpush1.bf16.msra.mxu0 %v5141
    %5344 = vmatprep.subr.bf16.mxu0 %v5146
    %5345 = vmatpush1.bf16.msra.mxu0 %v5145
    %5346 = vmatprep.subr.bf16.mxu0 %v5150
    %5347 = vmatpush1.bf16.msra.mxu0 %v5149
    %5348 = vmatprep.subr.bf16.mxu0 %v5154
    %5349 = vmatpush1.bf16.msra.mxu0 %v5153
    %5350 = vmatprep.subr.bf16.mxu0 %v5158
    %5351 = vmatpush1.bf16.msra.mxu0 %v5157
    %5352 = vmatprep.subr.bf16.mxu0 %v5162
    %5353 = vmatpush1.bf16.msra.mxu0 %v5161
    %5354 = vmatprep.subr.bf16.mxu0 %v5166
    %5355 = vmatpush1.bf16.msra.mxu0 %v5165
    %5356 = vmatprep.subr.bf16.mxu0 %v5170
    %5357 = vmatpush1.bf16.msra.mxu0 %v5169
    %5358 = vmatprep.subr.bf16.mxu0 0
    %5359 = vmatpush1.bf16.msra.mxu0 0
    %5360 = vmatprep.subr.bf16.mxu0 0
    %5361 = vmatpush1.bf16.msra.mxu0 0
    %5362 = vmatprep.subr.bf16.mxu0 0
    %5363 = vmatpush1.bf16.msra.mxu0 0
    %5364 = vmatprep.subr.bf16.mxu0 0
    %5365 = vmatpush1.bf16.msra.mxu0 0
    %5366 = vmatprep.subr.bf16.mxu0 0
    %5367 = vmatpush1.bf16.msra.mxu0 0
    %5368 = vmatprep.subr.bf16.mxu0 0
    %5369 = vmatpush1.bf16.msra.mxu0 0
    %5370 = vmatprep.subr.bf16.mxu0 0
    %5371 = vmatpush1.bf16.msra.mxu0 0
    %5372 = vmatprep.subr.bf16.mxu0 0
    %5373 = vmatpush1.bf16.msra.mxu0 0
    %5374 = vmatprep.mubr.bf16.mxu0 0
    %5375 = vmatmul.mubr.bf16.gmra.mrb[0].mxu0 %v4767
    %v5376 = vpop.f32.mrb[0].mxu0
    %v5377 = vadd.f32 %v5304, %v5376
    %v5378 = vpop.f32.mrb[0].mxu0
    %v5379 = vadd.f32 %v5306, %v5378
    %v5380 = vpop.f32.mrb[0].mxu0
    %v5381 = vadd.f32 %v5308, %v5380
    %v5382 = vpop.f32.mrb[0].mxu0
    %v5383 = vadd.f32 %v5310, %v5382
    %5384 = vmatprep.mubr.bf16.mxu0 0
    %5385 = vmatmul.mubr.bf16.gmra.mrb[0].mxu0 %v4770
    %v5386 = vpop.f32.mrb[0].mxu0
    %v5387 = vadd.f32 %v5314, %v5386
    %v5388 = vpop.f32.mrb[0].mxu0
    %v5389 = vadd.f32 %v5316, %v5388
    %v5390 = vpop.f32.mrb[0].mxu0
    %v5391 = vadd.f32 %v5318, %v5390
    %v5392 = vpop.f32.mrb[0].mxu0
    %v5393 = vadd.f32 %v5320, %v5392
    %5394 = vmatprep.mubr.bf16.mxu0 0
    %5395 = vmatmul.mubr.bf16.gmra.mrb[0].mxu0 %v4773
    %v5396 = vpop.f32.mrb[0].mxu0
    %v5397 = vadd.f32 %v5324, %v5396
    %v5398 = vpop.f32.mrb[0].mxu0
    %v5399 = vadd.f32 %v5326, %v5398
    %v5400 = vpop.f32.mrb[0].mxu0
    %v5401 = vadd.f32 %v5328, %v5400
    %v5402 = vpop.f32.mrb[0].mxu0
    %v5403 = vadd.f32 %v5330, %v5402
    %5404 = vmatprep.mubr.bf16.mxu0 0
    %5405 = vmatmul.mubr.bf16.gmra.mrb[0].mxu0 %v4776
    %v5406 = vpop.f32.mrb[0].mxu0
    %v5407 = vadd.f32 %v5334, %v5406
    %v5408 = vpop.f32.mrb[0].mxu0
    %v5409 = vadd.f32 %v5336, %v5408
    %v5410 = vpop.f32.mrb[0].mxu0
    %v5411 = vadd.f32 %v5338, %v5410
    %v5412 = vpop.f32.mrb[0].mxu0
    %v5413 = vadd.f32 %v5340, %v5412
    %5414 = vdwg.mxu0
    %5415 = vmatprep.subr.bf16.mxu0 %v5080
    %5416 = vmatpush1.bf16.msra.mxu0 %v5079
    %5417 = vmatprep.subr.bf16.mxu0 %v5084
    %5418 = vmatpush1.bf16.msra.mxu0 %v5083
    %5419 = vmatprep.subr.bf16.mxu0 %v5088
    %5420 = vmatpush1.bf16.msra.mxu0 %v5087
    %5421 = vmatprep.subr.bf16.mxu0 %v5092
    %5422 = vmatpush1.bf16.msra.mxu0 %v5091
    %5423 = vmatprep.subr.bf16.mxu0 %v5096
    %5424 = vmatpush1.bf16.msra.mxu0 %v5095
    %5425 = vmatprep.subr.bf16.mxu0 %v5100
    %5426 = vmatpush1.bf16.msra.mxu0 %v5099
    %5427 = vmatprep.subr.bf16.mxu0 %v5104
    %5428 = vmatpush1.bf16.msra.mxu0 %v5103
    %5429 = vmatprep.subr.bf16.mxu0 %v5108
    %5430 = vmatpush1.bf16.msra.mxu0 %v5107
    %5431 = vmatprep.subr.bf16.mxu0 %v5112
    %5432 = vmatpush1.bf16.msra.mxu0 %v5111
    %5433 = vmatprep.subr.bf16.mxu0 %v5116
    %5434 = vmatpush1.bf16.msra.mxu0 %v5115
    %5435 = vmatprep.subr.bf16.mxu0 %v5120
    %5436 = vmatpush1.bf16.msra.mxu0 %v5119
    %5437 = vmatprep.subr.bf16.mxu0 %v5124
    %5438 = vmatpush1.bf16.msra.mxu0 %v5123
    %5439 = vmatprep.subr.bf16.mxu0 %v5128
    %5440 = vmatpush1.bf16.msra.mxu0 %v5127
    %5441 = vmatprep.subr.bf16.mxu0 %v5132
    %5442 = vmatpush1.bf16.msra.mxu0 %v5131
    %5443 = vmatprep.subr.bf16.mxu0 %v5136
    %5444 = vmatpush1.bf16.msra.mxu0 %v5135
    %5445 = vmatprep.subr.bf16.mxu0 %v5140
    %5446 = vmatpush1.bf16.msra.mxu0 %v5139
    %5447 = vmatprep.mubr.bf16.mxu0 %v4766
    %5448 = vmatmul.mubr.bf16.gmra.mrb[0].mxu0 %v4765
    %v5449 = vpop.f32.mrb[0].mxu0
    %v5450 = vadd.f32 0.0, %v5449
    %v5451 = vpop.f32.mrb[0].mxu0
    %v5452 = vadd.f32 0.0, %v5451
    %v5453 = vpop.f32.mrb[0].mxu0
    %v5454 = vadd.f32 0.0, %v5453
    %v5455 = vpop.f32.mrb[0].mxu0
    %v5456 = vadd.f32 0.0, %v5455
    %5457 = vmatprep.mubr.bf16.mxu0 %v4769
    %5458 = vmatmul.mubr.bf16.gmra.mrb[0].mxu0 %v4768
    %v5459 = vpop.f32.mrb[0].mxu0
    %v5460 = vadd.f32 0.0, %v5459
    %v5461 = vpop.f32.mrb[0].mxu0
    %v5462 = vadd.f32 0.0, %v5461
    %v5463 = vpop.f32.mrb[0].mxu0
    %v5464 = vadd.f32 0.0, %v5463
    %v5465 = vpop.f32.mrb[0].mxu0
    %v5466 = vadd.f32 0.0, %v5465
    %5467 = vmatprep.mubr.bf16.mxu0 %v4772
    %5468 = vmatmul.mubr.bf16.gmra.mrb[0].mxu0 %v4771
    %v5469 = vpop.f32.mrb[0].mxu0
    %v5470 = vadd.f32 0.0, %v5469
    %v5471 = vpop.f32.mrb[0].mxu0
    %v5472 = vadd.f32 0.0, %v5471
    %v5473 = vpop.f32.mrb[0].mxu0
    %v5474 = vadd.f32 0.0, %v5473
    %v5475 = vpop.f32.mrb[0].mxu0
    %v5476 = vadd.f32 0.0, %v5475
    %5477 = vmatprep.mubr.bf16.mxu0 %v4775
    %5478 = vmatmul.mubr.bf16.gmra.mrb[0].mxu0 %v4774
    %v5479 = vpop.f32.mrb[0].mxu0
    %v5480 = vadd.f32 0.0, %v5479
    %v5481 = vpop.f32.mrb[0].mxu0
    %v5482 = vadd.f32 0.0, %v5481
    %v5483 = vpop.f32.mrb[0].mxu0
    %v5484 = vadd.f32 0.0, %v5483
    %v5485 = vpop.f32.mrb[0].mxu0
    %v5486 = vadd.f32 0.0, %v5485
    %5487 = vdwg.mxu0
    %5488 = vmatprep.subr.bf16.mxu0 %v5144
    %5489 = vmatpush1.bf16.msra.mxu0 %v5143
    %5490 = vmatprep.subr.bf16.mxu0 %v5148
    %5491 = vmatpush1.bf16.msra.mxu0 %v5147
    %5492 = vmatprep.subr.bf16.mxu0 %v5152
    %5493 = vmatpush1.bf16.msra.mxu0 %v5151
    %5494 = vmatprep.subr.bf16.mxu0 %v5156
    %5495 = vmatpush1.bf16.msra.mxu0 %v5155
    %5496 = vmatprep.subr.bf16.mxu0 %v5160
    %5497 = vmatpush1.bf16.msra.mxu0 %v5159
    %5498 = vmatprep.subr.bf16.mxu0 %v5164
    %5499 = vmatpush1.bf16.msra.mxu0 %v5163
    %5500 = vmatprep.subr.bf16.mxu0 %v5168
    %5501 = vmatpush1.bf16.msra.mxu0 %v5167
    %5502 = vmatprep.subr.bf16.mxu0 %v5172
    %5503 = vmatpush1.bf16.msra.mxu0 %v5171
    %5504 = vmatprep.subr.bf16.mxu0 0
    %5505 = vmatpush1.bf16.msra.mxu0 0
    %5506 = vmatprep.subr.bf16.mxu0 0
    %5507 = vmatpush1.bf16.msra.mxu0 0
    %5508 = vmatprep.subr.bf16.mxu0 0
    %5509 = vmatpush1.bf16.msra.mxu0 0
    %5510 = vmatprep.subr.bf16.mxu0 0
    %5511 = vmatpush1.bf16.msra.mxu0 0
    %5512 = vmatprep.subr.bf16.mxu0 0
    %5513 = vmatpush1.bf16.msra.mxu0 0
    %5514 = vmatprep.subr.bf16.mxu0 0
    %5515 = vmatpush1.bf16.msra.mxu0 0
    %5516 = vmatprep.subr.bf16.mxu0 0
    %5517 = vmatpush1.bf16.msra.mxu0 0
    %5518 = vmatprep.subr.bf16.mxu0 0
    %5519 = vmatpush1.bf16.msra.mxu0 0
    %5520 = vmatprep.mubr.bf16.mxu0 0
    %5521 = vmatmul.mubr.bf16.gmra.mrb[0].mxu0 %v4767
    %v5522 = vpop.f32.mrb[0].mxu0
    %v5523 = vadd.f32 %v5450, %v5522
    %v5524 = vpop.f32.mrb[0].mxu0
    %v5525 = vadd.f32 %v5452, %v5524
    %v5526 = vpop.f32.mrb[0].mxu0
    %v5527 = vadd.f32 %v5454, %v5526
    %v5528 = vpop.f32.mrb[0].mxu0
    %v5529 = vadd.f32 %v5456, %v5528
    %5530 = vmatprep.mubr.bf16.mxu0 0
    %5531 = vmatmul.mubr.bf16.gmra.mrb[0].mxu0 %v4770
    %v5532 = vpop.f32.mrb[0].mxu0
    %v5533 = vadd.f32 %v5460, %v5532
    %v5534 = vpop.f32.mrb[0].mxu0
    %v5535 = vadd.f32 %v5462, %v5534
    %v5536 = vpop.f32.mrb[0].mxu0
    %v5537 = vadd.f32 %v5464, %v5536
    %v5538 = vpop.f32.mrb[0].mxu0
    %v5539 = vadd.f32 %v5466, %v5538
    %5540 = vmatprep.mubr.bf16.mxu0 0
    %5541 = vmatmul.mubr.bf16.gmra.mrb[0].mxu0 %v4773
    %v5542 = vpop.f32.mrb[0].mxu0
    %v5543 = vadd.f32 %v5470, %v5542
    %v5544 = vpop.f32.mrb[0].mxu0
    %v5545 = vadd.f32 %v5472, %v5544
    %v5546 = vpop.f32.mrb[0].mxu0
    %v5547 = vadd.f32 %v5474, %v5546
    %v5548 = vpop.f32.mrb[0].mxu0
    %v5549 = vadd.f32 %v5476, %v5548
    %5550 = vmatprep.mubr.bf16.mxu0 0
    %5551 = vmatmul.mubr.bf16.gmra.mrb[0].mxu0 %v4776
    %v5552 = vpop.f32.mrb[0].mxu0
    %v5553 = vadd.f32 %v5480, %v5552
    %v5554 = vpop.f32.mrb[0].mxu0
    %v5555 = vadd.f32 %v5482, %v5554
    %v5556 = vpop.f32.mrb[0].mxu0
    %v5557 = vadd.f32 %v5484, %v5556
    %v5558 = vpop.f32.mrb[0].mxu0
    %v5559 = vadd.f32 %v5486, %v5558
    %5560 = vdwg.mxu0
    %v5577 = vunpack.c.l.b16 %v4499
    %v5578 = vunpack.c.h.b16 %v4499
    %v5579 = vunpack.c.l.b16 %v4500
    %v5580 = vunpack.c.l.b16 %v4501
    %v5581 = vunpack.c.h.b16 %v4501
    %v5582 = vunpack.c.l.b16 %v4502
    %v5583 = vunpack.c.l.b16 %v4503
    %v5584 = vunpack.c.h.b16 %v4503
    %v5585 = vunpack.c.l.b16 %v4504
    %v5586 = vunpack.c.l.b16 %v4505
    %v5587 = vunpack.c.h.b16 %v4505
    %v5588 = vunpack.c.l.b16 %v4506
    %v5589 = vunpack.c.l.b16 %v4507
    %v5590 = vunpack.c.h.b16 %v4507
    %v5591 = vunpack.c.l.b16 %v4508
    %v5592 = vunpack.c.l.b16 %v4509
    %v5593 = vunpack.c.h.b16 %v4509
    %v5594 = vunpack.c.l.b16 %v4510
    %v5595 = vunpack.c.l.b16 %v4511
    %v5596 = vunpack.c.h.b16 %v4511
    %v5597 = vunpack.c.l.b16 %v4512
    %v5598 = vunpack.c.l.b16 %v4513
    %v5599 = vunpack.c.h.b16 %v4513
    %v5600 = vunpack.c.l.b16 %v4514
    %v5601 = vpack.c.b16 %v5580, %v5577
    %v5602 = vpack.c.b16 %v5581, %v5578
    %v5603 = vpack.c.b16 %v5582, %v5579
    %v5604 = vpack.c.b16 %v5586, %v5583
    %v5605 = vpack.c.b16 %v5587, %v5584
    %v5606 = vpack.c.b16 %v5588, %v5585
    %v5607 = vpack.c.b16 %v5592, %v5589
    %v5608 = vpack.c.b16 %v5593, %v5590
    %v5609 = vpack.c.b16 %v5594, %v5591
    %v5610 = vpack.c.b16 %v5598, %v5595
    %v5611 = vpack.c.b16 %v5599, %v5596
    %v5612 = vpack.c.b16 %v5600, %v5597
    %v5721 = vunpack.c.l.b16 %v4515
    %v5722 = vunpack.c.h.b16 %v4515
    %v5723 = vunpack.c.l.b16 %v4516
    %v5724 = vunpack.c.h.b16 %v4516
    %v5725 = vunpack.c.l.b16 %v4517
    %v5726 = vunpack.c.h.b16 %v4517
    %v5727 = vunpack.c.l.b16 %v4518
    %v5728 = vunpack.c.h.b16 %v4518
    %v5729 = vunpack.c.l.b16 %v4519
    %v5730 = vunpack.c.h.b16 %v4519
    %v5731 = vunpack.c.l.b16 %v4520
    %v5732 = vunpack.c.h.b16 %v4520
    %v5733 = vunpack.c.l.b16 %v4521
    %v5734 = vunpack.c.h.b16 %v4521
    %v5735 = vunpack.c.l.b16 %v4522
    %v5736 = vunpack.c.h.b16 %v4522
    %v5737 = vunpack.c.l.b16 %v4523
    %v5738 = vunpack.c.h.b16 %v4523
    %v5739 = vunpack.c.l.b16 %v4524
    %v5740 = vunpack.c.h.b16 %v4524
    %v5741 = vunpack.c.l.b16 %v4525
    %v5742 = vunpack.c.h.b16 %v4525
    %v5743 = vunpack.c.l.b16 %v4526
    %v5744 = vunpack.c.h.b16 %v4526
    %v5745 = vunpack.c.l.b16 %v4527
    %v5746 = vunpack.c.h.b16 %v4527
    %v5747 = vunpack.c.l.b16 %v4528
    %v5748 = vunpack.c.h.b16 %v4528
    %v5749 = vunpack.c.l.b16 %v4529
    %v5750 = vunpack.c.h.b16 %v4529
    %v5751 = vunpack.c.l.b16 %v4530
    %v5752 = vunpack.c.h.b16 %v4530
    %v5753 = vunpack.c.l.b16 %v4531
    %v5754 = vunpack.c.h.b16 %v4531
    %v5755 = vunpack.c.l.b16 %v4532
    %v5756 = vunpack.c.h.b16 %v4532
    %v5757 = vunpack.c.l.b16 %v4533
    %v5758 = vunpack.c.h.b16 %v4533
    %v5759 = vunpack.c.l.b16 %v4534
    %v5760 = vunpack.c.h.b16 %v4534
    %v5761 = vunpack.c.l.b16 %v4535
    %v5762 = vunpack.c.h.b16 %v4535
    %v5763 = vunpack.c.l.b16 %v4536
    %v5764 = vunpack.c.h.b16 %v4536
    %v5765 = vunpack.c.l.b16 %v4537
    %v5766 = vunpack.c.h.b16 %v4537
    %v5767 = vunpack.c.l.b16 %v4538
    %v5768 = vunpack.c.h.b16 %v4538
    %v5769 = vunpack.c.l.b16 %v4539
    %v5770 = vunpack.c.h.b16 %v4539
    %v5771 = vunpack.c.l.b16 %v4540
    %v5772 = vunpack.c.h.b16 %v4540
    %v5773 = vunpack.c.l.b16 %v4541
    %v5774 = vunpack.c.h.b16 %v4541
    %v5775 = vunpack.c.l.b16 %v4542
    %v5776 = vunpack.c.h.b16 %v4542
    %v5777 = vunpack.c.l.b16 %v4543
    %v5778 = vunpack.c.h.b16 %v4543
    %v5779 = vunpack.c.l.b16 %v4544
    %v5780 = vunpack.c.h.b16 %v4544
    %v5781 = vunpack.c.l.b16 %v4545
    %v5782 = vunpack.c.h.b16 %v4545
    %v5783 = vunpack.c.l.b16 %v4546
    %v5784 = vunpack.c.h.b16 %v4546
    %v5785 = vunpack.c.l.b16 %v4547
    %v5786 = vunpack.c.h.b16 %v4547
    %v5787 = vunpack.c.l.b16 %v4548
    %v5788 = vunpack.c.h.b16 %v4548
    %v5789 = vunpack.c.l.b16 %v4549
    %v5790 = vunpack.c.h.b16 %v4549
    %v5791 = vunpack.c.l.b16 %v4550
    %v5792 = vunpack.c.h.b16 %v4550
    %v5793 = vunpack.c.l.b16 %v4551
    %v5794 = vunpack.c.h.b16 %v4551
    %v5795 = vunpack.c.l.b16 %v4552
    %v5796 = vunpack.c.h.b16 %v4552
    %v5797 = vunpack.c.l.b16 %v4553
    %v5798 = vunpack.c.h.b16 %v4553
    %v5799 = vunpack.c.l.b16 %v4554
    %v5800 = vunpack.c.h.b16 %v4554
    %v5801 = vunpack.c.l.b16 %v4555
    %v5802 = vunpack.c.h.b16 %v4555
    %v5803 = vunpack.c.l.b16 %v4556
    %v5804 = vunpack.c.h.b16 %v4556
    %v5805 = vunpack.c.l.b16 %v4557
    %v5806 = vunpack.c.h.b16 %v4557
    %v5807 = vunpack.c.l.b16 %v4558
    %v5808 = vunpack.c.h.b16 %v4558
    %v5809 = vunpack.c.l.b16 %v4559
    %v5810 = vunpack.c.h.b16 %v4559
    %v5811 = vunpack.c.l.b16 %v4560
    %v5812 = vunpack.c.h.b16 %v4560
    %v5813 = vunpack.c.l.b16 %v4561
    %v5814 = vunpack.c.h.b16 %v4561
    %v5815 = vunpack.c.l.b16 %v4562
    %v5816 = vunpack.c.h.b16 %v4562
    %v5817 = vunpack.c.l.b16 %v4563
    %v5818 = vunpack.c.h.b16 %v4563
    %v5819 = vunpack.c.l.b16 %v4564
    %v5820 = vunpack.c.h.b16 %v4564
    %v5821 = vunpack.c.l.b16 %v4565
    %v5822 = vunpack.c.h.b16 %v4565
    %v5823 = vunpack.c.l.b16 %v4566
    %v5824 = vunpack.c.h.b16 %v4566
    %v5825 = vunpack.c.l.b16 %v4567
    %v5826 = vunpack.c.h.b16 %v4567
    %v5827 = vunpack.c.l.b16 %v4568
    %v5828 = vunpack.c.h.b16 %v4568
    %v5829 = vunpack.c.l.b16 %v4569
    %v5830 = vunpack.c.h.b16 %v4569
    %v5831 = vunpack.c.l.b16 %v4570
    %v5832 = vunpack.c.h.b16 %v4570
    %v5833 = vunpack.c.l.b16 %v4571
    %v5834 = vunpack.c.h.b16 %v4571
    %v5835 = vunpack.c.l.b16 %v4572
    %v5836 = vunpack.c.h.b16 %v4572
    %v5837 = vunpack.c.l.b16 %v4573
    %v5838 = vunpack.c.h.b16 %v4573
    %v5839 = vunpack.c.l.b16 %v4574
    %v5840 = vunpack.c.h.b16 %v4574
    %v5841 = vunpack.c.l.b16 %v4575
    %v5842 = vunpack.c.h.b16 %v4575
    %v5843 = vunpack.c.l.b16 %v4576
    %v5844 = vunpack.c.h.b16 %v4576
    %v5845 = vunpack.c.l.b16 %v4577
    %v5846 = vunpack.c.h.b16 %v4577
    %v5847 = vunpack.c.l.b16 %v4578
    %v5848 = vunpack.c.h.b16 %v4578
    %v5849 = vunpack.c.l.b16 %v4579
    %v5850 = vunpack.c.h.b16 %v4579
    %v5851 = vunpack.c.l.b16 %v4580
    %v5852 = vunpack.c.h.b16 %v4580
    %v5853 = vunpack.c.l.b16 %v4581
    %v5854 = vunpack.c.h.b16 %v4581
    %v5855 = vunpack.c.l.b16 %v4582
    %v5856 = vunpack.c.h.b16 %v4582
    %v5857 = vunpack.c.l.b16 %v4583
    %v5858 = vunpack.c.h.b16 %v4583
    %v5859 = vunpack.c.l.b16 %v4584
    %v5860 = vunpack.c.h.b16 %v4584
    %v5861 = vunpack.c.l.b16 %v4585
    %v5862 = vunpack.c.h.b16 %v4585
    %v5863 = vunpack.c.l.b16 %v4586
    %v5864 = vunpack.c.h.b16 %v4586
    %v5865 = vunpack.c.l.b16 %v4587
    %v5866 = vunpack.c.h.b16 %v4587
    %v5867 = vunpack.c.l.b16 %v4588
    %v5868 = vunpack.c.h.b16 %v4588
    %v5869 = vunpack.c.l.b16 %v4589
    %v5870 = vunpack.c.h.b16 %v4589
    %v5871 = vunpack.c.l.b16 %v4590
    %v5872 = vunpack.c.h.b16 %v4590
    %v5873 = vunpack.c.l.b16 %v4591
    %v5874 = vunpack.c.h.b16 %v4591
    %v5875 = vunpack.c.l.b16 %v4592
    %v5876 = vunpack.c.h.b16 %v4592
    %v5877 = vunpack.c.l.b16 %v4593
    %v5878 = vunpack.c.h.b16 %v4593
    %v5879 = vunpack.c.l.b16 %v4594
    %v5880 = vunpack.c.h.b16 %v4594
    %v5881 = vunpack.c.l.b16 %v4595
    %v5882 = vunpack.c.h.b16 %v4595
    %v5883 = vunpack.c.l.b16 %v4596
    %v5884 = vunpack.c.h.b16 %v4596
    %v5885 = vunpack.c.l.b16 %v4597
    %v5886 = vunpack.c.h.b16 %v4597
    %v5887 = vunpack.c.l.b16 %v4598
    %v5888 = vunpack.c.h.b16 %v4598
    %v5889 = vunpack.c.l.b16 %v4599
    %v5890 = vunpack.c.h.b16 %v4599
    %v5891 = vunpack.c.l.b16 %v4600
    %v5892 = vunpack.c.h.b16 %v4600
    %v5893 = vunpack.c.l.b16 %v4601
    %v5894 = vunpack.c.h.b16 %v4601
    %v5895 = vunpack.c.l.b16 %v4602
    %v5896 = vunpack.c.h.b16 %v4602
    %v5897 = vunpack.c.l.b16 %v4603
    %v5898 = vunpack.c.h.b16 %v4603
    %v5899 = vunpack.c.l.b16 %v4604
    %v5900 = vunpack.c.h.b16 %v4604
    %v5901 = vunpack.c.l.b16 %v4605
    %v5902 = vunpack.c.h.b16 %v4605
    %v5903 = vunpack.c.l.b16 %v4606
    %v5904 = vunpack.c.h.b16 %v4606
    %v5905 = vunpack.c.l.b16 %v4607
    %v5906 = vunpack.c.h.b16 %v4607
    %v5907 = vunpack.c.l.b16 %v4608
    %v5908 = vunpack.c.h.b16 %v4608
    %v5909 = vunpack.c.l.b16 %v4609
    %v5910 = vunpack.c.h.b16 %v4609
    %v5911 = vunpack.c.l.b16 %v4610
    %v5912 = vunpack.c.h.b16 %v4610
    %v5913 = vpack.c.b16 %v5725, %v5721
    %v5914 = vpack.c.b16 %v5726, %v5722
    %v5915 = vpack.c.b16 %v5727, %v5723
    %v5916 = vpack.c.b16 %v5728, %v5724
    %v5917 = vpack.c.b16 %v5733, %v5729
    %v5918 = vpack.c.b16 %v5734, %v5730
    %v5919 = vpack.c.b16 %v5735, %v5731
    %v5920 = vpack.c.b16 %v5736, %v5732
    %v5921 = vpack.c.b16 %v5741, %v5737
    %v5922 = vpack.c.b16 %v5742, %v5738
    %v5923 = vpack.c.b16 %v5743, %v5739
    %v5924 = vpack.c.b16 %v5744, %v5740
    %v5925 = vpack.c.b16 %v5749, %v5745
    %v5926 = vpack.c.b16 %v5750, %v5746
    %v5927 = vpack.c.b16 %v5751, %v5747
    %v5928 = vpack.c.b16 %v5752, %v5748
    %v5929 = vpack.c.b16 %v5757, %v5753
    %v5930 = vpack.c.b16 %v5758, %v5754
    %v5931 = vpack.c.b16 %v5759, %v5755
    %v5932 = vpack.c.b16 %v5760, %v5756
    %v5933 = vpack.c.b16 %v5765, %v5761
    %v5934 = vpack.c.b16 %v5766, %v5762
    %v5935 = vpack.c.b16 %v5767, %v5763
    %v5936 = vpack.c.b16 %v5768, %v5764
    %v5937 = vpack.c.b16 %v5773, %v5769
    %v5938 = vpack.c.b16 %v5774, %v5770
    %v5939 = vpack.c.b16 %v5775, %v5771
    %v5940 = vpack.c.b16 %v5776, %v5772
    %v5941 = vpack.c.b16 %v5781, %v5777
    %v5942 = vpack.c.b16 %v5782, %v5778
    %v5943 = vpack.c.b16 %v5783, %v5779
    %v5944 = vpack.c.b16 %v5784, %v5780
    %v5945 = vpack.c.b16 %v5789, %v5785
    %v5946 = vpack.c.b16 %v5790, %v5786
    %v5947 = vpack.c.b16 %v5791, %v5787
    %v5948 = vpack.c.b16 %v5792, %v5788
    %v5949 = vpack.c.b16 %v5797, %v5793
    %v5950 = vpack.c.b16 %v5798, %v5794
    %v5951 = vpack.c.b16 %v5799, %v5795
    %v5952 = vpack.c.b16 %v5800, %v5796
    %v5953 = vpack.c.b16 %v5805, %v5801
    %v5954 = vpack.c.b16 %v5806, %v5802
    %v5955 = vpack.c.b16 %v5807, %v5803
    %v5956 = vpack.c.b16 %v5808, %v5804
    %v5957 = vpack.c.b16 %v5813, %v5809
    %v5958 = vpack.c.b16 %v5814, %v5810
    %v5959 = vpack.c.b16 %v5815, %v5811
    %v5960 = vpack.c.b16 %v5816, %v5812
    %v5961 = vpack.c.b16 %v5821, %v5817
    %v5962 = vpack.c.b16 %v5822, %v5818
    %v5963 = vpack.c.b16 %v5823, %v5819
    %v5964 = vpack.c.b16 %v5824, %v5820
    %v5965 = vpack.c.b16 %v5829, %v5825
    %v5966 = vpack.c.b16 %v5830, %v5826
    %v5967 = vpack.c.b16 %v5831, %v5827
    %v5968 = vpack.c.b16 %v5832, %v5828
    %v5969 = vpack.c.b16 %v5837, %v5833
    %v5970 = vpack.c.b16 %v5838, %v5834
    %v5971 = vpack.c.b16 %v5839, %v5835
    %v5972 = vpack.c.b16 %v5840, %v5836
    %v5973 = vpack.c.b16 %v5845, %v5841
    %v5974 = vpack.c.b16 %v5846, %v5842
    %v5975 = vpack.c.b16 %v5847, %v5843
    %v5976 = vpack.c.b16 %v5848, %v5844
    %v5977 = vpack.c.b16 %v5853, %v5849
    %v5978 = vpack.c.b16 %v5854, %v5850
    %v5979 = vpack.c.b16 %v5855, %v5851
    %v5980 = vpack.c.b16 %v5856, %v5852
    %v5981 = vpack.c.b16 %v5861, %v5857
    %v5982 = vpack.c.b16 %v5862, %v5858
    %v5983 = vpack.c.b16 %v5863, %v5859
    %v5984 = vpack.c.b16 %v5864, %v5860
    %v5985 = vpack.c.b16 %v5869, %v5865
    %v5986 = vpack.c.b16 %v5870, %v5866
    %v5987 = vpack.c.b16 %v5871, %v5867
    %v5988 = vpack.c.b16 %v5872, %v5868
    %v5989 = vpack.c.b16 %v5877, %v5873
    %v5990 = vpack.c.b16 %v5878, %v5874
    %v5991 = vpack.c.b16 %v5879, %v5875
    %v5992 = vpack.c.b16 %v5880, %v5876
    %v5993 = vpack.c.b16 %v5885, %v5881
    %v5994 = vpack.c.b16 %v5886, %v5882
    %v5995 = vpack.c.b16 %v5887, %v5883
    %v5996 = vpack.c.b16 %v5888, %v5884
    %v5997 = vpack.c.b16 %v5893, %v5889
    %v5998 = vpack.c.b16 %v5894, %v5890
    %v5999 = vpack.c.b16 %v5895, %v5891
    %v6000 = vpack.c.b16 %v5896, %v5892
    %v6001 = vpack.c.b16 %v5901, %v5897
    %v6002 = vpack.c.b16 %v5902, %v5898
    %v6003 = vpack.c.b16 %v5903, %v5899
    %v6004 = vpack.c.b16 %v5904, %v5900
    %v6005 = vpack.c.b16 %v5909, %v5905
    %v6006 = vpack.c.b16 %v5910, %v5906
    %v6007 = vpack.c.b16 %v5911, %v5907
    %v6008 = vpack.c.b16 %v5912, %v5908
    %6105 = vmatprep.subr.bf16.mxu0 %v5914
    %6106 = vmatpush1.bf16.msra.mxu0 %v5913
    %6107 = vmatprep.subr.bf16.mxu0 %v5918
    %6108 = vmatpush1.bf16.msra.mxu0 %v5917
    %6109 = vmatprep.subr.bf16.mxu0 %v5922
    %6110 = vmatpush1.bf16.msra.mxu0 %v5921
    %6111 = vmatprep.subr.bf16.mxu0 %v5926
    %6112 = vmatpush1.bf16.msra.mxu0 %v5925
    %6113 = vmatprep.subr.bf16.mxu0 %v5930
    %6114 = vmatpush1.bf16.msra.mxu0 %v5929
    %6115 = vmatprep.subr.bf16.mxu0 %v5934
    %6116 = vmatpush1.bf16.msra.mxu0 %v5933
    %6117 = vmatprep.subr.bf16.mxu0 %v5938
    %6118 = vmatpush1.bf16.msra.mxu0 %v5937
    %6119 = vmatprep.subr.bf16.mxu0 %v5942
    %6120 = vmatpush1.bf16.msra.mxu0 %v5941
    %6121 = vmatprep.subr.bf16.mxu0 %v5946
    %6122 = vmatpush1.bf16.msra.mxu0 %v5945
    %6123 = vmatprep.subr.bf16.mxu0 %v5950
    %6124 = vmatpush1.bf16.msra.mxu0 %v5949
    %6125 = vmatprep.subr.bf16.mxu0 %v5954
    %6126 = vmatpush1.bf16.msra.mxu0 %v5953
    %6127 = vmatprep.subr.bf16.mxu0 %v5958
    %6128 = vmatpush1.bf16.msra.mxu0 %v5957
    %6129 = vmatprep.subr.bf16.mxu0 %v5962
    %6130 = vmatpush1.bf16.msra.mxu0 %v5961
    %6131 = vmatprep.subr.bf16.mxu0 %v5966
    %6132 = vmatpush1.bf16.msra.mxu0 %v5965
    %6133 = vmatprep.subr.bf16.mxu0 %v5970
    %6134 = vmatpush1.bf16.msra.mxu0 %v5969
    %6135 = vmatprep.subr.bf16.mxu0 %v5974
    %6136 = vmatpush1.bf16.msra.mxu0 %v5973
    %6137 = vmatprep.mubr.bf16.mxu0 %v5602
    %6138 = vmatmul.mubr.bf16.gmra.mrb[0].mxu0 %v5601
    %v6139 = vpop.f32.mrb[0].mxu0
    %v6140 = vadd.f32 %v5377, %v6139
    %v6141 = vpop.f32.mrb[0].mxu0
    %v6142 = vadd.f32 %v5379, %v6141
    %v6143 = vpop.f32.mrb[0].mxu0
    %v6144 = vadd.f32 %v5381, %v6143
    %v6145 = vpop.f32.mrb[0].mxu0
    %v6146 = vadd.f32 %v5383, %v6145
    %6147 = vmatprep.mubr.bf16.mxu0 %v5605
    %6148 = vmatmul.mubr.bf16.gmra.mrb[0].mxu0 %v5604
    %v6149 = vpop.f32.mrb[0].mxu0
    %v6150 = vadd.f32 %v5387, %v6149
    %v6151 = vpop.f32.mrb[0].mxu0
    %v6152 = vadd.f32 %v5389, %v6151
    %v6153 = vpop.f32.mrb[0].mxu0
    %v6154 = vadd.f32 %v5391, %v6153
    %v6155 = vpop.f32.mrb[0].mxu0
    %v6156 = vadd.f32 %v5393, %v6155
    %6157 = vmatprep.mubr.bf16.mxu0 %v5608
    %6158 = vmatmul.mubr.bf16.gmra.mrb[0].mxu0 %v5607
    %v6159 = vpop.f32.mrb[0].mxu0
    %v6160 = vadd.f32 %v5397, %v6159
    %v6161 = vpop.f32.mrb[0].mxu0
    %v6162 = vadd.f32 %v5399, %v6161
    %v6163 = vpop.f32.mrb[0].mxu0
    %v6164 = vadd.f32 %v5401, %v6163
    %v6165 = vpop.f32.mrb[0].mxu0
    %v6166 = vadd.f32 %v5403, %v6165
    %6167 = vmatprep.mubr.bf16.mxu0 %v5611
    %6168 = vmatmul.mubr.bf16.gmra.mrb[0].mxu0 %v5610
    %v6169 = vpop.f32.mrb[0].mxu0
    %v6170 = vadd.f32 %v5407, %v6169
    %v6171 = vpop.f32.mrb[0].mxu0
    %v6172 = vadd.f32 %v5409, %v6171
    %v6173 = vpop.f32.mrb[0].mxu0
    %v6174 = vadd.f32 %v5411, %v6173
    %v6175 = vpop.f32.mrb[0].mxu0
    %v6176 = vadd.f32 %v5413, %v6175
    %6177 = vdwg.mxu0
    %6178 = vmatprep.subr.bf16.mxu0 %v5978
    %6179 = vmatpush1.bf16.msra.mxu0 %v5977
    %6180 = vmatprep.subr.bf16.mxu0 %v5982
    %6181 = vmatpush1.bf16.msra.mxu0 %v5981
    %6182 = vmatprep.subr.bf16.mxu0 %v5986
    %6183 = vmatpush1.bf16.msra.mxu0 %v5985
    %6184 = vmatprep.subr.bf16.mxu0 %v5990
    %6185 = vmatpush1.bf16.msra.mxu0 %v5989
    %6186 = vmatprep.subr.bf16.mxu0 %v5994
    %6187 = vmatpush1.bf16.msra.mxu0 %v5993
    %6188 = vmatprep.subr.bf16.mxu0 %v5998
    %6189 = vmatpush1.bf16.msra.mxu0 %v5997
    %6190 = vmatprep.subr.bf16.mxu0 %v6002
    %6191 = vmatpush1.bf16.msra.mxu0 %v6001
    %6192 = vmatprep.subr.bf16.mxu0 %v6006
    %6193 = vmatpush1.bf16.msra.mxu0 %v6005
    %6194 = vmatprep.subr.bf16.mxu0 0
    %6195 = vmatpush1.bf16.msra.mxu0 0
    %6196 = vmatprep.subr.bf16.mxu0 0
    %6197 = vmatpush1.bf16.msra.mxu0 0
    %6198 = vmatprep.subr.bf16.mxu0 0
    %6199 = vmatpush1.bf16.msra.mxu0 0
    %6200 = vmatprep.subr.bf16.mxu0 0
    %6201 = vmatpush1.bf16.msra.mxu0 0
    %6202 = vmatprep.subr.bf16.mxu0 0
    %6203 = vmatpush1.bf16.msra.mxu0 0
    %6204 = vmatprep.subr.bf16.mxu0 0
    %6205 = vmatpush1.bf16.msra.mxu0 0
    %6206 = vmatprep.subr.bf16.mxu0 0
    %6207 = vmatpush1.bf16.msra.mxu0 0
    %6208 = vmatprep.subr.bf16.mxu0 0
    %6209 = vmatpush1.bf16.msra.mxu0 0
    %6210 = vmatprep.mubr.bf16.mxu0 0
    %6211 = vmatmul.mubr.bf16.gmra.mrb[0].mxu0 %v5603
    %v6212 = vpop.f32.mrb[0].mxu0
    %v6213 = vadd.f32 %v6140, %v6212
    %v6214 = vpop.f32.mrb[0].mxu0
    %v6215 = vadd.f32 %v6142, %v6214
    %v6216 = vpop.f32.mrb[0].mxu0
    %v6217 = vadd.f32 %v6144, %v6216
    %v6218 = vpop.f32.mrb[0].mxu0
    %v6219 = vadd.f32 %v6146, %v6218
    %6220 = vmatprep.mubr.bf16.mxu0 0
    %6221 = vmatmul.mubr.bf16.gmra.mrb[0].mxu0 %v5606
    %v6222 = vpop.f32.mrb[0].mxu0
    %v6223 = vadd.f32 %v6150, %v6222
    %v6224 = vpop.f32.mrb[0].mxu0
    %v6225 = vadd.f32 %v6152, %v6224
    %v6226 = vpop.f32.mrb[0].mxu0
    %v6227 = vadd.f32 %v6154, %v6226
    %v6228 = vpop.f32.mrb[0].mxu0
    %v6229 = vadd.f32 %v6156, %v6228
    %6230 = vmatprep.mubr.bf16.mxu0 0
    %6231 = vmatmul.mubr.bf16.gmra.mrb[0].mxu0 %v5609
    %v6232 = vpop.f32.mrb[0].mxu0
    %v6233 = vadd.f32 %v6160, %v6232
    %v6234 = vpop.f32.mrb[0].mxu0
    %v6235 = vadd.f32 %v6162, %v6234
    %v6236 = vpop.f32.mrb[0].mxu0
    %v6237 = vadd.f32 %v6164, %v6236
    %v6238 = vpop.f32.mrb[0].mxu0
    %v6239 = vadd.f32 %v6166, %v6238
    %6240 = vmatprep.mubr.bf16.mxu0 0
    %6241 = vmatmul.mubr.bf16.gmra.mrb[0].mxu0 %v5612
    %v6242 = vpop.f32.mrb[0].mxu0
    %v6243 = vadd.f32 %v6170, %v6242
    %v6244 = vpop.f32.mrb[0].mxu0
    %v6245 = vadd.f32 %v6172, %v6244
    %v6246 = vpop.f32.mrb[0].mxu0
    %v6247 = vadd.f32 %v6174, %v6246
    %v6248 = vpop.f32.mrb[0].mxu0
    %v6249 = vadd.f32 %v6176, %v6248
    %6250 = vdwg.mxu0
    %6251 = vmatprep.subr.bf16.mxu0 %v5916
    %6252 = vmatpush1.bf16.msra.mxu0 %v5915
    %6253 = vmatprep.subr.bf16.mxu0 %v5920
    %6254 = vmatpush1.bf16.msra.mxu0 %v5919
    %6255 = vmatprep.subr.bf16.mxu0 %v5924
    %6256 = vmatpush1.bf16.msra.mxu0 %v5923
    %6257 = vmatprep.subr.bf16.mxu0 %v5928
    %6258 = vmatpush1.bf16.msra.mxu0 %v5927
    %6259 = vmatprep.subr.bf16.mxu0 %v5932
    %6260 = vmatpush1.bf16.msra.mxu0 %v5931
    %6261 = vmatprep.subr.bf16.mxu0 %v5936
    %6262 = vmatpush1.bf16.msra.mxu0 %v5935
    %6263 = vmatprep.subr.bf16.mxu0 %v5940
    %6264 = vmatpush1.bf16.msra.mxu0 %v5939
    %6265 = vmatprep.subr.bf16.mxu0 %v5944
    %6266 = vmatpush1.bf16.msra.mxu0 %v5943
    %6267 = vmatprep.subr.bf16.mxu0 %v5948
    %6268 = vmatpush1.bf16.msra.mxu0 %v5947
    %6269 = vmatprep.subr.bf16.mxu0 %v5952
    %6270 = vmatpush1.bf16.msra.mxu0 %v5951
    %6271 = vmatprep.subr.bf16.mxu0 %v5956
    %6272 = vmatpush1.bf16.msra.mxu0 %v5955
    %6273 = vmatprep.subr.bf16.mxu0 %v5960
    %6274 = vmatpush1.bf16.msra.mxu0 %v5959
    %6275 = vmatprep.subr.bf16.mxu0 %v5964
    %6276 = vmatpush1.bf16.msra.mxu0 %v5963
    %6277 = vmatprep.subr.bf16.mxu0 %v5968
    %6278 = vmatpush1.bf16.msra.mxu0 %v5967
    %6279 = vmatprep.subr.bf16.mxu0 %v5972
    %6280 = vmatpush1.bf16.msra.mxu0 %v5971
    %6281 = vmatprep.subr.bf16.mxu0 %v5976
    %6282 = vmatpush1.bf16.msra.mxu0 %v5975
    %6283 = vmatprep.mubr.bf16.mxu0 %v5602
    %6284 = vmatmul.mubr.bf16.gmra.mrb[0].mxu0 %v5601
    %v6285 = vpop.f32.mrb[0].mxu0
    %v6286 = vadd.f32 %v5523, %v6285
    %v6287 = vpop.f32.mrb[0].mxu0
    %v6288 = vadd.f32 %v5525, %v6287
    %v6289 = vpop.f32.mrb[0].mxu0
    %v6290 = vadd.f32 %v5527, %v6289
    %v6291 = vpop.f32.mrb[0].mxu0
    %v6292 = vadd.f32 %v5529, %v6291
    %6293 = vmatprep.mubr.bf16.mxu0 %v5605
    %6294 = vmatmul.mubr.bf16.gmra.mrb[0].mxu0 %v5604
    %v6295 = vpop.f32.mrb[0].mxu0
    %v6296 = vadd.f32 %v5533, %v6295
    %v6297 = vpop.f32.mrb[0].mxu0
    %v6298 = vadd.f32 %v5535, %v6297
    %v6299 = vpop.f32.mrb[0].mxu0
    %v6300 = vadd.f32 %v5537, %v6299
    %v6301 = vpop.f32.mrb[0].mxu0
    %v6302 = vadd.f32 %v5539, %v6301
    %6303 = vmatprep.mubr.bf16.mxu0 %v5608
    %6304 = vmatmul.mubr.bf16.gmra.mrb[0].mxu0 %v5607
    %v6305 = vpop.f32.mrb[0].mxu0
    %v6306 = vadd.f32 %v5543, %v6305
    %v6307 = vpop.f32.mrb[0].mxu0
    %v6308 = vadd.f32 %v5545, %v6307
    %v6309 = vpop.f32.mrb[0].mxu0
    %v6310 = vadd.f32 %v5547, %v6309
    %v6311 = vpop.f32.mrb[0].mxu0
    %v6312 = vadd.f32 %v5549, %v6311
    %6313 = vmatprep.mubr.bf16.mxu0 %v5611
    %6314 = vmatmul.mubr.bf16.gmra.mrb[0].mxu0 %v5610
    %v6315 = vpop.f32.mrb[0].mxu0
    %v6316 = vadd.f32 %v5553, %v6315
    %v6317 = vpop.f32.mrb[0].mxu0
    %v6318 = vadd.f32 %v5555, %v6317
    %v6319 = vpop.f32.mrb[0].mxu0
    %v6320 = vadd.f32 %v5557, %v6319
    %v6321 = vpop.f32.mrb[0].mxu0
    %v6322 = vadd.f32 %v5559, %v6321
    %6323 = vdwg.mxu0
    %6324 = vmatprep.subr.bf16.mxu0 %v5980
    %6325 = vmatpush1.bf16.msra.mxu0 %v5979
    %6326 = vmatprep.subr.bf16.mxu0 %v5984
    %6327 = vmatpush1.bf16.msra.mxu0 %v5983
    %6328 = vmatprep.subr.bf16.mxu0 %v5988
    %6329 = vmatpush1.bf16.msra.mxu0 %v5987
    %6330 = vmatprep.subr.bf16.mxu0 %v5992
    %6331 = vmatpush1.bf16.msra.mxu0 %v5991
    %6332 = vmatprep.subr.bf16.mxu0 %v5996
    %6333 = vmatpush1.bf16.msra.mxu0 %v5995
    %6334 = vmatprep.subr.bf16.mxu0 %v6000
    %6335 = vmatpush1.bf16.msra.mxu0 %v5999
    %6336 = vmatprep.subr.bf16.mxu0 %v6004
    %6337 = vmatpush1.bf16.msra.mxu0 %v6003
    %6338 = vmatprep.subr.bf16.mxu0 %v6008
    %6339 = vmatpush1.bf16.msra.mxu0 %v6007
    %6340 = vmatprep.subr.bf16.mxu0 0
    %6341 = vmatpush1.bf16.msra.mxu0 0
    %6342 = vmatprep.subr.bf16.mxu0 0
    %6343 = vmatpush1.bf16.msra.mxu0 0
    %6344 = vmatprep.subr.bf16.mxu0 0
    %6345 = vmatpush1.bf16.msra.mxu0 0
    %6346 = vmatprep.subr.bf16.mxu0 0
    %6347 = vmatpush1.bf16.msra.mxu0 0
    %6348 = vmatprep.subr.bf16.mxu0 0
    %6349 = vmatpush1.bf16.msra.mxu0 0
    %6350 = vmatprep.subr.bf16.mxu0 0
    %6351 = vmatpush1.bf16.msra.mxu0 0
    %6352 = vmatprep.subr.bf16.mxu0 0
    %6353 = vmatpush1.bf16.msra.mxu0 0
    %6354 = vmatprep.subr.bf16.mxu0 0
    %6355 = vmatpush1.bf16.msra.mxu0 0
    %6356 = vmatprep.mubr.bf16.mxu0 0
    %6357 = vmatmul.mubr.bf16.gmra.mrb[0].mxu0 %v5603
    %v6358 = vpop.f32.mrb[0].mxu0
    %v6359 = vadd.f32 %v6286, %v6358
    %v6360 = vpop.f32.mrb[0].mxu0
    %v6361 = vadd.f32 %v6288, %v6360
    %v6362 = vpop.f32.mrb[0].mxu0
    %v6363 = vadd.f32 %v6290, %v6362
    %v6364 = vpop.f32.mrb[0].mxu0
    %v6365 = vadd.f32 %v6292, %v6364
    %6366 = vmatprep.mubr.bf16.mxu0 0
    %6367 = vmatmul.mubr.bf16.gmra.mrb[0].mxu0 %v5606
    %v6368 = vpop.f32.mrb[0].mxu0
    %v6369 = vadd.f32 %v6296, %v6368
    %v6370 = vpop.f32.mrb[0].mxu0
    %v6371 = vadd.f32 %v6298, %v6370
    %v6372 = vpop.f32.mrb[0].mxu0
    %v6373 = vadd.f32 %v6300, %v6372
    %v6374 = vpop.f32.mrb[0].mxu0
    %v6375 = vadd.f32 %v6302, %v6374
    %6376 = vmatprep.mubr.bf16.mxu0 0
    %6377 = vmatmul.mubr.bf16.gmra.mrb[0].mxu0 %v5609
    %v6378 = vpop.f32.mrb[0].mxu0
    %v6379 = vadd.f32 %v6306, %v6378
    %v6380 = vpop.f32.mrb[0].mxu0
    %v6381 = vadd.f32 %v6308, %v6380
    %v6382 = vpop.f32.mrb[0].mxu0
    %v6383 = vadd.f32 %v6310, %v6382
    %v6384 = vpop.f32.mrb[0].mxu0
    %v6385 = vadd.f32 %v6312, %v6384
    %6386 = vmatprep.mubr.bf16.mxu0 0
    %6387 = vmatmul.mubr.bf16.gmra.mrb[0].mxu0 %v5612
    %v6388 = vpop.f32.mrb[0].mxu0
    %v6389 = vadd.f32 %v6316, %v6388
    %v6390 = vpop.f32.mrb[0].mxu0
    %v6391 = vadd.f32 %v6318, %v6390
    %v6392 = vpop.f32.mrb[0].mxu0
    %v6393 = vadd.f32 %v6320, %v6392
    %v6394 = vpop.f32.mrb[0].mxu0
    %v6395 = vadd.f32 %v6322, %v6394
    %6396 = vdwg.mxu0
    %s6397 = scalar_lea.vmem [#allocation2], 24
    %v6398 = vld [vmem:[%s6397] sm:$0xff]
    %v6399 = vld [vmem:[%s6397 + $0x8] sm:$0xf]
    %v6400 = vld [vmem:[%s6397 + $0xc] sm:$0xff]
    %v6401 = vld [vmem:[%s6397 + $0x14] sm:$0xf]
    %v6402 = vld [vmem:[%s6397 + $0x18] sm:$0xff]
    %v6403 = vld [vmem:[%s6397 + $0x20] sm:$0xf]
    %v6404 = vld [vmem:[%s6397 + $0x24] sm:$0xff]
    %v6405 = vld [vmem:[%s6397 + $0x2c] sm:$0xf]
    %v6406 = vld [vmem:[%s6397 + $0x30] sm:$0xff]
    %v6407 = vld [vmem:[%s6397 + $0x38] sm:$0xf]
    %v6408 = vld [vmem:[%s6397 + $0x3c] sm:$0xff]
    %v6409 = vld [vmem:[%s6397 + $0x44] sm:$0xf]
    %v6410 = vld [vmem:[%s6397 + $0x48] sm:$0xff]
    %v6411 = vld [vmem:[%s6397 + $0x50] sm:$0xf]
    %v6412 = vld [vmem:[%s6397 + $0x54] sm:$0xff]
    %v6413 = vld [vmem:[%s6397 + $0x5c] sm:$0xf]
    %s6414 = scalar_lea.vmem [#allocation8], 1536
    %v6415 = vld [vmem:[%s6414] sm:$0xff]
    %v6416 = vld [vmem:[%s6414 + $0x8] sm:$0xff]
    %v6417 = vld [vmem:[%s6414 + $0x10] sm:$0xff]
    %v6418 = vld [vmem:[%s6414 + $0x18] sm:$0xff]
    %v6419 = vld [vmem:[%s6414 + $0x20] sm:$0xff]
    %v6420 = vld [vmem:[%s6414 + $0x28] sm:$0xff]
    %v6421 = vld [vmem:[%s6414 + $0x30] sm:$0xff]
    %v6422 = vld [vmem:[%s6414 + $0x38] sm:$0xff]
    %v6423 = vld [vmem:[%s6414 + $0x40] sm:$0xff]
    %v6424 = vld [vmem:[%s6414 + $0x48] sm:$0xff]
    %v6425 = vld [vmem:[%s6414 + $0x50] sm:$0xff]
    %v6426 = vld [vmem:[%s6414 + $0x58] sm:$0xff]
    %v6427 = vld [vmem:[%s6414 + $0x60] sm:$0xff]
    %v6428 = vld [vmem:[%s6414 + $0x68] sm:$0xff]
    %v6429 = vld [vmem:[%s6414 + $0x70] sm:$0xff]
    %v6430 = vld [vmem:[%s6414 + $0x78] sm:$0xff]
    %v6431 = vld [vmem:[%s6414 + $0x80] sm:$0xff]
    %v6432 = vld [vmem:[%s6414 + $0x88] sm:$0xff]
    %v6433 = vld [vmem:[%s6414 + $0x90] sm:$0xff]
    %v6434 = vld [vmem:[%s6414 + $0x98] sm:$0xff]
    %v6435 = vld [vmem:[%s6414 + $0xa0] sm:$0xff]
    %v6436 = vld [vmem:[%s6414 + $0xa8] sm:$0xff]
    %v6437 = vld [vmem:[%s6414 + $0xb0] sm:$0xff]
    %v6438 = vld [vmem:[%s6414 + $0xb8] sm:$0xff]
    %v6439 = vld [vmem:[%s6414 + $0xc0] sm:$0xff]
    %v6440 = vld [vmem:[%s6414 + $0xc8] sm:$0xff]
    %v6441 = vld [vmem:[%s6414 + $0xd0] sm:$0xff]
    %v6442 = vld [vmem:[%s6414 + $0xd8] sm:$0xff]
    %v6443 = vld [vmem:[%s6414 + $0xe0] sm:$0xff]
    %v6444 = vld [vmem:[%s6414 + $0xe8] sm:$0xff]
    %v6445 = vld [vmem:[%s6414 + $0xf0] sm:$0xff]
    %v6446 = vld [vmem:[%s6414 + $0xf8] sm:$0xff]
    %v6447 = vld [vmem:[%s6414 + $0x100] sm:$0xff]
    %v6448 = vld [vmem:[%s6414 + $0x108] sm:$0xff]
    %v6449 = vld [vmem:[%s6414 + $0x110] sm:$0xff]
    %v6450 = vld [vmem:[%s6414 + $0x118] sm:$0xff]
    %v6451 = vld [vmem:[%s6414 + $0x120] sm:$0xff]
    %v6452 = vld [vmem:[%s6414 + $0x128] sm:$0xff]
    %v6453 = vld [vmem:[%s6414 + $0x130] sm:$0xff]
    %v6454 = vld [vmem:[%s6414 + $0x138] sm:$0xff]
    %v6455 = vld [vmem:[%s6414 + $0x140] sm:$0xff]
    %v6456 = vld [vmem:[%s6414 + $0x148] sm:$0xff]
    %v6457 = vld [vmem:[%s6414 + $0x150] sm:$0xff]
    %v6458 = vld [vmem:[%s6414 + $0x158] sm:$0xff]
    %v6459 = vld [vmem:[%s6414 + $0x160] sm:$0xff]
    %v6460 = vld [vmem:[%s6414 + $0x168] sm:$0xff]
    %v6461 = vld [vmem:[%s6414 + $0x170] sm:$0xff]
    %v6462 = vld [vmem:[%s6414 + $0x178] sm:$0xff]
    %v6463 = vld [vmem:[%s6414 + $0x180] sm:$0xff]
    %v6464 = vld [vmem:[%s6414 + $0x188] sm:$0xff]
    %v6465 = vld [vmem:[%s6414 + $0x190] sm:$0xff]
    %v6466 = vld [vmem:[%s6414 + $0x198] sm:$0xff]
    %v6467 = vld [vmem:[%s6414 + $0x1a0] sm:$0xff]
    %v6468 = vld [vmem:[%s6414 + $0x1a8] sm:$0xff]
    %v6469 = vld [vmem:[%s6414 + $0x1b0] sm:$0xff]
    %v6470 = vld [vmem:[%s6414 + $0x1b8] sm:$0xff]
    %v6471 = vld [vmem:[%s6414 + $0x1c0] sm:$0xff]
    %v6472 = vld [vmem:[%s6414 + $0x1c8] sm:$0xff]
    %v6473 = vld [vmem:[%s6414 + $0x1d0] sm:$0xff]
    %v6474 = vld [vmem:[%s6414 + $0x1d8] sm:$0xff]
    %v6475 = vld [vmem:[%s6414 + $0x1e0] sm:$0xff]
    %v6476 = vld [vmem:[%s6414 + $0x1e8] sm:$0xff]
    %v6477 = vld [vmem:[%s6414 + $0x1f0] sm:$0xff]
    %v6478 = vld [vmem:[%s6414 + $0x1f8] sm:$0xff]
    %v6479 = vld [vmem:[%s6414 + $0x200] sm:$0xff]
    %v6480 = vld [vmem:[%s6414 + $0x208] sm:$0xff]
    %v6481 = vld [vmem:[%s6414 + $0x210] sm:$0xff]
    %v6482 = vld [vmem:[%s6414 + $0x218] sm:$0xff]
    %v6483 = vld [vmem:[%s6414 + $0x220] sm:$0xff]
    %v6484 = vld [vmem:[%s6414 + $0x228] sm:$0xff]
    %v6485 = vld [vmem:[%s6414 + $0x230] sm:$0xff]
    %v6486 = vld [vmem:[%s6414 + $0x238] sm:$0xff]
    %v6487 = vld [vmem:[%s6414 + $0x240] sm:$0xff]
    %v6488 = vld [vmem:[%s6414 + $0x248] sm:$0xff]
    %v6489 = vld [vmem:[%s6414 + $0x250] sm:$0xff]
    %v6490 = vld [vmem:[%s6414 + $0x258] sm:$0xff]
    %v6491 = vld [vmem:[%s6414 + $0x260] sm:$0xff]
    %v6492 = vld [vmem:[%s6414 + $0x268] sm:$0xff]
    %v6493 = vld [vmem:[%s6414 + $0x270] sm:$0xff]
    %v6494 = vld [vmem:[%s6414 + $0x278] sm:$0xff]
    %v6495 = vld [vmem:[%s6414 + $0x280] sm:$0xff]
    %v6496 = vld [vmem:[%s6414 + $0x288] sm:$0xff]
    %v6497 = vld [vmem:[%s6414 + $0x290] sm:$0xff]
    %v6498 = vld [vmem:[%s6414 + $0x298] sm:$0xff]
    %v6499 = vld [vmem:[%s6414 + $0x2a0] sm:$0xff]
    %v6500 = vld [vmem:[%s6414 + $0x2a8] sm:$0xff]
    %v6501 = vld [vmem:[%s6414 + $0x2b0] sm:$0xff]
    %v6502 = vld [vmem:[%s6414 + $0x2b8] sm:$0xff]
    %v6503 = vld [vmem:[%s6414 + $0x2c0] sm:$0xff]
    %v6504 = vld [vmem:[%s6414 + $0x2c8] sm:$0xff]
    %v6505 = vld [vmem:[%s6414 + $0x2d0] sm:$0xff]
    %v6506 = vld [vmem:[%s6414 + $0x2d8] sm:$0xff]
    %v6507 = vld [vmem:[%s6414 + $0x2e0] sm:$0xff]
    %v6508 = vld [vmem:[%s6414 + $0x2e8] sm:$0xff]
    %v6509 = vld [vmem:[%s6414 + $0x2f0] sm:$0xff]
    %v6510 = vld [vmem:[%s6414 + $0x2f8] sm:$0xff]
    %v6527 = vunpack.c.l.b16 %v6398
    %v6528 = vunpack.c.h.b16 %v6398
    %v6529 = vunpack.c.l.b16 %v6399
    %v6530 = vunpack.c.l.b16 %v6400
    %v6531 = vunpack.c.h.b16 %v6400
    %v6532 = vunpack.c.l.b16 %v6401
    %v6533 = vunpack.c.l.b16 %v6402
    %v6534 = vunpack.c.h.b16 %v6402
    %v6535 = vunpack.c.l.b16 %v6403
    %v6536 = vunpack.c.l.b16 %v6404
    %v6537 = vunpack.c.h.b16 %v6404
    %v6538 = vunpack.c.l.b16 %v6405
    %v6539 = vunpack.c.l.b16 %v6406
    %v6540 = vunpack.c.h.b16 %v6406
    %v6541 = vunpack.c.l.b16 %v6407
    %v6542 = vunpack.c.l.b16 %v6408
    %v6543 = vunpack.c.h.b16 %v6408
    %v6544 = vunpack.c.l.b16 %v6409
    %v6545 = vunpack.c.l.b16 %v6410
    %v6546 = vunpack.c.h.b16 %v6410
    %v6547 = vunpack.c.l.b16 %v6411
    %v6548 = vunpack.c.l.b16 %v6412
    %v6549 = vunpack.c.h.b16 %v6412
    %v6550 = vunpack.c.l.b16 %v6413
    %v6551 = vpack.c.b16 %v6530, %v6527
    %v6552 = vpack.c.b16 %v6531, %v6528
    %v6553 = vpack.c.b16 %v6532, %v6529
    %v6554 = vpack.c.b16 %v6536, %v6533
    %v6555 = vpack.c.b16 %v6537, %v6534
    %v6556 = vpack.c.b16 %v6538, %v6535
    %v6557 = vpack.c.b16 %v6542, %v6539
    %v6558 = vpack.c.b16 %v6543, %v6540
    %v6559 = vpack.c.b16 %v6544, %v6541
    %v6560 = vpack.c.b16 %v6548, %v6545
    %v6561 = vpack.c.b16 %v6549, %v6546
    %v6562 = vpack.c.b16 %v6550, %v6547
    %v6671 = vunpack.c.l.b16 %v6415
    %v6672 = vunpack.c.h.b16 %v6415
    %v6673 = vunpack.c.l.b16 %v6416
    %v6674 = vunpack.c.h.b16 %v6416
    %v6675 = vunpack.c.l.b16 %v6417
    %v6676 = vunpack.c.h.b16 %v6417
    %v6677 = vunpack.c.l.b16 %v6418
    %v6678 = vunpack.c.h.b16 %v6418
    %v6679 = vunpack.c.l.b16 %v6419
    %v6680 = vunpack.c.h.b16 %v6419
    %v6681 = vunpack.c.l.b16 %v6420
    %v6682 = vunpack.c.h.b16 %v6420
    %v6683 = vunpack.c.l.b16 %v6421
    %v6684 = vunpack.c.h.b16 %v6421
    %v6685 = vunpack.c.l.b16 %v6422
    %v6686 = vunpack.c.h.b16 %v6422
    %v6687 = vunpack.c.l.b16 %v6423
    %v6688 = vunpack.c.h.b16 %v6423
    %v6689 = vunpack.c.l.b16 %v6424
    %v6690 = vunpack.c.h.b16 %v6424
    %v6691 = vunpack.c.l.b16 %v6425
    %v6692 = vunpack.c.h.b16 %v6425
    %v6693 = vunpack.c.l.b16 %v6426
    %v6694 = vunpack.c.h.b16 %v6426
    %v6695 = vunpack.c.l.b16 %v6427
    %v6696 = vunpack.c.h.b16 %v6427
    %v6697 = vunpack.c.l.b16 %v6428
    %v6698 = vunpack.c.h.b16 %v6428
    %v6699 = vunpack.c.l.b16 %v6429
    %v6700 = vunpack.c.h.b16 %v6429
    %v6701 = vunpack.c.l.b16 %v6430
    %v6702 = vunpack.c.h.b16 %v6430
    %v6703 = vunpack.c.l.b16 %v6431
    %v6704 = vunpack.c.h.b16 %v6431
    %v6705 = vunpack.c.l.b16 %v6432
    %v6706 = vunpack.c.h.b16 %v6432
    %v6707 = vunpack.c.l.b16 %v6433
    %v6708 = vunpack.c.h.b16 %v6433
    %v6709 = vunpack.c.l.b16 %v6434
    %v6710 = vunpack.c.h.b16 %v6434
    %v6711 = vunpack.c.l.b16 %v6435
    %v6712 = vunpack.c.h.b16 %v6435
    %v6713 = vunpack.c.l.b16 %v6436
    %v6714 = vunpack.c.h.b16 %v6436
    %v6715 = vunpack.c.l.b16 %v6437
    %v6716 = vunpack.c.h.b16 %v6437
    %v6717 = vunpack.c.l.b16 %v6438
    %v6718 = vunpack.c.h.b16 %v6438
    %v6719 = vunpack.c.l.b16 %v6439
    %v6720 = vunpack.c.h.b16 %v6439
    %v6721 = vunpack.c.l.b16 %v6440
    %v6722 = vunpack.c.h.b16 %v6440
    %v6723 = vunpack.c.l.b16 %v6441
    %v6724 = vunpack.c.h.b16 %v6441
    %v6725 = vunpack.c.l.b16 %v6442
    %v6726 = vunpack.c.h.b16 %v6442
    %v6727 = vunpack.c.l.b16 %v6443
    %v6728 = vunpack.c.h.b16 %v6443
    %v6729 = vunpack.c.l.b16 %v6444
    %v6730 = vunpack.c.h.b16 %v6444
    %v6731 = vunpack.c.l.b16 %v6445
    %v6732 = vunpack.c.h.b16 %v6445
    %v6733 = vunpack.c.l.b16 %v6446
    %v6734 = vunpack.c.h.b16 %v6446
    %v6735 = vunpack.c.l.b16 %v6447
    %v6736 = vunpack.c.h.b16 %v6447
    %v6737 = vunpack.c.l.b16 %v6448
    %v6738 = vunpack.c.h.b16 %v6448
    %v6739 = vunpack.c.l.b16 %v6449
    %v6740 = vunpack.c.h.b16 %v6449
    %v6741 = vunpack.c.l.b16 %v6450
    %v6742 = vunpack.c.h.b16 %v6450
    %v6743 = vunpack.c.l.b16 %v6451
    %v6744 = vunpack.c.h.b16 %v6451
    %v6745 = vunpack.c.l.b16 %v6452
    %v6746 = vunpack.c.h.b16 %v6452
    %v6747 = vunpack.c.l.b16 %v6453
    %v6748 = vunpack.c.h.b16 %v6453
    %v6749 = vunpack.c.l.b16 %v6454
    %v6750 = vunpack.c.h.b16 %v6454
    %v6751 = vunpack.c.l.b16 %v6455
    %v6752 = vunpack.c.h.b16 %v6455
    %v6753 = vunpack.c.l.b16 %v6456
    %v6754 = vunpack.c.h.b16 %v6456
    %v6755 = vunpack.c.l.b16 %v6457
    %v6756 = vunpack.c.h.b16 %v6457
    %v6757 = vunpack.c.l.b16 %v6458
    %v6758 = vunpack.c.h.b16 %v6458
    %v6759 = vunpack.c.l.b16 %v6459
    %v6760 = vunpack.c.h.b16 %v6459
    %v6761 = vunpack.c.l.b16 %v6460
    %v6762 = vunpack.c.h.b16 %v6460
    %v6763 = vunpack.c.l.b16 %v6461
    %v6764 = vunpack.c.h.b16 %v6461
    %v6765 = vunpack.c.l.b16 %v6462
    %v6766 = vunpack.c.h.b16 %v6462
    %v6767 = vunpack.c.l.b16 %v6463
    %v6768 = vunpack.c.h.b16 %v6463
    %v6769 = vunpack.c.l.b16 %v6464
    %v6770 = vunpack.c.h.b16 %v6464
    %v6771 = vunpack.c.l.b16 %v6465
    %v6772 = vunpack.c.h.b16 %v6465
    %v6773 = vunpack.c.l.b16 %v6466
    %v6774 = vunpack.c.h.b16 %v6466
    %v6775 = vunpack.c.l.b16 %v6467
    %v6776 = vunpack.c.h.b16 %v6467
    %v6777 = vunpack.c.l.b16 %v6468
    %v6778 = vunpack.c.h.b16 %v6468
    %v6779 = vunpack.c.l.b16 %v6469
    %v6780 = vunpack.c.h.b16 %v6469
    %v6781 = vunpack.c.l.b16 %v6470
    %v6782 = vunpack.c.h.b16 %v6470
    %v6783 = vunpack.c.l.b16 %v6471
    %v6784 = vunpack.c.h.b16 %v6471
    %v6785 = vunpack.c.l.b16 %v6472
    %v6786 = vunpack.c.h.b16 %v6472
    %v6787 = vunpack.c.l.b16 %v6473
    %v6788 = vunpack.c.h.b16 %v6473
    %v6789 = vunpack.c.l.b16 %v6474
    %v6790 = vunpack.c.h.b16 %v6474
    %v6791 = vunpack.c.l.b16 %v6475
    %v6792 = vunpack.c.h.b16 %v6475
    %v6793 = vunpack.c.l.b16 %v6476
    %v6794 = vunpack.c.h.b16 %v6476
    %v6795 = vunpack.c.l.b16 %v6477
    %v6796 = vunpack.c.h.b16 %v6477
    %v6797 = vunpack.c.l.b16 %v6478
    %v6798 = vunpack.c.h.b16 %v6478
    %v6799 = vunpack.c.l.b16 %v6479
    %v6800 = vunpack.c.h.b16 %v6479
    %v6801 = vunpack.c.l.b16 %v6480
    %v6802 = vunpack.c.h.b16 %v6480
    %v6803 = vunpack.c.l.b16 %v6481
    %v6804 = vunpack.c.h.b16 %v6481
    %v6805 = vunpack.c.l.b16 %v6482
    %v6806 = vunpack.c.h.b16 %v6482
    %v6807 = vunpack.c.l.b16 %v6483
    %v6808 = vunpack.c.h.b16 %v6483
    %v6809 = vunpack.c.l.b16 %v6484
    %v6810 = vunpack.c.h.b16 %v6484
    %v6811 = vunpack.c.l.b16 %v6485
    %v6812 = vunpack.c.h.b16 %v6485
    %v6813 = vunpack.c.l.b16 %v6486
    %v6814 = vunpack.c.h.b16 %v6486
    %v6815 = vunpack.c.l.b16 %v6487
    %v6816 = vunpack.c.h.b16 %v6487
    %v6817 = vunpack.c.l.b16 %v6488
    %v6818 = vunpack.c.h.b16 %v6488
    %v6819 = vunpack.c.l.b16 %v6489
    %v6820 = vunpack.c.h.b16 %v6489
    %v6821 = vunpack.c.l.b16 %v6490
    %v6822 = vunpack.c.h.b16 %v6490
    %v6823 = vunpack.c.l.b16 %v6491
    %v6824 = vunpack.c.h.b16 %v6491
    %v6825 = vunpack.c.l.b16 %v6492
    %v6826 = vunpack.c.h.b16 %v6492
    %v6827 = vunpack.c.l.b16 %v6493
    %v6828 = vunpack.c.h.b16 %v6493
    %v6829 = vunpack.c.l.b16 %v6494
    %v6830 = vunpack.c.h.b16 %v6494
    %v6831 = vunpack.c.l.b16 %v6495
    %v6832 = vunpack.c.h.b16 %v6495
    %v6833 = vunpack.c.l.b16 %v6496
    %v6834 = vunpack.c.h.b16 %v6496
    %v6835 = vunpack.c.l.b16 %v6497
    %v6836 = vunpack.c.h.b16 %v6497
    %v6837 = vunpack.c.l.b16 %v6498
    %v6838 = vunpack.c.h.b16 %v6498
    %v6839 = vunpack.c.l.b16 %v6499
    %v6840 = vunpack.c.h.b16 %v6499
    %v6841 = vunpack.c.l.b16 %v6500
    %v6842 = vunpack.c.h.b16 %v6500
    %v6843 = vunpack.c.l.b16 %v6501
    %v6844 = vunpack.c.h.b16 %v6501
    %v6845 = vunpack.c.l.b16 %v6502
    %v6846 = vunpack.c.h.b16 %v6502
    %v6847 = vunpack.c.l.b16 %v6503
    %v6848 = vunpack.c.h.b16 %v6503
    %v6849 = vunpack.c.l.b16 %v6504
    %v6850 = vunpack.c.h.b16 %v6504
    %v6851 = vunpack.c.l.b16 %v6505
    %v6852 = vunpack.c.h.b16 %v6505
    %v6853 = vunpack.c.l.b16 %v6506
    %v6854 = vunpack.c.h.b16 %v6506
    %v6855 = vunpack.c.l.b16 %v6507
    %v6856 = vunpack.c.h.b16 %v6507
    %v6857 = vunpack.c.l.b16 %v6508
    %v6858 = vunpack.c.h.b16 %v6508
    %v6859 = vunpack.c.l.b16 %v6509
    %v6860 = vunpack.c.h.b16 %v6509
    %v6861 = vunpack.c.l.b16 %v6510
    %v6862 = vunpack.c.h.b16 %v6510
    %v6863 = vpack.c.b16 %v6675, %v6671
    %v6864 = vpack.c.b16 %v6676, %v6672
    %v6865 = vpack.c.b16 %v6677, %v6673
    %v6866 = vpack.c.b16 %v6678, %v6674
    %v6867 = vpack.c.b16 %v6683, %v6679
    %v6868 = vpack.c.b16 %v6684, %v6680
    %v6869 = vpack.c.b16 %v6685, %v6681
    %v6870 = vpack.c.b16 %v6686, %v6682
    %v6871 = vpack.c.b16 %v6691, %v6687
    %v6872 = vpack.c.b16 %v6692, %v6688
    %v6873 = vpack.c.b16 %v6693, %v6689
    %v6874 = vpack.c.b16 %v6694, %v6690
    %v6875 = vpack.c.b16 %v6699, %v6695
    %v6876 = vpack.c.b16 %v6700, %v6696
    %v6877 = vpack.c.b16 %v6701, %v6697
    %v6878 = vpack.c.b16 %v6702, %v6698
    %v6879 = vpack.c.b16 %v6707, %v6703
    %v6880 = vpack.c.b16 %v6708, %v6704
    %v6881 = vpack.c.b16 %v6709, %v6705
    %v6882 = vpack.c.b16 %v6710, %v6706
    %v6883 = vpack.c.b16 %v6715, %v6711
    %v6884 = vpack.c.b16 %v6716, %v6712
    %v6885 = vpack.c.b16 %v6717, %v6713
    %v6886 = vpack.c.b16 %v6718, %v6714
    %v6887 = vpack.c.b16 %v6723, %v6719
    %v6888 = vpack.c.b16 %v6724, %v6720
    %v6889 = vpack.c.b16 %v6725, %v6721
    %v6890 = vpack.c.b16 %v6726, %v6722
    %v6891 = vpack.c.b16 %v6731, %v6727
    %v6892 = vpack.c.b16 %v6732, %v6728
    %v6893 = vpack.c.b16 %v6733, %v6729
    %v6894 = vpack.c.b16 %v6734, %v6730
    %v6895 = vpack.c.b16 %v6739, %v6735
    %v6896 = vpack.c.b16 %v6740, %v6736
    %v6897 = vpack.c.b16 %v6741, %v6737
    %v6898 = vpack.c.b16 %v6742, %v6738
    %v6899 = vpack.c.b16 %v6747, %v6743
    %v6900 = vpack.c.b16 %v6748, %v6744
    %v6901 = vpack.c.b16 %v6749, %v6745
    %v6902 = vpack.c.b16 %v6750, %v6746
    %v6903 = vpack.c.b16 %v6755, %v6751
    %v6904 = vpack.c.b16 %v6756, %v6752
    %v6905 = vpack.c.b16 %v6757, %v6753
    %v6906 = vpack.c.b16 %v6758, %v6754
    %v6907 = vpack.c.b16 %v6763, %v6759
    %v6908 = vpack.c.b16 %v6764, %v6760
    %v6909 = vpack.c.b16 %v6765, %v6761
    %v6910 = vpack.c.b16 %v6766, %v6762
    %v6911 = vpack.c.b16 %v6771, %v6767
    %v6912 = vpack.c.b16 %v6772, %v6768
    %v6913 = vpack.c.b16 %v6773, %v6769
    %v6914 = vpack.c.b16 %v6774, %v6770
    %v6915 = vpack.c.b16 %v6779, %v6775
    %v6916 = vpack.c.b16 %v6780, %v6776
    %v6917 = vpack.c.b16 %v6781, %v6777
    %v6918 = vpack.c.b16 %v6782, %v6778
    %v6919 = vpack.c.b16 %v6787, %v6783
    %v6920 = vpack.c.b16 %v6788, %v6784
    %v6921 = vpack.c.b16 %v6789, %v6785
    %v6922 = vpack.c.b16 %v6790, %v6786
    %v6923 = vpack.c.b16 %v6795, %v6791
    %v6924 = vpack.c.b16 %v6796, %v6792
    %v6925 = vpack.c.b16 %v6797, %v6793
    %v6926 = vpack.c.b16 %v6798, %v6794
    %v6927 = vpack.c.b16 %v6803, %v6799
    %v6928 = vpack.c.b16 %v6804, %v6800
    %v6929 = vpack.c.b16 %v6805, %v6801
    %v6930 = vpack.c.b16 %v6806, %v6802
    %v6931 = vpack.c.b16 %v6811, %v6807
    %v6932 = vpack.c.b16 %v6812, %v6808
    %v6933 = vpack.c.b16 %v6813, %v6809
    %v6934 = vpack.c.b16 %v6814, %v6810
    %v6935 = vpack.c.b16 %v6819, %v6815
    %v6936 = vpack.c.b16 %v6820, %v6816
    %v6937 = vpack.c.b16 %v6821, %v6817
    %v6938 = vpack.c.b16 %v6822, %v6818
    %v6939 = vpack.c.b16 %v6827, %v6823
    %v6940 = vpack.c.b16 %v6828, %v6824
    %v6941 = vpack.c.b16 %v6829, %v6825
    %v6942 = vpack.c.b16 %v6830, %v6826
    %v6943 = vpack.c.b16 %v6835, %v6831
    %v6944 = vpack.c.b16 %v6836, %v6832
    %v6945 = vpack.c.b16 %v6837, %v6833
    %v6946 = vpack.c.b16 %v6838, %v6834
    %v6947 = vpack.c.b16 %v6843, %v6839
    %v6948 = vpack.c.b16 %v6844, %v6840
    %v6949 = vpack.c.b16 %v6845, %v6841
    %v6950 = vpack.c.b16 %v6846, %v6842
    %v6951 = vpack.c.b16 %v6851, %v6847
    %v6952 = vpack.c.b16 %v6852, %v6848
    %v6953 = vpack.c.b16 %v6853, %v6849
    %v6954 = vpack.c.b16 %v6854, %v6850
    %v6955 = vpack.c.b16 %v6859, %v6855
    %v6956 = vpack.c.b16 %v6860, %v6856
    %v6957 = vpack.c.b16 %v6861, %v6857
    %v6958 = vpack.c.b16 %v6862, %v6858
    %7055 = vmatprep.subr.bf16.mxu0 %v6864
    %7056 = vmatpush1.bf16.msra.mxu0 %v6863
    %7057 = vmatprep.subr.bf16.mxu0 %v6868
    %7058 = vmatpush1.bf16.msra.mxu0 %v6867
    %7059 = vmatprep.subr.bf16.mxu0 %v6872
    %7060 = vmatpush1.bf16.msra.mxu0 %v6871
    %7061 = vmatprep.subr.bf16.mxu0 %v6876
    %7062 = vmatpush1.bf16.msra.mxu0 %v6875
    %7063 = vmatprep.subr.bf16.mxu0 %v6880
    %7064 = vmatpush1.bf16.msra.mxu0 %v6879
    %7065 = vmatprep.subr.bf16.mxu0 %v6884
    %7066 = vmatpush1.bf16.msra.mxu0 %v6883
    %7067 = vmatprep.subr.bf16.mxu0 %v6888
    %7068 = vmatpush1.bf16.msra.mxu0 %v6887
    %7069 = vmatprep.subr.bf16.mxu0 %v6892
    %7070 = vmatpush1.bf16.msra.mxu0 %v6891
    %7071 = vmatprep.subr.bf16.mxu0 %v6896
    %7072 = vmatpush1.bf16.msra.mxu0 %v6895
    %7073 = vmatprep.subr.bf16.mxu0 %v6900
    %7074 = vmatpush1.bf16.msra.mxu0 %v6899
    %7075 = vmatprep.subr.bf16.mxu0 %v6904
    %7076 = vmatpush1.bf16.msra.mxu0 %v6903
    %7077 = vmatprep.subr.bf16.mxu0 %v6908
    %7078 = vmatpush1.bf16.msra.mxu0 %v6907
    %7079 = vmatprep.subr.bf16.mxu0 %v6912
    %7080 = vmatpush1.bf16.msra.mxu0 %v6911
    %7081 = vmatprep.subr.bf16.mxu0 %v6916
    %7082 = vmatpush1.bf16.msra.mxu0 %v6915
    %7083 = vmatprep.subr.bf16.mxu0 %v6920
    %7084 = vmatpush1.bf16.msra.mxu0 %v6919
    %7085 = vmatprep.subr.bf16.mxu0 %v6924
    %7086 = vmatpush1.bf16.msra.mxu0 %v6923
    %7087 = vmatprep.mubr.bf16.mxu0 %v6552
    %7088 = vmatmul.mubr.bf16.gmra.mrb[0].mxu0 %v6551
    %v7089 = vpop.f32.mrb[0].mxu0
    %v7090 = vadd.f32 0.0, %v7089
    %v7091 = vpop.f32.mrb[0].mxu0
    %v7092 = vadd.f32 0.0, %v7091
    %v7093 = vpop.f32.mrb[0].mxu0
    %v7094 = vadd.f32 0.0, %v7093
    %v7095 = vpop.f32.mrb[0].mxu0
    %v7096 = vadd.f32 0.0, %v7095
    %7097 = vmatprep.mubr.bf16.mxu0 %v6555
    %7098 = vmatmul.mubr.bf16.gmra.mrb[0].mxu0 %v6554
    %v7099 = vpop.f32.mrb[0].mxu0
    %v7100 = vadd.f32 0.0, %v7099
    %v7101 = vpop.f32.mrb[0].mxu0
    %v7102 = vadd.f32 0.0, %v7101
    %v7103 = vpop.f32.mrb[0].mxu0
    %v7104 = vadd.f32 0.0, %v7103
    %v7105 = vpop.f32.mrb[0].mxu0
    %v7106 = vadd.f32 0.0, %v7105
    %7107 = vmatprep.mubr.bf16.mxu0 %v6558
    %7108 = vmatmul.mubr.bf16.gmra.mrb[0].mxu0 %v6557
    %v7109 = vpop.f32.mrb[0].mxu0
    %v7110 = vadd.f32 0.0, %v7109
    %v7111 = vpop.f32.mrb[0].mxu0
    %v7112 = vadd.f32 0.0, %v7111
    %v7113 = vpop.f32.mrb[0].mxu0
    %v7114 = vadd.f32 0.0, %v7113
    %v7115 = vpop.f32.mrb[0].mxu0
    %v7116 = vadd.f32 0.0, %v7115
    %7117 = vmatprep.mubr.bf16.mxu0 %v6561
    %7118 = vmatmul.mubr.bf16.gmra.mrb[0].mxu0 %v6560
    %v7119 = vpop.f32.mrb[0].mxu0
    %v7120 = vadd.f32 0.0, %v7119
    %v7121 = vpop.f32.mrb[0].mxu0
    %v7122 = vadd.f32 0.0, %v7121
    %v7123 = vpop.f32.mrb[0].mxu0
    %v7124 = vadd.f32 0.0, %v7123
    %v7125 = vpop.f32.mrb[0].mxu0
    %v7126 = vadd.f32 0.0, %v7125
    %7127 = vdwg.mxu0
    %7128 = vmatprep.subr.bf16.mxu0 %v6928
    %7129 = vmatpush1.bf16.msra.mxu0 %v6927
    %7130 = vmatprep.subr.bf16.mxu0 %v6932
    %7131 = vmatpush1.bf16.msra.mxu0 %v6931
    %7132 = vmatprep.subr.bf16.mxu0 %v6936
    %7133 = vmatpush1.bf16.msra.mxu0 %v6935
    %7134 = vmatprep.subr.bf16.mxu0 %v6940
    %7135 = vmatpush1.bf16.msra.mxu0 %v6939
    %7136 = vmatprep.subr.bf16.mxu0 %v6944
    %7137 = vmatpush1.bf16.msra.mxu0 %v6943
    %7138 = vmatprep.subr.bf16.mxu0 %v6948
    %7139 = vmatpush1.bf16.msra.mxu0 %v6947
    %7140 = vmatprep.subr.bf16.mxu0 %v6952
    %7141 = vmatpush1.bf16.msra.mxu0 %v6951
    %7142 = vmatprep.subr.bf16.mxu0 %v6956
    %7143 = vmatpush1.bf16.msra.mxu0 %v6955
    %7144 = vmatprep.subr.bf16.mxu0 0
    %7145 = vmatpush1.bf16.msra.mxu0 0
    %7146 = vmatprep.subr.bf16.mxu0 0
    %7147 = vmatpush1.bf16.msra.mxu0 0
    %7148 = vmatprep.subr.bf16.mxu0 0
    %7149 = vmatpush1.bf16.msra.mxu0 0
    %7150 = vmatprep.subr.bf16.mxu0 0
    %7151 = vmatpush1.bf16.msra.mxu0 0
    %7152 = vmatprep.subr.bf16.mxu0 0
    %7153 = vmatpush1.bf16.msra.mxu0 0
    %7154 = vmatprep.subr.bf16.mxu0 0
    %7155 = vmatpush1.bf16.msra.mxu0 0
    %7156 = vmatprep.subr.bf16.mxu0 0
    %7157 = vmatpush1.bf16.msra.mxu0 0
    %7158 = vmatprep.subr.bf16.mxu0 0
    %7159 = vmatpush1.bf16.msra.mxu0 0
    %7160 = vmatprep.mubr.bf16.mxu0 0
    %7161 = vmatmul.mubr.bf16.gmra.mrb[0].mxu0 %v6553
    %v7162 = vpop.f32.mrb[0].mxu0
    %v7163 = vadd.f32 %v7090, %v7162
    %v7164 = vpop.f32.mrb[0].mxu0
    %v7165 = vadd.f32 %v7092, %v7164
    %v7166 = vpop.f32.mrb[0].mxu0
    %v7167 = vadd.f32 %v7094, %v7166
    %v7168 = vpop.f32.mrb[0].mxu0
    %v7169 = vadd.f32 %v7096, %v7168
    %7170 = vmatprep.mubr.bf16.mxu0 0
    %7171 = vmatmul.mubr.bf16.gmra.mrb[0].mxu0 %v6556
    %v7172 = vpop.f32.mrb[0].mxu0
    %v7173 = vadd.f32 %v7100, %v7172
    %v7174 = vpop.f32.mrb[0].mxu0
    %v7175 = vadd.f32 %v7102, %v7174
    %v7176 = vpop.f32.mrb[0].mxu0
    %v7177 = vadd.f32 %v7104, %v7176
    %v7178 = vpop.f32.mrb[0].mxu0
    %v7179 = vadd.f32 %v7106, %v7178
    %7180 = vmatprep.mubr.bf16.mxu0 0
    %7181 = vmatmul.mubr.bf16.gmra.mrb[0].mxu0 %v6559
    %v7182 = vpop.f32.mrb[0].mxu0
    %v7183 = vadd.f32 %v7110, %v7182
    %v7184 = vpop.f32.mrb[0].mxu0
    %v7185 = vadd.f32 %v7112, %v7184
    %v7186 = vpop.f32.mrb[0].mxu0
    %v7187 = vadd.f32 %v7114, %v7186
    %v7188 = vpop.f32.mrb[0].mxu0
    %v7189 = vadd.f32 %v7116, %v7188
    %7190 = vmatprep.mubr.bf16.mxu0 0
    %7191 = vmatmul.mubr.bf16.gmra.mrb[0].mxu0 %v6562
    %v7192 = vpop.f32.mrb[0].mxu0
    %v7193 = vadd.f32 %v7120, %v7192
    %v7194 = vpop.f32.mrb[0].mxu0
    %v7195 = vadd.f32 %v7122, %v7194
    %v7196 = vpop.f32.mrb[0].mxu0
    %v7197 = vadd.f32 %v7124, %v7196
    %v7198 = vpop.f32.mrb[0].mxu0
    %v7199 = vadd.f32 %v7126, %v7198
    %7200 = vdwg.mxu0
    %7201 = vmatprep.subr.bf16.mxu0 %v6866
    %7202 = vmatpush1.bf16.msra.mxu0 %v6865
    %7203 = vmatprep.subr.bf16.mxu0 %v6870
    %7204 = vmatpush1.bf16.msra.mxu0 %v6869
    %7205 = vmatprep.subr.bf16.mxu0 %v6874
    %7206 = vmatpush1.bf16.msra.mxu0 %v6873
    %7207 = vmatprep.subr.bf16.mxu0 %v6878
    %7208 = vmatpush1.bf16.msra.mxu0 %v6877
    %7209 = vmatprep.subr.bf16.mxu0 %v6882
    %7210 = vmatpush1.bf16.msra.mxu0 %v6881
    %7211 = vmatprep.subr.bf16.mxu0 %v6886
    %7212 = vmatpush1.bf16.msra.mxu0 %v6885
    %7213 = vmatprep.subr.bf16.mxu0 %v6890
    %7214 = vmatpush1.bf16.msra.mxu0 %v6889
    %7215 = vmatprep.subr.bf16.mxu0 %v6894
    %7216 = vmatpush1.bf16.msra.mxu0 %v6893
    %7217 = vmatprep.subr.bf16.mxu0 %v6898
    %7218 = vmatpush1.bf16.msra.mxu0 %v6897
    %7219 = vmatprep.subr.bf16.mxu0 %v6902
    %7220 = vmatpush1.bf16.msra.mxu0 %v6901
    %7221 = vmatprep.subr.bf16.mxu0 %v6906
    %7222 = vmatpush1.bf16.msra.mxu0 %v6905
    %7223 = vmatprep.subr.bf16.mxu0 %v6910
    %7224 = vmatpush1.bf16.msra.mxu0 %v6909
    %7225 = vmatprep.subr.bf16.mxu0 %v6914
    %7226 = vmatpush1.bf16.msra.mxu0 %v6913
    %7227 = vmatprep.subr.bf16.mxu0 %v6918
    %7228 = vmatpush1.bf16.msra.mxu0 %v6917
    %7229 = vmatprep.subr.bf16.mxu0 %v6922
    %7230 = vmatpush1.bf16.msra.mxu0 %v6921
    %7231 = vmatprep.subr.bf16.mxu0 %v6926
    %7232 = vmatpush1.bf16.msra.mxu0 %v6925
    %7233 = vmatprep.mubr.bf16.mxu0 %v6552
    %7234 = vmatmul.mubr.bf16.gmra.mrb[0].mxu0 %v6551
    %v7235 = vpop.f32.mrb[0].mxu0
    %v7236 = vadd.f32 0.0, %v7235
    %v7237 = vpop.f32.mrb[0].mxu0
    %v7238 = vadd.f32 0.0, %v7237
    %v7239 = vpop.f32.mrb[0].mxu0
    %v7240 = vadd.f32 0.0, %v7239
    %v7241 = vpop.f32.mrb[0].mxu0
    %v7242 = vadd.f32 0.0, %v7241
    %7243 = vmatprep.mubr.bf16.mxu0 %v6555
    %7244 = vmatmul.mubr.bf16.gmra.mrb[0].mxu0 %v6554
    %v7245 = vpop.f32.mrb[0].mxu0
    %v7246 = vadd.f32 0.0, %v7245
    %v7247 = vpop.f32.mrb[0].mxu0
    %v7248 = vadd.f32 0.0, %v7247
    %v7249 = vpop.f32.mrb[0].mxu0
    %v7250 = vadd.f32 0.0, %v7249
    %v7251 = vpop.f32.mrb[0].mxu0
    %v7252 = vadd.f32 0.0, %v7251
    %7253 = vmatprep.mubr.bf16.mxu0 %v6558
    %7254 = vmatmul.mubr.bf16.gmra.mrb[0].mxu0 %v6557
    %v7255 = vpop.f32.mrb[0].mxu0
    %v7256 = vadd.f32 0.0, %v7255
    %v7257 = vpop.f32.mrb[0].mxu0
    %v7258 = vadd.f32 0.0, %v7257
    %v7259 = vpop.f32.mrb[0].mxu0
    %v7260 = vadd.f32 0.0, %v7259
    %v7261 = vpop.f32.mrb[0].mxu0
    %v7262 = vadd.f32 0.0, %v7261
    %7263 = vmatprep.mubr.bf16.mxu0 %v6561
    %7264 = vmatmul.mubr.bf16.gmra.mrb[0].mxu0 %v6560
    %v7265 = vpop.f32.mrb[0].mxu0
    %v7266 = vadd.f32 0.0, %v7265
    %v7267 = vpop.f32.mrb[0].mxu0
    %v7268 = vadd.f32 0.0, %v7267
    %v7269 = vpop.f32.mrb[0].mxu0
    %v7270 = vadd.f32 0.0, %v7269
    %v7271 = vpop.f32.mrb[0].mxu0
    %v7272 = vadd.f32 0.0, %v7271
    %7273 = vdwg.mxu0
    %7274 = vmatprep.subr.bf16.mxu0 %v6930
    %7275 = vmatpush1.bf16.msra.mxu0 %v6929
    %7276 = vmatprep.subr.bf16.mxu0 %v6934
    %7277 = vmatpush1.bf16.msra.mxu0 %v6933
    %7278 = vmatprep.subr.bf16.mxu0 %v6938
    %7279 = vmatpush1.bf16.msra.mxu0 %v6937
    %7280 = vmatprep.subr.bf16.mxu0 %v6942
    %7281 = vmatpush1.bf16.msra.mxu0 %v6941
    %7282 = vmatprep.subr.bf16.mxu0 %v6946
    %7283 = vmatpush1.bf16.msra.mxu0 %v6945
    %7284 = vmatprep.subr.bf16.mxu0 %v6950
    %7285 = vmatpush1.bf16.msra.mxu0 %v6949
    %7286 = vmatprep.subr.bf16.mxu0 %v6954
    %7287 = vmatpush1.bf16.msra.mxu0 %v6953
    %7288 = vmatprep.subr.bf16.mxu0 %v6958
    %7289 = vmatpush1.bf16.msra.mxu0 %v6957
    %7290 = vmatprep.subr.bf16.mxu0 0
    %7291 = vmatpush1.bf16.msra.mxu0 0
    %7292 = vmatprep.subr.bf16.mxu0 0
    %7293 = vmatpush1.bf16.msra.mxu0 0
    %7294 = vmatprep.subr.bf16.mxu0 0
    %7295 = vmatpush1.bf16.msra.mxu0 0
    %7296 = vmatprep.subr.bf16.mxu0 0
    %7297 = vmatpush1.bf16.msra.mxu0 0
    %7298 = vmatprep.subr.bf16.mxu0 0
    %7299 = vmatpush1.bf16.msra.mxu0 0
    %7300 = vmatprep.subr.bf16.mxu0 0
    %7301 = vmatpush1.bf16.msra.mxu0 0
    %7302 = vmatprep.subr.bf16.mxu0 0
    %7303 = vmatpush1.bf16.msra.mxu0 0
    %7304 = vmatprep.subr.bf16.mxu0 0
    %7305 = vmatpush1.bf16.msra.mxu0 0
    %7306 = vmatprep.mubr.bf16.mxu0 0
    %7307 = vmatmul.mubr.bf16.gmra.mrb[0].mxu0 %v6553
    %v7308 = vpop.f32.mrb[0].mxu0
    %v7309 = vadd.f32 %v7236, %v7308
    %v7310 = vpop.f32.mrb[0].mxu0
    %v7311 = vadd.f32 %v7238, %v7310
    %v7312 = vpop.f32.mrb[0].mxu0
    %v7313 = vadd.f32 %v7240, %v7312
    %v7314 = vpop.f32.mrb[0].mxu0
    %v7315 = vadd.f32 %v7242, %v7314
    %7316 = vmatprep.mubr.bf16.mxu0 0
    %7317 = vmatmul.mubr.bf16.gmra.mrb[0].mxu0 %v6556
    %v7318 = vpop.f32.mrb[0].mxu0
    %v7319 = vadd.f32 %v7246, %v7318
    %v7320 = vpop.f32.mrb[0].mxu0
    %v7321 = vadd.f32 %v7248, %v7320
    %v7322 = vpop.f32.mrb[0].mxu0
    %v7323 = vadd.f32 %v7250, %v7322
    %v7324 = vpop.f32.mrb[0].mxu0
    %v7325 = vadd.f32 %v7252, %v7324
    %7326 = vmatprep.mubr.bf16.mxu0 0
    %7327 = vmatmul.mubr.bf16.gmra.mrb[0].mxu0 %v6559
    %v7328 = vpop.f32.mrb[0].mxu0
    %v7329 = vadd.f32 %v7256, %v7328
    %v7330 = vpop.f32.mrb[0].mxu0
    %v7331 = vadd.f32 %v7258, %v7330
    %v7332 = vpop.f32.mrb[0].mxu0
    %v7333 = vadd.f32 %v7260, %v7332
    %v7334 = vpop.f32.mrb[0].mxu0
    %v7335 = vadd.f32 %v7262, %v7334
    %7336 = vmatprep.mubr.bf16.mxu0 0
    %7337 = vmatmul.mubr.bf16.gmra.mrb[0].mxu0 %v6562
    %v7338 = vpop.f32.mrb[0].mxu0
    %v7339 = vadd.f32 %v7266, %v7338
    %v7340 = vpop.f32.mrb[0].mxu0
    %v7341 = vadd.f32 %v7268, %v7340
    %v7342 = vpop.f32.mrb[0].mxu0
    %v7343 = vadd.f32 %v7270, %v7342
    %v7344 = vpop.f32.mrb[0].mxu0
    %v7345 = vadd.f32 %v7272, %v7344
    %7346 = vdwg.mxu0
    %v7347 = vadd.f32 %v6213, %v7163
    %v7348 = vadd.f32 %v6215, %v7165
    %v7349 = vadd.f32 %v6359, %v7309
    %v7350 = vadd.f32 %v6361, %v7311
    %v7351 = vadd.f32 %v6217, %v7167
    %v7352 = vadd.f32 %v6219, %v7169
    %v7353 = vadd.f32 %v6363, %v7313
    %v7354 = vadd.f32 %v6365, %v7315
    %v7355 = vadd.f32 %v6223, %v7173
    %v7356 = vadd.f32 %v6225, %v7175
    %v7357 = vadd.f32 %v6369, %v7319
    %v7358 = vadd.f32 %v6371, %v7321
    %v7359 = vadd.f32 %v6227, %v7177
    %v7360 = vadd.f32 %v6229, %v7179
    %v7361 = vadd.f32 %v6373, %v7323
    %v7362 = vadd.f32 %v6375, %v7325
    %v7363 = vadd.f32 %v6233, %v7183
    %v7364 = vadd.f32 %v6235, %v7185
    %v7365 = vadd.f32 %v6379, %v7329
    %v7366 = vadd.f32 %v6381, %v7331
    %v7367 = vadd.f32 %v6237, %v7187
    %v7368 = vadd.f32 %v6239, %v7189
    %v7369 = vadd.f32 %v6383, %v7333
    %v7370 = vadd.f32 %v6385, %v7335
    %v7371 = vadd.f32 %v6243, %v7193
    %v7372 = vadd.f32 %v6245, %v7195
    %v7373 = vadd.f32 %v6389, %v7339
    %v7374 = vadd.f32 %v6391, %v7341
    %v7375 = vadd.f32 %v6247, %v7197
    %v7376 = vadd.f32 %v6249, %v7199
    %v7377 = vadd.f32 %v6393, %v7343
    %v7378 = vadd.f32 %v6395, %v7345
    %s7379 = scalar_lea.vmem [#allocation2], 36
    %v7380 = vld [vmem:[%s7379] sm:$0xff]
    %v7381 = vld [vmem:[%s7379 + $0x8] sm:$0xf]
    %v7382 = vld [vmem:[%s7379 + $0xc] sm:$0xff]
    %v7383 = vld [vmem:[%s7379 + $0x14] sm:$0xf]
    %v7384 = vld [vmem:[%s7379 + $0x18] sm:$0xff]
    %v7385 = vld [vmem:[%s7379 + $0x20] sm:$0xf]
    %v7386 = vld [vmem:[%s7379 + $0x24] sm:$0xff]
    %v7387 = vld [vmem:[%s7379 + $0x2c] sm:$0xf]
    %v7388 = vld [vmem:[%s7379 + $0x30] sm:$0xff]
    %v7389 = vld [vmem:[%s7379 + $0x38] sm:$0xf]
    %v7390 = vld [vmem:[%s7379 + $0x3c] sm:$0xff]
    %v7391 = vld [vmem:[%s7379 + $0x44] sm:$0xf]
    %v7392 = vld [vmem:[%s7379 + $0x48] sm:$0xff]
    %v7393 = vld [vmem:[%s7379 + $0x50] sm:$0xf]
    %v7394 = vld [vmem:[%s7379 + $0x54] sm:$0xff]
    %v7395 = vld [vmem:[%s7379 + $0x5c] sm:$0xf]
    %s7396 = scalar_lea.vmem [#allocation8], 2304
    %v7397 = vld [vmem:[%s7396] sm:$0xff]
    %v7398 = vld [vmem:[%s7396 + $0x8] sm:$0xff]
    %v7399 = vld [vmem:[%s7396 + $0x10] sm:$0xff]
    %v7400 = vld [vmem:[%s7396 + $0x18] sm:$0xff]
    %v7401 = vld [vmem:[%s7396 + $0x20] sm:$0xff]
    %v7402 = vld [vmem:[%s7396 + $0x28] sm:$0xff]
    %v7403 = vld [vmem:[%s7396 + $0x30] sm:$0xff]
    %v7404 = vld [vmem:[%s7396 + $0x38] sm:$0xff]
    %v7405 = vld [vmem:[%s7396 + $0x40] sm:$0xff]
    %v7406 = vld [vmem:[%s7396 + $0x48] sm:$0xff]
    %v7407 = vld [vmem:[%s7396 + $0x50] sm:$0xff]
    %v7408 = vld [vmem:[%s7396 + $0x58] sm:$0xff]
    %v7409 = vld [vmem:[%s7396 + $0x60] sm:$0xff]
    %v7410 = vld [vmem:[%s7396 + $0x68] sm:$0xff]
    %v7411 = vld [vmem:[%s7396 + $0x70] sm:$0xff]
    %v7412 = vld [vmem:[%s7396 + $0x78] sm:$0xff]
    %v7413 = vld [vmem:[%s7396 + $0x80] sm:$0xff]
    %v7414 = vld [vmem:[%s7396 + $0x88] sm:$0xff]
    %v7415 = vld [vmem:[%s7396 + $0x90] sm:$0xff]
    %v7416 = vld [vmem:[%s7396 + $0x98] sm:$0xff]
    %v7417 = vld [vmem:[%s7396 + $0xa0] sm:$0xff]
    %v7418 = vld [vmem:[%s7396 + $0xa8] sm:$0xff]
    %v7419 = vld [vmem:[%s7396 + $0xb0] sm:$0xff]
    %v7420 = vld [vmem:[%s7396 + $0xb8] sm:$0xff]
    %v7421 = vld [vmem:[%s7396 + $0xc0] sm:$0xff]
    %v7422 = vld [vmem:[%s7396 + $0xc8] sm:$0xff]
    %v7423 = vld [vmem:[%s7396 + $0xd0] sm:$0xff]
    %v7424 = vld [vmem:[%s7396 + $0xd8] sm:$0xff]
    %v7425 = vld [vmem:[%s7396 + $0xe0] sm:$0xff]
    %v7426 = vld [vmem:[%s7396 + $0xe8] sm:$0xff]
    %v7427 = vld [vmem:[%s7396 + $0xf0] sm:$0xff]
    %v7428 = vld [vmem:[%s7396 + $0xf8] sm:$0xff]
    %v7429 = vld [vmem:[%s7396 + $0x100] sm:$0xff]
    %v7430 = vld [vmem:[%s7396 + $0x108] sm:$0xff]
    %v7431 = vld [vmem:[%s7396 + $0x110] sm:$0xff]
    %v7432 = vld [vmem:[%s7396 + $0x118] sm:$0xff]
    %v7433 = vld [vmem:[%s7396 + $0x120] sm:$0xff]
    %v7434 = vld [vmem:[%s7396 + $0x128] sm:$0xff]
    %v7435 = vld [vmem:[%s7396 + $0x130] sm:$0xff]
    %v7436 = vld [vmem:[%s7396 + $0x138] sm:$0xff]
    %v7437 = vld [vmem:[%s7396 + $0x140] sm:$0xff]
    %v7438 = vld [vmem:[%s7396 + $0x148] sm:$0xff]
    %v7439 = vld [vmem:[%s7396 + $0x150] sm:$0xff]
    %v7440 = vld [vmem:[%s7396 + $0x158] sm:$0xff]
    %v7441 = vld [vmem:[%s7396 + $0x160] sm:$0xff]
    %v7442 = vld [vmem:[%s7396 + $0x168] sm:$0xff]
    %v7443 = vld [vmem:[%s7396 + $0x170] sm:$0xff]
    %v7444 = vld [vmem:[%s7396 + $0x178] sm:$0xff]
    %v7445 = vld [vmem:[%s7396 + $0x180] sm:$0xff]
    %v7446 = vld [vmem:[%s7396 + $0x188] sm:$0xff]
    %v7447 = vld [vmem:[%s7396 + $0x190] sm:$0xff]
    %v7448 = vld [vmem:[%s7396 + $0x198] sm:$0xff]
    %v7449 = vld [vmem:[%s7396 + $0x1a0] sm:$0xff]
    %v7450 = vld [vmem:[%s7396 + $0x1a8] sm:$0xff]
    %v7451 = vld [vmem:[%s7396 + $0x1b0] sm:$0xff]
    %v7452 = vld [vmem:[%s7396 + $0x1b8] sm:$0xff]
    %v7453 = vld [vmem:[%s7396 + $0x1c0] sm:$0xff]
    %v7454 = vld [vmem:[%s7396 + $0x1c8] sm:$0xff]
    %v7455 = vld [vmem:[%s7396 + $0x1d0] sm:$0xff]
    %v7456 = vld [vmem:[%s7396 + $0x1d8] sm:$0xff]
    %v7457 = vld [vmem:[%s7396 + $0x1e0] sm:$0xff]
    %v7458 = vld [vmem:[%s7396 + $0x1e8] sm:$0xff]
    %v7459 = vld [vmem:[%s7396 + $0x1f0] sm:$0xff]
    %v7460 = vld [vmem:[%s7396 + $0x1f8] sm:$0xff]
    %v7461 = vld [vmem:[%s7396 + $0x200] sm:$0xff]
    %v7462 = vld [vmem:[%s7396 + $0x208] sm:$0xff]
    %v7463 = vld [vmem:[%s7396 + $0x210] sm:$0xff]
    %v7464 = vld [vmem:[%s7396 + $0x218] sm:$0xff]
    %v7465 = vld [vmem:[%s7396 + $0x220] sm:$0xff]
    %v7466 = vld [vmem:[%s7396 + $0x228] sm:$0xff]
    %v7467 = vld [vmem:[%s7396 + $0x230] sm:$0xff]
    %v7468 = vld [vmem:[%s7396 + $0x238] sm:$0xff]
    %v7469 = vld [vmem:[%s7396 + $0x240] sm:$0xff]
    %v7470 = vld [vmem:[%s7396 + $0x248] sm:$0xff]
    %v7471 = vld [vmem:[%s7396 + $0x250] sm:$0xff]
    %v7472 = vld [vmem:[%s7396 + $0x258] sm:$0xff]
    %v7473 = vld [vmem:[%s7396 + $0x260] sm:$0xff]
    %v7474 = vld [vmem:[%s7396 + $0x268] sm:$0xff]
    %v7475 = vld [vmem:[%s7396 + $0x270] sm:$0xff]
    %v7476 = vld [vmem:[%s7396 + $0x278] sm:$0xff]
    %v7477 = vld [vmem:[%s7396 + $0x280] sm:$0xff]
    %v7478 = vld [vmem:[%s7396 + $0x288] sm:$0xff]
    %v7479 = vld [vmem:[%s7396 + $0x290] sm:$0xff]
    %v7480 = vld [vmem:[%s7396 + $0x298] sm:$0xff]
    %v7481 = vld [vmem:[%s7396 + $0x2a0] sm:$0xff]
    %v7482 = vld [vmem:[%s7396 + $0x2a8] sm:$0xff]
    %v7483 = vld [vmem:[%s7396 + $0x2b0] sm:$0xff]
    %v7484 = vld [vmem:[%s7396 + $0x2b8] sm:$0xff]
    %v7485 = vld [vmem:[%s7396 + $0x2c0] sm:$0xff]
    %v7486 = vld [vmem:[%s7396 + $0x2c8] sm:$0xff]
    %v7487 = vld [vmem:[%s7396 + $0x2d0] sm:$0xff]
    %v7488 = vld [vmem:[%s7396 + $0x2d8] sm:$0xff]
    %v7489 = vld [vmem:[%s7396 + $0x2e0] sm:$0xff]
    %v7490 = vld [vmem:[%s7396 + $0x2e8] sm:$0xff]
    %v7491 = vld [vmem:[%s7396 + $0x2f0] sm:$0xff]
    %v7492 = vld [vmem:[%s7396 + $0x2f8] sm:$0xff]
    %v7509 = vunpack.c.l.b16 %v7380
    %v7510 = vunpack.c.h.b16 %v7380
    %v7511 = vunpack.c.l.b16 %v7381
    %v7512 = vunpack.c.l.b16 %v7382
    %v7513 = vunpack.c.h.b16 %v7382
    %v7514 = vunpack.c.l.b16 %v7383
    %v7515 = vunpack.c.l.b16 %v7384
    %v7516 = vunpack.c.h.b16 %v7384
    %v7517 = vunpack.c.l.b16 %v7385
    %v7518 = vunpack.c.l.b16 %v7386
    %v7519 = vunpack.c.h.b16 %v7386
    %v7520 = vunpack.c.l.b16 %v7387
    %v7521 = vunpack.c.l.b16 %v7388
    %v7522 = vunpack.c.h.b16 %v7388
    %v7523 = vunpack.c.l.b16 %v7389
    %v7524 = vunpack.c.l.b16 %v7390
    %v7525 = vunpack.c.h.b16 %v7390
    %v7526 = vunpack.c.l.b16 %v7391
    %v7527 = vunpack.c.l.b16 %v7392
    %v7528 = vunpack.c.h.b16 %v7392
    %v7529 = vunpack.c.l.b16 %v7393
    %v7530 = vunpack.c.l.b16 %v7394
    %v7531 = vunpack.c.h.b16 %v7394
    %v7532 = vunpack.c.l.b16 %v7395
    %v7533 = vpack.c.b16 %v7512, %v7509
    %v7534 = vpack.c.b16 %v7513, %v7510
    %v7535 = vpack.c.b16 %v7514, %v7511
    %v7536 = vpack.c.b16 %v7518, %v7515
    %v7537 = vpack.c.b16 %v7519, %v7516
    %v7538 = vpack.c.b16 %v7520, %v7517
    %v7539 = vpack.c.b16 %v7524, %v7521
    %v7540 = vpack.c.b16 %v7525, %v7522
    %v7541 = vpack.c.b16 %v7526, %v7523
    %v7542 = vpack.c.b16 %v7530, %v7527
    %v7543 = vpack.c.b16 %v7531, %v7528
    %v7544 = vpack.c.b16 %v7532, %v7529
    %v7653 = vunpack.c.l.b16 %v7397
    %v7654 = vunpack.c.h.b16 %v7397
    %v7655 = vunpack.c.l.b16 %v7398
    %v7656 = vunpack.c.h.b16 %v7398
    %v7657 = vunpack.c.l.b16 %v7399
    %v7658 = vunpack.c.h.b16 %v7399
    %v7659 = vunpack.c.l.b16 %v7400
    %v7660 = vunpack.c.h.b16 %v7400
    %v7661 = vunpack.c.l.b16 %v7401
    %v7662 = vunpack.c.h.b16 %v7401
    %v7663 = vunpack.c.l.b16 %v7402
    %v7664 = vunpack.c.h.b16 %v7402
    %v7665 = vunpack.c.l.b16 %v7403
    %v7666 = vunpack.c.h.b16 %v7403
    %v7667 = vunpack.c.l.b16 %v7404
    %v7668 = vunpack.c.h.b16 %v7404
    %v7669 = vunpack.c.l.b16 %v7405
    %v7670 = vunpack.c.h.b16 %v7405
    %v7671 = vunpack.c.l.b16 %v7406
    %v7672 = vunpack.c.h.b16 %v7406
    %v7673 = vunpack.c.l.b16 %v7407
    %v7674 = vunpack.c.h.b16 %v7407
    %v7675 = vunpack.c.l.b16 %v7408
    %v7676 = vunpack.c.h.b16 %v7408
    %v7677 = vunpack.c.l.b16 %v7409
    %v7678 = vunpack.c.h.b16 %v7409
    %v7679 = vunpack.c.l.b16 %v7410
    %v7680 = vunpack.c.h.b16 %v7410
    %v7681 = vunpack.c.l.b16 %v7411
    %v7682 = vunpack.c.h.b16 %v7411
    %v7683 = vunpack.c.l.b16 %v7412
    %v7684 = vunpack.c.h.b16 %v7412
    %v7685 = vunpack.c.l.b16 %v7413
    %v7686 = vunpack.c.h.b16 %v7413
    %v7687 = vunpack.c.l.b16 %v7414
    %v7688 = vunpack.c.h.b16 %v7414
    %v7689 = vunpack.c.l.b16 %v7415
    %v7690 = vunpack.c.h.b16 %v7415
    %v7691 = vunpack.c.l.b16 %v7416
    %v7692 = vunpack.c.h.b16 %v7416
    %v7693 = vunpack.c.l.b16 %v7417
    %v7694 = vunpack.c.h.b16 %v7417
    %v7695 = vunpack.c.l.b16 %v7418
    %v7696 = vunpack.c.h.b16 %v7418
    %v7697 = vunpack.c.l.b16 %v7419
    %v7698 = vunpack.c.h.b16 %v7419
    %v7699 = vunpack.c.l.b16 %v7420
    %v7700 = vunpack.c.h.b16 %v7420
    %v7701 = vunpack.c.l.b16 %v7421
    %v7702 = vunpack.c.h.b16 %v7421
    %v7703 = vunpack.c.l.b16 %v7422
    %v7704 = vunpack.c.h.b16 %v7422
    %v7705 = vunpack.c.l.b16 %v7423
    %v7706 = vunpack.c.h.b16 %v7423
    %v7707 = vunpack.c.l.b16 %v7424
    %v7708 = vunpack.c.h.b16 %v7424
    %v7709 = vunpack.c.l.b16 %v7425
    %v7710 = vunpack.c.h.b16 %v7425
    %v7711 = vunpack.c.l.b16 %v7426
    %v7712 = vunpack.c.h.b16 %v7426
    %v7713 = vunpack.c.l.b16 %v7427
    %v7714 = vunpack.c.h.b16 %v7427
    %v7715 = vunpack.c.l.b16 %v7428
    %v7716 = vunpack.c.h.b16 %v7428
    %v7717 = vunpack.c.l.b16 %v7429
    %v7718 = vunpack.c.h.b16 %v7429
    %v7719 = vunpack.c.l.b16 %v7430
    %v7720 = vunpack.c.h.b16 %v7430
    %v7721 = vunpack.c.l.b16 %v7431
    %v7722 = vunpack.c.h.b16 %v7431
    %v7723 = vunpack.c.l.b16 %v7432
    %v7724 = vunpack.c.h.b16 %v7432
    %v7725 = vunpack.c.l.b16 %v7433
    %v7726 = vunpack.c.h.b16 %v7433
    %v7727 = vunpack.c.l.b16 %v7434
    %v7728 = vunpack.c.h.b16 %v7434
    %v7729 = vunpack.c.l.b16 %v7435
    %v7730 = vunpack.c.h.b16 %v7435
    %v7731 = vunpack.c.l.b16 %v7436
    %v7732 = vunpack.c.h.b16 %v7436
    %v7733 = vunpack.c.l.b16 %v7437
    %v7734 = vunpack.c.h.b16 %v7437
    %v7735 = vunpack.c.l.b16 %v7438
    %v7736 = vunpack.c.h.b16 %v7438
    %v7737 = vunpack.c.l.b16 %v7439
    %v7738 = vunpack.c.h.b16 %v7439
    %v7739 = vunpack.c.l.b16 %v7440
    %v7740 = vunpack.c.h.b16 %v7440
    %v7741 = vunpack.c.l.b16 %v7441
    %v7742 = vunpack.c.h.b16 %v7441
    %v7743 = vunpack.c.l.b16 %v7442
    %v7744 = vunpack.c.h.b16 %v7442
    %v7745 = vunpack.c.l.b16 %v7443
    %v7746 = vunpack.c.h.b16 %v7443
    %v7747 = vunpack.c.l.b16 %v7444
    %v7748 = vunpack.c.h.b16 %v7444
    %v7749 = vunpack.c.l.b16 %v7445
    %v7750 = vunpack.c.h.b16 %v7445
    %v7751 = vunpack.c.l.b16 %v7446
    %v7752 = vunpack.c.h.b16 %v7446
    %v7753 = vunpack.c.l.b16 %v7447
    %v7754 = vunpack.c.h.b16 %v7447
    %v7755 = vunpack.c.l.b16 %v7448
    %v7756 = vunpack.c.h.b16 %v7448
    %v7757 = vunpack.c.l.b16 %v7449
    %v7758 = vunpack.c.h.b16 %v7449
    %v7759 = vunpack.c.l.b16 %v7450
    %v7760 = vunpack.c.h.b16 %v7450
    %v7761 = vunpack.c.l.b16 %v7451
    %v7762 = vunpack.c.h.b16 %v7451
    %v7763 = vunpack.c.l.b16 %v7452
    %v7764 = vunpack.c.h.b16 %v7452
    %v7765 = vunpack.c.l.b16 %v7453
    %v7766 = vunpack.c.h.b16 %v7453
    %v7767 = vunpack.c.l.b16 %v7454
    %v7768 = vunpack.c.h.b16 %v7454
    %v7769 = vunpack.c.l.b16 %v7455
    %v7770 = vunpack.c.h.b16 %v7455
    %v7771 = vunpack.c.l.b16 %v7456
    %v7772 = vunpack.c.h.b16 %v7456
    %v7773 = vunpack.c.l.b16 %v7457
    %v7774 = vunpack.c.h.b16 %v7457
    %v7775 = vunpack.c.l.b16 %v7458
    %v7776 = vunpack.c.h.b16 %v7458
    %v7777 = vunpack.c.l.b16 %v7459
    %v7778 = vunpack.c.h.b16 %v7459
    %v7779 = vunpack.c.l.b16 %v7460
    %v7780 = vunpack.c.h.b16 %v7460
    %v7781 = vunpack.c.l.b16 %v7461
    %v7782 = vunpack.c.h.b16 %v7461
    %v7783 = vunpack.c.l.b16 %v7462
    %v7784 = vunpack.c.h.b16 %v7462
    %v7785 = vunpack.c.l.b16 %v7463
    %v7786 = vunpack.c.h.b16 %v7463
    %v7787 = vunpack.c.l.b16 %v7464
    %v7788 = vunpack.c.h.b16 %v7464
    %v7789 = vunpack.c.l.b16 %v7465
    %v7790 = vunpack.c.h.b16 %v7465
    %v7791 = vunpack.c.l.b16 %v7466
    %v7792 = vunpack.c.h.b16 %v7466
    %v7793 = vunpack.c.l.b16 %v7467
    %v7794 = vunpack.c.h.b16 %v7467
    %v7795 = vunpack.c.l.b16 %v7468
    %v7796 = vunpack.c.h.b16 %v7468
    %v7797 = vunpack.c.l.b16 %v7469
    %v7798 = vunpack.c.h.b16 %v7469
    %v7799 = vunpack.c.l.b16 %v7470
    %v7800 = vunpack.c.h.b16 %v7470
    %v7801 = vunpack.c.l.b16 %v7471
    %v7802 = vunpack.c.h.b16 %v7471
    %v7803 = vunpack.c.l.b16 %v7472
    %v7804 = vunpack.c.h.b16 %v7472
    %v7805 = vunpack.c.l.b16 %v7473
    %v7806 = vunpack.c.h.b16 %v7473
    %v7807 = vunpack.c.l.b16 %v7474
    %v7808 = vunpack.c.h.b16 %v7474
    %v7809 = vunpack.c.l.b16 %v7475
    %v7810 = vunpack.c.h.b16 %v7475
    %v7811 = vunpack.c.l.b16 %v7476
    %v7812 = vunpack.c.h.b16 %v7476
    %v7813 = vunpack.c.l.b16 %v7477
    %v7814 = vunpack.c.h.b16 %v7477
    %v7815 = vunpack.c.l.b16 %v7478
    %v7816 = vunpack.c.h.b16 %v7478
    %v7817 = vunpack.c.l.b16 %v7479
    %v7818 = vunpack.c.h.b16 %v7479
    %v7819 = vunpack.c.l.b16 %v7480
    %v7820 = vunpack.c.h.b16 %v7480
    %v7821 = vunpack.c.l.b16 %v7481
    %v7822 = vunpack.c.h.b16 %v7481
    %v7823 = vunpack.c.l.b16 %v7482
    %v7824 = vunpack.c.h.b16 %v7482
    %v7825 = vunpack.c.l.b16 %v7483
    %v7826 = vunpack.c.h.b16 %v7483
    %v7827 = vunpack.c.l.b16 %v7484
    %v7828 = vunpack.c.h.b16 %v7484
    %v7829 = vunpack.c.l.b16 %v7485
    %v7830 = vunpack.c.h.b16 %v7485
    %v7831 = vunpack.c.l.b16 %v7486
    %v7832 = vunpack.c.h.b16 %v7486
    %v7833 = vunpack.c.l.b16 %v7487
    %v7834 = vunpack.c.h.b16 %v7487
    %v7835 = vunpack.c.l.b16 %v7488
    %v7836 = vunpack.c.h.b16 %v7488
    %v7837 = vunpack.c.l.b16 %v7489
    %v7838 = vunpack.c.h.b16 %v7489
    %v7839 = vunpack.c.l.b16 %v7490
    %v7840 = vunpack.c.h.b16 %v7490
    %v7841 = vunpack.c.l.b16 %v7491
    %v7842 = vunpack.c.h.b16 %v7491
    %v7843 = vunpack.c.l.b16 %v7492
    %v7844 = vunpack.c.h.b16 %v7492
    %v7845 = vpack.c.b16 %v7657, %v7653
    %v7846 = vpack.c.b16 %v7658, %v7654
    %v7847 = vpack.c.b16 %v7659, %v7655
    %v7848 = vpack.c.b16 %v7660, %v7656
    %v7849 = vpack.c.b16 %v7665, %v7661
    %v7850 = vpack.c.b16 %v7666, %v7662
    %v7851 = vpack.c.b16 %v7667, %v7663
    %v7852 = vpack.c.b16 %v7668, %v7664
    %v7853 = vpack.c.b16 %v7673, %v7669
    %v7854 = vpack.c.b16 %v7674, %v7670
    %v7855 = vpack.c.b16 %v7675, %v7671
    %v7856 = vpack.c.b16 %v7676, %v7672
    %v7857 = vpack.c.b16 %v7681, %v7677
    %v7858 = vpack.c.b16 %v7682, %v7678
    %v7859 = vpack.c.b16 %v7683, %v7679
    %v7860 = vpack.c.b16 %v7684, %v7680
    %v7861 = vpack.c.b16 %v7689, %v7685
    %v7862 = vpack.c.b16 %v7690, %v7686
    %v7863 = vpack.c.b16 %v7691, %v7687
    %v7864 = vpack.c.b16 %v7692, %v7688
    %v7865 = vpack.c.b16 %v7697, %v7693
    %v7866 = vpack.c.b16 %v7698, %v7694
    %v7867 = vpack.c.b16 %v7699, %v7695
    %v7868 = vpack.c.b16 %v7700, %v7696
    %v7869 = vpack.c.b16 %v7705, %v7701
    %v7870 = vpack.c.b16 %v7706, %v7702
    %v7871 = vpack.c.b16 %v7707, %v7703
    %v7872 = vpack.c.b16 %v7708, %v7704
    %v7873 = vpack.c.b16 %v7713, %v7709
    %v7874 = vpack.c.b16 %v7714, %v7710
    %v7875 = vpack.c.b16 %v7715, %v7711
    %v7876 = vpack.c.b16 %v7716, %v7712
    %v7877 = vpack.c.b16 %v7721, %v7717
    %v7878 = vpack.c.b16 %v7722, %v7718
    %v7879 = vpack.c.b16 %v7723, %v7719
    %v7880 = vpack.c.b16 %v7724, %v7720
    %v7881 = vpack.c.b16 %v7729, %v7725
    %v7882 = vpack.c.b16 %v7730, %v7726
    %v7883 = vpack.c.b16 %v7731, %v7727
    %v7884 = vpack.c.b16 %v7732, %v7728
    %v7885 = vpack.c.b16 %v7737, %v7733
    %v7886 = vpack.c.b16 %v7738, %v7734
    %v7887 = vpack.c.b16 %v7739, %v7735
    %v7888 = vpack.c.b16 %v7740, %v7736
    %v7889 = vpack.c.b16 %v7745, %v7741
    %v7890 = vpack.c.b16 %v7746, %v7742
    %v7891 = vpack.c.b16 %v7747, %v7743
    %v7892 = vpack.c.b16 %v7748, %v7744
    %v7893 = vpack.c.b16 %v7753, %v7749
    %v7894 = vpack.c.b16 %v7754, %v7750
    %v7895 = vpack.c.b16 %v7755, %v7751
    %v7896 = vpack.c.b16 %v7756, %v7752
    %v7897 = vpack.c.b16 %v7761, %v7757
    %v7898 = vpack.c.b16 %v7762, %v7758
    %v7899 = vpack.c.b16 %v7763, %v7759
    %v7900 = vpack.c.b16 %v7764, %v7760
    %v7901 = vpack.c.b16 %v7769, %v7765
    %v7902 = vpack.c.b16 %v7770, %v7766
    %v7903 = vpack.c.b16 %v7771, %v7767
    %v7904 = vpack.c.b16 %v7772, %v7768
    %v7905 = vpack.c.b16 %v7777, %v7773
    %v7906 = vpack.c.b16 %v7778, %v7774
    %v7907 = vpack.c.b16 %v7779, %v7775
    %v7908 = vpack.c.b16 %v7780, %v7776
    %v7909 = vpack.c.b16 %v7785, %v7781
    %v7910 = vpack.c.b16 %v7786, %v7782
    %v7911 = vpack.c.b16 %v7787, %v7783
    %v7912 = vpack.c.b16 %v7788, %v7784
    %v7913 = vpack.c.b16 %v7793, %v7789
    %v7914 = vpack.c.b16 %v7794, %v7790
    %v7915 = vpack.c.b16 %v7795, %v7791
    %v7916 = vpack.c.b16 %v7796, %v7792
    %v7917 = vpack.c.b16 %v7801, %v7797
    %v7918 = vpack.c.b16 %v7802, %v7798
    %v7919 = vpack.c.b16 %v7803, %v7799
    %v7920 = vpack.c.b16 %v7804, %v7800
    %v7921 = vpack.c.b16 %v7809, %v7805
    %v7922 = vpack.c.b16 %v7810, %v7806
    %v7923 = vpack.c.b16 %v7811, %v7807
    %v7924 = vpack.c.b16 %v7812, %v7808
    %v7925 = vpack.c.b16 %v7817, %v7813
    %v7926 = vpack.c.b16 %v7818, %v7814
    %v7927 = vpack.c.b16 %v7819, %v7815
    %v7928 = vpack.c.b16 %v7820, %v7816
    %v7929 = vpack.c.b16 %v7825, %v7821
    %v7930 = vpack.c.b16 %v7826, %v7822
    %v7931 = vpack.c.b16 %v7827, %v7823
    %v7932 = vpack.c.b16 %v7828, %v7824
    %v7933 = vpack.c.b16 %v7833, %v7829
    %v7934 = vpack.c.b16 %v7834, %v7830
    %v7935 = vpack.c.b16 %v7835, %v7831
    %v7936 = vpack.c.b16 %v7836, %v7832
    %v7937 = vpack.c.b16 %v7841, %v7837
    %v7938 = vpack.c.b16 %v7842, %v7838
    %v7939 = vpack.c.b16 %v7843, %v7839
    %v7940 = vpack.c.b16 %v7844, %v7840
    %8037 = vmatprep.subr.bf16.mxu0 %v7846
    %8038 = vmatpush1.bf16.msra.mxu0 %v7845
    %8039 = vmatprep.subr.bf16.mxu0 %v7850
    %8040 = vmatpush1.bf16.msra.mxu0 %v7849
    %8041 = vmatprep.subr.bf16.mxu0 %v7854
    %8042 = vmatpush1.bf16.msra.mxu0 %v7853
    %8043 = vmatprep.subr.bf16.mxu0 %v7858
    %8044 = vmatpush1.bf16.msra.mxu0 %v7857
    %8045 = vmatprep.subr.bf16.mxu0 %v7862
    %8046 = vmatpush1.bf16.msra.mxu0 %v7861
    %8047 = vmatprep.subr.bf16.mxu0 %v7866
    %8048 = vmatpush1.bf16.msra.mxu0 %v7865
    %8049 = vmatprep.subr.bf16.mxu0 %v7870
    %8050 = vmatpush1.bf16.msra.mxu0 %v7869
    %8051 = vmatprep.subr.bf16.mxu0 %v7874
    %8052 = vmatpush1.bf16.msra.mxu0 %v7873
    %8053 = vmatprep.subr.bf16.mxu0 %v7878
    %8054 = vmatpush1.bf16.msra.mxu0 %v7877
    %8055 = vmatprep.subr.bf16.mxu0 %v7882
    %8056 = vmatpush1.bf16.msra.mxu0 %v7881
    %8057 = vmatprep.subr.bf16.mxu0 %v7886
    %8058 = vmatpush1.bf16.msra.mxu0 %v7885
    %8059 = vmatprep.subr.bf16.mxu0 %v7890
    %8060 = vmatpush1.bf16.msra.mxu0 %v7889
    %8061 = vmatprep.subr.bf16.mxu0 %v7894
    %8062 = vmatpush1.bf16.msra.mxu0 %v7893
    %8063 = vmatprep.subr.bf16.mxu0 %v7898
    %8064 = vmatpush1.bf16.msra.mxu0 %v7897
    %8065 = vmatprep.subr.bf16.mxu0 %v7902
    %8066 = vmatpush1.bf16.msra.mxu0 %v7901
    %8067 = vmatprep.subr.bf16.mxu0 %v7906
    %8068 = vmatpush1.bf16.msra.mxu0 %v7905
    %8069 = vmatprep.mubr.bf16.mxu0 %v7534
    %8070 = vmatmul.mubr.bf16.gmra.mrb[0].mxu0 %v7533
    %v8071 = vpop.f32.mrb[0].mxu0
    %v8072 = vadd.f32 0.0, %v8071
    %v8073 = vpop.f32.mrb[0].mxu0
    %v8074 = vadd.f32 0.0, %v8073
    %v8075 = vpop.f32.mrb[0].mxu0
    %v8076 = vadd.f32 0.0, %v8075
    %v8077 = vpop.f32.mrb[0].mxu0
    %v8078 = vadd.f32 0.0, %v8077
    %8079 = vmatprep.mubr.bf16.mxu0 %v7537
    %8080 = vmatmul.mubr.bf16.gmra.mrb[0].mxu0 %v7536
    %v8081 = vpop.f32.mrb[0].mxu0
    %v8082 = vadd.f32 0.0, %v8081
    %v8083 = vpop.f32.mrb[0].mxu0
    %v8084 = vadd.f32 0.0, %v8083
    %v8085 = vpop.f32.mrb[0].mxu0
    %v8086 = vadd.f32 0.0, %v8085
    %v8087 = vpop.f32.mrb[0].mxu0
    %v8088 = vadd.f32 0.0, %v8087
    %8089 = vmatprep.mubr.bf16.mxu0 %v7540
    %8090 = vmatmul.mubr.bf16.gmra.mrb[0].mxu0 %v7539
    %v8091 = vpop.f32.mrb[0].mxu0
    %v8092 = vadd.f32 0.0, %v8091
    %v8093 = vpop.f32.mrb[0].mxu0
    %v8094 = vadd.f32 0.0, %v8093
    %v8095 = vpop.f32.mrb[0].mxu0
    %v8096 = vadd.f32 0.0, %v8095
    %v8097 = vpop.f32.mrb[0].mxu0
    %v8098 = vadd.f32 0.0, %v8097
    %8099 = vmatprep.mubr.bf16.mxu0 %v7543
    %8100 = vmatmul.mubr.bf16.gmra.mrb[0].mxu0 %v7542
    %v8101 = vpop.f32.mrb[0].mxu0
    %v8102 = vadd.f32 0.0, %v8101
    %v8103 = vpop.f32.mrb[0].mxu0
    %v8104 = vadd.f32 0.0, %v8103
    %v8105 = vpop.f32.mrb[0].mxu0
    %v8106 = vadd.f32 0.0, %v8105
    %v8107 = vpop.f32.mrb[0].mxu0
    %v8108 = vadd.f32 0.0, %v8107
    %8109 = vdwg.mxu0
    %8110 = vmatprep.subr.bf16.mxu0 %v7910
    %8111 = vmatpush1.bf16.msra.mxu0 %v7909
    %8112 = vmatprep.subr.bf16.mxu0 %v7914
    %8113 = vmatpush1.bf16.msra.mxu0 %v7913
    %8114 = vmatprep.subr.bf16.mxu0 %v7918
    %8115 = vmatpush1.bf16.msra.mxu0 %v7917
    %8116 = vmatprep.subr.bf16.mxu0 %v7922
    %8117 = vmatpush1.bf16.msra.mxu0 %v7921
    %8118 = vmatprep.subr.bf16.mxu0 %v7926
    %8119 = vmatpush1.bf16.msra.mxu0 %v7925
    %8120 = vmatprep.subr.bf16.mxu0 %v7930
    %8121 = vmatpush1.bf16.msra.mxu0 %v7929
    %8122 = vmatprep.subr.bf16.mxu0 %v7934
    %8123 = vmatpush1.bf16.msra.mxu0 %v7933
    %8124 = vmatprep.subr.bf16.mxu0 %v7938
    %8125 = vmatpush1.bf16.msra.mxu0 %v7937
    %8126 = vmatprep.subr.bf16.mxu0 0
    %8127 = vmatpush1.bf16.msra.mxu0 0
    %8128 = vmatprep.subr.bf16.mxu0 0
    %8129 = vmatpush1.bf16.msra.mxu0 0
    %8130 = vmatprep.subr.bf16.mxu0 0
    %8131 = vmatpush1.bf16.msra.mxu0 0
    %8132 = vmatprep.subr.bf16.mxu0 0
    %8133 = vmatpush1.bf16.msra.mxu0 0
    %8134 = vmatprep.subr.bf16.mxu0 0
    %8135 = vmatpush1.bf16.msra.mxu0 0
    %8136 = vmatprep.subr.bf16.mxu0 0
    %8137 = vmatpush1.bf16.msra.mxu0 0
    %8138 = vmatprep.subr.bf16.mxu0 0
    %8139 = vmatpush1.bf16.msra.mxu0 0
    %8140 = vmatprep.subr.bf16.mxu0 0
    %8141 = vmatpush1.bf16.msra.mxu0 0
    %8142 = vmatprep.mubr.bf16.mxu0 0
    %8143 = vmatmul.mubr.bf16.gmra.mrb[0].mxu0 %v7535
    %v8144 = vpop.f32.mrb[0].mxu0
    %v8145 = vadd.f32 %v8072, %v8144
    %v8146 = vpop.f32.mrb[0].mxu0
    %v8147 = vadd.f32 %v8074, %v8146
    %v8148 = vpop.f32.mrb[0].mxu0
    %v8149 = vadd.f32 %v8076, %v8148
    %v8150 = vpop.f32.mrb[0].mxu0
    %v8151 = vadd.f32 %v8078, %v8150
    %8152 = vmatprep.mubr.bf16.mxu0 0
    %8153 = vmatmul.mubr.bf16.gmra.mrb[0].mxu0 %v7538
    %v8154 = vpop.f32.mrb[0].mxu0
    %v8155 = vadd.f32 %v8082, %v8154
    %v8156 = vpop.f32.mrb[0].mxu0
    %v8157 = vadd.f32 %v8084, %v8156
    %v8158 = vpop.f32.mrb[0].mxu0
    %v8159 = vadd.f32 %v8086, %v8158
    %v8160 = vpop.f32.mrb[0].mxu0
    %v8161 = vadd.f32 %v8088, %v8160
    %8162 = vmatprep.mubr.bf16.mxu0 0
    %8163 = vmatmul.mubr.bf16.gmra.mrb[0].mxu0 %v7541
    %v8164 = vpop.f32.mrb[0].mxu0
    %v8165 = vadd.f32 %v8092, %v8164
    %v8166 = vpop.f32.mrb[0].mxu0
    %v8167 = vadd.f32 %v8094, %v8166
    %v8168 = vpop.f32.mrb[0].mxu0
    %v8169 = vadd.f32 %v8096, %v8168
    %v8170 = vpop.f32.mrb[0].mxu0
    %v8171 = vadd.f32 %v8098, %v8170
    %8172 = vmatprep.mubr.bf16.mxu0 0
    %8173 = vmatmul.mubr.bf16.gmra.mrb[0].mxu0 %v7544
    %v8174 = vpop.f32.mrb[0].mxu0
    %v8175 = vadd.f32 %v8102, %v8174
    %v8176 = vpop.f32.mrb[0].mxu0
    %v8177 = vadd.f32 %v8104, %v8176
    %v8178 = vpop.f32.mrb[0].mxu0
    %v8179 = vadd.f32 %v8106, %v8178
    %v8180 = vpop.f32.mrb[0].mxu0
    %v8181 = vadd.f32 %v8108, %v8180
    %8182 = vdwg.mxu0
    %8183 = vmatprep.subr.bf16.mxu0 %v7848
    %8184 = vmatpush1.bf16.msra.mxu0 %v7847
    %8185 = vmatprep.subr.bf16.mxu0 %v7852
    %8186 = vmatpush1.bf16.msra.mxu0 %v7851
    %8187 = vmatprep.subr.bf16.mxu0 %v7856
    %8188 = vmatpush1.bf16.msra.mxu0 %v7855
    %8189 = vmatprep.subr.bf16.mxu0 %v7860
    %8190 = vmatpush1.bf16.msra.mxu0 %v7859
    %8191 = vmatprep.subr.bf16.mxu0 %v7864
    %8192 = vmatpush1.bf16.msra.mxu0 %v7863
    %8193 = vmatprep.subr.bf16.mxu0 %v7868
    %8194 = vmatpush1.bf16.msra.mxu0 %v7867
    %8195 = vmatprep.subr.bf16.mxu0 %v7872
    %8196 = vmatpush1.bf16.msra.mxu0 %v7871
    %8197 = vmatprep.subr.bf16.mxu0 %v7876
    %8198 = vmatpush1.bf16.msra.mxu0 %v7875
    %8199 = vmatprep.subr.bf16.mxu0 %v7880
    %8200 = vmatpush1.bf16.msra.mxu0 %v7879
    %8201 = vmatprep.subr.bf16.mxu0 %v7884
    %8202 = vmatpush1.bf16.msra.mxu0 %v7883
    %8203 = vmatprep.subr.bf16.mxu0 %v7888
    %8204 = vmatpush1.bf16.msra.mxu0 %v7887
    %8205 = vmatprep.subr.bf16.mxu0 %v7892
    %8206 = vmatpush1.bf16.msra.mxu0 %v7891
    %8207 = vmatprep.subr.bf16.mxu0 %v7896
    %8208 = vmatpush1.bf16.msra.mxu0 %v7895
    %8209 = vmatprep.subr.bf16.mxu0 %v7900
    %8210 = vmatpush1.bf16.msra.mxu0 %v7899
    %8211 = vmatprep.subr.bf16.mxu0 %v7904
    %8212 = vmatpush1.bf16.msra.mxu0 %v7903
    %8213 = vmatprep.subr.bf16.mxu0 %v7908
    %8214 = vmatpush1.bf16.msra.mxu0 %v7907
    %8215 = vmatprep.mubr.bf16.mxu0 %v7534
    %8216 = vmatmul.mubr.bf16.gmra.mrb[0].mxu0 %v7533
    %v8217 = vpop.f32.mrb[0].mxu0
    %v8218 = vadd.f32 0.0, %v8217
    %v8219 = vpop.f32.mrb[0].mxu0
    %v8220 = vadd.f32 0.0, %v8219
    %v8221 = vpop.f32.mrb[0].mxu0
    %v8222 = vadd.f32 0.0, %v8221
    %v8223 = vpop.f32.mrb[0].mxu0
    %v8224 = vadd.f32 0.0, %v8223
    %8225 = vmatprep.mubr.bf16.mxu0 %v7537
    %8226 = vmatmul.mubr.bf16.gmra.mrb[0].mxu0 %v7536
    %v8227 = vpop.f32.mrb[0].mxu0
    %v8228 = vadd.f32 0.0, %v8227
    %v8229 = vpop.f32.mrb[0].mxu0
    %v8230 = vadd.f32 0.0, %v8229
    %v8231 = vpop.f32.mrb[0].mxu0
    %v8232 = vadd.f32 0.0, %v8231
    %v8233 = vpop.f32.mrb[0].mxu0
    %v8234 = vadd.f32 0.0, %v8233
    %8235 = vmatprep.mubr.bf16.mxu0 %v7540
    %8236 = vmatmul.mubr.bf16.gmra.mrb[0].mxu0 %v7539
    %v8237 = vpop.f32.mrb[0].mxu0
    %v8238 = vadd.f32 0.0, %v8237
    %v8239 = vpop.f32.mrb[0].mxu0
    %v8240 = vadd.f32 0.0, %v8239
    %v8241 = vpop.f32.mrb[0].mxu0
    %v8242 = vadd.f32 0.0, %v8241
    %v8243 = vpop.f32.mrb[0].mxu0
    %v8244 = vadd.f32 0.0, %v8243
    %8245 = vmatprep.mubr.bf16.mxu0 %v7543
    %8246 = vmatmul.mubr.bf16.gmra.mrb[0].mxu0 %v7542
    %v8247 = vpop.f32.mrb[0].mxu0
    %v8248 = vadd.f32 0.0, %v8247
    %v8249 = vpop.f32.mrb[0].mxu0
    %v8250 = vadd.f32 0.0, %v8249
    %v8251 = vpop.f32.mrb[0].mxu0
    %v8252 = vadd.f32 0.0, %v8251
    %v8253 = vpop.f32.mrb[0].mxu0
    %v8254 = vadd.f32 0.0, %v8253
    %8255 = vdwg.mxu0
    %8256 = vmatprep.subr.bf16.mxu0 %v7912
    %8257 = vmatpush1.bf16.msra.mxu0 %v7911
    %8258 = vmatprep.subr.bf16.mxu0 %v7916
    %8259 = vmatpush1.bf16.msra.mxu0 %v7915
    %8260 = vmatprep.subr.bf16.mxu0 %v7920
    %8261 = vmatpush1.bf16.msra.mxu0 %v7919
    %8262 = vmatprep.subr.bf16.mxu0 %v7924
    %8263 = vmatpush1.bf16.msra.mxu0 %v7923
    %8264 = vmatprep.subr.bf16.mxu0 %v7928
    %8265 = vmatpush1.bf16.msra.mxu0 %v7927
    %8266 = vmatprep.subr.bf16.mxu0 %v7932
    %8267 = vmatpush1.bf16.msra.mxu0 %v7931
    %8268 = vmatprep.subr.bf16.mxu0 %v7936
    %8269 = vmatpush1.bf16.msra.mxu0 %v7935
    %8270 = vmatprep.subr.bf16.mxu0 %v7940
    %8271 = vmatpush1.bf16.msra.mxu0 %v7939
    %8272 = vmatprep.subr.bf16.mxu0 0
    %8273 = vmatpush1.bf16.msra.mxu0 0
    %8274 = vmatprep.subr.bf16.mxu0 0
    %8275 = vmatpush1.bf16.msra.mxu0 0
    %8276 = vmatprep.subr.bf16.mxu0 0
    %8277 = vmatpush1.bf16.msra.mxu0 0
    %8278 = vmatprep.subr.bf16.mxu0 0
    %8279 = vmatpush1.bf16.msra.mxu0 0
    %8280 = vmatprep.subr.bf16.mxu0 0
    %8281 = vmatpush1.bf16.msra.mxu0 0
    %8282 = vmatprep.subr.bf16.mxu0 0
    %8283 = vmatpush1.bf16.msra.mxu0 0
    %8284 = vmatprep.subr.bf16.mxu0 0
    %8285 = vmatpush1.bf16.msra.mxu0 0
    %8286 = vmatprep.subr.bf16.mxu0 0
    %8287 = vmatpush1.bf16.msra.mxu0 0
    %8288 = vmatprep.mubr.bf16.mxu0 0
    %8289 = vmatmul.mubr.bf16.gmra.mrb[0].mxu0 %v7535
    %v8290 = vpop.f32.mrb[0].mxu0
    %v8291 = vadd.f32 %v8218, %v8290
    %v8292 = vpop.f32.mrb[0].mxu0
    %v8293 = vadd.f32 %v8220, %v8292
    %v8294 = vpop.f32.mrb[0].mxu0
    %v8295 = vadd.f32 %v8222, %v8294
    %v8296 = vpop.f32.mrb[0].mxu0
    %v8297 = vadd.f32 %v8224, %v8296
    %8298 = vmatprep.mubr.bf16.mxu0 0
    %8299 = vmatmul.mubr.bf16.gmra.mrb[0].mxu0 %v7538
    %v8300 = vpop.f32.mrb[0].mxu0
    %v8301 = vadd.f32 %v8228, %v8300
    %v8302 = vpop.f32.mrb[0].mxu0
    %v8303 = vadd.f32 %v8230, %v8302
    %v8304 = vpop.f32.mrb[0].mxu0
    %v8305 = vadd.f32 %v8232, %v8304
    %v8306 = vpop.f32.mrb[0].mxu0
    %v8307 = vadd.f32 %v8234, %v8306
    %8308 = vmatprep.mubr.bf16.mxu0 0
    %8309 = vmatmul.mubr.bf16.gmra.mrb[0].mxu0 %v7541
    %v8310 = vpop.f32.mrb[0].mxu0
    %v8311 = vadd.f32 %v8238, %v8310
    %v8312 = vpop.f32.mrb[0].mxu0
    %v8313 = vadd.f32 %v8240, %v8312
    %v8314 = vpop.f32.mrb[0].mxu0
    %v8315 = vadd.f32 %v8242, %v8314
    %v8316 = vpop.f32.mrb[0].mxu0
    %v8317 = vadd.f32 %v8244, %v8316
    %8318 = vmatprep.mubr.bf16.mxu0 0
    %8319 = vmatmul.mubr.bf16.gmra.mrb[0].mxu0 %v7544
    %v8320 = vpop.f32.mrb[0].mxu0
    %v8321 = vadd.f32 %v8248, %v8320
    %v8322 = vpop.f32.mrb[0].mxu0
    %v8323 = vadd.f32 %v8250, %v8322
    %v8324 = vpop.f32.mrb[0].mxu0
    %v8325 = vadd.f32 %v8252, %v8324
    %v8326 = vpop.f32.mrb[0].mxu0
    %v8327 = vadd.f32 %v8254, %v8326
    %8328 = vdwg.mxu0
    %v8329 = vadd.f32 %v7347, %v8145
    %v8330 = vadd.f32 %v7348, %v8147
    %v8331 = vadd.f32 %v7349, %v8291
    %v8332 = vadd.f32 %v7350, %v8293
    %v8333 = vadd.f32 %v7351, %v8149
    %v8334 = vadd.f32 %v7352, %v8151
    %v8335 = vadd.f32 %v7353, %v8295
    %v8336 = vadd.f32 %v7354, %v8297
    %v8337 = vadd.f32 %v7355, %v8155
    %v8338 = vadd.f32 %v7356, %v8157
    %v8339 = vadd.f32 %v7357, %v8301
    %v8340 = vadd.f32 %v7358, %v8303
    %v8341 = vadd.f32 %v7359, %v8159
    %v8342 = vadd.f32 %v7360, %v8161
    %v8343 = vadd.f32 %v7361, %v8305
    %v8344 = vadd.f32 %v7362, %v8307
    %v8345 = vadd.f32 %v7363, %v8165
    %v8346 = vadd.f32 %v7364, %v8167
    %v8347 = vadd.f32 %v7365, %v8311
    %v8348 = vadd.f32 %v7366, %v8313
    %v8349 = vadd.f32 %v7367, %v8169
    %v8350 = vadd.f32 %v7368, %v8171
    %v8351 = vadd.f32 %v7369, %v8315
    %v8352 = vadd.f32 %v7370, %v8317
    %v8353 = vadd.f32 %v7371, %v8175
    %v8354 = vadd.f32 %v7372, %v8177
    %v8355 = vadd.f32 %v7373, %v8321
    %v8356 = vadd.f32 %v7374, %v8323
    %v8357 = vadd.f32 %v7375, %v8179
    %v8358 = vadd.f32 %v7376, %v8181
    %v8359 = vadd.f32 %v7377, %v8325
    %v8360 = vadd.f32 %v7378, %v8327
    %s8361 = scalar_lea.vmem [#allocation2], 48
    %v8362 = vld [vmem:[%s8361] sm:$0xff]
    %v8363 = vld [vmem:[%s8361 + $0x8] sm:$0xf]
    %v8364 = vld [vmem:[%s8361 + $0xc] sm:$0xff]
    %v8365 = vld [vmem:[%s8361 + $0x14] sm:$0xf]
    %v8366 = vld [vmem:[%s8361 + $0x18] sm:$0xff]
    %v8367 = vld [vmem:[%s8361 + $0x20] sm:$0xf]
    %v8368 = vld [vmem:[%s8361 + $0x24] sm:$0xff]
    %v8369 = vld [vmem:[%s8361 + $0x2c] sm:$0xf]
    %v8370 = vld [vmem:[%s8361 + $0x30] sm:$0xff]
    %v8371 = vld [vmem:[%s8361 + $0x38] sm:$0xf]
    %v8372 = vld [vmem:[%s8361 + $0x3c] sm:$0xff]
    %v8373 = vld [vmem:[%s8361 + $0x44] sm:$0xf]
    %v8374 = vld [vmem:[%s8361 + $0x48] sm:$0xff]
    %v8375 = vld [vmem:[%s8361 + $0x50] sm:$0xf]
    %v8376 = vld [vmem:[%s8361 + $0x54] sm:$0xff]
    %v8377 = vld [vmem:[%s8361 + $0x5c] sm:$0xf]
    %s8378 = scalar_lea.vmem [#allocation8], 3072
    %v8379 = vld [vmem:[%s8378] sm:$0xff]
    %v8380 = vld [vmem:[%s8378 + $0x8] sm:$0xff]
    %v8381 = vld [vmem:[%s8378 + $0x10] sm:$0xff]
    %v8382 = vld [vmem:[%s8378 + $0x18] sm:$0xff]
    %v8383 = vld [vmem:[%s8378 + $0x20] sm:$0xff]
    %v8384 = vld [vmem:[%s8378 + $0x28] sm:$0xff]
    %v8385 = vld [vmem:[%s8378 + $0x30] sm:$0xff]
    %v8386 = vld [vmem:[%s8378 + $0x38] sm:$0xff]
    %v8387 = vld [vmem:[%s8378 + $0x40] sm:$0xff]
    %v8388 = vld [vmem:[%s8378 + $0x48] sm:$0xff]
    %v8389 = vld [vmem:[%s8378 + $0x50] sm:$0xff]
    %v8390 = vld [vmem:[%s8378 + $0x58] sm:$0xff]
    %v8391 = vld [vmem:[%s8378 + $0x60] sm:$0xff]
    %v8392 = vld [vmem:[%s8378 + $0x68] sm:$0xff]
    %v8393 = vld [vmem:[%s8378 + $0x70] sm:$0xff]
    %v8394 = vld [vmem:[%s8378 + $0x78] sm:$0xff]
    %v8395 = vld [vmem:[%s8378 + $0x80] sm:$0xff]
    %v8396 = vld [vmem:[%s8378 + $0x88] sm:$0xff]
    %v8397 = vld [vmem:[%s8378 + $0x90] sm:$0xff]
    %v8398 = vld [vmem:[%s8378 + $0x98] sm:$0xff]
    %v8399 = vld [vmem:[%s8378 + $0xa0] sm:$0xff]
    %v8400 = vld [vmem:[%s8378 + $0xa8] sm:$0xff]
    %v8401 = vld [vmem:[%s8378 + $0xb0] sm:$0xff]
    %v8402 = vld [vmem:[%s8378 + $0xb8] sm:$0xff]
    %v8403 = vld [vmem:[%s8378 + $0xc0] sm:$0xff]
    %v8404 = vld [vmem:[%s8378 + $0xc8] sm:$0xff]
    %v8405 = vld [vmem:[%s8378 + $0xd0] sm:$0xff]
    %v8406 = vld [vmem:[%s8378 + $0xd8] sm:$0xff]
    %v8407 = vld [vmem:[%s8378 + $0xe0] sm:$0xff]
    %v8408 = vld [vmem:[%s8378 + $0xe8] sm:$0xff]
    %v8409 = vld [vmem:[%s8378 + $0xf0] sm:$0xff]
    %v8410 = vld [vmem:[%s8378 + $0xf8] sm:$0xff]
    %v8411 = vld [vmem:[%s8378 + $0x100] sm:$0xff]
    %v8412 = vld [vmem:[%s8378 + $0x108] sm:$0xff]
    %v8413 = vld [vmem:[%s8378 + $0x110] sm:$0xff]
    %v8414 = vld [vmem:[%s8378 + $0x118] sm:$0xff]
    %v8415 = vld [vmem:[%s8378 + $0x120] sm:$0xff]
    %v8416 = vld [vmem:[%s8378 + $0x128] sm:$0xff]
    %v8417 = vld [vmem:[%s8378 + $0x130] sm:$0xff]
    %v8418 = vld [vmem:[%s8378 + $0x138] sm:$0xff]
    %v8419 = vld [vmem:[%s8378 + $0x140] sm:$0xff]
    %v8420 = vld [vmem:[%s8378 + $0x148] sm:$0xff]
    %v8421 = vld [vmem:[%s8378 + $0x150] sm:$0xff]
    %v8422 = vld [vmem:[%s8378 + $0x158] sm:$0xff]
    %v8423 = vld [vmem:[%s8378 + $0x160] sm:$0xff]
    %v8424 = vld [vmem:[%s8378 + $0x168] sm:$0xff]
    %v8425 = vld [vmem:[%s8378 + $0x170] sm:$0xff]
    %v8426 = vld [vmem:[%s8378 + $0x178] sm:$0xff]
    %v8427 = vld [vmem:[%s8378 + $0x180] sm:$0xff]
    %v8428 = vld [vmem:[%s8378 + $0x188] sm:$0xff]
    %v8429 = vld [vmem:[%s8378 + $0x190] sm:$0xff]
    %v8430 = vld [vmem:[%s8378 + $0x198] sm:$0xff]
    %v8431 = vld [vmem:[%s8378 + $0x1a0] sm:$0xff]
    %v8432 = vld [vmem:[%s8378 + $0x1a8] sm:$0xff]
    %v8433 = vld [vmem:[%s8378 + $0x1b0] sm:$0xff]
    %v8434 = vld [vmem:[%s8378 + $0x1b8] sm:$0xff]
    %v8435 = vld [vmem:[%s8378 + $0x1c0] sm:$0xff]
    %v8436 = vld [vmem:[%s8378 + $0x1c8] sm:$0xff]
    %v8437 = vld [vmem:[%s8378 + $0x1d0] sm:$0xff]
    %v8438 = vld [vmem:[%s8378 + $0x1d8] sm:$0xff]
    %v8439 = vld [vmem:[%s8378 + $0x1e0] sm:$0xff]
    %v8440 = vld [vmem:[%s8378 + $0x1e8] sm:$0xff]
    %v8441 = vld [vmem:[%s8378 + $0x1f0] sm:$0xff]
    %v8442 = vld [vmem:[%s8378 + $0x1f8] sm:$0xff]
    %v8443 = vld [vmem:[%s8378 + $0x200] sm:$0xff]
    %v8444 = vld [vmem:[%s8378 + $0x208] sm:$0xff]
    %v8445 = vld [vmem:[%s8378 + $0x210] sm:$0xff]
    %v8446 = vld [vmem:[%s8378 + $0x218] sm:$0xff]
    %v8447 = vld [vmem:[%s8378 + $0x220] sm:$0xff]
    %v8448 = vld [vmem:[%s8378 + $0x228] sm:$0xff]
    %v8449 = vld [vmem:[%s8378 + $0x230] sm:$0xff]
    %v8450 = vld [vmem:[%s8378 + $0x238] sm:$0xff]
    %v8451 = vld [vmem:[%s8378 + $0x240] sm:$0xff]
    %v8452 = vld [vmem:[%s8378 + $0x248] sm:$0xff]
    %v8453 = vld [vmem:[%s8378 + $0x250] sm:$0xff]
    %v8454 = vld [vmem:[%s8378 + $0x258] sm:$0xff]
    %v8455 = vld [vmem:[%s8378 + $0x260] sm:$0xff]
    %v8456 = vld [vmem:[%s8378 + $0x268] sm:$0xff]
    %v8457 = vld [vmem:[%s8378 + $0x270] sm:$0xff]
    %v8458 = vld [vmem:[%s8378 + $0x278] sm:$0xff]
    %v8459 = vld [vmem:[%s8378 + $0x280] sm:$0xff]
    %v8460 = vld [vmem:[%s8378 + $0x288] sm:$0xff]
    %v8461 = vld [vmem:[%s8378 + $0x290] sm:$0xff]
    %v8462 = vld [vmem:[%s8378 + $0x298] sm:$0xff]
    %v8463 = vld [vmem:[%s8378 + $0x2a0] sm:$0xff]
    %v8464 = vld [vmem:[%s8378 + $0x2a8] sm:$0xff]
    %v8465 = vld [vmem:[%s8378 + $0x2b0] sm:$0xff]
    %v8466 = vld [vmem:[%s8378 + $0x2b8] sm:$0xff]
    %v8467 = vld [vmem:[%s8378 + $0x2c0] sm:$0xff]
    %v8468 = vld [vmem:[%s8378 + $0x2c8] sm:$0xff]
    %v8469 = vld [vmem:[%s8378 + $0x2d0] sm:$0xff]
    %v8470 = vld [vmem:[%s8378 + $0x2d8] sm:$0xff]
    %v8471 = vld [vmem:[%s8378 + $0x2e0] sm:$0xff]
    %v8472 = vld [vmem:[%s8378 + $0x2e8] sm:$0xff]
    %v8473 = vld [vmem:[%s8378 + $0x2f0] sm:$0xff]
    %v8474 = vld [vmem:[%s8378 + $0x2f8] sm:$0xff]
    %v8491 = vunpack.c.l.b16 %v8362
    %v8492 = vunpack.c.h.b16 %v8362
    %v8493 = vunpack.c.l.b16 %v8363
    %v8494 = vunpack.c.l.b16 %v8364
    %v8495 = vunpack.c.h.b16 %v8364
    %v8496 = vunpack.c.l.b16 %v8365
    %v8497 = vunpack.c.l.b16 %v8366
    %v8498 = vunpack.c.h.b16 %v8366
    %v8499 = vunpack.c.l.b16 %v8367
    %v8500 = vunpack.c.l.b16 %v8368
    %v8501 = vunpack.c.h.b16 %v8368
    %v8502 = vunpack.c.l.b16 %v8369
    %v8503 = vunpack.c.l.b16 %v8370
    %v8504 = vunpack.c.h.b16 %v8370
    %v8505 = vunpack.c.l.b16 %v8371
    %v8506 = vunpack.c.l.b16 %v8372
    %v8507 = vunpack.c.h.b16 %v8372
    %v8508 = vunpack.c.l.b16 %v8373
    %v8509 = vunpack.c.l.b16 %v8374
    %v8510 = vunpack.c.h.b16 %v8374
    %v8511 = vunpack.c.l.b16 %v8375
    %v8512 = vunpack.c.l.b16 %v8376
    %v8513 = vunpack.c.h.b16 %v8376
    %v8514 = vunpack.c.l.b16 %v8377
    %v8515 = vpack.c.b16 %v8494, %v8491
    %v8516 = vpack.c.b16 %v8495, %v8492
    %v8517 = vpack.c.b16 %v8496, %v8493
    %v8518 = vpack.c.b16 %v8500, %v8497
    %v8519 = vpack.c.b16 %v8501, %v8498
    %v8520 = vpack.c.b16 %v8502, %v8499
    %v8521 = vpack.c.b16 %v8506, %v8503
    %v8522 = vpack.c.b16 %v8507, %v8504
    %v8523 = vpack.c.b16 %v8508, %v8505
    %v8524 = vpack.c.b16 %v8512, %v8509
    %v8525 = vpack.c.b16 %v8513, %v8510
    %v8526 = vpack.c.b16 %v8514, %v8511
    %v8635 = vunpack.c.l.b16 %v8379
    %v8636 = vunpack.c.h.b16 %v8379
    %v8637 = vunpack.c.l.b16 %v8380
    %v8638 = vunpack.c.h.b16 %v8380
    %v8639 = vunpack.c.l.b16 %v8381
    %v8640 = vunpack.c.h.b16 %v8381
    %v8641 = vunpack.c.l.b16 %v8382
    %v8642 = vunpack.c.h.b16 %v8382
    %v8643 = vunpack.c.l.b16 %v8383
    %v8644 = vunpack.c.h.b16 %v8383
    %v8645 = vunpack.c.l.b16 %v8384
    %v8646 = vunpack.c.h.b16 %v8384
    %v8647 = vunpack.c.l.b16 %v8385
    %v8648 = vunpack.c.h.b16 %v8385
    %v8649 = vunpack.c.l.b16 %v8386
    %v8650 = vunpack.c.h.b16 %v8386
    %v8651 = vunpack.c.l.b16 %v8387
    %v8652 = vunpack.c.h.b16 %v8387
    %v8653 = vunpack.c.l.b16 %v8388
    %v8654 = vunpack.c.h.b16 %v8388
    %v8655 = vunpack.c.l.b16 %v8389
    %v8656 = vunpack.c.h.b16 %v8389
    %v8657 = vunpack.c.l.b16 %v8390
    %v8658 = vunpack.c.h.b16 %v8390
    %v8659 = vunpack.c.l.b16 %v8391
    %v8660 = vunpack.c.h.b16 %v8391
    %v8661 = vunpack.c.l.b16 %v8392
    %v8662 = vunpack.c.h.b16 %v8392
    %v8663 = vunpack.c.l.b16 %v8393
    %v8664 = vunpack.c.h.b16 %v8393
    %v8665 = vunpack.c.l.b16 %v8394
    %v8666 = vunpack.c.h.b16 %v8394
    %v8667 = vunpack.c.l.b16 %v8395
    %v8668 = vunpack.c.h.b16 %v8395
    %v8669 = vunpack.c.l.b16 %v8396
    %v8670 = vunpack.c.h.b16 %v8396
    %v8671 = vunpack.c.l.b16 %v8397
    %v8672 = vunpack.c.h.b16 %v8397
    %v8673 = vunpack.c.l.b16 %v8398
    %v8674 = vunpack.c.h.b16 %v8398
    %v8675 = vunpack.c.l.b16 %v8399
    %v8676 = vunpack.c.h.b16 %v8399
    %v8677 = vunpack.c.l.b16 %v8400
    %v8678 = vunpack.c.h.b16 %v8400
    %v8679 = vunpack.c.l.b16 %v8401
    %v8680 = vunpack.c.h.b16 %v8401
    %v8681 = vunpack.c.l.b16 %v8402
    %v8682 = vunpack.c.h.b16 %v8402
    %v8683 = vunpack.c.l.b16 %v8403
    %v8684 = vunpack.c.h.b16 %v8403
    %v8685 = vunpack.c.l.b16 %v8404
    %v8686 = vunpack.c.h.b16 %v8404
    %v8687 = vunpack.c.l.b16 %v8405
    %v8688 = vunpack.c.h.b16 %v8405
    %v8689 = vunpack.c.l.b16 %v8406
    %v8690 = vunpack.c.h.b16 %v8406
    %v8691 = vunpack.c.l.b16 %v8407
    %v8692 = vunpack.c.h.b16 %v8407
    %v8693 = vunpack.c.l.b16 %v8408
    %v8694 = vunpack.c.h.b16 %v8408
    %v8695 = vunpack.c.l.b16 %v8409
    %v8696 = vunpack.c.h.b16 %v8409
    %v8697 = vunpack.c.l.b16 %v8410
    %v8698 = vunpack.c.h.b16 %v8410
    %v8699 = vunpack.c.l.b16 %v8411
    %v8700 = vunpack.c.h.b16 %v8411
    %v8701 = vunpack.c.l.b16 %v8412
    %v8702 = vunpack.c.h.b16 %v8412
    %v8703 = vunpack.c.l.b16 %v8413
    %v8704 = vunpack.c.h.b16 %v8413
    %v8705 = vunpack.c.l.b16 %v8414
    %v8706 = vunpack.c.h.b16 %v8414
    %v8707 = vunpack.c.l.b16 %v8415
    %v8708 = vunpack.c.h.b16 %v8415
    %v8709 = vunpack.c.l.b16 %v8416
    %v8710 = vunpack.c.h.b16 %v8416
    %v8711 = vunpack.c.l.b16 %v8417
    %v8712 = vunpack.c.h.b16 %v8417
    %v8713 = vunpack.c.l.b16 %v8418
    %v8714 = vunpack.c.h.b16 %v8418
    %v8715 = vunpack.c.l.b16 %v8419
    %v8716 = vunpack.c.h.b16 %v8419
    %v8717 = vunpack.c.l.b16 %v8420
    %v8718 = vunpack.c.h.b16 %v8420
    %v8719 = vunpack.c.l.b16 %v8421
    %v8720 = vunpack.c.h.b16 %v8421
    %v8721 = vunpack.c.l.b16 %v8422
    %v8722 = vunpack.c.h.b16 %v8422
    %v8723 = vunpack.c.l.b16 %v8423
    %v8724 = vunpack.c.h.b16 %v8423
    %v8725 = vunpack.c.l.b16 %v8424
    %v8726 = vunpack.c.h.b16 %v8424
    %v8727 = vunpack.c.l.b16 %v8425
    %v8728 = vunpack.c.h.b16 %v8425
    %v8729 = vunpack.c.l.b16 %v8426
    %v8730 = vunpack.c.h.b16 %v8426
    %v8731 = vunpack.c.l.b16 %v8427
    %v8732 = vunpack.c.h.b16 %v8427
    %v8733 = vunpack.c.l.b16 %v8428
    %v8734 = vunpack.c.h.b16 %v8428
    %v8735 = vunpack.c.l.b16 %v8429
    %v8736 = vunpack.c.h.b16 %v8429
    %v8737 = vunpack.c.l.b16 %v8430
    %v8738 = vunpack.c.h.b16 %v8430
    %v8739 = vunpack.c.l.b16 %v8431
    %v8740 = vunpack.c.h.b16 %v8431
    %v8741 = vunpack.c.l.b16 %v8432
    %v8742 = vunpack.c.h.b16 %v8432
    %v8743 = vunpack.c.l.b16 %v8433
    %v8744 = vunpack.c.h.b16 %v8433
    %v8745 = vunpack.c.l.b16 %v8434
    %v8746 = vunpack.c.h.b16 %v8434
    %v8747 = vunpack.c.l.b16 %v8435
    %v8748 = vunpack.c.h.b16 %v8435
    %v8749 = vunpack.c.l.b16 %v8436
    %v8750 = vunpack.c.h.b16 %v8436
    %v8751 = vunpack.c.l.b16 %v8437
    %v8752 = vunpack.c.h.b16 %v8437
    %v8753 = vunpack.c.l.b16 %v8438
    %v8754 = vunpack.c.h.b16 %v8438
    %v8755 = vunpack.c.l.b16 %v8439
    %v8756 = vunpack.c.h.b16 %v8439
    %v8757 = vunpack.c.l.b16 %v8440
    %v8758 = vunpack.c.h.b16 %v8440
    %v8759 = vunpack.c.l.b16 %v8441
    %v8760 = vunpack.c.h.b16 %v8441
    %v8761 = vunpack.c.l.b16 %v8442
    %v8762 = vunpack.c.h.b16 %v8442
    %v8763 = vunpack.c.l.b16 %v8443
    %v8764 = vunpack.c.h.b16 %v8443
    %v8765 = vunpack.c.l.b16 %v8444
    %v8766 = vunpack.c.h.b16 %v8444
    %v8767 = vunpack.c.l.b16 %v8445
    %v8768 = vunpack.c.h.b16 %v8445
    %v8769 = vunpack.c.l.b16 %v8446
    %v8770 = vunpack.c.h.b16 %v8446
    %v8771 = vunpack.c.l.b16 %v8447
    %v8772 = vunpack.c.h.b16 %v8447
    %v8773 = vunpack.c.l.b16 %v8448
    %v8774 = vunpack.c.h.b16 %v8448
    %v8775 = vunpack.c.l.b16 %v8449
    %v8776 = vunpack.c.h.b16 %v8449
    %v8777 = vunpack.c.l.b16 %v8450
    %v8778 = vunpack.c.h.b16 %v8450
    %v8779 = vunpack.c.l.b16 %v8451
    %v8780 = vunpack.c.h.b16 %v8451
    %v8781 = vunpack.c.l.b16 %v8452
    %v8782 = vunpack.c.h.b16 %v8452
    %v8783 = vunpack.c.l.b16 %v8453
    %v8784 = vunpack.c.h.b16 %v8453
    %v8785 = vunpack.c.l.b16 %v8454
    %v8786 = vunpack.c.h.b16 %v8454
    %v8787 = vunpack.c.l.b16 %v8455
    %v8788 = vunpack.c.h.b16 %v8455
    %v8789 = vunpack.c.l.b16 %v8456
    %v8790 = vunpack.c.h.b16 %v8456
    %v8791 = vunpack.c.l.b16 %v8457
    %v8792 = vunpack.c.h.b16 %v8457
    %v8793 = vunpack.c.l.b16 %v8458
    %v8794 = vunpack.c.h.b16 %v8458
    %v8795 = vunpack.c.l.b16 %v8459
    %v8796 = vunpack.c.h.b16 %v8459
    %v8797 = vunpack.c.l.b16 %v8460
    %v8798 = vunpack.c.h.b16 %v8460
    %v8799 = vunpack.c.l.b16 %v8461
    %v8800 = vunpack.c.h.b16 %v8461
    %v8801 = vunpack.c.l.b16 %v8462
    %v8802 = vunpack.c.h.b16 %v8462
    %v8803 = vunpack.c.l.b16 %v8463
    %v8804 = vunpack.c.h.b16 %v8463
    %v8805 = vunpack.c.l.b16 %v8464
    %v8806 = vunpack.c.h.b16 %v8464
    %v8807 = vunpack.c.l.b16 %v8465
    %v8808 = vunpack.c.h.b16 %v8465
    %v8809 = vunpack.c.l.b16 %v8466
    %v8810 = vunpack.c.h.b16 %v8466
    %v8811 = vunpack.c.l.b16 %v8467
    %v8812 = vunpack.c.h.b16 %v8467
    %v8813 = vunpack.c.l.b16 %v8468
    %v8814 = vunpack.c.h.b16 %v8468
    %v8815 = vunpack.c.l.b16 %v8469
    %v8816 = vunpack.c.h.b16 %v8469
    %v8817 = vunpack.c.l.b16 %v8470
    %v8818 = vunpack.c.h.b16 %v8470
    %v8819 = vunpack.c.l.b16 %v8471
    %v8820 = vunpack.c.h.b16 %v8471
    %v8821 = vunpack.c.l.b16 %v8472
    %v8822 = vunpack.c.h.b16 %v8472
    %v8823 = vunpack.c.l.b16 %v8473
    %v8824 = vunpack.c.h.b16 %v8473
    %v8825 = vunpack.c.l.b16 %v8474
    %v8826 = vunpack.c.h.b16 %v8474
    %v8827 = vpack.c.b16 %v8639, %v8635
    %v8828 = vpack.c.b16 %v8640, %v8636
    %v8829 = vpack.c.b16 %v8641, %v8637
    %v8830 = vpack.c.b16 %v8642, %v8638
    %v8831 = vpack.c.b16 %v8647, %v8643
    %v8832 = vpack.c.b16 %v8648, %v8644
    %v8833 = vpack.c.b16 %v8649, %v8645
    %v8834 = vpack.c.b16 %v8650, %v8646
    %v8835 = vpack.c.b16 %v8655, %v8651
    %v8836 = vpack.c.b16 %v8656, %v8652
    %v8837 = vpack.c.b16 %v8657, %v8653
    %v8838 = vpack.c.b16 %v8658, %v8654
    %v8839 = vpack.c.b16 %v8663, %v8659
    %v8840 = vpack.c.b16 %v8664, %v8660
    %v8841 = vpack.c.b16 %v8665, %v8661
    %v8842 = vpack.c.b16 %v8666, %v8662
    %v8843 = vpack.c.b16 %v8671, %v8667
    %v8844 = vpack.c.b16 %v8672, %v8668
    %v8845 = vpack.c.b16 %v8673, %v8669
    %v8846 = vpack.c.b16 %v8674, %v8670
    %v8847 = vpack.c.b16 %v8679, %v8675
    %v8848 = vpack.c.b16 %v8680, %v8676
    %v8849 = vpack.c.b16 %v8681, %v8677
    %v8850 = vpack.c.b16 %v8682, %v8678
    %v8851 = vpack.c.b16 %v8687, %v8683
    %v8852 = vpack.c.b16 %v8688, %v8684
    %v8853 = vpack.c.b16 %v8689, %v8685
    %v8854 = vpack.c.b16 %v8690, %v8686
    %v8855 = vpack.c.b16 %v8695, %v8691
    %v8856 = vpack.c.b16 %v8696, %v8692
    %v8857 = vpack.c.b16 %v8697, %v8693
    %v8858 = vpack.c.b16 %v8698, %v8694
    %v8859 = vpack.c.b16 %v8703, %v8699
    %v8860 = vpack.c.b16 %v8704, %v8700
    %v8861 = vpack.c.b16 %v8705, %v8701
    %v8862 = vpack.c.b16 %v8706, %v8702
    %v8863 = vpack.c.b16 %v8711, %v8707
    %v8864 = vpack.c.b16 %v8712, %v8708
    %v8865 = vpack.c.b16 %v8713, %v8709
    %v8866 = vpack.c.b16 %v8714, %v8710
    %v8867 = vpack.c.b16 %v8719, %v8715
    %v8868 = vpack.c.b16 %v8720, %v8716
    %v8869 = vpack.c.b16 %v8721, %v8717
    %v8870 = vpack.c.b16 %v8722, %v8718
    %v8871 = vpack.c.b16 %v8727, %v8723
    %v8872 = vpack.c.b16 %v8728, %v8724
    %v8873 = vpack.c.b16 %v8729, %v8725
    %v8874 = vpack.c.b16 %v8730, %v8726
    %v8875 = vpack.c.b16 %v8735, %v8731
    %v8876 = vpack.c.b16 %v8736, %v8732
    %v8877 = vpack.c.b16 %v8737, %v8733
    %v8878 = vpack.c.b16 %v8738, %v8734
    %v8879 = vpack.c.b16 %v8743, %v8739
    %v8880 = vpack.c.b16 %v8744, %v8740
    %v8881 = vpack.c.b16 %v8745, %v8741
    %v8882 = vpack.c.b16 %v8746, %v8742
    %v8883 = vpack.c.b16 %v8751, %v8747
    %v8884 = vpack.c.b16 %v8752, %v8748
    %v8885 = vpack.c.b16 %v8753, %v8749
    %v8886 = vpack.c.b16 %v8754, %v8750
    %v8887 = vpack.c.b16 %v8759, %v8755
    %v8888 = vpack.c.b16 %v8760, %v8756
    %v8889 = vpack.c.b16 %v8761, %v8757
    %v8890 = vpack.c.b16 %v8762, %v8758
    %v8891 = vpack.c.b16 %v8767, %v8763
    %v8892 = vpack.c.b16 %v8768, %v8764
    %v8893 = vpack.c.b16 %v8769, %v8765
    %v8894 = vpack.c.b16 %v8770, %v8766
    %v8895 = vpack.c.b16 %v8775, %v8771
    %v8896 = vpack.c.b16 %v8776, %v8772
    %v8897 = vpack.c.b16 %v8777, %v8773
    %v8898 = vpack.c.b16 %v8778, %v8774
    %v8899 = vpack.c.b16 %v8783, %v8779
    %v8900 = vpack.c.b16 %v8784, %v8780
    %v8901 = vpack.c.b16 %v8785, %v8781
    %v8902 = vpack.c.b16 %v8786, %v8782
    %v8903 = vpack.c.b16 %v8791, %v8787
    %v8904 = vpack.c.b16 %v8792, %v8788
    %v8905 = vpack.c.b16 %v8793, %v8789
    %v8906 = vpack.c.b16 %v8794, %v8790
    %v8907 = vpack.c.b16 %v8799, %v8795
    %v8908 = vpack.c.b16 %v8800, %v8796
    %v8909 = vpack.c.b16 %v8801, %v8797
    %v8910 = vpack.c.b16 %v8802, %v8798
    %v8911 = vpack.c.b16 %v8807, %v8803
    %v8912 = vpack.c.b16 %v8808, %v8804
    %v8913 = vpack.c.b16 %v8809, %v8805
    %v8914 = vpack.c.b16 %v8810, %v8806
    %v8915 = vpack.c.b16 %v8815, %v8811
    %v8916 = vpack.c.b16 %v8816, %v8812
    %v8917 = vpack.c.b16 %v8817, %v8813
    %v8918 = vpack.c.b16 %v8818, %v8814
    %v8919 = vpack.c.b16 %v8823, %v8819
    %v8920 = vpack.c.b16 %v8824, %v8820
    %v8921 = vpack.c.b16 %v8825, %v8821
    %v8922 = vpack.c.b16 %v8826, %v8822
    %9019 = vmatprep.subr.bf16.mxu0 %v8828
    %9020 = vmatpush1.bf16.msra.mxu0 %v8827
    %9021 = vmatprep.subr.bf16.mxu0 %v8832
    %9022 = vmatpush1.bf16.msra.mxu0 %v8831
    %9023 = vmatprep.subr.bf16.mxu0 %v8836
    %9024 = vmatpush1.bf16.msra.mxu0 %v8835
    %9025 = vmatprep.subr.bf16.mxu0 %v8840
    %9026 = vmatpush1.bf16.msra.mxu0 %v8839
    %9027 = vmatprep.subr.bf16.mxu0 %v8844
    %9028 = vmatpush1.bf16.msra.mxu0 %v8843
    %9029 = vmatprep.subr.bf16.mxu0 %v8848
    %9030 = vmatpush1.bf16.msra.mxu0 %v8847
    %9031 = vmatprep.subr.bf16.mxu0 %v8852
    %9032 = vmatpush1.bf16.msra.mxu0 %v8851
    %9033 = vmatprep.subr.bf16.mxu0 %v8856
    %9034 = vmatpush1.bf16.msra.mxu0 %v8855
    %9035 = vmatprep.subr.bf16.mxu0 %v8860
    %9036 = vmatpush1.bf16.msra.mxu0 %v8859
    %9037 = vmatprep.subr.bf16.mxu0 %v8864
    %9038 = vmatpush1.bf16.msra.mxu0 %v8863
    %9039 = vmatprep.subr.bf16.mxu0 %v8868
    %9040 = vmatpush1.bf16.msra.mxu0 %v8867
    %9041 = vmatprep.subr.bf16.mxu0 %v8872
    %9042 = vmatpush1.bf16.msra.mxu0 %v8871
    %9043 = vmatprep.subr.bf16.mxu0 %v8876
    %9044 = vmatpush1.bf16.msra.mxu0 %v8875
    %9045 = vmatprep.subr.bf16.mxu0 %v8880
    %9046 = vmatpush1.bf16.msra.mxu0 %v8879
    %9047 = vmatprep.subr.bf16.mxu0 %v8884
    %9048 = vmatpush1.bf16.msra.mxu0 %v8883
    %9049 = vmatprep.subr.bf16.mxu0 %v8888
    %9050 = vmatpush1.bf16.msra.mxu0 %v8887
    %9051 = vmatprep.mubr.bf16.mxu0 %v8516
    %9052 = vmatmul.mubr.bf16.gmra.mrb[0].mxu0 %v8515
    %v9053 = vpop.f32.mrb[0].mxu0
    %v9054 = vadd.f32 0.0, %v9053
    %v9055 = vpop.f32.mrb[0].mxu0
    %v9056 = vadd.f32 0.0, %v9055
    %v9057 = vpop.f32.mrb[0].mxu0
    %v9058 = vadd.f32 0.0, %v9057
    %v9059 = vpop.f32.mrb[0].mxu0
    %v9060 = vadd.f32 0.0, %v9059
    %9061 = vmatprep.mubr.bf16.mxu0 %v8519
    %9062 = vmatmul.mubr.bf16.gmra.mrb[0].mxu0 %v8518
    %v9063 = vpop.f32.mrb[0].mxu0
    %v9064 = vadd.f32 0.0, %v9063
    %v9065 = vpop.f32.mrb[0].mxu0
    %v9066 = vadd.f32 0.0, %v9065
    %v9067 = vpop.f32.mrb[0].mxu0
    %v9068 = vadd.f32 0.0, %v9067
    %v9069 = vpop.f32.mrb[0].mxu0
    %v9070 = vadd.f32 0.0, %v9069
    %9071 = vmatprep.mubr.bf16.mxu0 %v8522
    %9072 = vmatmul.mubr.bf16.gmra.mrb[0].mxu0 %v8521
    %v9073 = vpop.f32.mrb[0].mxu0
    %v9074 = vadd.f32 0.0, %v9073
    %v9075 = vpop.f32.mrb[0].mxu0
    %v9076 = vadd.f32 0.0, %v9075
    %v9077 = vpop.f32.mrb[0].mxu0
    %v9078 = vadd.f32 0.0, %v9077
    %v9079 = vpop.f32.mrb[0].mxu0
    %v9080 = vadd.f32 0.0, %v9079
    %9081 = vmatprep.mubr.bf16.mxu0 %v8525
    %9082 = vmatmul.mubr.bf16.gmra.mrb[0].mxu0 %v8524
    %v9083 = vpop.f32.mrb[0].mxu0
    %v9084 = vadd.f32 0.0, %v9083
    %v9085 = vpop.f32.mrb[0].mxu0
    %v9086 = vadd.f32 0.0, %v9085
    %v9087 = vpop.f32.mrb[0].mxu0
    %v9088 = vadd.f32 0.0, %v9087
    %v9089 = vpop.f32.mrb[0].mxu0
    %v9090 = vadd.f32 0.0, %v9089
    %9091 = vdwg.mxu0
    %9092 = vmatprep.subr.bf16.mxu0 %v8892
    %9093 = vmatpush1.bf16.msra.mxu0 %v8891
    %9094 = vmatprep.subr.bf16.mxu0 %v8896
    %9095 = vmatpush1.bf16.msra.mxu0 %v8895
    %9096 = vmatprep.subr.bf16.mxu0 %v8900
    %9097 = vmatpush1.bf16.msra.mxu0 %v8899
    %9098 = vmatprep.subr.bf16.mxu0 %v8904
    %9099 = vmatpush1.bf16.msra.mxu0 %v8903
    %9100 = vmatprep.subr.bf16.mxu0 %v8908
    %9101 = vmatpush1.bf16.msra.mxu0 %v8907
    %9102 = vmatprep.subr.bf16.mxu0 %v8912
    %9103 = vmatpush1.bf16.msra.mxu0 %v8911
    %9104 = vmatprep.subr.bf16.mxu0 %v8916
    %9105 = vmatpush1.bf16.msra.mxu0 %v8915
    %9106 = vmatprep.subr.bf16.mxu0 %v8920
    %9107 = vmatpush1.bf16.msra.mxu0 %v8919
    %9108 = vmatprep.subr.bf16.mxu0 0
    %9109 = vmatpush1.bf16.msra.mxu0 0
    %9110 = vmatprep.subr.bf16.mxu0 0
    %9111 = vmatpush1.bf16.msra.mxu0 0
    %9112 = vmatprep.subr.bf16.mxu0 0
    %9113 = vmatpush1.bf16.msra.mxu0 0
    %9114 = vmatprep.subr.bf16.mxu0 0
    %9115 = vmatpush1.bf16.msra.mxu0 0
    %9116 = vmatprep.subr.bf16.mxu0 0
    %9117 = vmatpush1.bf16.msra.mxu0 0
    %9118 = vmatprep.subr.bf16.mxu0 0
    %9119 = vmatpush1.bf16.msra.mxu0 0
    %9120 = vmatprep.subr.bf16.mxu0 0
    %9121 = vmatpush1.bf16.msra.mxu0 0
    %9122 = vmatprep.subr.bf16.mxu0 0
    %9123 = vmatpush1.bf16.msra.mxu0 0
    %9124 = vmatprep.mubr.bf16.mxu0 0
    %9125 = vmatmul.mubr.bf16.gmra.mrb[0].mxu0 %v8517
    %v9126 = vpop.f32.mrb[0].mxu0
    %v9127 = vadd.f32 %v9054, %v9126
    %v9128 = vpop.f32.mrb[0].mxu0
    %v9129 = vadd.f32 %v9056, %v9128
    %v9130 = vpop.f32.mrb[0].mxu0
    %v9131 = vadd.f32 %v9058, %v9130
    %v9132 = vpop.f32.mrb[0].mxu0
    %v9133 = vadd.f32 %v9060, %v9132
    %9134 = vmatprep.mubr.bf16.mxu0 0
    %9135 = vmatmul.mubr.bf16.gmra.mrb[0].mxu0 %v8520
    %v9136 = vpop.f32.mrb[0].mxu0
    %v9137 = vadd.f32 %v9064, %v9136
    %v9138 = vpop.f32.mrb[0].mxu0
    %v9139 = vadd.f32 %v9066, %v9138
    %v9140 = vpop.f32.mrb[0].mxu0
    %v9141 = vadd.f32 %v9068, %v9140
    %v9142 = vpop.f32.mrb[0].mxu0
    %v9143 = vadd.f32 %v9070, %v9142
    %9144 = vmatprep.mubr.bf16.mxu0 0
    %9145 = vmatmul.mubr.bf16.gmra.mrb[0].mxu0 %v8523
    %v9146 = vpop.f32.mrb[0].mxu0
    %v9147 = vadd.f32 %v9074, %v9146
    %v9148 = vpop.f32.mrb[0].mxu0
    %v9149 = vadd.f32 %v9076, %v9148
    %v9150 = vpop.f32.mrb[0].mxu0
    %v9151 = vadd.f32 %v9078, %v9150
    %v9152 = vpop.f32.mrb[0].mxu0
    %v9153 = vadd.f32 %v9080, %v9152
    %9154 = vmatprep.mubr.bf16.mxu0 0
    %9155 = vmatmul.mubr.bf16.gmra.mrb[0].mxu0 %v8526
    %v9156 = vpop.f32.mrb[0].mxu0
    %v9157 = vadd.f32 %v9084, %v9156
    %v9158 = vpop.f32.mrb[0].mxu0
    %v9159 = vadd.f32 %v9086, %v9158
    %v9160 = vpop.f32.mrb[0].mxu0
    %v9161 = vadd.f32 %v9088, %v9160
    %v9162 = vpop.f32.mrb[0].mxu0
    %v9163 = vadd.f32 %v9090, %v9162
    %9164 = vdwg.mxu0
    %9165 = vmatprep.subr.bf16.mxu0 %v8830
    %9166 = vmatpush1.bf16.msra.mxu0 %v8829
    %9167 = vmatprep.subr.bf16.mxu0 %v8834
    %9168 = vmatpush1.bf16.msra.mxu0 %v8833
    %9169 = vmatprep.subr.bf16.mxu0 %v8838
    %9170 = vmatpush1.bf16.msra.mxu0 %v8837
    %9171 = vmatprep.subr.bf16.mxu0 %v8842
    %9172 = vmatpush1.bf16.msra.mxu0 %v8841
    %9173 = vmatprep.subr.bf16.mxu0 %v8846
    %9174 = vmatpush1.bf16.msra.mxu0 %v8845
    %9175 = vmatprep.subr.bf16.mxu0 %v8850
    %9176 = vmatpush1.bf16.msra.mxu0 %v8849
    %9177 = vmatprep.subr.bf16.mxu0 %v8854
    %9178 = vmatpush1.bf16.msra.mxu0 %v8853
    %9179 = vmatprep.subr.bf16.mxu0 %v8858
    %9180 = vmatpush1.bf16.msra.mxu0 %v8857
    %9181 = vmatprep.subr.bf16.mxu0 %v8862
    %9182 = vmatpush1.bf16.msra.mxu0 %v8861
    %9183 = vmatprep.subr.bf16.mxu0 %v8866
    %9184 = vmatpush1.bf16.msra.mxu0 %v8865
    %9185 = vmatprep.subr.bf16.mxu0 %v8870
    %9186 = vmatpush1.bf16.msra.mxu0 %v8869
    %9187 = vmatprep.subr.bf16.mxu0 %v8874
    %9188 = vmatpush1.bf16.msra.mxu0 %v8873
    %9189 = vmatprep.subr.bf16.mxu0 %v8878
    %9190 = vmatpush1.bf16.msra.mxu0 %v8877
    %9191 = vmatprep.subr.bf16.mxu0 %v8882
    %9192 = vmatpush1.bf16.msra.mxu0 %v8881
    %9193 = vmatprep.subr.bf16.mxu0 %v8886
    %9194 = vmatpush1.bf16.msra.mxu0 %v8885
    %9195 = vmatprep.subr.bf16.mxu0 %v8890
    %9196 = vmatpush1.bf16.msra.mxu0 %v8889
    %9197 = vmatprep.mubr.bf16.mxu0 %v8516
    %9198 = vmatmul.mubr.bf16.gmra.mrb[0].mxu0 %v8515
    %v9199 = vpop.f32.mrb[0].mxu0
    %v9200 = vadd.f32 0.0, %v9199
    %v9201 = vpop.f32.mrb[0].mxu0
    %v9202 = vadd.f32 0.0, %v9201
    %v9203 = vpop.f32.mrb[0].mxu0
    %v9204 = vadd.f32 0.0, %v9203
    %v9205 = vpop.f32.mrb[0].mxu0
    %v9206 = vadd.f32 0.0, %v9205
    %9207 = vmatprep.mubr.bf16.mxu0 %v8519
    %9208 = vmatmul.mubr.bf16.gmra.mrb[0].mxu0 %v8518
    %v9209 = vpop.f32.mrb[0].mxu0
    %v9210 = vadd.f32 0.0, %v9209
    %v9211 = vpop.f32.mrb[0].mxu0
    %v9212 = vadd.f32 0.0, %v9211
    %v9213 = vpop.f32.mrb[0].mxu0
    %v9214 = vadd.f32 0.0, %v9213
    %v9215 = vpop.f32.mrb[0].mxu0
    %v9216 = vadd.f32 0.0, %v9215
    %9217 = vmatprep.mubr.bf16.mxu0 %v8522
    %9218 = vmatmul.mubr.bf16.gmra.mrb[0].mxu0 %v8521
    %v9219 = vpop.f32.mrb[0].mxu0
    %v9220 = vadd.f32 0.0, %v9219
    %v9221 = vpop.f32.mrb[0].mxu0
    %v9222 = vadd.f32 0.0, %v9221
    %v9223 = vpop.f32.mrb[0].mxu0
    %v9224 = vadd.f32 0.0, %v9223
    %v9225 = vpop.f32.mrb[0].mxu0
    %v9226 = vadd.f32 0.0, %v9225
    %9227 = vmatprep.mubr.bf16.mxu0 %v8525
    %9228 = vmatmul.mubr.bf16.gmra.mrb[0].mxu0 %v8524
    %v9229 = vpop.f32.mrb[0].mxu0
    %v9230 = vadd.f32 0.0, %v9229
    %v9231 = vpop.f32.mrb[0].mxu0
    %v9232 = vadd.f32 0.0, %v9231
    %v9233 = vpop.f32.mrb[0].mxu0
    %v9234 = vadd.f32 0.0, %v9233
    %v9235 = vpop.f32.mrb[0].mxu0
    %v9236 = vadd.f32 0.0, %v9235
    %9237 = vdwg.mxu0
    %9238 = vmatprep.subr.bf16.mxu0 %v8894
    %9239 = vmatpush1.bf16.msra.mxu0 %v8893
    %9240 = vmatprep.subr.bf16.mxu0 %v8898
    %9241 = vmatpush1.bf16.msra.mxu0 %v8897
    %9242 = vmatprep.subr.bf16.mxu0 %v8902
    %9243 = vmatpush1.bf16.msra.mxu0 %v8901
    %9244 = vmatprep.subr.bf16.mxu0 %v8906
    %9245 = vmatpush1.bf16.msra.mxu0 %v8905
    %9246 = vmatprep.subr.bf16.mxu0 %v8910
    %9247 = vmatpush1.bf16.msra.mxu0 %v8909
    %9248 = vmatprep.subr.bf16.mxu0 %v8914
    %9249 = vmatpush1.bf16.msra.mxu0 %v8913
    %9250 = vmatprep.subr.bf16.mxu0 %v8918
    %9251 = vmatpush1.bf16.msra.mxu0 %v8917
    %9252 = vmatprep.subr.bf16.mxu0 %v8922
    %9253 = vmatpush1.bf16.msra.mxu0 %v8921
    %9254 = vmatprep.subr.bf16.mxu0 0
    %9255 = vmatpush1.bf16.msra.mxu0 0
    %9256 = vmatprep.subr.bf16.mxu0 0
    %9257 = vmatpush1.bf16.msra.mxu0 0
    %9258 = vmatprep.subr.bf16.mxu0 0
    %9259 = vmatpush1.bf16.msra.mxu0 0
    %9260 = vmatprep.subr.bf16.mxu0 0
    %9261 = vmatpush1.bf16.msra.mxu0 0
    %9262 = vmatprep.subr.bf16.mxu0 0
    %9263 = vmatpush1.bf16.msra.mxu0 0
    %9264 = vmatprep.subr.bf16.mxu0 0
    %9265 = vmatpush1.bf16.msra.mxu0 0
    %9266 = vmatprep.subr.bf16.mxu0 0
    %9267 = vmatpush1.bf16.msra.mxu0 0
    %9268 = vmatprep.subr.bf16.mxu0 0
    %9269 = vmatpush1.bf16.msra.mxu0 0
    %9270 = vmatprep.mubr.bf16.mxu0 0
    %9271 = vmatmul.mubr.bf16.gmra.mrb[0].mxu0 %v8517
    %v9272 = vpop.f32.mrb[0].mxu0
    %v9273 = vadd.f32 %v9200, %v9272
    %v9274 = vpop.f32.mrb[0].mxu0
    %v9275 = vadd.f32 %v9202, %v9274
    %v9276 = vpop.f32.mrb[0].mxu0
    %v9277 = vadd.f32 %v9204, %v9276
    %v9278 = vpop.f32.mrb[0].mxu0
    %v9279 = vadd.f32 %v9206, %v9278
    %9280 = vmatprep.mubr.bf16.mxu0 0
    %9281 = vmatmul.mubr.bf16.gmra.mrb[0].mxu0 %v8520
    %v9282 = vpop.f32.mrb[0].mxu0
    %v9283 = vadd.f32 %v9210, %v9282
    %v9284 = vpop.f32.mrb[0].mxu0
    %v9285 = vadd.f32 %v9212, %v9284
    %v9286 = vpop.f32.mrb[0].mxu0
    %v9287 = vadd.f32 %v9214, %v9286
    %v9288 = vpop.f32.mrb[0].mxu0
    %v9289 = vadd.f32 %v9216, %v9288
    %9290 = vmatprep.mubr.bf16.mxu0 0
    %9291 = vmatmul.mubr.bf16.gmra.mrb[0].mxu0 %v8523
    %v9292 = vpop.f32.mrb[0].mxu0
    %v9293 = vadd.f32 %v9220, %v9292
    %v9294 = vpop.f32.mrb[0].mxu0
    %v9295 = vadd.f32 %v9222, %v9294
    %v9296 = vpop.f32.mrb[0].mxu0
    %v9297 = vadd.f32 %v9224, %v9296
    %v9298 = vpop.f32.mrb[0].mxu0
    %v9299 = vadd.f32 %v9226, %v9298
    %9300 = vmatprep.mubr.bf16.mxu0 0
    %9301 = vmatmul.mubr.bf16.gmra.mrb[0].mxu0 %v8526
    %v9302 = vpop.f32.mrb[0].mxu0
    %v9303 = vadd.f32 %v9230, %v9302
    %v9304 = vpop.f32.mrb[0].mxu0
    %v9305 = vadd.f32 %v9232, %v9304
    %v9306 = vpop.f32.mrb[0].mxu0
    %v9307 = vadd.f32 %v9234, %v9306
    %v9308 = vpop.f32.mrb[0].mxu0
    %v9309 = vadd.f32 %v9236, %v9308
    %9310 = vdwg.mxu0
    %v9311 = vadd.f32 %v8329, %v9127
    %v9312 = vadd.f32 %v8330, %v9129
    %v9313 = vadd.f32 %v8331, %v9273
    %v9314 = vadd.f32 %v8332, %v9275
    %v9315 = vadd.f32 %v8333, %v9131
    %v9316 = vadd.f32 %v8334, %v9133
    %v9317 = vadd.f32 %v8335, %v9277
    %v9318 = vadd.f32 %v8336, %v9279
    %v9319 = vadd.f32 %v8337, %v9137
    %v9320 = vadd.f32 %v8338, %v9139
    %v9321 = vadd.f32 %v8339, %v9283
    %v9322 = vadd.f32 %v8340, %v9285
    %v9323 = vadd.f32 %v8341, %v9141
    %v9324 = vadd.f32 %v8342, %v9143
    %v9325 = vadd.f32 %v8343, %v9287
    %v9326 = vadd.f32 %v8344, %v9289
    %v9327 = vadd.f32 %v8345, %v9147
    %v9328 = vadd.f32 %v8346, %v9149
    %v9329 = vadd.f32 %v8347, %v9293
    %v9330 = vadd.f32 %v8348, %v9295
    %v9331 = vadd.f32 %v8349, %v9151
    %v9332 = vadd.f32 %v8350, %v9153
    %v9333 = vadd.f32 %v8351, %v9297
    %v9334 = vadd.f32 %v8352, %v9299
    %v9335 = vadd.f32 %v8353, %v9157
    %v9336 = vadd.f32 %v8354, %v9159
    %v9337 = vadd.f32 %v8355, %v9303
    %v9338 = vadd.f32 %v8356, %v9305
    %v9339 = vadd.f32 %v8357, %v9161
    %v9340 = vadd.f32 %v8358, %v9163
    %v9341 = vadd.f32 %v8359, %v9307
    %v9342 = vadd.f32 %v8360, %v9309
    %v9343 = vld [vmem:[#allocation9] sm:$0xf]
    %v9345 = vlaneseq
    %v9346 = vshrl.u32 %v9345, 7
    %v9347 = vsub.s32 0, %v9346
    %v9348 = vrot.slane %v9343, %v9347
    %v9349 = vlaneseq
    %v9350 = vshrl.u32 %v9349, 7
    %v9351 = vsub.s32 1, %v9350
    %v9352 = vrot.slane %v9343, %v9351
    %v9353 = vlaneseq
    %v9354 = vshrl.u32 %v9353, 7
    %v9355 = vsub.s32 2, %v9354
    %v9356 = vrot.slane %v9343, %v9355
    %v9357 = vlaneseq
    %v9358 = vshrl.u32 %v9357, 7
    %v9359 = vsub.s32 3, %v9358
    %v9360 = vrot.slane %v9343, %v9359
    %v9365 = vadd.f32 %v9311, %v9348
    %v9366 = vadd.f32 %v9312, %v9352
    %v9367 = vadd.f32 %v9313, %v9356
    %v9368 = vadd.f32 %v9314, %v9360
    %v9369 = vadd.f32 %v9315, %v9348
    %v9370 = vadd.f32 %v9316, %v9352
    %v9371 = vadd.f32 %v9317, %v9356
    %v9372 = vadd.f32 %v9318, %v9360
    %v9373 = vadd.f32 %v9319, %v9348
    %v9374 = vadd.f32 %v9320, %v9352
    %v9375 = vadd.f32 %v9321, %v9356
    %v9376 = vadd.f32 %v9322, %v9360
    %v9377 = vadd.f32 %v9323, %v9348
    %v9378 = vadd.f32 %v9324, %v9352
    %v9379 = vadd.f32 %v9325, %v9356
    %v9380 = vadd.f32 %v9326, %v9360
    %v9381 = vadd.f32 %v9327, %v9348
    %v9382 = vadd.f32 %v9328, %v9352
    %v9383 = vadd.f32 %v9329, %v9356
    %v9384 = vadd.f32 %v9330, %v9360
    %v9385 = vadd.f32 %v9331, %v9348
    %v9386 = vadd.f32 %v9332, %v9352
    %v9387 = vadd.f32 %v9333, %v9356
    %v9388 = vadd.f32 %v9334, %v9360
    %v9389 = vadd.f32 %v9335, %v9348
    %v9390 = vadd.f32 %v9336, %v9352
    %v9391 = vadd.f32 %v9337, %v9356
    %v9392 = vadd.f32 %v9338, %v9360
    %v9393 = vadd.f32 %v9339, %v9348
    %v9394 = vadd.f32 %v9340, %v9352
    %v9395 = vadd.f32 %v9341, %v9356
    %v9396 = vadd.f32 %v9342, %v9360
    %v9397 = vmax.f32 %v9365, 0.0
    %v9398 = vmax.f32 %v9366, 0.0
    %v9399 = vmax.f32 %v9367, 0.0
    %v9400 = vmax.f32 %v9368, 0.0
    %v9401 = vmax.f32 %v9369, 0.0
    %v9402 = vmax.f32 %v9370, 0.0
    %v9403 = vmax.f32 %v9371, 0.0
    %v9404 = vmax.f32 %v9372, 0.0
    %v9405 = vmax.f32 %v9373, 0.0
    %v9406 = vmax.f32 %v9374, 0.0
    %v9407 = vmax.f32 %v9375, 0.0
    %v9408 = vmax.f32 %v9376, 0.0
    %v9409 = vmax.f32 %v9377, 0.0
    %v9410 = vmax.f32 %v9378, 0.0
    %v9411 = vmax.f32 %v9379, 0.0
    %v9412 = vmax.f32 %v9380, 0.0
    %v9413 = vmax.f32 %v9381, 0.0
    %v9414 = vmax.f32 %v9382, 0.0
    %v9415 = vmax.f32 %v9383, 0.0
    %v9416 = vmax.f32 %v9384, 0.0
    %v9417 = vmax.f32 %v9385, 0.0
    %v9418 = vmax.f32 %v9386, 0.0
    %v9419 = vmax.f32 %v9387, 0.0
    %v9420 = vmax.f32 %v9388, 0.0
    %v9421 = vmax.f32 %v9389, 0.0
    %v9422 = vmax.f32 %v9390, 0.0
    %v9423 = vmax.f32 %v9391, 0.0
    %v9424 = vmax.f32 %v9392, 0.0
    %v9425 = vmax.f32 %v9393, 0.0
    %v9426 = vmax.f32 %v9394, 0.0
    %v9427 = vmax.f32 %v9395, 0.0
    %v9428 = vmax.f32 %v9396, 0.0
    %v9429 = vmax.f32 %v9397, %v9399
    %v9430 = vmax.f32 %v9398, %v9400
    %v9431 = vmax.f32 %v9401, %v9403
    %v9432 = vmax.f32 %v9402, %v9404
    %v9433 = vmax.f32 %v9405, %v9407
    %v9434 = vmax.f32 %v9406, %v9408
    %v9435 = vmax.f32 %v9409, %v9411
    %v9436 = vmax.f32 %v9410, %v9412
    %v9437 = vmax.f32 %v9413, %v9415
    %v9438 = vmax.f32 %v9414, %v9416
    %v9439 = vmax.f32 %v9417, %v9419
    %v9440 = vmax.f32 %v9418, %v9420
    %v9441 = vmax.f32 %v9421, %v9423
    %v9442 = vmax.f32 %v9422, %v9424
    %v9443 = vmax.f32 %v9425, %v9427
    %v9444 = vmax.f32 %v9426, %v9428
    %v9445 = vmax.f32 %v9429, %v9431
    %v9446 = vmax.f32 %v9430, %v9432
    %v9447 = vmax.f32 %v9433, %v9435
    %v9448 = vmax.f32 %v9434, %v9436
    %v9449 = vmax.f32 %v9437, %v9439
    %v9450 = vmax.f32 %v9438, %v9440
    %v9451 = vmax.f32 %v9441, %v9443
    %v9452 = vmax.f32 %v9442, %v9444
    %v9453 = vpack.c.bf16 %v9445, %v9445
    %v9454 = vpack.c.bf16 %v9446, %v9446
    %v9455 = vpack.c.bf16 %v9447, %v9447
    %v9456 = vpack.c.bf16 %v9448, %v9448
    %v9457 = vpack.c.bf16 %v9449, %v9449
    %v9458 = vpack.c.bf16 %v9450, %v9450
    %v9459 = vpack.c.bf16 %v9451, %v9451
    %v9460 = vpack.c.bf16 %v9452, %v9452
    %v9463 = vunpack.c.l.b16 %v9453
    %v9464 = vunpack.c.l.b16 %v9454
    %v9465 = vpack.c.b16 %v9464, %v9463
    %9467 = vst [vmem:[#allocation3] sm:$0xff] %v9465
    %v9470 = vunpack.c.l.b16 %v9455
    %v9471 = vunpack.c.l.b16 %v9456
    %v9472 = vpack.c.b16 %v9471, %v9470
    %9474 = vst [vmem:[#allocation3 + $0x8] sm:$0xff] %v9472
    %v9477 = vunpack.c.l.b16 %v9457
    %v9478 = vunpack.c.l.b16 %v9458
    %v9479 = vpack.c.b16 %v9478, %v9477
    %9481 = vst [vmem:[#allocation3 + $0x10] sm:$0xff] %v9479
    %v9484 = vunpack.c.l.b16 %v9459
    %v9485 = vunpack.c.l.b16 %v9460
    %v9486 = vpack.c.b16 %v9485, %v9484
    %9488 = vst [vmem:[#allocation3 + $0x18] sm:$0xff] %v9486
    %v9489 = vld [vmem:[#allocation3] sm:$0xff]
    %v9490 = vld [vmem:[#allocation3 + $0x8] sm:$0xff]
    %v9491 = vld [vmem:[#allocation3 + $0x10] sm:$0xff]
    %v9492 = vld [vmem:[#allocation3 + $0x18] sm:$0xff]
    %v9493 = vld [vmem:[#allocation11] sm:$0xff]
    %v9494 = vld [vmem:[#allocation11 + $0x8] sm:$0xff]
    %v9495 = vld [vmem:[#allocation11 + $0x10] sm:$0xff]
    %v9496 = vld [vmem:[#allocation11 + $0x18] sm:$0xff]
    %v9497 = vld [vmem:[#allocation11 + $0x20] sm:$0xff]
    %v9498 = vld [vmem:[#allocation11 + $0x28] sm:$0xff]
    %v9499 = vld [vmem:[#allocation11 + $0x30] sm:$0xff]
    %v9500 = vld [vmem:[#allocation11 + $0x38] sm:$0xff]
    %v9501 = vld [vmem:[#allocation11 + $0x40] sm:$0xff]
    %v9502 = vld [vmem:[#allocation11 + $0x48] sm:$0xff]
    %v9503 = vld [vmem:[#allocation11 + $0x50] sm:$0xff]
    %v9504 = vld [vmem:[#allocation11 + $0x58] sm:$0xff]
    %v9505 = vld [vmem:[#allocation11 + $0x60] sm:$0xff]
    %v9506 = vld [vmem:[#allocation11 + $0x68] sm:$0xff]
    %v9507 = vld [vmem:[#allocation11 + $0x70] sm:$0xff]
    %v9508 = vld [vmem:[#allocation11 + $0x78] sm:$0xff]
    %v9509 = vld [vmem:[#allocation11 + $0x80] sm:$0xff]
    %v9510 = vld [vmem:[#allocation11 + $0x88] sm:$0xff]
    %v9511 = vld [vmem:[#allocation11 + $0x90] sm:$0xff]
    %v9512 = vld [vmem:[#allocation11 + $0x98] sm:$0xff]
    %v9513 = vld [vmem:[#allocation11 + $0xa0] sm:$0xff]
    %v9514 = vld [vmem:[#allocation11 + $0xa8] sm:$0xff]
    %v9515 = vld [vmem:[#allocation11 + $0xb0] sm:$0xff]
    %v9516 = vld [vmem:[#allocation11 + $0xb8] sm:$0xff]
    %v9517 = vld [vmem:[#allocation11 + $0xc0] sm:$0xff]
    %v9518 = vld [vmem:[#allocation11 + $0xc8] sm:$0xff]
    %v9519 = vld [vmem:[#allocation11 + $0xd0] sm:$0xff]
    %v9520 = vld [vmem:[#allocation11 + $0xd8] sm:$0xff]
    %v9521 = vld [vmem:[#allocation11 + $0xe0] sm:$0xff]
    %v9522 = vld [vmem:[#allocation11 + $0xe8] sm:$0xff]
    %v9523 = vld [vmem:[#allocation11 + $0xf0] sm:$0xff]
    %v9524 = vld [vmem:[#allocation11 + $0xf8] sm:$0xff]
    %v9525 = vld [vmem:[#allocation11 + $0x100] sm:$0xff]
    %v9526 = vld [vmem:[#allocation11 + $0x108] sm:$0xff]
    %v9527 = vld [vmem:[#allocation11 + $0x110] sm:$0xff]
    %v9528 = vld [vmem:[#allocation11 + $0x118] sm:$0xff]
    %v9529 = vld [vmem:[#allocation11 + $0x120] sm:$0xff]
    %v9530 = vld [vmem:[#allocation11 + $0x128] sm:$0xff]
    %v9531 = vld [vmem:[#allocation11 + $0x130] sm:$0xff]
    %v9532 = vld [vmem:[#allocation11 + $0x138] sm:$0xff]
    %v9533 = vld [vmem:[#allocation11 + $0x140] sm:$0xff]
    %v9534 = vld [vmem:[#allocation11 + $0x148] sm:$0xff]
    %v9535 = vld [vmem:[#allocation11 + $0x150] sm:$0xff]
    %v9536 = vld [vmem:[#allocation11 + $0x158] sm:$0xff]
    %v9537 = vld [vmem:[#allocation11 + $0x160] sm:$0xff]
    %v9538 = vld [vmem:[#allocation11 + $0x168] sm:$0xff]
    %v9539 = vld [vmem:[#allocation11 + $0x170] sm:$0xff]
    %v9540 = vld [vmem:[#allocation11 + $0x178] sm:$0xff]
    %v9541 = vld [vmem:[#allocation11 + $0x180] sm:$0xff]
    %v9542 = vld [vmem:[#allocation11 + $0x188] sm:$0xff]
    %v9543 = vld [vmem:[#allocation11 + $0x190] sm:$0xff]
    %v9544 = vld [vmem:[#allocation11 + $0x198] sm:$0xff]
    %v9545 = vld [vmem:[#allocation11 + $0x1a0] sm:$0xff]
    %v9546 = vld [vmem:[#allocation11 + $0x1a8] sm:$0xff]
    %v9547 = vld [vmem:[#allocation11 + $0x1b0] sm:$0xff]
    %v9548 = vld [vmem:[#allocation11 + $0x1b8] sm:$0xff]
    %v9549 = vld [vmem:[#allocation11 + $0x1c0] sm:$0xff]
    %v9550 = vld [vmem:[#allocation11 + $0x1c8] sm:$0xff]
    %v9551 = vld [vmem:[#allocation11 + $0x1d0] sm:$0xff]
    %v9552 = vld [vmem:[#allocation11 + $0x1d8] sm:$0xff]
    %v9553 = vld [vmem:[#allocation11 + $0x1e0] sm:$0xff]
    %v9554 = vld [vmem:[#allocation11 + $0x1e8] sm:$0xff]
    %v9555 = vld [vmem:[#allocation11 + $0x1f0] sm:$0xff]
    %v9556 = vld [vmem:[#allocation11 + $0x1f8] sm:$0xff]
    %v9557 = vld [vmem:[#allocation11 + $0x200] sm:$0xff]
    %v9558 = vld [vmem:[#allocation11 + $0x208] sm:$0xff]
    %v9559 = vld [vmem:[#allocation11 + $0x210] sm:$0xff]
    %v9560 = vld [vmem:[#allocation11 + $0x218] sm:$0xff]
    %v9561 = vld [vmem:[#allocation11 + $0x220] sm:$0xff]
    %v9562 = vld [vmem:[#allocation11 + $0x228] sm:$0xff]
    %v9563 = vld [vmem:[#allocation11 + $0x230] sm:$0xff]
    %v9564 = vld [vmem:[#allocation11 + $0x238] sm:$0xff]
    %v9565 = vld [vmem:[#allocation11 + $0x240] sm:$0xff]
    %v9566 = vld [vmem:[#allocation11 + $0x248] sm:$0xff]
    %v9567 = vld [vmem:[#allocation11 + $0x250] sm:$0xff]
    %v9568 = vld [vmem:[#allocation11 + $0x258] sm:$0xff]
    %v9569 = vld [vmem:[#allocation11 + $0x260] sm:$0xff]
    %v9570 = vld [vmem:[#allocation11 + $0x268] sm:$0xff]
    %v9571 = vld [vmem:[#allocation11 + $0x270] sm:$0xff]
    %v9572 = vld [vmem:[#allocation11 + $0x278] sm:$0xff]
    %v9573 = vld [vmem:[#allocation11 + $0x280] sm:$0xff]
    %v9574 = vld [vmem:[#allocation11 + $0x288] sm:$0xff]
    %v9575 = vld [vmem:[#allocation11 + $0x290] sm:$0xff]
    %v9576 = vld [vmem:[#allocation11 + $0x298] sm:$0xff]
    %v9577 = vld [vmem:[#allocation11 + $0x2a0] sm:$0xff]
    %v9578 = vld [vmem:[#allocation11 + $0x2a8] sm:$0xff]
    %v9579 = vld [vmem:[#allocation11 + $0x2b0] sm:$0xff]
    %v9580 = vld [vmem:[#allocation11 + $0x2b8] sm:$0xff]
    %v9581 = vld [vmem:[#allocation11 + $0x2c0] sm:$0xff]
    %v9582 = vld [vmem:[#allocation11 + $0x2c8] sm:$0xff]
    %v9583 = vld [vmem:[#allocation11 + $0x2d0] sm:$0xff]
    %v9584 = vld [vmem:[#allocation11 + $0x2d8] sm:$0xff]
    %v9585 = vld [vmem:[#allocation11 + $0x2e0] sm:$0xff]
    %v9586 = vld [vmem:[#allocation11 + $0x2e8] sm:$0xff]
    %v9587 = vld [vmem:[#allocation11 + $0x2f0] sm:$0xff]
    %v9588 = vld [vmem:[#allocation11 + $0x2f8] sm:$0xff]
    %v9589 = vld [vmem:[#allocation11 + $0x300] sm:$0xff]
    %v9590 = vld [vmem:[#allocation11 + $0x308] sm:$0xff]
    %v9591 = vld [vmem:[#allocation11 + $0x310] sm:$0xff]
    %v9592 = vld [vmem:[#allocation11 + $0x318] sm:$0xff]
    %v9593 = vld [vmem:[#allocation11 + $0x320] sm:$0xff]
    %v9594 = vld [vmem:[#allocation11 + $0x328] sm:$0xff]
    %v9595 = vld [vmem:[#allocation11 + $0x330] sm:$0xff]
    %v9596 = vld [vmem:[#allocation11 + $0x338] sm:$0xff]
    %v9597 = vld [vmem:[#allocation11 + $0x340] sm:$0xff]
    %v9598 = vld [vmem:[#allocation11 + $0x348] sm:$0xff]
    %v9599 = vld [vmem:[#allocation11 + $0x350] sm:$0xff]
    %v9600 = vld [vmem:[#allocation11 + $0x358] sm:$0xff]
    %v9601 = vld [vmem:[#allocation11 + $0x360] sm:$0xff]
    %v9602 = vld [vmem:[#allocation11 + $0x368] sm:$0xff]
    %v9603 = vld [vmem:[#allocation11 + $0x370] sm:$0xff]
    %v9604 = vld [vmem:[#allocation11 + $0x378] sm:$0xff]
    %v9605 = vld [vmem:[#allocation11 + $0x380] sm:$0xff]
    %v9606 = vld [vmem:[#allocation11 + $0x388] sm:$0xff]
    %v9607 = vld [vmem:[#allocation11 + $0x390] sm:$0xff]
    %v9608 = vld [vmem:[#allocation11 + $0x398] sm:$0xff]
    %v9609 = vld [vmem:[#allocation11 + $0x3a0] sm:$0xff]
    %v9610 = vld [vmem:[#allocation11 + $0x3a8] sm:$0xff]
    %v9611 = vld [vmem:[#allocation11 + $0x3b0] sm:$0xff]
    %v9612 = vld [vmem:[#allocation11 + $0x3b8] sm:$0xff]
    %v9613 = vld [vmem:[#allocation11 + $0x3c0] sm:$0xff]
    %v9614 = vld [vmem:[#allocation11 + $0x3c8] sm:$0xff]
    %v9615 = vld [vmem:[#allocation11 + $0x3d0] sm:$0xff]
    %v9616 = vld [vmem:[#allocation11 + $0x3d8] sm:$0xff]
    %v9617 = vld [vmem:[#allocation11 + $0x3e0] sm:$0xff]
    %v9618 = vld [vmem:[#allocation11 + $0x3e8] sm:$0xff]
    %v9619 = vld [vmem:[#allocation11 + $0x3f0] sm:$0xff]
    %v9620 = vld [vmem:[#allocation11 + $0x3f8] sm:$0xff]
    %v9621 = vld [vmem:[#allocation11 + $0x400] sm:$0xff]
    %v9622 = vld [vmem:[#allocation11 + $0x408] sm:$0xff]
    %v9623 = vld [vmem:[#allocation11 + $0x410] sm:$0xff]
    %v9624 = vld [vmem:[#allocation11 + $0x418] sm:$0xff]
    %v9625 = vld [vmem:[#allocation11 + $0x420] sm:$0xff]
    %v9626 = vld [vmem:[#allocation11 + $0x428] sm:$0xff]
    %v9627 = vld [vmem:[#allocation11 + $0x430] sm:$0xff]
    %v9628 = vld [vmem:[#allocation11 + $0x438] sm:$0xff]
    %v9629 = vld [vmem:[#allocation11 + $0x440] sm:$0xff]
    %v9630 = vld [vmem:[#allocation11 + $0x448] sm:$0xff]
    %v9631 = vld [vmem:[#allocation11 + $0x450] sm:$0xff]
    %v9632 = vld [vmem:[#allocation11 + $0x458] sm:$0xff]
    %v9633 = vld [vmem:[#allocation11 + $0x460] sm:$0xff]
    %v9634 = vld [vmem:[#allocation11 + $0x468] sm:$0xff]
    %v9635 = vld [vmem:[#allocation11 + $0x470] sm:$0xff]
    %v9636 = vld [vmem:[#allocation11 + $0x478] sm:$0xff]
    %v9637 = vld [vmem:[#allocation11 + $0x480] sm:$0xff]
    %v9638 = vld [vmem:[#allocation11 + $0x488] sm:$0xff]
    %v9639 = vld [vmem:[#allocation11 + $0x490] sm:$0xff]
    %v9640 = vld [vmem:[#allocation11 + $0x498] sm:$0xff]
    %v9641 = vld [vmem:[#allocation11 + $0x4a0] sm:$0xff]
    %v9642 = vld [vmem:[#allocation11 + $0x4a8] sm:$0xff]
    %v9643 = vld [vmem:[#allocation11 + $0x4b0] sm:$0xff]
    %v9644 = vld [vmem:[#allocation11 + $0x4b8] sm:$0xff]
    %v9645 = vld [vmem:[#allocation11 + $0x4c0] sm:$0xff]
    %v9646 = vld [vmem:[#allocation11 + $0x4c8] sm:$0xff]
    %v9647 = vld [vmem:[#allocation11 + $0x4d0] sm:$0xff]
    %v9648 = vld [vmem:[#allocation11 + $0x4d8] sm:$0xff]
    %v9649 = vld [vmem:[#allocation11 + $0x4e0] sm:$0xff]
    %v9650 = vld [vmem:[#allocation11 + $0x4e8] sm:$0xff]
    %v9651 = vld [vmem:[#allocation11 + $0x4f0] sm:$0xff]
    %v9652 = vld [vmem:[#allocation11 + $0x4f8] sm:$0xff]
    %v9653 = vld [vmem:[#allocation11 + $0x500] sm:$0xff]
    %v9654 = vld [vmem:[#allocation11 + $0x508] sm:$0xff]
    %v9655 = vld [vmem:[#allocation11 + $0x510] sm:$0xff]
    %v9656 = vld [vmem:[#allocation11 + $0x518] sm:$0xff]
    %v9657 = vld [vmem:[#allocation11 + $0x520] sm:$0xff]
    %v9658 = vld [vmem:[#allocation11 + $0x528] sm:$0xff]
    %v9659 = vld [vmem:[#allocation11 + $0x530] sm:$0xff]
    %v9660 = vld [vmem:[#allocation11 + $0x538] sm:$0xff]
    %v9661 = vld [vmem:[#allocation11 + $0x540] sm:$0xff]
    %v9662 = vld [vmem:[#allocation11 + $0x548] sm:$0xff]
    %v9663 = vld [vmem:[#allocation11 + $0x550] sm:$0xff]
    %v9664 = vld [vmem:[#allocation11 + $0x558] sm:$0xff]
    %v9665 = vld [vmem:[#allocation11 + $0x560] sm:$0xff]
    %v9666 = vld [vmem:[#allocation11 + $0x568] sm:$0xff]
    %v9667 = vld [vmem:[#allocation11 + $0x570] sm:$0xff]
    %v9668 = vld [vmem:[#allocation11 + $0x578] sm:$0xff]
    %v9669 = vld [vmem:[#allocation11 + $0x580] sm:$0xff]
    %v9670 = vld [vmem:[#allocation11 + $0x588] sm:$0xff]
    %v9671 = vld [vmem:[#allocation11 + $0x590] sm:$0xff]
    %v9672 = vld [vmem:[#allocation11 + $0x598] sm:$0xff]
    %v9673 = vld [vmem:[#allocation11 + $0x5a0] sm:$0xff]
    %v9674 = vld [vmem:[#allocation11 + $0x5a8] sm:$0xff]
    %v9675 = vld [vmem:[#allocation11 + $0x5b0] sm:$0xff]
    %v9676 = vld [vmem:[#allocation11 + $0x5b8] sm:$0xff]
    %v9677 = vld [vmem:[#allocation11 + $0x5c0] sm:$0xff]
    %v9678 = vld [vmem:[#allocation11 + $0x5c8] sm:$0xff]
    %v9679 = vld [vmem:[#allocation11 + $0x5d0] sm:$0xff]
    %v9680 = vld [vmem:[#allocation11 + $0x5d8] sm:$0xff]
    %v9681 = vld [vmem:[#allocation11 + $0x5e0] sm:$0xff]
    %v9682 = vld [vmem:[#allocation11 + $0x5e8] sm:$0xff]
    %v9683 = vld [vmem:[#allocation11 + $0x5f0] sm:$0xff]
    %v9684 = vld [vmem:[#allocation11 + $0x5f8] sm:$0xff]
    %v9685 = vld [vmem:[#allocation11 + $0x600] sm:$0xff]
    %v9686 = vld [vmem:[#allocation11 + $0x608] sm:$0xff]
    %v9687 = vld [vmem:[#allocation11 + $0x610] sm:$0xff]
    %v9688 = vld [vmem:[#allocation11 + $0x618] sm:$0xff]
    %v9689 = vld [vmem:[#allocation11 + $0x620] sm:$0xff]
    %v9690 = vld [vmem:[#allocation11 + $0x628] sm:$0xff]
    %v9691 = vld [vmem:[#allocation11 + $0x630] sm:$0xff]
    %v9692 = vld [vmem:[#allocation11 + $0x638] sm:$0xff]
    %v9693 = vld [vmem:[#allocation11 + $0x640] sm:$0xff]
    %v9694 = vld [vmem:[#allocation11 + $0x648] sm:$0xff]
    %v9695 = vld [vmem:[#allocation11 + $0x650] sm:$0xff]
    %v9696 = vld [vmem:[#allocation11 + $0x658] sm:$0xff]
    %v9697 = vld [vmem:[#allocation11 + $0x660] sm:$0xff]
    %v9698 = vld [vmem:[#allocation11 + $0x668] sm:$0xff]
    %v9699 = vld [vmem:[#allocation11 + $0x670] sm:$0xff]
    %v9700 = vld [vmem:[#allocation11 + $0x678] sm:$0xff]
    %v9701 = vld [vmem:[#allocation11 + $0x680] sm:$0xff]
    %v9702 = vld [vmem:[#allocation11 + $0x688] sm:$0xff]
    %v9703 = vld [vmem:[#allocation11 + $0x690] sm:$0xff]
    %v9704 = vld [vmem:[#allocation11 + $0x698] sm:$0xff]
    %v9705 = vld [vmem:[#allocation11 + $0x6a0] sm:$0xff]
    %v9706 = vld [vmem:[#allocation11 + $0x6a8] sm:$0xff]
    %v9707 = vld [vmem:[#allocation11 + $0x6b0] sm:$0xff]
    %v9708 = vld [vmem:[#allocation11 + $0x6b8] sm:$0xff]
    %v9709 = vld [vmem:[#allocation11 + $0x6c0] sm:$0xff]
    %v9710 = vld [vmem:[#allocation11 + $0x6c8] sm:$0xff]
    %v9711 = vld [vmem:[#allocation11 + $0x6d0] sm:$0xff]
    %v9712 = vld [vmem:[#allocation11 + $0x6d8] sm:$0xff]
    %v9713 = vld [vmem:[#allocation11 + $0x6e0] sm:$0xff]
    %v9714 = vld [vmem:[#allocation11 + $0x6e8] sm:$0xff]
    %v9715 = vld [vmem:[#allocation11 + $0x6f0] sm:$0xff]
    %v9716 = vld [vmem:[#allocation11 + $0x6f8] sm:$0xff]
    %v9717 = vld [vmem:[#allocation11 + $0x700] sm:$0xff]
    %v9718 = vld [vmem:[#allocation11 + $0x708] sm:$0xff]
    %v9719 = vld [vmem:[#allocation11 + $0x710] sm:$0xff]
    %v9720 = vld [vmem:[#allocation11 + $0x718] sm:$0xff]
    %v9721 = vld [vmem:[#allocation11 + $0x720] sm:$0xff]
    %v9722 = vld [vmem:[#allocation11 + $0x728] sm:$0xff]
    %v9723 = vld [vmem:[#allocation11 + $0x730] sm:$0xff]
    %v9724 = vld [vmem:[#allocation11 + $0x738] sm:$0xff]
    %v9725 = vld [vmem:[#allocation11 + $0x740] sm:$0xff]
    %v9726 = vld [vmem:[#allocation11 + $0x748] sm:$0xff]
    %v9727 = vld [vmem:[#allocation11 + $0x750] sm:$0xff]
    %v9728 = vld [vmem:[#allocation11 + $0x758] sm:$0xff]
    %v9729 = vld [vmem:[#allocation11 + $0x760] sm:$0xff]
    %v9730 = vld [vmem:[#allocation11 + $0x768] sm:$0xff]
    %v9731 = vld [vmem:[#allocation11 + $0x770] sm:$0xff]
    %v9732 = vld [vmem:[#allocation11 + $0x778] sm:$0xff]
    %v9733 = vld [vmem:[#allocation11 + $0x780] sm:$0xff]
    %v9734 = vld [vmem:[#allocation11 + $0x788] sm:$0xff]
    %v9735 = vld [vmem:[#allocation11 + $0x790] sm:$0xff]
    %v9736 = vld [vmem:[#allocation11 + $0x798] sm:$0xff]
    %v9737 = vld [vmem:[#allocation11 + $0x7a0] sm:$0xff]
    %v9738 = vld [vmem:[#allocation11 + $0x7a8] sm:$0xff]
    %v9739 = vld [vmem:[#allocation11 + $0x7b0] sm:$0xff]
    %v9740 = vld [vmem:[#allocation11 + $0x7b8] sm:$0xff]
    %v9741 = vld [vmem:[#allocation11 + $0x7c0] sm:$0xff]
    %v9742 = vld [vmem:[#allocation11 + $0x7c8] sm:$0xff]
    %v9743 = vld [vmem:[#allocation11 + $0x7d0] sm:$0xff]
    %v9744 = vld [vmem:[#allocation11 + $0x7d8] sm:$0xff]
    %v9745 = vld [vmem:[#allocation11 + $0x7e0] sm:$0xff]
    %v9746 = vld [vmem:[#allocation11 + $0x7e8] sm:$0xff]
    %v9747 = vld [vmem:[#allocation11 + $0x7f0] sm:$0xff]
    %v9748 = vld [vmem:[#allocation11 + $0x7f8] sm:$0xff]
    %v9749 = vld [vmem:[#allocation11 + $0x800] sm:$0xff]
    %v9750 = vld [vmem:[#allocation11 + $0x808] sm:$0xff]
    %v9751 = vld [vmem:[#allocation11 + $0x810] sm:$0xff]
    %v9752 = vld [vmem:[#allocation11 + $0x818] sm:$0xff]
    %v9753 = vld [vmem:[#allocation11 + $0x820] sm:$0xff]
    %v9754 = vld [vmem:[#allocation11 + $0x828] sm:$0xff]
    %v9755 = vld [vmem:[#allocation11 + $0x830] sm:$0xff]
    %v9756 = vld [vmem:[#allocation11 + $0x838] sm:$0xff]
    %v9757 = vld [vmem:[#allocation11 + $0x840] sm:$0xff]
    %v9758 = vld [vmem:[#allocation11 + $0x848] sm:$0xff]
    %v9759 = vld [vmem:[#allocation11 + $0x850] sm:$0xff]
    %v9760 = vld [vmem:[#allocation11 + $0x858] sm:$0xff]
    %v9761 = vld [vmem:[#allocation11 + $0x860] sm:$0xff]
    %v9762 = vld [vmem:[#allocation11 + $0x868] sm:$0xff]
    %v9763 = vld [vmem:[#allocation11 + $0x870] sm:$0xff]
    %v9764 = vld [vmem:[#allocation11 + $0x878] sm:$0xff]
    %v9765 = vld [vmem:[#allocation11 + $0x880] sm:$0xff]
    %v9766 = vld [vmem:[#allocation11 + $0x888] sm:$0xff]
    %v9767 = vld [vmem:[#allocation11 + $0x890] sm:$0xff]
    %v9768 = vld [vmem:[#allocation11 + $0x898] sm:$0xff]
    %v9769 = vld [vmem:[#allocation11 + $0x8a0] sm:$0xff]
    %v9770 = vld [vmem:[#allocation11 + $0x8a8] sm:$0xff]
    %v9771 = vld [vmem:[#allocation11 + $0x8b0] sm:$0xff]
    %v9772 = vld [vmem:[#allocation11 + $0x8b8] sm:$0xff]
    %v9773 = vld [vmem:[#allocation11 + $0x8c0] sm:$0xff]
    %v9774 = vld [vmem:[#allocation11 + $0x8c8] sm:$0xff]
    %v9775 = vld [vmem:[#allocation11 + $0x8d0] sm:$0xff]
    %v9776 = vld [vmem:[#allocation11 + $0x8d8] sm:$0xff]
    %v9777 = vld [vmem:[#allocation11 + $0x8e0] sm:$0xff]
    %v9778 = vld [vmem:[#allocation11 + $0x8e8] sm:$0xff]
    %v9779 = vld [vmem:[#allocation11 + $0x8f0] sm:$0xff]
    %v9780 = vld [vmem:[#allocation11 + $0x8f8] sm:$0xff]
    %v9781 = vld [vmem:[#allocation11 + $0x900] sm:$0xff]
    %v9782 = vld [vmem:[#allocation11 + $0x908] sm:$0xff]
    %v9783 = vld [vmem:[#allocation11 + $0x910] sm:$0xff]
    %v9784 = vld [vmem:[#allocation11 + $0x918] sm:$0xff]
    %v9785 = vld [vmem:[#allocation11 + $0x920] sm:$0xff]
    %v9786 = vld [vmem:[#allocation11 + $0x928] sm:$0xff]
    %v9787 = vld [vmem:[#allocation11 + $0x930] sm:$0xff]
    %v9788 = vld [vmem:[#allocation11 + $0x938] sm:$0xff]
    %v9789 = vld [vmem:[#allocation11 + $0x940] sm:$0xff]
    %v9790 = vld [vmem:[#allocation11 + $0x948] sm:$0xff]
    %v9791 = vld [vmem:[#allocation11 + $0x950] sm:$0xff]
    %v9792 = vld [vmem:[#allocation11 + $0x958] sm:$0xff]
    %v9793 = vld [vmem:[#allocation11 + $0x960] sm:$0xff]
    %v9794 = vld [vmem:[#allocation11 + $0x968] sm:$0xff]
    %v9795 = vld [vmem:[#allocation11 + $0x970] sm:$0xff]
    %v9796 = vld [vmem:[#allocation11 + $0x978] sm:$0xff]
    %v9797 = vld [vmem:[#allocation11 + $0x980] sm:$0xff]
    %v9798 = vld [vmem:[#allocation11 + $0x988] sm:$0xff]
    %v9799 = vld [vmem:[#allocation11 + $0x990] sm:$0xff]
    %v9800 = vld [vmem:[#allocation11 + $0x998] sm:$0xff]
    %v9801 = vld [vmem:[#allocation11 + $0x9a0] sm:$0xff]
    %v9802 = vld [vmem:[#allocation11 + $0x9a8] sm:$0xff]
    %v9803 = vld [vmem:[#allocation11 + $0x9b0] sm:$0xff]
    %v9804 = vld [vmem:[#allocation11 + $0x9b8] sm:$0xff]
    %v9805 = vld [vmem:[#allocation11 + $0x9c0] sm:$0xff]
    %v9806 = vld [vmem:[#allocation11 + $0x9c8] sm:$0xff]
    %v9807 = vld [vmem:[#allocation11 + $0x9d0] sm:$0xff]
    %v9808 = vld [vmem:[#allocation11 + $0x9d8] sm:$0xff]
    %v9809 = vld [vmem:[#allocation11 + $0x9e0] sm:$0xff]
    %v9810 = vld [vmem:[#allocation11 + $0x9e8] sm:$0xff]
    %v9811 = vld [vmem:[#allocation11 + $0x9f0] sm:$0xff]
    %v9812 = vld [vmem:[#allocation11 + $0x9f8] sm:$0xff]
    %v9813 = vld [vmem:[#allocation11 + $0xa00] sm:$0xff]
    %v9814 = vld [vmem:[#allocation11 + $0xa08] sm:$0xff]
    %v9815 = vld [vmem:[#allocation11 + $0xa10] sm:$0xff]
    %v9816 = vld [vmem:[#allocation11 + $0xa18] sm:$0xff]
    %v9817 = vld [vmem:[#allocation11 + $0xa20] sm:$0xff]
    %v9818 = vld [vmem:[#allocation11 + $0xa28] sm:$0xff]
    %v9819 = vld [vmem:[#allocation11 + $0xa30] sm:$0xff]
    %v9820 = vld [vmem:[#allocation11 + $0xa38] sm:$0xff]
    %v9821 = vld [vmem:[#allocation11 + $0xa40] sm:$0xff]
    %v9822 = vld [vmem:[#allocation11 + $0xa48] sm:$0xff]
    %v9823 = vld [vmem:[#allocation11 + $0xa50] sm:$0xff]
    %v9824 = vld [vmem:[#allocation11 + $0xa58] sm:$0xff]
    %v9825 = vld [vmem:[#allocation11 + $0xa60] sm:$0xff]
    %v9826 = vld [vmem:[#allocation11 + $0xa68] sm:$0xff]
    %v9827 = vld [vmem:[#allocation11 + $0xa70] sm:$0xff]
    %v9828 = vld [vmem:[#allocation11 + $0xa78] sm:$0xff]
    %v9829 = vld [vmem:[#allocation11 + $0xa80] sm:$0xff]
    %v9830 = vld [vmem:[#allocation11 + $0xa88] sm:$0xff]
    %v9831 = vld [vmem:[#allocation11 + $0xa90] sm:$0xff]
    %v9832 = vld [vmem:[#allocation11 + $0xa98] sm:$0xff]
    %v9833 = vld [vmem:[#allocation11 + $0xaa0] sm:$0xff]
    %v9834 = vld [vmem:[#allocation11 + $0xaa8] sm:$0xff]
    %v9835 = vld [vmem:[#allocation11 + $0xab0] sm:$0xff]
    %v9836 = vld [vmem:[#allocation11 + $0xab8] sm:$0xff]
    %v9837 = vld [vmem:[#allocation11 + $0xac0] sm:$0xff]
    %v9838 = vld [vmem:[#allocation11 + $0xac8] sm:$0xff]
    %v9839 = vld [vmem:[#allocation11 + $0xad0] sm:$0xff]
    %v9840 = vld [vmem:[#allocation11 + $0xad8] sm:$0xff]
    %v9841 = vld [vmem:[#allocation11 + $0xae0] sm:$0xff]
    %v9842 = vld [vmem:[#allocation11 + $0xae8] sm:$0xff]
    %v9843 = vld [vmem:[#allocation11 + $0xaf0] sm:$0xff]
    %v9844 = vld [vmem:[#allocation11 + $0xaf8] sm:$0xff]
    %v9845 = vld [vmem:[#allocation11 + $0xb00] sm:$0xff]
    %v9846 = vld [vmem:[#allocation11 + $0xb08] sm:$0xff]
    %v9847 = vld [vmem:[#allocation11 + $0xb10] sm:$0xff]
    %v9848 = vld [vmem:[#allocation11 + $0xb18] sm:$0xff]
    %v9849 = vld [vmem:[#allocation11 + $0xb20] sm:$0xff]
    %v9850 = vld [vmem:[#allocation11 + $0xb28] sm:$0xff]
    %v9851 = vld [vmem:[#allocation11 + $0xb30] sm:$0xff]
    %v9852 = vld [vmem:[#allocation11 + $0xb38] sm:$0xff]
    %v9853 = vld [vmem:[#allocation11 + $0xb40] sm:$0xff]
    %v9854 = vld [vmem:[#allocation11 + $0xb48] sm:$0xff]
    %v9855 = vld [vmem:[#allocation11 + $0xb50] sm:$0xff]
    %v9856 = vld [vmem:[#allocation11 + $0xb58] sm:$0xff]
    %v9857 = vld [vmem:[#allocation11 + $0xb60] sm:$0xff]
    %v9858 = vld [vmem:[#allocation11 + $0xb68] sm:$0xff]
    %v9859 = vld [vmem:[#allocation11 + $0xb70] sm:$0xff]
    %v9860 = vld [vmem:[#allocation11 + $0xb78] sm:$0xff]
    %v9861 = vld [vmem:[#allocation11 + $0xb80] sm:$0xff]
    %v9862 = vld [vmem:[#allocation11 + $0xb88] sm:$0xff]
    %v9863 = vld [vmem:[#allocation11 + $0xb90] sm:$0xff]
    %v9864 = vld [vmem:[#allocation11 + $0xb98] sm:$0xff]
    %v9865 = vld [vmem:[#allocation11 + $0xba0] sm:$0xff]
    %v9866 = vld [vmem:[#allocation11 + $0xba8] sm:$0xff]
    %v9867 = vld [vmem:[#allocation11 + $0xbb0] sm:$0xff]
    %v9868 = vld [vmem:[#allocation11 + $0xbb8] sm:$0xff]
    %v9869 = vld [vmem:[#allocation11 + $0xbc0] sm:$0xff]
    %v9870 = vld [vmem:[#allocation11 + $0xbc8] sm:$0xff]
    %v9871 = vld [vmem:[#allocation11 + $0xbd0] sm:$0xff]
    %v9872 = vld [vmem:[#allocation11 + $0xbd8] sm:$0xff]
    %v9873 = vld [vmem:[#allocation11 + $0xbe0] sm:$0xff]
    %v9874 = vld [vmem:[#allocation11 + $0xbe8] sm:$0xff]
    %v9875 = vld [vmem:[#allocation11 + $0xbf0] sm:$0xff]
    %v9876 = vld [vmem:[#allocation11 + $0xbf8] sm:$0xff]
    %v9877 = vld [vmem:[#allocation11 + $0xc00] sm:$0xff]
    %v9878 = vld [vmem:[#allocation11 + $0xc08] sm:$0xff]
    %v9879 = vld [vmem:[#allocation11 + $0xc10] sm:$0xff]
    %v9880 = vld [vmem:[#allocation11 + $0xc18] sm:$0xff]
    %v9881 = vld [vmem:[#allocation11 + $0xc20] sm:$0xff]
    %v9882 = vld [vmem:[#allocation11 + $0xc28] sm:$0xff]
    %v9883 = vld [vmem:[#allocation11 + $0xc30] sm:$0xff]
    %v9884 = vld [vmem:[#allocation11 + $0xc38] sm:$0xff]
    %v9885 = vld [vmem:[#allocation11 + $0xc40] sm:$0xff]
    %v9886 = vld [vmem:[#allocation11 + $0xc48] sm:$0xff]
    %v9887 = vld [vmem:[#allocation11 + $0xc50] sm:$0xff]
    %v9888 = vld [vmem:[#allocation11 + $0xc58] sm:$0xff]
    %v9889 = vld [vmem:[#allocation11 + $0xc60] sm:$0xff]
    %v9890 = vld [vmem:[#allocation11 + $0xc68] sm:$0xff]
    %v9891 = vld [vmem:[#allocation11 + $0xc70] sm:$0xff]
    %v9892 = vld [vmem:[#allocation11 + $0xc78] sm:$0xff]
    %v9893 = vld [vmem:[#allocation11 + $0xc80] sm:$0xff]
    %v9894 = vld [vmem:[#allocation11 + $0xc88] sm:$0xff]
    %v9895 = vld [vmem:[#allocation11 + $0xc90] sm:$0xff]
    %v9896 = vld [vmem:[#allocation11 + $0xc98] sm:$0xff]
    %v9897 = vld [vmem:[#allocation11 + $0xca0] sm:$0xff]
    %v9898 = vld [vmem:[#allocation11 + $0xca8] sm:$0xff]
    %v9899 = vld [vmem:[#allocation11 + $0xcb0] sm:$0xff]
    %v9900 = vld [vmem:[#allocation11 + $0xcb8] sm:$0xff]
    %v9901 = vld [vmem:[#allocation11 + $0xcc0] sm:$0xff]
    %v9902 = vld [vmem:[#allocation11 + $0xcc8] sm:$0xff]
    %v9903 = vld [vmem:[#allocation11 + $0xcd0] sm:$0xff]
    %v9904 = vld [vmem:[#allocation11 + $0xcd8] sm:$0xff]
    %v9905 = vld [vmem:[#allocation11 + $0xce0] sm:$0xff]
    %v9906 = vld [vmem:[#allocation11 + $0xce8] sm:$0xff]
    %v9907 = vld [vmem:[#allocation11 + $0xcf0] sm:$0xff]
    %v9908 = vld [vmem:[#allocation11 + $0xcf8] sm:$0xff]
    %v9909 = vld [vmem:[#allocation11 + $0xd00] sm:$0xff]
    %v9910 = vld [vmem:[#allocation11 + $0xd08] sm:$0xff]
    %v9911 = vld [vmem:[#allocation11 + $0xd10] sm:$0xff]
    %v9912 = vld [vmem:[#allocation11 + $0xd18] sm:$0xff]
    %v9913 = vld [vmem:[#allocation11 + $0xd20] sm:$0xff]
    %v9914 = vld [vmem:[#allocation11 + $0xd28] sm:$0xff]
    %v9915 = vld [vmem:[#allocation11 + $0xd30] sm:$0xff]
    %v9916 = vld [vmem:[#allocation11 + $0xd38] sm:$0xff]
    %v9917 = vld [vmem:[#allocation11 + $0xd40] sm:$0xff]
    %v9918 = vld [vmem:[#allocation11 + $0xd48] sm:$0xff]
    %v9919 = vld [vmem:[#allocation11 + $0xd50] sm:$0xff]
    %v9920 = vld [vmem:[#allocation11 + $0xd58] sm:$0xff]
    %v9921 = vld [vmem:[#allocation11 + $0xd60] sm:$0xff]
    %v9922 = vld [vmem:[#allocation11 + $0xd68] sm:$0xff]
    %v9923 = vld [vmem:[#allocation11 + $0xd70] sm:$0xff]
    %v9924 = vld [vmem:[#allocation11 + $0xd78] sm:$0xff]
    %v9925 = vld [vmem:[#allocation11 + $0xd80] sm:$0xff]
    %v9926 = vld [vmem:[#allocation11 + $0xd88] sm:$0xff]
    %v9927 = vld [vmem:[#allocation11 + $0xd90] sm:$0xff]
    %v9928 = vld [vmem:[#allocation11 + $0xd98] sm:$0xff]
    %v9929 = vld [vmem:[#allocation11 + $0xda0] sm:$0xff]
    %v9930 = vld [vmem:[#allocation11 + $0xda8] sm:$0xff]
    %v9931 = vld [vmem:[#allocation11 + $0xdb0] sm:$0xff]
    %v9932 = vld [vmem:[#allocation11 + $0xdb8] sm:$0xff]
    %v9933 = vld [vmem:[#allocation11 + $0xdc0] sm:$0xff]
    %v9934 = vld [vmem:[#allocation11 + $0xdc8] sm:$0xff]
    %v9935 = vld [vmem:[#allocation11 + $0xdd0] sm:$0xff]
    %v9936 = vld [vmem:[#allocation11 + $0xdd8] sm:$0xff]
    %v9937 = vld [vmem:[#allocation11 + $0xde0] sm:$0xff]
    %v9938 = vld [vmem:[#allocation11 + $0xde8] sm:$0xff]
    %v9939 = vld [vmem:[#allocation11 + $0xdf0] sm:$0xff]
    %v9940 = vld [vmem:[#allocation11 + $0xdf8] sm:$0xff]
    %v9941 = vld [vmem:[#allocation11 + $0xe00] sm:$0xff]
    %v9942 = vld [vmem:[#allocation11 + $0xe08] sm:$0xff]
    %v9943 = vld [vmem:[#allocation11 + $0xe10] sm:$0xff]
    %v9944 = vld [vmem:[#allocation11 + $0xe18] sm:$0xff]
    %v9945 = vld [vmem:[#allocation11 + $0xe20] sm:$0xff]
    %v9946 = vld [vmem:[#allocation11 + $0xe28] sm:$0xff]
    %v9947 = vld [vmem:[#allocation11 + $0xe30] sm:$0xff]
    %v9948 = vld [vmem:[#allocation11 + $0xe38] sm:$0xff]
    %v9949 = vld [vmem:[#allocation11 + $0xe40] sm:$0xff]
    %v9950 = vld [vmem:[#allocation11 + $0xe48] sm:$0xff]
    %v9951 = vld [vmem:[#allocation11 + $0xe50] sm:$0xff]
    %v9952 = vld [vmem:[#allocation11 + $0xe58] sm:$0xff]
    %v9953 = vld [vmem:[#allocation11 + $0xe60] sm:$0xff]
    %v9954 = vld [vmem:[#allocation11 + $0xe68] sm:$0xff]
    %v9955 = vld [vmem:[#allocation11 + $0xe70] sm:$0xff]
    %v9956 = vld [vmem:[#allocation11 + $0xe78] sm:$0xff]
    %v9957 = vld [vmem:[#allocation11 + $0xe80] sm:$0xff]
    %v9958 = vld [vmem:[#allocation11 + $0xe88] sm:$0xff]
    %v9959 = vld [vmem:[#allocation11 + $0xe90] sm:$0xff]
    %v9960 = vld [vmem:[#allocation11 + $0xe98] sm:$0xff]
    %v9961 = vld [vmem:[#allocation11 + $0xea0] sm:$0xff]
    %v9962 = vld [vmem:[#allocation11 + $0xea8] sm:$0xff]
    %v9963 = vld [vmem:[#allocation11 + $0xeb0] sm:$0xff]
    %v9964 = vld [vmem:[#allocation11 + $0xeb8] sm:$0xff]
    %v9965 = vld [vmem:[#allocation11 + $0xec0] sm:$0xff]
    %v9966 = vld [vmem:[#allocation11 + $0xec8] sm:$0xff]
    %v9967 = vld [vmem:[#allocation11 + $0xed0] sm:$0xff]
    %v9968 = vld [vmem:[#allocation11 + $0xed8] sm:$0xff]
    %v9969 = vld [vmem:[#allocation11 + $0xee0] sm:$0xff]
    %v9970 = vld [vmem:[#allocation11 + $0xee8] sm:$0xff]
    %v9971 = vld [vmem:[#allocation11 + $0xef0] sm:$0xff]
    %v9972 = vld [vmem:[#allocation11 + $0xef8] sm:$0xff]
    %v9973 = vld [vmem:[#allocation11 + $0xf00] sm:$0xff]
    %v9974 = vld [vmem:[#allocation11 + $0xf08] sm:$0xff]
    %v9975 = vld [vmem:[#allocation11 + $0xf10] sm:$0xff]
    %v9976 = vld [vmem:[#allocation11 + $0xf18] sm:$0xff]
    %v9977 = vld [vmem:[#allocation11 + $0xf20] sm:$0xff]
    %v9978 = vld [vmem:[#allocation11 + $0xf28] sm:$0xff]
    %v9979 = vld [vmem:[#allocation11 + $0xf30] sm:$0xff]
    %v9980 = vld [vmem:[#allocation11 + $0xf38] sm:$0xff]
    %v9981 = vld [vmem:[#allocation11 + $0xf40] sm:$0xff]
    %v9982 = vld [vmem:[#allocation11 + $0xf48] sm:$0xff]
    %v9983 = vld [vmem:[#allocation11 + $0xf50] sm:$0xff]
    %v9984 = vld [vmem:[#allocation11 + $0xf58] sm:$0xff]
    %v9985 = vld [vmem:[#allocation11 + $0xf60] sm:$0xff]
    %v9986 = vld [vmem:[#allocation11 + $0xf68] sm:$0xff]
    %v9987 = vld [vmem:[#allocation11 + $0xf70] sm:$0xff]
    %v9988 = vld [vmem:[#allocation11 + $0xf78] sm:$0xff]
    %v9989 = vld [vmem:[#allocation11 + $0xf80] sm:$0xff]
    %v9990 = vld [vmem:[#allocation11 + $0xf88] sm:$0xff]
    %v9991 = vld [vmem:[#allocation11 + $0xf90] sm:$0xff]
    %v9992 = vld [vmem:[#allocation11 + $0xf98] sm:$0xff]
    %v9993 = vld [vmem:[#allocation11 + $0xfa0] sm:$0xff]
    %v9994 = vld [vmem:[#allocation11 + $0xfa8] sm:$0xff]
    %v9995 = vld [vmem:[#allocation11 + $0xfb0] sm:$0xff]
    %v9996 = vld [vmem:[#allocation11 + $0xfb8] sm:$0xff]
    %v9997 = vld [vmem:[#allocation11 + $0xfc0] sm:$0xff]
    %v9998 = vld [vmem:[#allocation11 + $0xfc8] sm:$0xff]
    %v9999 = vld [vmem:[#allocation11 + $0xfd0] sm:$0xff]
    %v10000 = vld [vmem:[#allocation11 + $0xfd8] sm:$0xff]
    %v10001 = vld [vmem:[#allocation11 + $0xfe0] sm:$0xff]
    %v10002 = vld [vmem:[#allocation11 + $0xfe8] sm:$0xff]
    %v10003 = vld [vmem:[#allocation11 + $0xff0] sm:$0xff]
    %v10004 = vld [vmem:[#allocation11 + $0xff8] sm:$0xff]
    %v10005 = vld [vmem:[#allocation12] sm:$0xff]
    %v10007 = vlaneseq
    %v10008 = vshrl.u32 %v10007, 7
    %v10009 = vsub.s32 0, %v10008
    %v10010 = vrot.slane %v10005, %v10009
    %v10011 = vlaneseq
    %v10012 = vshrl.u32 %v10011, 7
    %v10013 = vsub.s32 1, %v10012
    %v10014 = vrot.slane %v10005, %v10013
    %v10015 = vlaneseq
    %v10016 = vshrl.u32 %v10015, 7
    %v10017 = vsub.s32 2, %v10016
    %v10018 = vrot.slane %v10005, %v10017
    %v10019 = vlaneseq
    %v10020 = vshrl.u32 %v10019, 7
    %v10021 = vsub.s32 3, %v10020
    %v10022 = vrot.slane %v10005, %v10021
    %v10023 = vlaneseq
    %v10024 = vshrl.u32 %v10023, 7
    %v10025 = vsub.s32 4, %v10024
    %v10026 = vrot.slane %v10005, %v10025
    %v10027 = vlaneseq
    %v10028 = vshrl.u32 %v10027, 7
    %v10029 = vsub.s32 5, %v10028
    %v10030 = vrot.slane %v10005, %v10029
    %v10031 = vlaneseq
    %v10032 = vshrl.u32 %v10031, 7
    %v10033 = vsub.s32 6, %v10032
    %v10034 = vrot.slane %v10005, %v10033
    %v10035 = vlaneseq
    %v10036 = vshrl.u32 %v10035, 7
    %v10037 = vsub.s32 7, %v10036
    %v10038 = vrot.slane %v10005, %v10037
    %v10051 = vunpack.c.l.b16 %v9489
    %v10052 = vunpack.c.h.b16 %v9489
    %v10053 = vunpack.c.l.b16 %v9490
    %v10054 = vunpack.c.h.b16 %v9490
    %v10055 = vunpack.c.l.b16 %v9491
    %v10056 = vunpack.c.h.b16 %v9491
    %v10057 = vunpack.c.l.b16 %v9492
    %v10058 = vunpack.c.h.b16 %v9492
    %v10059 = vpack.c.b16 %v10051, %v10051
    %v10060 = vpack.c.b16 %v10052, %v10052
    %v10061 = vpack.c.b16 %v10053, %v10053
    %v10062 = vpack.c.b16 %v10054, %v10054
    %v10063 = vpack.c.b16 %v10055, %v10055
    %v10064 = vpack.c.b16 %v10056, %v10056
    %v10065 = vpack.c.b16 %v10057, %v10057
    %v10066 = vpack.c.b16 %v10058, %v10058
    %v10587 = vunpack.c.l.b16 %v9493
    %v10588 = vunpack.c.h.b16 %v9493
    %v10589 = vunpack.c.l.b16 %v9494
    %v10590 = vunpack.c.h.b16 %v9494
    %v10591 = vunpack.c.l.b16 %v9495
    %v10592 = vunpack.c.h.b16 %v9495
    %v10593 = vunpack.c.l.b16 %v9496
    %v10594 = vunpack.c.h.b16 %v9496
    %v10595 = vunpack.c.l.b16 %v9497
    %v10596 = vunpack.c.h.b16 %v9497
    %v10597 = vunpack.c.l.b16 %v9498
    %v10598 = vunpack.c.h.b16 %v9498
    %v10599 = vunpack.c.l.b16 %v9499
    %v10600 = vunpack.c.h.b16 %v9499
    %v10601 = vunpack.c.l.b16 %v9500
    %v10602 = vunpack.c.h.b16 %v9500
    %v10603 = vunpack.c.l.b16 %v9501
    %v10604 = vunpack.c.h.b16 %v9501
    %v10605 = vunpack.c.l.b16 %v9502
    %v10606 = vunpack.c.h.b16 %v9502
    %v10607 = vunpack.c.l.b16 %v9503
    %v10608 = vunpack.c.h.b16 %v9503
    %v10609 = vunpack.c.l.b16 %v9504
    %v10610 = vunpack.c.h.b16 %v9504
    %v10611 = vunpack.c.l.b16 %v9505
    %v10612 = vunpack.c.h.b16 %v9505
    %v10613 = vunpack.c.l.b16 %v9506
    %v10614 = vunpack.c.h.b16 %v9506
    %v10615 = vunpack.c.l.b16 %v9507
    %v10616 = vunpack.c.h.b16 %v9507
    %v10617 = vunpack.c.l.b16 %v9508
    %v10618 = vunpack.c.h.b16 %v9508
    %v10619 = vunpack.c.l.b16 %v9509
    %v10620 = vunpack.c.h.b16 %v9509
    %v10621 = vunpack.c.l.b16 %v9510
    %v10622 = vunpack.c.h.b16 %v9510
    %v10623 = vunpack.c.l.b16 %v9511
    %v10624 = vunpack.c.h.b16 %v9511
    %v10625 = vunpack.c.l.b16 %v9512
    %v10626 = vunpack.c.h.b16 %v9512
    %v10627 = vunpack.c.l.b16 %v9513
    %v10628 = vunpack.c.h.b16 %v9513
    %v10629 = vunpack.c.l.b16 %v9514
    %v10630 = vunpack.c.h.b16 %v9514
    %v10631 = vunpack.c.l.b16 %v9515
    %v10632 = vunpack.c.h.b16 %v9515
    %v10633 = vunpack.c.l.b16 %v9516
    %v10634 = vunpack.c.h.b16 %v9516
    %v10635 = vunpack.c.l.b16 %v9517
    %v10636 = vunpack.c.h.b16 %v9517
    %v10637 = vunpack.c.l.b16 %v9518
    %v10638 = vunpack.c.h.b16 %v9518
    %v10639 = vunpack.c.l.b16 %v9519
    %v10640 = vunpack.c.h.b16 %v9519
    %v10641 = vunpack.c.l.b16 %v9520
    %v10642 = vunpack.c.h.b16 %v9520
    %v10643 = vunpack.c.l.b16 %v9521
    %v10644 = vunpack.c.h.b16 %v9521
    %v10645 = vunpack.c.l.b16 %v9522
    %v10646 = vunpack.c.h.b16 %v9522
    %v10647 = vunpack.c.l.b16 %v9523
    %v10648 = vunpack.c.h.b16 %v9523
    %v10649 = vunpack.c.l.b16 %v9524
    %v10650 = vunpack.c.h.b16 %v9524
    %v10651 = vunpack.c.l.b16 %v9525
    %v10652 = vunpack.c.h.b16 %v9525
    %v10653 = vunpack.c.l.b16 %v9526
    %v10654 = vunpack.c.h.b16 %v9526
    %v10655 = vunpack.c.l.b16 %v9527
    %v10656 = vunpack.c.h.b16 %v9527
    %v10657 = vunpack.c.l.b16 %v9528
    %v10658 = vunpack.c.h.b16 %v9528
    %v10659 = vunpack.c.l.b16 %v9529
    %v10660 = vunpack.c.h.b16 %v9529
    %v10661 = vunpack.c.l.b16 %v9530
    %v10662 = vunpack.c.h.b16 %v9530
    %v10663 = vunpack.c.l.b16 %v9531
    %v10664 = vunpack.c.h.b16 %v9531
    %v10665 = vunpack.c.l.b16 %v9532
    %v10666 = vunpack.c.h.b16 %v9532
    %v10667 = vunpack.c.l.b16 %v9533
    %v10668 = vunpack.c.h.b16 %v9533
    %v10669 = vunpack.c.l.b16 %v9534
    %v10670 = vunpack.c.h.b16 %v9534
    %v10671 = vunpack.c.l.b16 %v9535
    %v10672 = vunpack.c.h.b16 %v9535
    %v10673 = vunpack.c.l.b16 %v9536
    %v10674 = vunpack.c.h.b16 %v9536
    %v10675 = vunpack.c.l.b16 %v9537
    %v10676 = vunpack.c.h.b16 %v9537
    %v10677 = vunpack.c.l.b16 %v9538
    %v10678 = vunpack.c.h.b16 %v9538
    %v10679 = vunpack.c.l.b16 %v9539
    %v10680 = vunpack.c.h.b16 %v9539
    %v10681 = vunpack.c.l.b16 %v9540
    %v10682 = vunpack.c.h.b16 %v9540
    %v10683 = vunpack.c.l.b16 %v9541
    %v10684 = vunpack.c.h.b16 %v9541
    %v10685 = vunpack.c.l.b16 %v9542
    %v10686 = vunpack.c.h.b16 %v9542
    %v10687 = vunpack.c.l.b16 %v9543
    %v10688 = vunpack.c.h.b16 %v9543
    %v10689 = vunpack.c.l.b16 %v9544
    %v10690 = vunpack.c.h.b16 %v9544
    %v10691 = vunpack.c.l.b16 %v9545
    %v10692 = vunpack.c.h.b16 %v9545
    %v10693 = vunpack.c.l.b16 %v9546
    %v10694 = vunpack.c.h.b16 %v9546
    %v10695 = vunpack.c.l.b16 %v9547
    %v10696 = vunpack.c.h.b16 %v9547
    %v10697 = vunpack.c.l.b16 %v9548
    %v10698 = vunpack.c.h.b16 %v9548
    %v10699 = vunpack.c.l.b16 %v9549
    %v10700 = vunpack.c.h.b16 %v9549
    %v10701 = vunpack.c.l.b16 %v9550
    %v10702 = vunpack.c.h.b16 %v9550
    %v10703 = vunpack.c.l.b16 %v9551
    %v10704 = vunpack.c.h.b16 %v9551
    %v10705 = vunpack.c.l.b16 %v9552
    %v10706 = vunpack.c.h.b16 %v9552
    %v10707 = vunpack.c.l.b16 %v9553
    %v10708 = vunpack.c.h.b16 %v9553
    %v10709 = vunpack.c.l.b16 %v9554
    %v10710 = vunpack.c.h.b16 %v9554
    %v10711 = vunpack.c.l.b16 %v9555
    %v10712 = vunpack.c.h.b16 %v9555
    %v10713 = vunpack.c.l.b16 %v9556
    %v10714 = vunpack.c.h.b16 %v9556
    %v10715 = vunpack.c.l.b16 %v9557
    %v10716 = vunpack.c.h.b16 %v9557
    %v10717 = vunpack.c.l.b16 %v9558
    %v10718 = vunpack.c.h.b16 %v9558
    %v10719 = vunpack.c.l.b16 %v9559
    %v10720 = vunpack.c.h.b16 %v9559
    %v10721 = vunpack.c.l.b16 %v9560
    %v10722 = vunpack.c.h.b16 %v9560
    %v10723 = vunpack.c.l.b16 %v9561
    %v10724 = vunpack.c.h.b16 %v9561
    %v10725 = vunpack.c.l.b16 %v9562
    %v10726 = vunpack.c.h.b16 %v9562
    %v10727 = vunpack.c.l.b16 %v9563
    %v10728 = vunpack.c.h.b16 %v9563
    %v10729 = vunpack.c.l.b16 %v9564
    %v10730 = vunpack.c.h.b16 %v9564
    %v10731 = vunpack.c.l.b16 %v9565
    %v10732 = vunpack.c.h.b16 %v9565
    %v10733 = vunpack.c.l.b16 %v9566
    %v10734 = vunpack.c.h.b16 %v9566
    %v10735 = vunpack.c.l.b16 %v9567
    %v10736 = vunpack.c.h.b16 %v9567
    %v10737 = vunpack.c.l.b16 %v9568
    %v10738 = vunpack.c.h.b16 %v9568
    %v10739 = vunpack.c.l.b16 %v9569
    %v10740 = vunpack.c.h.b16 %v9569
    %v10741 = vunpack.c.l.b16 %v9570
    %v10742 = vunpack.c.h.b16 %v9570
    %v10743 = vunpack.c.l.b16 %v9571
    %v10744 = vunpack.c.h.b16 %v9571
    %v10745 = vunpack.c.l.b16 %v9572
    %v10746 = vunpack.c.h.b16 %v9572
    %v10747 = vunpack.c.l.b16 %v9573
    %v10748 = vunpack.c.h.b16 %v9573
    %v10749 = vunpack.c.l.b16 %v9574
    %v10750 = vunpack.c.h.b16 %v9574
    %v10751 = vunpack.c.l.b16 %v9575
    %v10752 = vunpack.c.h.b16 %v9575
    %v10753 = vunpack.c.l.b16 %v9576
    %v10754 = vunpack.c.h.b16 %v9576
    %v10755 = vunpack.c.l.b16 %v9577
    %v10756 = vunpack.c.h.b16 %v9577
    %v10757 = vunpack.c.l.b16 %v9578
    %v10758 = vunpack.c.h.b16 %v9578
    %v10759 = vunpack.c.l.b16 %v9579
    %v10760 = vunpack.c.h.b16 %v9579
    %v10761 = vunpack.c.l.b16 %v9580
    %v10762 = vunpack.c.h.b16 %v9580
    %v10763 = vunpack.c.l.b16 %v9581
    %v10764 = vunpack.c.h.b16 %v9581
    %v10765 = vunpack.c.l.b16 %v9582
    %v10766 = vunpack.c.h.b16 %v9582
    %v10767 = vunpack.c.l.b16 %v9583
    %v10768 = vunpack.c.h.b16 %v9583
    %v10769 = vunpack.c.l.b16 %v9584
    %v10770 = vunpack.c.h.b16 %v9584
    %v10771 = vunpack.c.l.b16 %v9585
    %v10772 = vunpack.c.h.b16 %v9585
    %v10773 = vunpack.c.l.b16 %v9586
    %v10774 = vunpack.c.h.b16 %v9586
    %v10775 = vunpack.c.l.b16 %v9587
    %v10776 = vunpack.c.h.b16 %v9587
    %v10777 = vunpack.c.l.b16 %v9588
    %v10778 = vunpack.c.h.b16 %v9588
    %v10779 = vunpack.c.l.b16 %v9589
    %v10780 = vunpack.c.h.b16 %v9589
    %v10781 = vunpack.c.l.b16 %v9590
    %v10782 = vunpack.c.h.b16 %v9590
    %v10783 = vunpack.c.l.b16 %v9591
    %v10784 = vunpack.c.h.b16 %v9591
    %v10785 = vunpack.c.l.b16 %v9592
    %v10786 = vunpack.c.h.b16 %v9592
    %v10787 = vunpack.c.l.b16 %v9593
    %v10788 = vunpack.c.h.b16 %v9593
    %v10789 = vunpack.c.l.b16 %v9594
    %v10790 = vunpack.c.h.b16 %v9594
    %v10791 = vunpack.c.l.b16 %v9595
    %v10792 = vunpack.c.h.b16 %v9595
    %v10793 = vunpack.c.l.b16 %v9596
    %v10794 = vunpack.c.h.b16 %v9596
    %v10795 = vunpack.c.l.b16 %v9597
    %v10796 = vunpack.c.h.b16 %v9597
    %v10797 = vunpack.c.l.b16 %v9598
    %v10798 = vunpack.c.h.b16 %v9598
    %v10799 = vunpack.c.l.b16 %v9599
    %v10800 = vunpack.c.h.b16 %v9599
    %v10801 = vunpack.c.l.b16 %v9600
    %v10802 = vunpack.c.h.b16 %v9600
    %v10803 = vunpack.c.l.b16 %v9601
    %v10804 = vunpack.c.h.b16 %v9601
    %v10805 = vunpack.c.l.b16 %v9602
    %v10806 = vunpack.c.h.b16 %v9602
    %v10807 = vunpack.c.l.b16 %v9603
    %v10808 = vunpack.c.h.b16 %v9603
    %v10809 = vunpack.c.l.b16 %v9604
    %v10810 = vunpack.c.h.b16 %v9604
    %v10811 = vunpack.c.l.b16 %v9605
    %v10812 = vunpack.c.h.b16 %v9605
    %v10813 = vunpack.c.l.b16 %v9606
    %v10814 = vunpack.c.h.b16 %v9606
    %v10815 = vunpack.c.l.b16 %v9607
    %v10816 = vunpack.c.h.b16 %v9607
    %v10817 = vunpack.c.l.b16 %v9608
    %v10818 = vunpack.c.h.b16 %v9608
    %v10819 = vunpack.c.l.b16 %v9609
    %v10820 = vunpack.c.h.b16 %v9609
    %v10821 = vunpack.c.l.b16 %v9610
    %v10822 = vunpack.c.h.b16 %v9610
    %v10823 = vunpack.c.l.b16 %v9611
    %v10824 = vunpack.c.h.b16 %v9611
    %v10825 = vunpack.c.l.b16 %v9612
    %v10826 = vunpack.c.h.b16 %v9612
    %v10827 = vunpack.c.l.b16 %v9613
    %v10828 = vunpack.c.h.b16 %v9613
    %v10829 = vunpack.c.l.b16 %v9614
    %v10830 = vunpack.c.h.b16 %v9614
    %v10831 = vunpack.c.l.b16 %v9615
    %v10832 = vunpack.c.h.b16 %v9615
    %v10833 = vunpack.c.l.b16 %v9616
    %v10834 = vunpack.c.h.b16 %v9616
    %v10835 = vunpack.c.l.b16 %v9617
    %v10836 = vunpack.c.h.b16 %v9617
    %v10837 = vunpack.c.l.b16 %v9618
    %v10838 = vunpack.c.h.b16 %v9618
    %v10839 = vunpack.c.l.b16 %v9619
    %v10840 = vunpack.c.h.b16 %v9619
    %v10841 = vunpack.c.l.b16 %v9620
    %v10842 = vunpack.c.h.b16 %v9620
    %v10843 = vunpack.c.l.b16 %v9621
    %v10844 = vunpack.c.h.b16 %v9621
    %v10845 = vunpack.c.l.b16 %v9622
    %v10846 = vunpack.c.h.b16 %v9622
    %v10847 = vunpack.c.l.b16 %v9623
    %v10848 = vunpack.c.h.b16 %v9623
    %v10849 = vunpack.c.l.b16 %v9624
    %v10850 = vunpack.c.h.b16 %v9624
    %v10851 = vunpack.c.l.b16 %v9625
    %v10852 = vunpack.c.h.b16 %v9625
    %v10853 = vunpack.c.l.b16 %v9626
    %v10854 = vunpack.c.h.b16 %v9626
    %v10855 = vunpack.c.l.b16 %v9627
    %v10856 = vunpack.c.h.b16 %v9627
    %v10857 = vunpack.c.l.b16 %v9628
    %v10858 = vunpack.c.h.b16 %v9628
    %v10859 = vunpack.c.l.b16 %v9629
    %v10860 = vunpack.c.h.b16 %v9629
    %v10861 = vunpack.c.l.b16 %v9630
    %v10862 = vunpack.c.h.b16 %v9630
    %v10863 = vunpack.c.l.b16 %v9631
    %v10864 = vunpack.c.h.b16 %v9631
    %v10865 = vunpack.c.l.b16 %v9632
    %v10866 = vunpack.c.h.b16 %v9632
    %v10867 = vunpack.c.l.b16 %v9633
    %v10868 = vunpack.c.h.b16 %v9633
    %v10869 = vunpack.c.l.b16 %v9634
    %v10870 = vunpack.c.h.b16 %v9634
    %v10871 = vunpack.c.l.b16 %v9635
    %v10872 = vunpack.c.h.b16 %v9635
    %v10873 = vunpack.c.l.b16 %v9636
    %v10874 = vunpack.c.h.b16 %v9636
    %v10875 = vunpack.c.l.b16 %v9637
    %v10876 = vunpack.c.h.b16 %v9637
    %v10877 = vunpack.c.l.b16 %v9638
    %v10878 = vunpack.c.h.b16 %v9638
    %v10879 = vunpack.c.l.b16 %v9639
    %v10880 = vunpack.c.h.b16 %v9639
    %v10881 = vunpack.c.l.b16 %v9640
    %v10882 = vunpack.c.h.b16 %v9640
    %v10883 = vunpack.c.l.b16 %v9641
    %v10884 = vunpack.c.h.b16 %v9641
    %v10885 = vunpack.c.l.b16 %v9642
    %v10886 = vunpack.c.h.b16 %v9642
    %v10887 = vunpack.c.l.b16 %v9643
    %v10888 = vunpack.c.h.b16 %v9643
    %v10889 = vunpack.c.l.b16 %v9644
    %v10890 = vunpack.c.h.b16 %v9644
    %v10891 = vunpack.c.l.b16 %v9645
    %v10892 = vunpack.c.h.b16 %v9645
    %v10893 = vunpack.c.l.b16 %v9646
    %v10894 = vunpack.c.h.b16 %v9646
    %v10895 = vunpack.c.l.b16 %v9647
    %v10896 = vunpack.c.h.b16 %v9647
    %v10897 = vunpack.c.l.b16 %v9648
    %v10898 = vunpack.c.h.b16 %v9648
    %v10899 = vunpack.c.l.b16 %v9649
    %v10900 = vunpack.c.h.b16 %v9649
    %v10901 = vunpack.c.l.b16 %v9650
    %v10902 = vunpack.c.h.b16 %v9650
    %v10903 = vunpack.c.l.b16 %v9651
    %v10904 = vunpack.c.h.b16 %v9651
    %v10905 = vunpack.c.l.b16 %v9652
    %v10906 = vunpack.c.h.b16 %v9652
    %v10907 = vunpack.c.l.b16 %v9653
    %v10908 = vunpack.c.h.b16 %v9653
    %v10909 = vunpack.c.l.b16 %v9654
    %v10910 = vunpack.c.h.b16 %v9654
    %v10911 = vunpack.c.l.b16 %v9655
    %v10912 = vunpack.c.h.b16 %v9655
    %v10913 = vunpack.c.l.b16 %v9656
    %v10914 = vunpack.c.h.b16 %v9656
    %v10915 = vunpack.c.l.b16 %v9657
    %v10916 = vunpack.c.h.b16 %v9657
    %v10917 = vunpack.c.l.b16 %v9658
    %v10918 = vunpack.c.h.b16 %v9658
    %v10919 = vunpack.c.l.b16 %v9659
    %v10920 = vunpack.c.h.b16 %v9659
    %v10921 = vunpack.c.l.b16 %v9660
    %v10922 = vunpack.c.h.b16 %v9660
    %v10923 = vunpack.c.l.b16 %v9661
    %v10924 = vunpack.c.h.b16 %v9661
    %v10925 = vunpack.c.l.b16 %v9662
    %v10926 = vunpack.c.h.b16 %v9662
    %v10927 = vunpack.c.l.b16 %v9663
    %v10928 = vunpack.c.h.b16 %v9663
    %v10929 = vunpack.c.l.b16 %v9664
    %v10930 = vunpack.c.h.b16 %v9664
    %v10931 = vunpack.c.l.b16 %v9665
    %v10932 = vunpack.c.h.b16 %v9665
    %v10933 = vunpack.c.l.b16 %v9666
    %v10934 = vunpack.c.h.b16 %v9666
    %v10935 = vunpack.c.l.b16 %v9667
    %v10936 = vunpack.c.h.b16 %v9667
    %v10937 = vunpack.c.l.b16 %v9668
    %v10938 = vunpack.c.h.b16 %v9668
    %v10939 = vunpack.c.l.b16 %v9669
    %v10940 = vunpack.c.h.b16 %v9669
    %v10941 = vunpack.c.l.b16 %v9670
    %v10942 = vunpack.c.h.b16 %v9670
    %v10943 = vunpack.c.l.b16 %v9671
    %v10944 = vunpack.c.h.b16 %v9671
    %v10945 = vunpack.c.l.b16 %v9672
    %v10946 = vunpack.c.h.b16 %v9672
    %v10947 = vunpack.c.l.b16 %v9673
    %v10948 = vunpack.c.h.b16 %v9673
    %v10949 = vunpack.c.l.b16 %v9674
    %v10950 = vunpack.c.h.b16 %v9674
    %v10951 = vunpack.c.l.b16 %v9675
    %v10952 = vunpack.c.h.b16 %v9675
    %v10953 = vunpack.c.l.b16 %v9676
    %v10954 = vunpack.c.h.b16 %v9676
    %v10955 = vunpack.c.l.b16 %v9677
    %v10956 = vunpack.c.h.b16 %v9677
    %v10957 = vunpack.c.l.b16 %v9678
    %v10958 = vunpack.c.h.b16 %v9678
    %v10959 = vunpack.c.l.b16 %v9679
    %v10960 = vunpack.c.h.b16 %v9679
    %v10961 = vunpack.c.l.b16 %v9680
    %v10962 = vunpack.c.h.b16 %v9680
    %v10963 = vunpack.c.l.b16 %v9681
    %v10964 = vunpack.c.h.b16 %v9681
    %v10965 = vunpack.c.l.b16 %v9682
    %v10966 = vunpack.c.h.b16 %v9682
    %v10967 = vunpack.c.l.b16 %v9683
    %v10968 = vunpack.c.h.b16 %v9683
    %v10969 = vunpack.c.l.b16 %v9684
    %v10970 = vunpack.c.h.b16 %v9684
    %v10971 = vunpack.c.l.b16 %v9685
    %v10972 = vunpack.c.h.b16 %v9685
    %v10973 = vunpack.c.l.b16 %v9686
    %v10974 = vunpack.c.h.b16 %v9686
    %v10975 = vunpack.c.l.b16 %v9687
    %v10976 = vunpack.c.h.b16 %v9687
    %v10977 = vunpack.c.l.b16 %v9688
    %v10978 = vunpack.c.h.b16 %v9688
    %v10979 = vunpack.c.l.b16 %v9689
    %v10980 = vunpack.c.h.b16 %v9689
    %v10981 = vunpack.c.l.b16 %v9690
    %v10982 = vunpack.c.h.b16 %v9690
    %v10983 = vunpack.c.l.b16 %v9691
    %v10984 = vunpack.c.h.b16 %v9691
    %v10985 = vunpack.c.l.b16 %v9692
    %v10986 = vunpack.c.h.b16 %v9692
    %v10987 = vunpack.c.l.b16 %v9693
    %v10988 = vunpack.c.h.b16 %v9693
    %v10989 = vunpack.c.l.b16 %v9694
    %v10990 = vunpack.c.h.b16 %v9694
    %v10991 = vunpack.c.l.b16 %v9695
    %v10992 = vunpack.c.h.b16 %v9695
    %v10993 = vunpack.c.l.b16 %v9696
    %v10994 = vunpack.c.h.b16 %v9696
    %v10995 = vunpack.c.l.b16 %v9697
    %v10996 = vunpack.c.h.b16 %v9697
    %v10997 = vunpack.c.l.b16 %v9698
    %v10998 = vunpack.c.h.b16 %v9698
    %v10999 = vunpack.c.l.b16 %v9699
    %v11000 = vunpack.c.h.b16 %v9699
    %v11001 = vunpack.c.l.b16 %v9700
    %v11002 = vunpack.c.h.b16 %v9700
    %v11003 = vunpack.c.l.b16 %v9701
    %v11004 = vunpack.c.h.b16 %v9701
    %v11005 = vunpack.c.l.b16 %v9702
    %v11006 = vunpack.c.h.b16 %v9702
    %v11007 = vunpack.c.l.b16 %v9703
    %v11008 = vunpack.c.h.b16 %v9703
    %v11009 = vunpack.c.l.b16 %v9704
    %v11010 = vunpack.c.h.b16 %v9704
    %v11011 = vunpack.c.l.b16 %v9705
    %v11012 = vunpack.c.h.b16 %v9705
    %v11013 = vunpack.c.l.b16 %v9706
    %v11014 = vunpack.c.h.b16 %v9706
    %v11015 = vunpack.c.l.b16 %v9707
    %v11016 = vunpack.c.h.b16 %v9707
    %v11017 = vunpack.c.l.b16 %v9708
    %v11018 = vunpack.c.h.b16 %v9708
    %v11019 = vunpack.c.l.b16 %v9709
    %v11020 = vunpack.c.h.b16 %v9709
    %v11021 = vunpack.c.l.b16 %v9710
    %v11022 = vunpack.c.h.b16 %v9710
    %v11023 = vunpack.c.l.b16 %v9711
    %v11024 = vunpack.c.h.b16 %v9711
    %v11025 = vunpack.c.l.b16 %v9712
    %v11026 = vunpack.c.h.b16 %v9712
    %v11027 = vunpack.c.l.b16 %v9713
    %v11028 = vunpack.c.h.b16 %v9713
    %v11029 = vunpack.c.l.b16 %v9714
    %v11030 = vunpack.c.h.b16 %v9714
    %v11031 = vunpack.c.l.b16 %v9715
    %v11032 = vunpack.c.h.b16 %v9715
    %v11033 = vunpack.c.l.b16 %v9716
    %v11034 = vunpack.c.h.b16 %v9716
    %v11035 = vunpack.c.l.b16 %v9717
    %v11036 = vunpack.c.h.b16 %v9717
    %v11037 = vunpack.c.l.b16 %v9718
    %v11038 = vunpack.c.h.b16 %v9718
    %v11039 = vunpack.c.l.b16 %v9719
    %v11040 = vunpack.c.h.b16 %v9719
    %v11041 = vunpack.c.l.b16 %v9720
    %v11042 = vunpack.c.h.b16 %v9720
    %v11043 = vunpack.c.l.b16 %v9721
    %v11044 = vunpack.c.h.b16 %v9721
    %v11045 = vunpack.c.l.b16 %v9722
    %v11046 = vunpack.c.h.b16 %v9722
    %v11047 = vunpack.c.l.b16 %v9723
    %v11048 = vunpack.c.h.b16 %v9723
    %v11049 = vunpack.c.l.b16 %v9724
    %v11050 = vunpack.c.h.b16 %v9724
    %v11051 = vunpack.c.l.b16 %v9725
    %v11052 = vunpack.c.h.b16 %v9725
    %v11053 = vunpack.c.l.b16 %v9726
    %v11054 = vunpack.c.h.b16 %v9726
    %v11055 = vunpack.c.l.b16 %v9727
    %v11056 = vunpack.c.h.b16 %v9727
    %v11057 = vunpack.c.l.b16 %v9728
    %v11058 = vunpack.c.h.b16 %v9728
    %v11059 = vunpack.c.l.b16 %v9729
    %v11060 = vunpack.c.h.b16 %v9729
    %v11061 = vunpack.c.l.b16 %v9730
    %v11062 = vunpack.c.h.b16 %v9730
    %v11063 = vunpack.c.l.b16 %v9731
    %v11064 = vunpack.c.h.b16 %v9731
    %v11065 = vunpack.c.l.b16 %v9732
    %v11066 = vunpack.c.h.b16 %v9732
    %v11067 = vunpack.c.l.b16 %v9733
    %v11068 = vunpack.c.h.b16 %v9733
    %v11069 = vunpack.c.l.b16 %v9734
    %v11070 = vunpack.c.h.b16 %v9734
    %v11071 = vunpack.c.l.b16 %v9735
    %v11072 = vunpack.c.h.b16 %v9735
    %v11073 = vunpack.c.l.b16 %v9736
    %v11074 = vunpack.c.h.b16 %v9736
    %v11075 = vunpack.c.l.b16 %v9737
    %v11076 = vunpack.c.h.b16 %v9737
    %v11077 = vunpack.c.l.b16 %v9738
    %v11078 = vunpack.c.h.b16 %v9738
    %v11079 = vunpack.c.l.b16 %v9739
    %v11080 = vunpack.c.h.b16 %v9739
    %v11081 = vunpack.c.l.b16 %v9740
    %v11082 = vunpack.c.h.b16 %v9740
    %v11083 = vunpack.c.l.b16 %v9741
    %v11084 = vunpack.c.h.b16 %v9741
    %v11085 = vunpack.c.l.b16 %v9742
    %v11086 = vunpack.c.h.b16 %v9742
    %v11087 = vunpack.c.l.b16 %v9743
    %v11088 = vunpack.c.h.b16 %v9743
    %v11089 = vunpack.c.l.b16 %v9744
    %v11090 = vunpack.c.h.b16 %v9744
    %v11091 = vunpack.c.l.b16 %v9745
    %v11092 = vunpack.c.h.b16 %v9745
    %v11093 = vunpack.c.l.b16 %v9746
    %v11094 = vunpack.c.h.b16 %v9746
    %v11095 = vunpack.c.l.b16 %v9747
    %v11096 = vunpack.c.h.b16 %v9747
    %v11097 = vunpack.c.l.b16 %v9748
    %v11098 = vunpack.c.h.b16 %v9748
    %v11099 = vunpack.c.l.b16 %v9749
    %v11100 = vunpack.c.h.b16 %v9749
    %v11101 = vunpack.c.l.b16 %v9750
    %v11102 = vunpack.c.h.b16 %v9750
    %v11103 = vunpack.c.l.b16 %v9751
    %v11104 = vunpack.c.h.b16 %v9751
    %v11105 = vunpack.c.l.b16 %v9752
    %v11106 = vunpack.c.h.b16 %v9752
    %v11107 = vunpack.c.l.b16 %v9753
    %v11108 = vunpack.c.h.b16 %v9753
    %v11109 = vunpack.c.l.b16 %v9754
    %v11110 = vunpack.c.h.b16 %v9754
    %v11111 = vunpack.c.l.b16 %v9755
    %v11112 = vunpack.c.h.b16 %v9755
    %v11113 = vunpack.c.l.b16 %v9756
    %v11114 = vunpack.c.h.b16 %v9756
    %v11115 = vunpack.c.l.b16 %v9757
    %v11116 = vunpack.c.h.b16 %v9757
    %v11117 = vunpack.c.l.b16 %v9758
    %v11118 = vunpack.c.h.b16 %v9758
    %v11119 = vunpack.c.l.b16 %v9759
    %v11120 = vunpack.c.h.b16 %v9759
    %v11121 = vunpack.c.l.b16 %v9760
    %v11122 = vunpack.c.h.b16 %v9760
    %v11123 = vunpack.c.l.b16 %v9761
    %v11124 = vunpack.c.h.b16 %v9761
    %v11125 = vunpack.c.l.b16 %v9762
    %v11126 = vunpack.c.h.b16 %v9762
    %v11127 = vunpack.c.l.b16 %v9763
    %v11128 = vunpack.c.h.b16 %v9763
    %v11129 = vunpack.c.l.b16 %v9764
    %v11130 = vunpack.c.h.b16 %v9764
    %v11131 = vunpack.c.l.b16 %v9765
    %v11132 = vunpack.c.h.b16 %v9765
    %v11133 = vunpack.c.l.b16 %v9766
    %v11134 = vunpack.c.h.b16 %v9766
    %v11135 = vunpack.c.l.b16 %v9767
    %v11136 = vunpack.c.h.b16 %v9767
    %v11137 = vunpack.c.l.b16 %v9768
    %v11138 = vunpack.c.h.b16 %v9768
    %v11139 = vunpack.c.l.b16 %v9769
    %v11140 = vunpack.c.h.b16 %v9769
    %v11141 = vunpack.c.l.b16 %v9770
    %v11142 = vunpack.c.h.b16 %v9770
    %v11143 = vunpack.c.l.b16 %v9771
    %v11144 = vunpack.c.h.b16 %v9771
    %v11145 = vunpack.c.l.b16 %v9772
    %v11146 = vunpack.c.h.b16 %v9772
    %v11147 = vunpack.c.l.b16 %v9773
    %v11148 = vunpack.c.h.b16 %v9773
    %v11149 = vunpack.c.l.b16 %v9774
    %v11150 = vunpack.c.h.b16 %v9774
    %v11151 = vunpack.c.l.b16 %v9775
    %v11152 = vunpack.c.h.b16 %v9775
    %v11153 = vunpack.c.l.b16 %v9776
    %v11154 = vunpack.c.h.b16 %v9776
    %v11155 = vunpack.c.l.b16 %v9777
    %v11156 = vunpack.c.h.b16 %v9777
    %v11157 = vunpack.c.l.b16 %v9778
    %v11158 = vunpack.c.h.b16 %v9778
    %v11159 = vunpack.c.l.b16 %v9779
    %v11160 = vunpack.c.h.b16 %v9779
    %v11161 = vunpack.c.l.b16 %v9780
    %v11162 = vunpack.c.h.b16 %v9780
    %v11163 = vunpack.c.l.b16 %v9781
    %v11164 = vunpack.c.h.b16 %v9781
    %v11165 = vunpack.c.l.b16 %v9782
    %v11166 = vunpack.c.h.b16 %v9782
    %v11167 = vunpack.c.l.b16 %v9783
    %v11168 = vunpack.c.h.b16 %v9783
    %v11169 = vunpack.c.l.b16 %v9784
    %v11170 = vunpack.c.h.b16 %v9784
    %v11171 = vunpack.c.l.b16 %v9785
    %v11172 = vunpack.c.h.b16 %v9785
    %v11173 = vunpack.c.l.b16 %v9786
    %v11174 = vunpack.c.h.b16 %v9786
    %v11175 = vunpack.c.l.b16 %v9787
    %v11176 = vunpack.c.h.b16 %v9787
    %v11177 = vunpack.c.l.b16 %v9788
    %v11178 = vunpack.c.h.b16 %v9788
    %v11179 = vunpack.c.l.b16 %v9789
    %v11180 = vunpack.c.h.b16 %v9789
    %v11181 = vunpack.c.l.b16 %v9790
    %v11182 = vunpack.c.h.b16 %v9790
    %v11183 = vunpack.c.l.b16 %v9791
    %v11184 = vunpack.c.h.b16 %v9791
    %v11185 = vunpack.c.l.b16 %v9792
    %v11186 = vunpack.c.h.b16 %v9792
    %v11187 = vunpack.c.l.b16 %v9793
    %v11188 = vunpack.c.h.b16 %v9793
    %v11189 = vunpack.c.l.b16 %v9794
    %v11190 = vunpack.c.h.b16 %v9794
    %v11191 = vunpack.c.l.b16 %v9795
    %v11192 = vunpack.c.h.b16 %v9795
    %v11193 = vunpack.c.l.b16 %v9796
    %v11194 = vunpack.c.h.b16 %v9796
    %v11195 = vunpack.c.l.b16 %v9797
    %v11196 = vunpack.c.h.b16 %v9797
    %v11197 = vunpack.c.l.b16 %v9798
    %v11198 = vunpack.c.h.b16 %v9798
    %v11199 = vunpack.c.l.b16 %v9799
    %v11200 = vunpack.c.h.b16 %v9799
    %v11201 = vunpack.c.l.b16 %v9800
    %v11202 = vunpack.c.h.b16 %v9800
    %v11203 = vunpack.c.l.b16 %v9801
    %v11204 = vunpack.c.h.b16 %v9801
    %v11205 = vunpack.c.l.b16 %v9802
    %v11206 = vunpack.c.h.b16 %v9802
    %v11207 = vunpack.c.l.b16 %v9803
    %v11208 = vunpack.c.h.b16 %v9803
    %v11209 = vunpack.c.l.b16 %v9804
    %v11210 = vunpack.c.h.b16 %v9804
    %v11211 = vunpack.c.l.b16 %v9805
    %v11212 = vunpack.c.h.b16 %v9805
    %v11213 = vunpack.c.l.b16 %v9806
    %v11214 = vunpack.c.h.b16 %v9806
    %v11215 = vunpack.c.l.b16 %v9807
    %v11216 = vunpack.c.h.b16 %v9807
    %v11217 = vunpack.c.l.b16 %v9808
    %v11218 = vunpack.c.h.b16 %v9808
    %v11219 = vunpack.c.l.b16 %v9809
    %v11220 = vunpack.c.h.b16 %v9809
    %v11221 = vunpack.c.l.b16 %v9810
    %v11222 = vunpack.c.h.b16 %v9810
    %v11223 = vunpack.c.l.b16 %v9811
    %v11224 = vunpack.c.h.b16 %v9811
    %v11225 = vunpack.c.l.b16 %v9812
    %v11226 = vunpack.c.h.b16 %v9812
    %v11227 = vunpack.c.l.b16 %v9813
    %v11228 = vunpack.c.h.b16 %v9813
    %v11229 = vunpack.c.l.b16 %v9814
    %v11230 = vunpack.c.h.b16 %v9814
    %v11231 = vunpack.c.l.b16 %v9815
    %v11232 = vunpack.c.h.b16 %v9815
    %v11233 = vunpack.c.l.b16 %v9816
    %v11234 = vunpack.c.h.b16 %v9816
    %v11235 = vunpack.c.l.b16 %v9817
    %v11236 = vunpack.c.h.b16 %v9817
    %v11237 = vunpack.c.l.b16 %v9818
    %v11238 = vunpack.c.h.b16 %v9818
    %v11239 = vunpack.c.l.b16 %v9819
    %v11240 = vunpack.c.h.b16 %v9819
    %v11241 = vunpack.c.l.b16 %v9820
    %v11242 = vunpack.c.h.b16 %v9820
    %v11243 = vunpack.c.l.b16 %v9821
    %v11244 = vunpack.c.h.b16 %v9821
    %v11245 = vunpack.c.l.b16 %v9822
    %v11246 = vunpack.c.h.b16 %v9822
    %v11247 = vunpack.c.l.b16 %v9823
    %v11248 = vunpack.c.h.b16 %v9823
    %v11249 = vunpack.c.l.b16 %v9824
    %v11250 = vunpack.c.h.b16 %v9824
    %v11251 = vunpack.c.l.b16 %v9825
    %v11252 = vunpack.c.h.b16 %v9825
    %v11253 = vunpack.c.l.b16 %v9826
    %v11254 = vunpack.c.h.b16 %v9826
    %v11255 = vunpack.c.l.b16 %v9827
    %v11256 = vunpack.c.h.b16 %v9827
    %v11257 = vunpack.c.l.b16 %v9828
    %v11258 = vunpack.c.h.b16 %v9828
    %v11259 = vunpack.c.l.b16 %v9829
    %v11260 = vunpack.c.h.b16 %v9829
    %v11261 = vunpack.c.l.b16 %v9830
    %v11262 = vunpack.c.h.b16 %v9830
    %v11263 = vunpack.c.l.b16 %v9831
    %v11264 = vunpack.c.h.b16 %v9831
    %v11265 = vunpack.c.l.b16 %v9832
    %v11266 = vunpack.c.h.b16 %v9832
    %v11267 = vunpack.c.l.b16 %v9833
    %v11268 = vunpack.c.h.b16 %v9833
    %v11269 = vunpack.c.l.b16 %v9834
    %v11270 = vunpack.c.h.b16 %v9834
    %v11271 = vunpack.c.l.b16 %v9835
    %v11272 = vunpack.c.h.b16 %v9835
    %v11273 = vunpack.c.l.b16 %v9836
    %v11274 = vunpack.c.h.b16 %v9836
    %v11275 = vunpack.c.l.b16 %v9837
    %v11276 = vunpack.c.h.b16 %v9837
    %v11277 = vunpack.c.l.b16 %v9838
    %v11278 = vunpack.c.h.b16 %v9838
    %v11279 = vunpack.c.l.b16 %v9839
    %v11280 = vunpack.c.h.b16 %v9839
    %v11281 = vunpack.c.l.b16 %v9840
    %v11282 = vunpack.c.h.b16 %v9840
    %v11283 = vunpack.c.l.b16 %v9841
    %v11284 = vunpack.c.h.b16 %v9841
    %v11285 = vunpack.c.l.b16 %v9842
    %v11286 = vunpack.c.h.b16 %v9842
    %v11287 = vunpack.c.l.b16 %v9843
    %v11288 = vunpack.c.h.b16 %v9843
    %v11289 = vunpack.c.l.b16 %v9844
    %v11290 = vunpack.c.h.b16 %v9844
    %v11291 = vunpack.c.l.b16 %v9845
    %v11292 = vunpack.c.h.b16 %v9845
    %v11293 = vunpack.c.l.b16 %v9846
    %v11294 = vunpack.c.h.b16 %v9846
    %v11295 = vunpack.c.l.b16 %v9847
    %v11296 = vunpack.c.h.b16 %v9847
    %v11297 = vunpack.c.l.b16 %v9848
    %v11298 = vunpack.c.h.b16 %v9848
    %v11299 = vunpack.c.l.b16 %v9849
    %v11300 = vunpack.c.h.b16 %v9849
    %v11301 = vunpack.c.l.b16 %v9850
    %v11302 = vunpack.c.h.b16 %v9850
    %v11303 = vunpack.c.l.b16 %v9851
    %v11304 = vunpack.c.h.b16 %v9851
    %v11305 = vunpack.c.l.b16 %v9852
    %v11306 = vunpack.c.h.b16 %v9852
    %v11307 = vunpack.c.l.b16 %v9853
    %v11308 = vunpack.c.h.b16 %v9853
    %v11309 = vunpack.c.l.b16 %v9854
    %v11310 = vunpack.c.h.b16 %v9854
    %v11311 = vunpack.c.l.b16 %v9855
    %v11312 = vunpack.c.h.b16 %v9855
    %v11313 = vunpack.c.l.b16 %v9856
    %v11314 = vunpack.c.h.b16 %v9856
    %v11315 = vunpack.c.l.b16 %v9857
    %v11316 = vunpack.c.h.b16 %v9857
    %v11317 = vunpack.c.l.b16 %v9858
    %v11318 = vunpack.c.h.b16 %v9858
    %v11319 = vunpack.c.l.b16 %v9859
    %v11320 = vunpack.c.h.b16 %v9859
    %v11321 = vunpack.c.l.b16 %v9860
    %v11322 = vunpack.c.h.b16 %v9860
    %v11323 = vunpack.c.l.b16 %v9861
    %v11324 = vunpack.c.h.b16 %v9861
    %v11325 = vunpack.c.l.b16 %v9862
    %v11326 = vunpack.c.h.b16 %v9862
    %v11327 = vunpack.c.l.b16 %v9863
    %v11328 = vunpack.c.h.b16 %v9863
    %v11329 = vunpack.c.l.b16 %v9864
    %v11330 = vunpack.c.h.b16 %v9864
    %v11331 = vunpack.c.l.b16 %v9865
    %v11332 = vunpack.c.h.b16 %v9865
    %v11333 = vunpack.c.l.b16 %v9866
    %v11334 = vunpack.c.h.b16 %v9866
    %v11335 = vunpack.c.l.b16 %v9867
    %v11336 = vunpack.c.h.b16 %v9867
    %v11337 = vunpack.c.l.b16 %v9868
    %v11338 = vunpack.c.h.b16 %v9868
    %v11339 = vunpack.c.l.b16 %v9869
    %v11340 = vunpack.c.h.b16 %v9869
    %v11341 = vunpack.c.l.b16 %v9870
    %v11342 = vunpack.c.h.b16 %v9870
    %v11343 = vunpack.c.l.b16 %v9871
    %v11344 = vunpack.c.h.b16 %v9871
    %v11345 = vunpack.c.l.b16 %v9872
    %v11346 = vunpack.c.h.b16 %v9872
    %v11347 = vunpack.c.l.b16 %v9873
    %v11348 = vunpack.c.h.b16 %v9873
    %v11349 = vunpack.c.l.b16 %v9874
    %v11350 = vunpack.c.h.b16 %v9874
    %v11351 = vunpack.c.l.b16 %v9875
    %v11352 = vunpack.c.h.b16 %v9875
    %v11353 = vunpack.c.l.b16 %v9876
    %v11354 = vunpack.c.h.b16 %v9876
    %v11355 = vunpack.c.l.b16 %v9877
    %v11356 = vunpack.c.h.b16 %v9877
    %v11357 = vunpack.c.l.b16 %v9878
    %v11358 = vunpack.c.h.b16 %v9878
    %v11359 = vunpack.c.l.b16 %v9879
    %v11360 = vunpack.c.h.b16 %v9879
    %v11361 = vunpack.c.l.b16 %v9880
    %v11362 = vunpack.c.h.b16 %v9880
    %v11363 = vunpack.c.l.b16 %v9881
    %v11364 = vunpack.c.h.b16 %v9881
    %v11365 = vunpack.c.l.b16 %v9882
    %v11366 = vunpack.c.h.b16 %v9882
    %v11367 = vunpack.c.l.b16 %v9883
    %v11368 = vunpack.c.h.b16 %v9883
    %v11369 = vunpack.c.l.b16 %v9884
    %v11370 = vunpack.c.h.b16 %v9884
    %v11371 = vunpack.c.l.b16 %v9885
    %v11372 = vunpack.c.h.b16 %v9885
    %v11373 = vunpack.c.l.b16 %v9886
    %v11374 = vunpack.c.h.b16 %v9886
    %v11375 = vunpack.c.l.b16 %v9887
    %v11376 = vunpack.c.h.b16 %v9887
    %v11377 = vunpack.c.l.b16 %v9888
    %v11378 = vunpack.c.h.b16 %v9888
    %v11379 = vunpack.c.l.b16 %v9889
    %v11380 = vunpack.c.h.b16 %v9889
    %v11381 = vunpack.c.l.b16 %v9890
    %v11382 = vunpack.c.h.b16 %v9890
    %v11383 = vunpack.c.l.b16 %v9891
    %v11384 = vunpack.c.h.b16 %v9891
    %v11385 = vunpack.c.l.b16 %v9892
    %v11386 = vunpack.c.h.b16 %v9892
    %v11387 = vunpack.c.l.b16 %v9893
    %v11388 = vunpack.c.h.b16 %v9893
    %v11389 = vunpack.c.l.b16 %v9894
    %v11390 = vunpack.c.h.b16 %v9894
    %v11391 = vunpack.c.l.b16 %v9895
    %v11392 = vunpack.c.h.b16 %v9895
    %v11393 = vunpack.c.l.b16 %v9896
    %v11394 = vunpack.c.h.b16 %v9896
    %v11395 = vunpack.c.l.b16 %v9897
    %v11396 = vunpack.c.h.b16 %v9897
    %v11397 = vunpack.c.l.b16 %v9898
    %v11398 = vunpack.c.h.b16 %v9898
    %v11399 = vunpack.c.l.b16 %v9899
    %v11400 = vunpack.c.h.b16 %v9899
    %v11401 = vunpack.c.l.b16 %v9900
    %v11402 = vunpack.c.h.b16 %v9900
    %v11403 = vunpack.c.l.b16 %v9901
    %v11404 = vunpack.c.h.b16 %v9901
    %v11405 = vunpack.c.l.b16 %v9902
    %v11406 = vunpack.c.h.b16 %v9902
    %v11407 = vunpack.c.l.b16 %v9903
    %v11408 = vunpack.c.h.b16 %v9903
    %v11409 = vunpack.c.l.b16 %v9904
    %v11410 = vunpack.c.h.b16 %v9904
    %v11411 = vunpack.c.l.b16 %v9905
    %v11412 = vunpack.c.h.b16 %v9905
    %v11413 = vunpack.c.l.b16 %v9906
    %v11414 = vunpack.c.h.b16 %v9906
    %v11415 = vunpack.c.l.b16 %v9907
    %v11416 = vunpack.c.h.b16 %v9907
    %v11417 = vunpack.c.l.b16 %v9908
    %v11418 = vunpack.c.h.b16 %v9908
    %v11419 = vunpack.c.l.b16 %v9909
    %v11420 = vunpack.c.h.b16 %v9909
    %v11421 = vunpack.c.l.b16 %v9910
    %v11422 = vunpack.c.h.b16 %v9910
    %v11423 = vunpack.c.l.b16 %v9911
    %v11424 = vunpack.c.h.b16 %v9911
    %v11425 = vunpack.c.l.b16 %v9912
    %v11426 = vunpack.c.h.b16 %v9912
    %v11427 = vunpack.c.l.b16 %v9913
    %v11428 = vunpack.c.h.b16 %v9913
    %v11429 = vunpack.c.l.b16 %v9914
    %v11430 = vunpack.c.h.b16 %v9914
    %v11431 = vunpack.c.l.b16 %v9915
    %v11432 = vunpack.c.h.b16 %v9915
    %v11433 = vunpack.c.l.b16 %v9916
    %v11434 = vunpack.c.h.b16 %v9916
    %v11435 = vunpack.c.l.b16 %v9917
    %v11436 = vunpack.c.h.b16 %v9917
    %v11437 = vunpack.c.l.b16 %v9918
    %v11438 = vunpack.c.h.b16 %v9918
    %v11439 = vunpack.c.l.b16 %v9919
    %v11440 = vunpack.c.h.b16 %v9919
    %v11441 = vunpack.c.l.b16 %v9920
    %v11442 = vunpack.c.h.b16 %v9920
    %v11443 = vunpack.c.l.b16 %v9921
    %v11444 = vunpack.c.h.b16 %v9921
    %v11445 = vunpack.c.l.b16 %v9922
    %v11446 = vunpack.c.h.b16 %v9922
    %v11447 = vunpack.c.l.b16 %v9923
    %v11448 = vunpack.c.h.b16 %v9923
    %v11449 = vunpack.c.l.b16 %v9924
    %v11450 = vunpack.c.h.b16 %v9924
    %v11451 = vunpack.c.l.b16 %v9925
    %v11452 = vunpack.c.h.b16 %v9925
    %v11453 = vunpack.c.l.b16 %v9926
    %v11454 = vunpack.c.h.b16 %v9926
    %v11455 = vunpack.c.l.b16 %v9927
    %v11456 = vunpack.c.h.b16 %v9927
    %v11457 = vunpack.c.l.b16 %v9928
    %v11458 = vunpack.c.h.b16 %v9928
    %v11459 = vunpack.c.l.b16 %v9929
    %v11460 = vunpack.c.h.b16 %v9929
    %v11461 = vunpack.c.l.b16 %v9930
    %v11462 = vunpack.c.h.b16 %v9930
    %v11463 = vunpack.c.l.b16 %v9931
    %v11464 = vunpack.c.h.b16 %v9931
    %v11465 = vunpack.c.l.b16 %v9932
    %v11466 = vunpack.c.h.b16 %v9932
    %v11467 = vunpack.c.l.b16 %v9933
    %v11468 = vunpack.c.h.b16 %v9933
    %v11469 = vunpack.c.l.b16 %v9934
    %v11470 = vunpack.c.h.b16 %v9934
    %v11471 = vunpack.c.l.b16 %v9935
    %v11472 = vunpack.c.h.b16 %v9935
    %v11473 = vunpack.c.l.b16 %v9936
    %v11474 = vunpack.c.h.b16 %v9936
    %v11475 = vunpack.c.l.b16 %v9937
    %v11476 = vunpack.c.h.b16 %v9937
    %v11477 = vunpack.c.l.b16 %v9938
    %v11478 = vunpack.c.h.b16 %v9938
    %v11479 = vunpack.c.l.b16 %v9939
    %v11480 = vunpack.c.h.b16 %v9939
    %v11481 = vunpack.c.l.b16 %v9940
    %v11482 = vunpack.c.h.b16 %v9940
    %v11483 = vunpack.c.l.b16 %v9941
    %v11484 = vunpack.c.h.b16 %v9941
    %v11485 = vunpack.c.l.b16 %v9942
    %v11486 = vunpack.c.h.b16 %v9942
    %v11487 = vunpack.c.l.b16 %v9943
    %v11488 = vunpack.c.h.b16 %v9943
    %v11489 = vunpack.c.l.b16 %v9944
    %v11490 = vunpack.c.h.b16 %v9944
    %v11491 = vunpack.c.l.b16 %v9945
    %v11492 = vunpack.c.h.b16 %v9945
    %v11493 = vunpack.c.l.b16 %v9946
    %v11494 = vunpack.c.h.b16 %v9946
    %v11495 = vunpack.c.l.b16 %v9947
    %v11496 = vunpack.c.h.b16 %v9947
    %v11497 = vunpack.c.l.b16 %v9948
    %v11498 = vunpack.c.h.b16 %v9948
    %v11499 = vunpack.c.l.b16 %v9949
    %v11500 = vunpack.c.h.b16 %v9949
    %v11501 = vunpack.c.l.b16 %v9950
    %v11502 = vunpack.c.h.b16 %v9950
    %v11503 = vunpack.c.l.b16 %v9951
    %v11504 = vunpack.c.h.b16 %v9951
    %v11505 = vunpack.c.l.b16 %v9952
    %v11506 = vunpack.c.h.b16 %v9952
    %v11507 = vunpack.c.l.b16 %v9953
    %v11508 = vunpack.c.h.b16 %v9953
    %v11509 = vunpack.c.l.b16 %v9954
    %v11510 = vunpack.c.h.b16 %v9954
    %v11511 = vunpack.c.l.b16 %v9955
    %v11512 = vunpack.c.h.b16 %v9955
    %v11513 = vunpack.c.l.b16 %v9956
    %v11514 = vunpack.c.h.b16 %v9956
    %v11515 = vunpack.c.l.b16 %v9957
    %v11516 = vunpack.c.h.b16 %v9957
    %v11517 = vunpack.c.l.b16 %v9958
    %v11518 = vunpack.c.h.b16 %v9958
    %v11519 = vunpack.c.l.b16 %v9959
    %v11520 = vunpack.c.h.b16 %v9959
    %v11521 = vunpack.c.l.b16 %v9960
    %v11522 = vunpack.c.h.b16 %v9960
    %v11523 = vunpack.c.l.b16 %v9961
    %v11524 = vunpack.c.h.b16 %v9961
    %v11525 = vunpack.c.l.b16 %v9962
    %v11526 = vunpack.c.h.b16 %v9962
    %v11527 = vunpack.c.l.b16 %v9963
    %v11528 = vunpack.c.h.b16 %v9963
    %v11529 = vunpack.c.l.b16 %v9964
    %v11530 = vunpack.c.h.b16 %v9964
    %v11531 = vunpack.c.l.b16 %v9965
    %v11532 = vunpack.c.h.b16 %v9965
    %v11533 = vunpack.c.l.b16 %v9966
    %v11534 = vunpack.c.h.b16 %v9966
    %v11535 = vunpack.c.l.b16 %v9967
    %v11536 = vunpack.c.h.b16 %v9967
    %v11537 = vunpack.c.l.b16 %v9968
    %v11538 = vunpack.c.h.b16 %v9968
    %v11539 = vunpack.c.l.b16 %v9969
    %v11540 = vunpack.c.h.b16 %v9969
    %v11541 = vunpack.c.l.b16 %v9970
    %v11542 = vunpack.c.h.b16 %v9970
    %v11543 = vunpack.c.l.b16 %v9971
    %v11544 = vunpack.c.h.b16 %v9971
    %v11545 = vunpack.c.l.b16 %v9972
    %v11546 = vunpack.c.h.b16 %v9972
    %v11547 = vunpack.c.l.b16 %v9973
    %v11548 = vunpack.c.h.b16 %v9973
    %v11549 = vunpack.c.l.b16 %v9974
    %v11550 = vunpack.c.h.b16 %v9974
    %v11551 = vunpack.c.l.b16 %v9975
    %v11552 = vunpack.c.h.b16 %v9975
    %v11553 = vunpack.c.l.b16 %v9976
    %v11554 = vunpack.c.h.b16 %v9976
    %v11555 = vunpack.c.l.b16 %v9977
    %v11556 = vunpack.c.h.b16 %v9977
    %v11557 = vunpack.c.l.b16 %v9978
    %v11558 = vunpack.c.h.b16 %v9978
    %v11559 = vunpack.c.l.b16 %v9979
    %v11560 = vunpack.c.h.b16 %v9979
    %v11561 = vunpack.c.l.b16 %v9980
    %v11562 = vunpack.c.h.b16 %v9980
    %v11563 = vunpack.c.l.b16 %v9981
    %v11564 = vunpack.c.h.b16 %v9981
    %v11565 = vunpack.c.l.b16 %v9982
    %v11566 = vunpack.c.h.b16 %v9982
    %v11567 = vunpack.c.l.b16 %v9983
    %v11568 = vunpack.c.h.b16 %v9983
    %v11569 = vunpack.c.l.b16 %v9984
    %v11570 = vunpack.c.h.b16 %v9984
    %v11571 = vunpack.c.l.b16 %v9985
    %v11572 = vunpack.c.h.b16 %v9985
    %v11573 = vunpack.c.l.b16 %v9986
    %v11574 = vunpack.c.h.b16 %v9986
    %v11575 = vunpack.c.l.b16 %v9987
    %v11576 = vunpack.c.h.b16 %v9987
    %v11577 = vunpack.c.l.b16 %v9988
    %v11578 = vunpack.c.h.b16 %v9988
    %v11579 = vunpack.c.l.b16 %v9989
    %v11580 = vunpack.c.h.b16 %v9989
    %v11581 = vunpack.c.l.b16 %v9990
    %v11582 = vunpack.c.h.b16 %v9990
    %v11583 = vunpack.c.l.b16 %v9991
    %v11584 = vunpack.c.h.b16 %v9991
    %v11585 = vunpack.c.l.b16 %v9992
    %v11586 = vunpack.c.h.b16 %v9992
    %v11587 = vunpack.c.l.b16 %v9993
    %v11588 = vunpack.c.h.b16 %v9993
    %v11589 = vunpack.c.l.b16 %v9994
    %v11590 = vunpack.c.h.b16 %v9994
    %v11591 = vunpack.c.l.b16 %v9995
    %v11592 = vunpack.c.h.b16 %v9995
    %v11593 = vunpack.c.l.b16 %v9996
    %v11594 = vunpack.c.h.b16 %v9996
    %v11595 = vunpack.c.l.b16 %v9997
    %v11596 = vunpack.c.h.b16 %v9997
    %v11597 = vunpack.c.l.b16 %v9998
    %v11598 = vunpack.c.h.b16 %v9998
    %v11599 = vunpack.c.l.b16 %v9999
    %v11600 = vunpack.c.h.b16 %v9999
    %v11601 = vunpack.c.l.b16 %v10000
    %v11602 = vunpack.c.h.b16 %v10000
    %v11603 = vunpack.c.l.b16 %v10001
    %v11604 = vunpack.c.h.b16 %v10001
    %v11605 = vunpack.c.l.b16 %v10002
    %v11606 = vunpack.c.h.b16 %v10002
    %v11607 = vunpack.c.l.b16 %v10003
    %v11608 = vunpack.c.h.b16 %v10003
    %v11609 = vunpack.c.l.b16 %v10004
    %v11610 = vunpack.c.h.b16 %v10004
    %v11611 = vpack.c.b16 %v10595, %v10587
    %v11612 = vpack.c.b16 %v10596, %v10588
    %v11613 = vpack.c.b16 %v10597, %v10589
    %v11614 = vpack.c.b16 %v10598, %v10590
    %v11615 = vpack.c.b16 %v10599, %v10591
    %v11616 = vpack.c.b16 %v10600, %v10592
    %v11617 = vpack.c.b16 %v10601, %v10593
    %v11618 = vpack.c.b16 %v10602, %v10594
    %v11619 = vpack.c.b16 %v10611, %v10603
    %v11620 = vpack.c.b16 %v10612, %v10604
    %v11621 = vpack.c.b16 %v10613, %v10605
    %v11622 = vpack.c.b16 %v10614, %v10606
    %v11623 = vpack.c.b16 %v10615, %v10607
    %v11624 = vpack.c.b16 %v10616, %v10608
    %v11625 = vpack.c.b16 %v10617, %v10609
    %v11626 = vpack.c.b16 %v10618, %v10610
    %v11627 = vpack.c.b16 %v10627, %v10619
    %v11628 = vpack.c.b16 %v10628, %v10620
    %v11629 = vpack.c.b16 %v10629, %v10621
    %v11630 = vpack.c.b16 %v10630, %v10622
    %v11631 = vpack.c.b16 %v10631, %v10623
    %v11632 = vpack.c.b16 %v10632, %v10624
    %v11633 = vpack.c.b16 %v10633, %v10625
    %v11634 = vpack.c.b16 %v10634, %v10626
    %v11635 = vpack.c.b16 %v10643, %v10635
    %v11636 = vpack.c.b16 %v10644, %v10636
    %v11637 = vpack.c.b16 %v10645, %v10637
    %v11638 = vpack.c.b16 %v10646, %v10638
    %v11639 = vpack.c.b16 %v10647, %v10639
    %v11640 = vpack.c.b16 %v10648, %v10640
    %v11641 = vpack.c.b16 %v10649, %v10641
    %v11642 = vpack.c.b16 %v10650, %v10642
    %v11643 = vpack.c.b16 %v10659, %v10651
    %v11644 = vpack.c.b16 %v10660, %v10652
    %v11645 = vpack.c.b16 %v10661, %v10653
    %v11646 = vpack.c.b16 %v10662, %v10654
    %v11647 = vpack.c.b16 %v10663, %v10655
    %v11648 = vpack.c.b16 %v10664, %v10656
    %v11649 = vpack.c.b16 %v10665, %v10657
    %v11650 = vpack.c.b16 %v10666, %v10658
    %v11651 = vpack.c.b16 %v10675, %v10667
    %v11652 = vpack.c.b16 %v10676, %v10668
    %v11653 = vpack.c.b16 %v10677, %v10669
    %v11654 = vpack.c.b16 %v10678, %v10670
    %v11655 = vpack.c.b16 %v10679, %v10671
    %v11656 = vpack.c.b16 %v10680, %v10672
    %v11657 = vpack.c.b16 %v10681, %v10673
    %v11658 = vpack.c.b16 %v10682, %v10674
    %v11659 = vpack.c.b16 %v10691, %v10683
    %v11660 = vpack.c.b16 %v10692, %v10684
    %v11661 = vpack.c.b16 %v10693, %v10685
    %v11662 = vpack.c.b16 %v10694, %v10686
    %v11663 = vpack.c.b16 %v10695, %v10687
    %v11664 = vpack.c.b16 %v10696, %v10688
    %v11665 = vpack.c.b16 %v10697, %v10689
    %v11666 = vpack.c.b16 %v10698, %v10690
    %v11667 = vpack.c.b16 %v10707, %v10699
    %v11668 = vpack.c.b16 %v10708, %v10700
    %v11669 = vpack.c.b16 %v10709, %v10701
    %v11670 = vpack.c.b16 %v10710, %v10702
    %v11671 = vpack.c.b16 %v10711, %v10703
    %v11672 = vpack.c.b16 %v10712, %v10704
    %v11673 = vpack.c.b16 %v10713, %v10705
    %v11674 = vpack.c.b16 %v10714, %v10706
    %v11675 = vpack.c.b16 %v10723, %v10715
    %v11676 = vpack.c.b16 %v10724, %v10716
    %v11677 = vpack.c.b16 %v10725, %v10717
    %v11678 = vpack.c.b16 %v10726, %v10718
    %v11679 = vpack.c.b16 %v10727, %v10719
    %v11680 = vpack.c.b16 %v10728, %v10720
    %v11681 = vpack.c.b16 %v10729, %v10721
    %v11682 = vpack.c.b16 %v10730, %v10722
    %v11683 = vpack.c.b16 %v10739, %v10731
    %v11684 = vpack.c.b16 %v10740, %v10732
    %v11685 = vpack.c.b16 %v10741, %v10733
    %v11686 = vpack.c.b16 %v10742, %v10734
    %v11687 = vpack.c.b16 %v10743, %v10735
    %v11688 = vpack.c.b16 %v10744, %v10736
    %v11689 = vpack.c.b16 %v10745, %v10737
    %v11690 = vpack.c.b16 %v10746, %v10738
    %v11691 = vpack.c.b16 %v10755, %v10747
    %v11692 = vpack.c.b16 %v10756, %v10748
    %v11693 = vpack.c.b16 %v10757, %v10749
    %v11694 = vpack.c.b16 %v10758, %v10750
    %v11695 = vpack.c.b16 %v10759, %v10751
    %v11696 = vpack.c.b16 %v10760, %v10752
    %v11697 = vpack.c.b16 %v10761, %v10753
    %v11698 = vpack.c.b16 %v10762, %v10754
    %v11699 = vpack.c.b16 %v10771, %v10763
    %v11700 = vpack.c.b16 %v10772, %v10764
    %v11701 = vpack.c.b16 %v10773, %v10765
    %v11702 = vpack.c.b16 %v10774, %v10766
    %v11703 = vpack.c.b16 %v10775, %v10767
    %v11704 = vpack.c.b16 %v10776, %v10768
    %v11705 = vpack.c.b16 %v10777, %v10769
    %v11706 = vpack.c.b16 %v10778, %v10770
    %v11707 = vpack.c.b16 %v10787, %v10779
    %v11708 = vpack.c.b16 %v10788, %v10780
    %v11709 = vpack.c.b16 %v10789, %v10781
    %v11710 = vpack.c.b16 %v10790, %v10782
    %v11711 = vpack.c.b16 %v10791, %v10783
    %v11712 = vpack.c.b16 %v10792, %v10784
    %v11713 = vpack.c.b16 %v10793, %v10785
    %v11714 = vpack.c.b16 %v10794, %v10786
    %v11715 = vpack.c.b16 %v10803, %v10795
    %v11716 = vpack.c.b16 %v10804, %v10796
    %v11717 = vpack.c.b16 %v10805, %v10797
    %v11718 = vpack.c.b16 %v10806, %v10798
    %v11719 = vpack.c.b16 %v10807, %v10799
    %v11720 = vpack.c.b16 %v10808, %v10800
    %v11721 = vpack.c.b16 %v10809, %v10801
    %v11722 = vpack.c.b16 %v10810, %v10802
    %v11723 = vpack.c.b16 %v10819, %v10811
    %v11724 = vpack.c.b16 %v10820, %v10812
    %v11725 = vpack.c.b16 %v10821, %v10813
    %v11726 = vpack.c.b16 %v10822, %v10814
    %v11727 = vpack.c.b16 %v10823, %v10815
    %v11728 = vpack.c.b16 %v10824, %v10816
    %v11729 = vpack.c.b16 %v10825, %v10817
    %v11730 = vpack.c.b16 %v10826, %v10818
    %v11731 = vpack.c.b16 %v10835, %v10827
    %v11732 = vpack.c.b16 %v10836, %v10828
    %v11733 = vpack.c.b16 %v10837, %v10829
    %v11734 = vpack.c.b16 %v10838, %v10830
    %v11735 = vpack.c.b16 %v10839, %v10831
    %v11736 = vpack.c.b16 %v10840, %v10832
    %v11737 = vpack.c.b16 %v10841, %v10833
    %v11738 = vpack.c.b16 %v10842, %v10834
    %v11739 = vpack.c.b16 %v10851, %v10843
    %v11740 = vpack.c.b16 %v10852, %v10844
    %v11741 = vpack.c.b16 %v10853, %v10845
    %v11742 = vpack.c.b16 %v10854, %v10846
    %v11743 = vpack.c.b16 %v10855, %v10847
    %v11744 = vpack.c.b16 %v10856, %v10848
    %v11745 = vpack.c.b16 %v10857, %v10849
    %v11746 = vpack.c.b16 %v10858, %v10850
    %v11747 = vpack.c.b16 %v10867, %v10859
    %v11748 = vpack.c.b16 %v10868, %v10860
    %v11749 = vpack.c.b16 %v10869, %v10861
    %v11750 = vpack.c.b16 %v10870, %v10862
    %v11751 = vpack.c.b16 %v10871, %v10863
    %v11752 = vpack.c.b16 %v10872, %v10864
    %v11753 = vpack.c.b16 %v10873, %v10865
    %v11754 = vpack.c.b16 %v10874, %v10866
    %v11755 = vpack.c.b16 %v10883, %v10875
    %v11756 = vpack.c.b16 %v10884, %v10876
    %v11757 = vpack.c.b16 %v10885, %v10877
    %v11758 = vpack.c.b16 %v10886, %v10878
    %v11759 = vpack.c.b16 %v10887, %v10879
    %v11760 = vpack.c.b16 %v10888, %v10880
    %v11761 = vpack.c.b16 %v10889, %v10881
    %v11762 = vpack.c.b16 %v10890, %v10882
    %v11763 = vpack.c.b16 %v10899, %v10891
    %v11764 = vpack.c.b16 %v10900, %v10892
    %v11765 = vpack.c.b16 %v10901, %v10893
    %v11766 = vpack.c.b16 %v10902, %v10894
    %v11767 = vpack.c.b16 %v10903, %v10895
    %v11768 = vpack.c.b16 %v10904, %v10896
    %v11769 = vpack.c.b16 %v10905, %v10897
    %v11770 = vpack.c.b16 %v10906, %v10898
    %v11771 = vpack.c.b16 %v10915, %v10907
    %v11772 = vpack.c.b16 %v10916, %v10908
    %v11773 = vpack.c.b16 %v10917, %v10909
    %v11774 = vpack.c.b16 %v10918, %v10910
    %v11775 = vpack.c.b16 %v10919, %v10911
    %v11776 = vpack.c.b16 %v10920, %v10912
    %v11777 = vpack.c.b16 %v10921, %v10913
    %v11778 = vpack.c.b16 %v10922, %v10914
    %v11779 = vpack.c.b16 %v10931, %v10923
    %v11780 = vpack.c.b16 %v10932, %v10924
    %v11781 = vpack.c.b16 %v10933, %v10925
    %v11782 = vpack.c.b16 %v10934, %v10926
    %v11783 = vpack.c.b16 %v10935, %v10927
    %v11784 = vpack.c.b16 %v10936, %v10928
    %v11785 = vpack.c.b16 %v10937, %v10929
    %v11786 = vpack.c.b16 %v10938, %v10930
    %v11787 = vpack.c.b16 %v10947, %v10939
    %v11788 = vpack.c.b16 %v10948, %v10940
    %v11789 = vpack.c.b16 %v10949, %v10941
    %v11790 = vpack.c.b16 %v10950, %v10942
    %v11791 = vpack.c.b16 %v10951, %v10943
    %v11792 = vpack.c.b16 %v10952, %v10944
    %v11793 = vpack.c.b16 %v10953, %v10945
    %v11794 = vpack.c.b16 %v10954, %v10946
    %v11795 = vpack.c.b16 %v10963, %v10955
    %v11796 = vpack.c.b16 %v10964, %v10956
    %v11797 = vpack.c.b16 %v10965, %v10957
    %v11798 = vpack.c.b16 %v10966, %v10958
    %v11799 = vpack.c.b16 %v10967, %v10959
    %v11800 = vpack.c.b16 %v10968, %v10960
    %v11801 = vpack.c.b16 %v10969, %v10961
    %v11802 = vpack.c.b16 %v10970, %v10962
    %v11803 = vpack.c.b16 %v10979, %v10971
    %v11804 = vpack.c.b16 %v10980, %v10972
    %v11805 = vpack.c.b16 %v10981, %v10973
    %v11806 = vpack.c.b16 %v10982, %v10974
    %v11807 = vpack.c.b16 %v10983, %v10975
    %v11808 = vpack.c.b16 %v10984, %v10976
    %v11809 = vpack.c.b16 %v10985, %v10977
    %v11810 = vpack.c.b16 %v10986, %v10978
    %v11811 = vpack.c.b16 %v10995, %v10987
    %v11812 = vpack.c.b16 %v10996, %v10988
    %v11813 = vpack.c.b16 %v10997, %v10989
    %v11814 = vpack.c.b16 %v10998, %v10990
    %v11815 = vpack.c.b16 %v10999, %v10991
    %v11816 = vpack.c.b16 %v11000, %v10992
    %v11817 = vpack.c.b16 %v11001, %v10993
    %v11818 = vpack.c.b16 %v11002, %v10994
    %v11819 = vpack.c.b16 %v11011, %v11003
    %v11820 = vpack.c.b16 %v11012, %v11004
    %v11821 = vpack.c.b16 %v11013, %v11005
    %v11822 = vpack.c.b16 %v11014, %v11006
    %v11823 = vpack.c.b16 %v11015, %v11007
    %v11824 = vpack.c.b16 %v11016, %v11008
    %v11825 = vpack.c.b16 %v11017, %v11009
    %v11826 = vpack.c.b16 %v11018, %v11010
    %v11827 = vpack.c.b16 %v11027, %v11019
    %v11828 = vpack.c.b16 %v11028, %v11020
    %v11829 = vpack.c.b16 %v11029, %v11021
    %v11830 = vpack.c.b16 %v11030, %v11022
    %v11831 = vpack.c.b16 %v11031, %v11023
    %v11832 = vpack.c.b16 %v11032, %v11024
    %v11833 = vpack.c.b16 %v11033, %v11025
    %v11834 = vpack.c.b16 %v11034, %v11026
    %v11835 = vpack.c.b16 %v11043, %v11035
    %v11836 = vpack.c.b16 %v11044, %v11036
    %v11837 = vpack.c.b16 %v11045, %v11037
    %v11838 = vpack.c.b16 %v11046, %v11038
    %v11839 = vpack.c.b16 %v11047, %v11039
    %v11840 = vpack.c.b16 %v11048, %v11040
    %v11841 = vpack.c.b16 %v11049, %v11041
    %v11842 = vpack.c.b16 %v11050, %v11042
    %v11843 = vpack.c.b16 %v11059, %v11051
    %v11844 = vpack.c.b16 %v11060, %v11052
    %v11845 = vpack.c.b16 %v11061, %v11053
    %v11846 = vpack.c.b16 %v11062, %v11054
    %v11847 = vpack.c.b16 %v11063, %v11055
    %v11848 = vpack.c.b16 %v11064, %v11056
    %v11849 = vpack.c.b16 %v11065, %v11057
    %v11850 = vpack.c.b16 %v11066, %v11058
    %v11851 = vpack.c.b16 %v11075, %v11067
    %v11852 = vpack.c.b16 %v11076, %v11068
    %v11853 = vpack.c.b16 %v11077, %v11069
    %v11854 = vpack.c.b16 %v11078, %v11070
    %v11855 = vpack.c.b16 %v11079, %v11071
    %v11856 = vpack.c.b16 %v11080, %v11072
    %v11857 = vpack.c.b16 %v11081, %v11073
    %v11858 = vpack.c.b16 %v11082, %v11074
    %v11859 = vpack.c.b16 %v11091, %v11083
    %v11860 = vpack.c.b16 %v11092, %v11084
    %v11861 = vpack.c.b16 %v11093, %v11085
    %v11862 = vpack.c.b16 %v11094, %v11086
    %v11863 = vpack.c.b16 %v11095, %v11087
    %v11864 = vpack.c.b16 %v11096, %v11088
    %v11865 = vpack.c.b16 %v11097, %v11089
    %v11866 = vpack.c.b16 %v11098, %v11090
    %v11867 = vpack.c.b16 %v11107, %v11099
    %v11868 = vpack.c.b16 %v11108, %v11100
    %v11869 = vpack.c.b16 %v11109, %v11101
    %v11870 = vpack.c.b16 %v11110, %v11102
    %v11871 = vpack.c.b16 %v11111, %v11103
    %v11872 = vpack.c.b16 %v11112, %v11104
    %v11873 = vpack.c.b16 %v11113, %v11105
    %v11874 = vpack.c.b16 %v11114, %v11106
    %v11875 = vpack.c.b16 %v11123, %v11115
    %v11876 = vpack.c.b16 %v11124, %v11116
    %v11877 = vpack.c.b16 %v11125, %v11117
    %v11878 = vpack.c.b16 %v11126, %v11118
    %v11879 = vpack.c.b16 %v11127, %v11119
    %v11880 = vpack.c.b16 %v11128, %v11120
    %v11881 = vpack.c.b16 %v11129, %v11121
    %v11882 = vpack.c.b16 %v11130, %v11122
    %v11883 = vpack.c.b16 %v11139, %v11131
    %v11884 = vpack.c.b16 %v11140, %v11132
    %v11885 = vpack.c.b16 %v11141, %v11133
    %v11886 = vpack.c.b16 %v11142, %v11134
    %v11887 = vpack.c.b16 %v11143, %v11135
    %v11888 = vpack.c.b16 %v11144, %v11136
    %v11889 = vpack.c.b16 %v11145, %v11137
    %v11890 = vpack.c.b16 %v11146, %v11138
    %v11891 = vpack.c.b16 %v11155, %v11147
    %v11892 = vpack.c.b16 %v11156, %v11148
    %v11893 = vpack.c.b16 %v11157, %v11149
    %v11894 = vpack.c.b16 %v11158, %v11150
    %v11895 = vpack.c.b16 %v11159, %v11151
    %v11896 = vpack.c.b16 %v11160, %v11152
    %v11897 = vpack.c.b16 %v11161, %v11153
    %v11898 = vpack.c.b16 %v11162, %v11154
    %v11899 = vpack.c.b16 %v11171, %v11163
    %v11900 = vpack.c.b16 %v11172, %v11164
    %v11901 = vpack.c.b16 %v11173, %v11165
    %v11902 = vpack.c.b16 %v11174, %v11166
    %v11903 = vpack.c.b16 %v11175, %v11167
    %v11904 = vpack.c.b16 %v11176, %v11168
    %v11905 = vpack.c.b16 %v11177, %v11169
    %v11906 = vpack.c.b16 %v11178, %v11170
    %v11907 = vpack.c.b16 %v11187, %v11179
    %v11908 = vpack.c.b16 %v11188, %v11180
    %v11909 = vpack.c.b16 %v11189, %v11181
    %v11910 = vpack.c.b16 %v11190, %v11182
    %v11911 = vpack.c.b16 %v11191, %v11183
    %v11912 = vpack.c.b16 %v11192, %v11184
    %v11913 = vpack.c.b16 %v11193, %v11185
    %v11914 = vpack.c.b16 %v11194, %v11186
    %v11915 = vpack.c.b16 %v11203, %v11195
    %v11916 = vpack.c.b16 %v11204, %v11196
    %v11917 = vpack.c.b16 %v11205, %v11197
    %v11918 = vpack.c.b16 %v11206, %v11198
    %v11919 = vpack.c.b16 %v11207, %v11199
    %v11920 = vpack.c.b16 %v11208, %v11200
    %v11921 = vpack.c.b16 %v11209, %v11201
    %v11922 = vpack.c.b16 %v11210, %v11202
    %v11923 = vpack.c.b16 %v11219, %v11211
    %v11924 = vpack.c.b16 %v11220, %v11212
    %v11925 = vpack.c.b16 %v11221, %v11213
    %v11926 = vpack.c.b16 %v11222, %v11214
    %v11927 = vpack.c.b16 %v11223, %v11215
    %v11928 = vpack.c.b16 %v11224, %v11216
    %v11929 = vpack.c.b16 %v11225, %v11217
    %v11930 = vpack.c.b16 %v11226, %v11218
    %v11931 = vpack.c.b16 %v11235, %v11227
    %v11932 = vpack.c.b16 %v11236, %v11228
    %v11933 = vpack.c.b16 %v11237, %v11229
    %v11934 = vpack.c.b16 %v11238, %v11230
    %v11935 = vpack.c.b16 %v11239, %v11231
    %v11936 = vpack.c.b16 %v11240, %v11232
    %v11937 = vpack.c.b16 %v11241, %v11233
    %v11938 = vpack.c.b16 %v11242, %v11234
    %v11939 = vpack.c.b16 %v11251, %v11243
    %v11940 = vpack.c.b16 %v11252, %v11244
    %v11941 = vpack.c.b16 %v11253, %v11245
    %v11942 = vpack.c.b16 %v11254, %v11246
    %v11943 = vpack.c.b16 %v11255, %v11247
    %v11944 = vpack.c.b16 %v11256, %v11248
    %v11945 = vpack.c.b16 %v11257, %v11249
    %v11946 = vpack.c.b16 %v11258, %v11250
    %v11947 = vpack.c.b16 %v11267, %v11259
    %v11948 = vpack.c.b16 %v11268, %v11260
    %v11949 = vpack.c.b16 %v11269, %v11261
    %v11950 = vpack.c.b16 %v11270, %v11262
    %v11951 = vpack.c.b16 %v11271, %v11263
    %v11952 = vpack.c.b16 %v11272, %v11264
    %v11953 = vpack.c.b16 %v11273, %v11265
    %v11954 = vpack.c.b16 %v11274, %v11266
    %v11955 = vpack.c.b16 %v11283, %v11275
    %v11956 = vpack.c.b16 %v11284, %v11276
    %v11957 = vpack.c.b16 %v11285, %v11277
    %v11958 = vpack.c.b16 %v11286, %v11278
    %v11959 = vpack.c.b16 %v11287, %v11279
    %v11960 = vpack.c.b16 %v11288, %v11280
    %v11961 = vpack.c.b16 %v11289, %v11281
    %v11962 = vpack.c.b16 %v11290, %v11282
    %v11963 = vpack.c.b16 %v11299, %v11291
    %v11964 = vpack.c.b16 %v11300, %v11292
    %v11965 = vpack.c.b16 %v11301, %v11293
    %v11966 = vpack.c.b16 %v11302, %v11294
    %v11967 = vpack.c.b16 %v11303, %v11295
    %v11968 = vpack.c.b16 %v11304, %v11296
    %v11969 = vpack.c.b16 %v11305, %v11297
    %v11970 = vpack.c.b16 %v11306, %v11298
    %v11971 = vpack.c.b16 %v11315, %v11307
    %v11972 = vpack.c.b16 %v11316, %v11308
    %v11973 = vpack.c.b16 %v11317, %v11309
    %v11974 = vpack.c.b16 %v11318, %v11310
    %v11975 = vpack.c.b16 %v11319, %v11311
    %v11976 = vpack.c.b16 %v11320, %v11312
    %v11977 = vpack.c.b16 %v11321, %v11313
    %v11978 = vpack.c.b16 %v11322, %v11314
    %v11979 = vpack.c.b16 %v11331, %v11323
    %v11980 = vpack.c.b16 %v11332, %v11324
    %v11981 = vpack.c.b16 %v11333, %v11325
    %v11982 = vpack.c.b16 %v11334, %v11326
    %v11983 = vpack.c.b16 %v11335, %v11327
    %v11984 = vpack.c.b16 %v11336, %v11328
    %v11985 = vpack.c.b16 %v11337, %v11329
    %v11986 = vpack.c.b16 %v11338, %v11330
    %v11987 = vpack.c.b16 %v11347, %v11339
    %v11988 = vpack.c.b16 %v11348, %v11340
    %v11989 = vpack.c.b16 %v11349, %v11341
    %v11990 = vpack.c.b16 %v11350, %v11342
    %v11991 = vpack.c.b16 %v11351, %v11343
    %v11992 = vpack.c.b16 %v11352, %v11344
    %v11993 = vpack.c.b16 %v11353, %v11345
    %v11994 = vpack.c.b16 %v11354, %v11346
    %v11995 = vpack.c.b16 %v11363, %v11355
    %v11996 = vpack.c.b16 %v11364, %v11356
    %v11997 = vpack.c.b16 %v11365, %v11357
    %v11998 = vpack.c.b16 %v11366, %v11358
    %v11999 = vpack.c.b16 %v11367, %v11359
    %v12000 = vpack.c.b16 %v11368, %v11360
    %v12001 = vpack.c.b16 %v11369, %v11361
    %v12002 = vpack.c.b16 %v11370, %v11362
    %v12003 = vpack.c.b16 %v11379, %v11371
    %v12004 = vpack.c.b16 %v11380, %v11372
    %v12005 = vpack.c.b16 %v11381, %v11373
    %v12006 = vpack.c.b16 %v11382, %v11374
    %v12007 = vpack.c.b16 %v11383, %v11375
    %v12008 = vpack.c.b16 %v11384, %v11376
    %v12009 = vpack.c.b16 %v11385, %v11377
    %v12010 = vpack.c.b16 %v11386, %v11378
    %v12011 = vpack.c.b16 %v11395, %v11387
    %v12012 = vpack.c.b16 %v11396, %v11388
    %v12013 = vpack.c.b16 %v11397, %v11389
    %v12014 = vpack.c.b16 %v11398, %v11390
    %v12015 = vpack.c.b16 %v11399, %v11391
    %v12016 = vpack.c.b16 %v11400, %v11392
    %v12017 = vpack.c.b16 %v11401, %v11393
    %v12018 = vpack.c.b16 %v11402, %v11394
    %v12019 = vpack.c.b16 %v11411, %v11403
    %v12020 = vpack.c.b16 %v11412, %v11404
    %v12021 = vpack.c.b16 %v11413, %v11405
    %v12022 = vpack.c.b16 %v11414, %v11406
    %v12023 = vpack.c.b16 %v11415, %v11407
    %v12024 = vpack.c.b16 %v11416, %v11408
    %v12025 = vpack.c.b16 %v11417, %v11409
    %v12026 = vpack.c.b16 %v11418, %v11410
    %v12027 = vpack.c.b16 %v11427, %v11419
    %v12028 = vpack.c.b16 %v11428, %v11420
    %v12029 = vpack.c.b16 %v11429, %v11421
    %v12030 = vpack.c.b16 %v11430, %v11422
    %v12031 = vpack.c.b16 %v11431, %v11423
    %v12032 = vpack.c.b16 %v11432, %v11424
    %v12033 = vpack.c.b16 %v11433, %v11425
    %v12034 = vpack.c.b16 %v11434, %v11426
    %v12035 = vpack.c.b16 %v11443, %v11435
    %v12036 = vpack.c.b16 %v11444, %v11436
    %v12037 = vpack.c.b16 %v11445, %v11437
    %v12038 = vpack.c.b16 %v11446, %v11438
    %v12039 = vpack.c.b16 %v11447, %v11439
    %v12040 = vpack.c.b16 %v11448, %v11440
    %v12041 = vpack.c.b16 %v11449, %v11441
    %v12042 = vpack.c.b16 %v11450, %v11442
    %v12043 = vpack.c.b16 %v11459, %v11451
    %v12044 = vpack.c.b16 %v11460, %v11452
    %v12045 = vpack.c.b16 %v11461, %v11453
    %v12046 = vpack.c.b16 %v11462, %v11454
    %v12047 = vpack.c.b16 %v11463, %v11455
    %v12048 = vpack.c.b16 %v11464, %v11456
    %v12049 = vpack.c.b16 %v11465, %v11457
    %v12050 = vpack.c.b16 %v11466, %v11458
    %v12051 = vpack.c.b16 %v11475, %v11467
    %v12052 = vpack.c.b16 %v11476, %v11468
    %v12053 = vpack.c.b16 %v11477, %v11469
    %v12054 = vpack.c.b16 %v11478, %v11470
    %v12055 = vpack.c.b16 %v11479, %v11471
    %v12056 = vpack.c.b16 %v11480, %v11472
    %v12057 = vpack.c.b16 %v11481, %v11473
    %v12058 = vpack.c.b16 %v11482, %v11474
    %v12059 = vpack.c.b16 %v11491, %v11483
    %v12060 = vpack.c.b16 %v11492, %v11484
    %v12061 = vpack.c.b16 %v11493, %v11485
    %v12062 = vpack.c.b16 %v11494, %v11486
    %v12063 = vpack.c.b16 %v11495, %v11487
    %v12064 = vpack.c.b16 %v11496, %v11488
    %v12065 = vpack.c.b16 %v11497, %v11489
    %v12066 = vpack.c.b16 %v11498, %v11490
    %v12067 = vpack.c.b16 %v11507, %v11499
    %v12068 = vpack.c.b16 %v11508, %v11500
    %v12069 = vpack.c.b16 %v11509, %v11501
    %v12070 = vpack.c.b16 %v11510, %v11502
    %v12071 = vpack.c.b16 %v11511, %v11503
    %v12072 = vpack.c.b16 %v11512, %v11504
    %v12073 = vpack.c.b16 %v11513, %v11505
    %v12074 = vpack.c.b16 %v11514, %v11506
    %v12075 = vpack.c.b16 %v11523, %v11515
    %v12076 = vpack.c.b16 %v11524, %v11516
    %v12077 = vpack.c.b16 %v11525, %v11517
    %v12078 = vpack.c.b16 %v11526, %v11518
    %v12079 = vpack.c.b16 %v11527, %v11519
    %v12080 = vpack.c.b16 %v11528, %v11520
    %v12081 = vpack.c.b16 %v11529, %v11521
    %v12082 = vpack.c.b16 %v11530, %v11522
    %v12083 = vpack.c.b16 %v11539, %v11531
    %v12084 = vpack.c.b16 %v11540, %v11532
    %v12085 = vpack.c.b16 %v11541, %v11533
    %v12086 = vpack.c.b16 %v11542, %v11534
    %v12087 = vpack.c.b16 %v11543, %v11535
    %v12088 = vpack.c.b16 %v11544, %v11536
    %v12089 = vpack.c.b16 %v11545, %v11537
    %v12090 = vpack.c.b16 %v11546, %v11538
    %v12091 = vpack.c.b16 %v11555, %v11547
    %v12092 = vpack.c.b16 %v11556, %v11548
    %v12093 = vpack.c.b16 %v11557, %v11549
    %v12094 = vpack.c.b16 %v11558, %v11550
    %v12095 = vpack.c.b16 %v11559, %v11551
    %v12096 = vpack.c.b16 %v11560, %v11552
    %v12097 = vpack.c.b16 %v11561, %v11553
    %v12098 = vpack.c.b16 %v11562, %v11554
    %v12099 = vpack.c.b16 %v11571, %v11563
    %v12100 = vpack.c.b16 %v11572, %v11564
    %v12101 = vpack.c.b16 %v11573, %v11565
    %v12102 = vpack.c.b16 %v11574, %v11566
    %v12103 = vpack.c.b16 %v11575, %v11567
    %v12104 = vpack.c.b16 %v11576, %v11568
    %v12105 = vpack.c.b16 %v11577, %v11569
    %v12106 = vpack.c.b16 %v11578, %v11570
    %v12107 = vpack.c.b16 %v11587, %v11579
    %v12108 = vpack.c.b16 %v11588, %v11580
    %v12109 = vpack.c.b16 %v11589, %v11581
    %v12110 = vpack.c.b16 %v11590, %v11582
    %v12111 = vpack.c.b16 %v11591, %v11583
    %v12112 = vpack.c.b16 %v11592, %v11584
    %v12113 = vpack.c.b16 %v11593, %v11585
    %v12114 = vpack.c.b16 %v11594, %v11586
    %v12115 = vpack.c.b16 %v11603, %v11595
    %v12116 = vpack.c.b16 %v11604, %v11596
    %v12117 = vpack.c.b16 %v11605, %v11597
    %v12118 = vpack.c.b16 %v11606, %v11598
    %v12119 = vpack.c.b16 %v11607, %v11599
    %v12120 = vpack.c.b16 %v11608, %v11600
    %v12121 = vpack.c.b16 %v11609, %v11601
    %v12122 = vpack.c.b16 %v11610, %v11602
    %12635 = vmatprep.subr.bf16.mxu0 %v11612
    %12636 = vmatpush1.bf16.msra.mxu0 %v11611
    %12637 = vmatprep.subr.bf16.mxu0 %v11620
    %12638 = vmatpush1.bf16.msra.mxu0 %v11619
    %12639 = vmatprep.subr.bf16.mxu0 %v11628
    %12640 = vmatpush1.bf16.msra.mxu0 %v11627
    %12641 = vmatprep.subr.bf16.mxu0 %v11636
    %12642 = vmatpush1.bf16.msra.mxu0 %v11635
    %12643 = vmatprep.subr.bf16.mxu0 %v11644
    %12644 = vmatpush1.bf16.msra.mxu0 %v11643
    %12645 = vmatprep.subr.bf16.mxu0 %v11652
    %12646 = vmatpush1.bf16.msra.mxu0 %v11651
    %12647 = vmatprep.subr.bf16.mxu0 %v11660
    %12648 = vmatpush1.bf16.msra.mxu0 %v11659
    %12649 = vmatprep.subr.bf16.mxu0 %v11668
    %12650 = vmatpush1.bf16.msra.mxu0 %v11667
    %12651 = vmatprep.subr.bf16.mxu0 %v11676
    %12652 = vmatpush1.bf16.msra.mxu0 %v11675
    %12653 = vmatprep.subr.bf16.mxu0 %v11684
    %12654 = vmatpush1.bf16.msra.mxu0 %v11683
    %12655 = vmatprep.subr.bf16.mxu0 %v11692
    %12656 = vmatpush1.bf16.msra.mxu0 %v11691
    %12657 = vmatprep.subr.bf16.mxu0 %v11700
    %12658 = vmatpush1.bf16.msra.mxu0 %v11699
    %12659 = vmatprep.subr.bf16.mxu0 %v11708
    %12660 = vmatpush1.bf16.msra.mxu0 %v11707
    %12661 = vmatprep.subr.bf16.mxu0 %v11716
    %12662 = vmatpush1.bf16.msra.mxu0 %v11715
    %12663 = vmatprep.subr.bf16.mxu0 %v11724
    %12664 = vmatpush1.bf16.msra.mxu0 %v11723
    %12665 = vmatprep.subr.bf16.mxu0 %v11732
    %12666 = vmatpush1.bf16.msra.mxu0 %v11731
    %12667 = vmatprep.mubr.bf16.mxu0 %v10060
    %12668 = vmatmul.mubr.bf16.gmra.mrb[0].mxu0 %v10059
    %v12669 = vpop.f32.mrb[0].mxu0
    %v12670 = vadd.f32 %v10010, %v12669
    %v12671 = vpop.f32.mrb[0].mxu0
    %v12672 = vadd.f32 %v10014, %v12671
    %v12673 = vpop.f32.mrb[0].mxu0
    %v12674 = vpop.f32.mrb[0].mxu0
    %12675 = vdwg.mxu0
    %12676 = vmatprep.subr.bf16.mxu0 %v11740
    %12677 = vmatpush1.bf16.msra.mxu0 %v11739
    %12678 = vmatprep.subr.bf16.mxu0 %v11748
    %12679 = vmatpush1.bf16.msra.mxu0 %v11747
    %12680 = vmatprep.subr.bf16.mxu0 %v11756
    %12681 = vmatpush1.bf16.msra.mxu0 %v11755
    %12682 = vmatprep.subr.bf16.mxu0 %v11764
    %12683 = vmatpush1.bf16.msra.mxu0 %v11763
    %12684 = vmatprep.subr.bf16.mxu0 %v11772
    %12685 = vmatpush1.bf16.msra.mxu0 %v11771
    %12686 = vmatprep.subr.bf16.mxu0 %v11780
    %12687 = vmatpush1.bf16.msra.mxu0 %v11779
    %12688 = vmatprep.subr.bf16.mxu0 %v11788
    %12689 = vmatpush1.bf16.msra.mxu0 %v11787
    %12690 = vmatprep.subr.bf16.mxu0 %v11796
    %12691 = vmatpush1.bf16.msra.mxu0 %v11795
    %12692 = vmatprep.subr.bf16.mxu0 %v11804
    %12693 = vmatpush1.bf16.msra.mxu0 %v11803
    %12694 = vmatprep.subr.bf16.mxu0 %v11812
    %12695 = vmatpush1.bf16.msra.mxu0 %v11811
    %12696 = vmatprep.subr.bf16.mxu0 %v11820
    %12697 = vmatpush1.bf16.msra.mxu0 %v11819
    %12698 = vmatprep.subr.bf16.mxu0 %v11828
    %12699 = vmatpush1.bf16.msra.mxu0 %v11827
    %12700 = vmatprep.subr.bf16.mxu0 %v11836
    %12701 = vmatpush1.bf16.msra.mxu0 %v11835
    %12702 = vmatprep.subr.bf16.mxu0 %v11844
    %12703 = vmatpush1.bf16.msra.mxu0 %v11843
    %12704 = vmatprep.subr.bf16.mxu0 %v11852
    %12705 = vmatpush1.bf16.msra.mxu0 %v11851
    %12706 = vmatprep.subr.bf16.mxu0 %v11860
    %12707 = vmatpush1.bf16.msra.mxu0 %v11859
    %12708 = vmatprep.mubr.bf16.mxu0 %v10062
    %12709 = vmatmul.mubr.bf16.gmra.mrb[0].mxu0 %v10061
    %v12710 = vpop.f32.mrb[0].mxu0
    %v12711 = vadd.f32 %v12670, %v12710
    %v12712 = vpop.f32.mrb[0].mxu0
    %v12713 = vadd.f32 %v12672, %v12712
    %v12714 = vpop.f32.mrb[0].mxu0
    %v12715 = vpop.f32.mrb[0].mxu0
    %12716 = vdwg.mxu0
    %12717 = vmatprep.subr.bf16.mxu0 %v11868
    %12718 = vmatpush1.bf16.msra.mxu0 %v11867
    %12719 = vmatprep.subr.bf16.mxu0 %v11876
    %12720 = vmatpush1.bf16.msra.mxu0 %v11875
    %12721 = vmatprep.subr.bf16.mxu0 %v11884
    %12722 = vmatpush1.bf16.msra.mxu0 %v11883
    %12723 = vmatprep.subr.bf16.mxu0 %v11892
    %12724 = vmatpush1.bf16.msra.mxu0 %v11891
    %12725 = vmatprep.subr.bf16.mxu0 %v11900
    %12726 = vmatpush1.bf16.msra.mxu0 %v11899
    %12727 = vmatprep.subr.bf16.mxu0 %v11908
    %12728 = vmatpush1.bf16.msra.mxu0 %v11907
    %12729 = vmatprep.subr.bf16.mxu0 %v11916
    %12730 = vmatpush1.bf16.msra.mxu0 %v11915
    %12731 = vmatprep.subr.bf16.mxu0 %v11924
    %12732 = vmatpush1.bf16.msra.mxu0 %v11923
    %12733 = vmatprep.subr.bf16.mxu0 %v11932
    %12734 = vmatpush1.bf16.msra.mxu0 %v11931
    %12735 = vmatprep.subr.bf16.mxu0 %v11940
    %12736 = vmatpush1.bf16.msra.mxu0 %v11939
    %12737 = vmatprep.subr.bf16.mxu0 %v11948
    %12738 = vmatpush1.bf16.msra.mxu0 %v11947
    %12739 = vmatprep.subr.bf16.mxu0 %v11956
    %12740 = vmatpush1.bf16.msra.mxu0 %v11955
    %12741 = vmatprep.subr.bf16.mxu0 %v11964
    %12742 = vmatpush1.bf16.msra.mxu0 %v11963
    %12743 = vmatprep.subr.bf16.mxu0 %v11972
    %12744 = vmatpush1.bf16.msra.mxu0 %v11971
    %12745 = vmatprep.subr.bf16.mxu0 %v11980
    %12746 = vmatpush1.bf16.msra.mxu0 %v11979
    %12747 = vmatprep.subr.bf16.mxu0 %v11988
    %12748 = vmatpush1.bf16.msra.mxu0 %v11987
    %12749 = vmatprep.mubr.bf16.mxu0 %v10064
    %12750 = vmatmul.mubr.bf16.gmra.mrb[0].mxu0 %v10063
    %v12751 = vpop.f32.mrb[0].mxu0
    %v12752 = vadd.f32 %v12711, %v12751
    %v12753 = vpop.f32.mrb[0].mxu0
    %v12754 = vadd.f32 %v12713, %v12753
    %v12755 = vpop.f32.mrb[0].mxu0
    %v12756 = vpop.f32.mrb[0].mxu0
    %12757 = vdwg.mxu0
    %12758 = vmatprep.subr.bf16.mxu0 %v11996
    %12759 = vmatpush1.bf16.msra.mxu0 %v11995
    %12760 = vmatprep.subr.bf16.mxu0 %v12004
    %12761 = vmatpush1.bf16.msra.mxu0 %v12003
    %12762 = vmatprep.subr.bf16.mxu0 %v12012
    %12763 = vmatpush1.bf16.msra.mxu0 %v12011
    %12764 = vmatprep.subr.bf16.mxu0 %v12020
    %12765 = vmatpush1.bf16.msra.mxu0 %v12019
    %12766 = vmatprep.subr.bf16.mxu0 %v12028
    %12767 = vmatpush1.bf16.msra.mxu0 %v12027
    %12768 = vmatprep.subr.bf16.mxu0 %v12036
    %12769 = vmatpush1.bf16.msra.mxu0 %v12035
    %12770 = vmatprep.subr.bf16.mxu0 %v12044
    %12771 = vmatpush1.bf16.msra.mxu0 %v12043
    %12772 = vmatprep.subr.bf16.mxu0 %v12052
    %12773 = vmatpush1.bf16.msra.mxu0 %v12051
    %12774 = vmatprep.subr.bf16.mxu0 %v12060
    %12775 = vmatpush1.bf16.msra.mxu0 %v12059
    %12776 = vmatprep.subr.bf16.mxu0 %v12068
    %12777 = vmatpush1.bf16.msra.mxu0 %v12067
    %12778 = vmatprep.subr.bf16.mxu0 %v12076
    %12779 = vmatpush1.bf16.msra.mxu0 %v12075
    %12780 = vmatprep.subr.bf16.mxu0 %v12084
    %12781 = vmatpush1.bf16.msra.mxu0 %v12083
    %12782 = vmatprep.subr.bf16.mxu0 %v12092
    %12783 = vmatpush1.bf16.msra.mxu0 %v12091
    %12784 = vmatprep.subr.bf16.mxu0 %v12100
    %12785 = vmatpush1.bf16.msra.mxu0 %v12099
    %12786 = vmatprep.subr.bf16.mxu0 %v12108
    %12787 = vmatpush1.bf16.msra.mxu0 %v12107
    %12788 = vmatprep.subr.bf16.mxu0 %v12116
    %12789 = vmatpush1.bf16.msra.mxu0 %v12115
    %12790 = vmatprep.mubr.bf16.mxu0 %v10066
    %12791 = vmatmul.mubr.bf16.gmra.mrb[0].mxu0 %v10065
    %v12792 = vpop.f32.mrb[0].mxu0
    %v12793 = vadd.f32 %v12752, %v12792
    %v12794 = vpop.f32.mrb[0].mxu0
    %v12795 = vadd.f32 %v12754, %v12794
    %v12796 = vpop.f32.mrb[0].mxu0
    %v12797 = vpop.f32.mrb[0].mxu0
    %12798 = vdwg.mxu0
    %12799 = vmatprep.subr.bf16.mxu0 %v11614
    %12800 = vmatpush1.bf16.msra.mxu0 %v11613
    %12801 = vmatprep.subr.bf16.mxu0 %v11622
    %12802 = vmatpush1.bf16.msra.mxu0 %v11621
    %12803 = vmatprep.subr.bf16.mxu0 %v11630
    %12804 = vmatpush1.bf16.msra.mxu0 %v11629
    %12805 = vmatprep.subr.bf16.mxu0 %v11638
    %12806 = vmatpush1.bf16.msra.mxu0 %v11637
    %12807 = vmatprep.subr.bf16.mxu0 %v11646
    %12808 = vmatpush1.bf16.msra.mxu0 %v11645
    %12809 = vmatprep.subr.bf16.mxu0 %v11654
    %12810 = vmatpush1.bf16.msra.mxu0 %v11653
    %12811 = vmatprep.subr.bf16.mxu0 %v11662
    %12812 = vmatpush1.bf16.msra.mxu0 %v11661
    %12813 = vmatprep.subr.bf16.mxu0 %v11670
    %12814 = vmatpush1.bf16.msra.mxu0 %v11669
    %12815 = vmatprep.subr.bf16.mxu0 %v11678
    %12816 = vmatpush1.bf16.msra.mxu0 %v11677
    %12817 = vmatprep.subr.bf16.mxu0 %v11686
    %12818 = vmatpush1.bf16.msra.mxu0 %v11685
    %12819 = vmatprep.subr.bf16.mxu0 %v11694
    %12820 = vmatpush1.bf16.msra.mxu0 %v11693
    %12821 = vmatprep.subr.bf16.mxu0 %v11702
    %12822 = vmatpush1.bf16.msra.mxu0 %v11701
    %12823 = vmatprep.subr.bf16.mxu0 %v11710
    %12824 = vmatpush1.bf16.msra.mxu0 %v11709
    %12825 = vmatprep.subr.bf16.mxu0 %v11718
    %12826 = vmatpush1.bf16.msra.mxu0 %v11717
    %12827 = vmatprep.subr.bf16.mxu0 %v11726
    %12828 = vmatpush1.bf16.msra.mxu0 %v11725
    %12829 = vmatprep.subr.bf16.mxu0 %v11734
    %12830 = vmatpush1.bf16.msra.mxu0 %v11733
    %12831 = vmatprep.mubr.bf16.mxu0 %v10060
    %12832 = vmatmul.mubr.bf16.gmra.mrb[0].mxu0 %v10059
    %v12833 = vpop.f32.mrb[0].mxu0
    %v12834 = vadd.f32 %v10018, %v12833
    %v12835 = vpop.f32.mrb[0].mxu0
    %v12836 = vadd.f32 %v10022, %v12835
    %v12837 = vpop.f32.mrb[0].mxu0
    %v12838 = vpop.f32.mrb[0].mxu0
    %12839 = vdwg.mxu0
    %12840 = vmatprep.subr.bf16.mxu0 %v11742
    %12841 = vmatpush1.bf16.msra.mxu0 %v11741
    %12842 = vmatprep.subr.bf16.mxu0 %v11750
    %12843 = vmatpush1.bf16.msra.mxu0 %v11749
    %12844 = vmatprep.subr.bf16.mxu0 %v11758
    %12845 = vmatpush1.bf16.msra.mxu0 %v11757
    %12846 = vmatprep.subr.bf16.mxu0 %v11766
    %12847 = vmatpush1.bf16.msra.mxu0 %v11765
    %12848 = vmatprep.subr.bf16.mxu0 %v11774
    %12849 = vmatpush1.bf16.msra.mxu0 %v11773
    %12850 = vmatprep.subr.bf16.mxu0 %v11782
    %12851 = vmatpush1.bf16.msra.mxu0 %v11781
    %12852 = vmatprep.subr.bf16.mxu0 %v11790
    %12853 = vmatpush1.bf16.msra.mxu0 %v11789
    %12854 = vmatprep.subr.bf16.mxu0 %v11798
    %12855 = vmatpush1.bf16.msra.mxu0 %v11797
    %12856 = vmatprep.subr.bf16.mxu0 %v11806
    %12857 = vmatpush1.bf16.msra.mxu0 %v11805
    %12858 = vmatprep.subr.bf16.mxu0 %v11814
    %12859 = vmatpush1.bf16.msra.mxu0 %v11813
    %12860 = vmatprep.subr.bf16.mxu0 %v11822
    %12861 = vmatpush1.bf16.msra.mxu0 %v11821
    %12862 = vmatprep.subr.bf16.mxu0 %v11830
    %12863 = vmatpush1.bf16.msra.mxu0 %v11829
    %12864 = vmatprep.subr.bf16.mxu0 %v11838
    %12865 = vmatpush1.bf16.msra.mxu0 %v11837
    %12866 = vmatprep.subr.bf16.mxu0 %v11846
    %12867 = vmatpush1.bf16.msra.mxu0 %v11845
    %12868 = vmatprep.subr.bf16.mxu0 %v11854
    %12869 = vmatpush1.bf16.msra.mxu0 %v11853
    %12870 = vmatprep.subr.bf16.mxu0 %v11862
    %12871 = vmatpush1.bf16.msra.mxu0 %v11861
    %12872 = vmatprep.mubr.bf16.mxu0 %v10062
    %12873 = vmatmul.mubr.bf16.gmra.mrb[0].mxu0 %v10061
    %v12874 = vpop.f32.mrb[0].mxu0
    %v12875 = vadd.f32 %v12834, %v12874
    %v12876 = vpop.f32.mrb[0].mxu0
    %v12877 = vadd.f32 %v12836, %v12876
    %v12878 = vpop.f32.mrb[0].mxu0
    %v12879 = vpop.f32.mrb[0].mxu0
    %12880 = vdwg.mxu0
    %12881 = vmatprep.subr.bf16.mxu0 %v11870
    %12882 = vmatpush1.bf16.msra.mxu0 %v11869
    %12883 = vmatprep.subr.bf16.mxu0 %v11878
    %12884 = vmatpush1.bf16.msra.mxu0 %v11877
    %12885 = vmatprep.subr.bf16.mxu0 %v11886
    %12886 = vmatpush1.bf16.msra.mxu0 %v11885
    %12887 = vmatprep.subr.bf16.mxu0 %v11894
    %12888 = vmatpush1.bf16.msra.mxu0 %v11893
    %12889 = vmatprep.subr.bf16.mxu0 %v11902
    %12890 = vmatpush1.bf16.msra.mxu0 %v11901
    %12891 = vmatprep.subr.bf16.mxu0 %v11910
    %12892 = vmatpush1.bf16.msra.mxu0 %v11909
    %12893 = vmatprep.subr.bf16.mxu0 %v11918
    %12894 = vmatpush1.bf16.msra.mxu0 %v11917
    %12895 = vmatprep.subr.bf16.mxu0 %v11926
    %12896 = vmatpush1.bf16.msra.mxu0 %v11925
    %12897 = vmatprep.subr.bf16.mxu0 %v11934
    %12898 = vmatpush1.bf16.msra.mxu0 %v11933
    %12899 = vmatprep.subr.bf16.mxu0 %v11942
    %12900 = vmatpush1.bf16.msra.mxu0 %v11941
    %12901 = vmatprep.subr.bf16.mxu0 %v11950
    %12902 = vmatpush1.bf16.msra.mxu0 %v11949
    %12903 = vmatprep.subr.bf16.mxu0 %v11958
    %12904 = vmatpush1.bf16.msra.mxu0 %v11957
    %12905 = vmatprep.subr.bf16.mxu0 %v11966
    %12906 = vmatpush1.bf16.msra.mxu0 %v11965
    %12907 = vmatprep.subr.bf16.mxu0 %v11974
    %12908 = vmatpush1.bf16.msra.mxu0 %v11973
    %12909 = vmatprep.subr.bf16.mxu0 %v11982
    %12910 = vmatpush1.bf16.msra.mxu0 %v11981
    %12911 = vmatprep.subr.bf16.mxu0 %v11990
    %12912 = vmatpush1.bf16.msra.mxu0 %v11989
    %12913 = vmatprep.mubr.bf16.mxu0 %v10064
    %12914 = vmatmul.mubr.bf16.gmra.mrb[0].mxu0 %v10063
    %v12915 = vpop.f32.mrb[0].mxu0
    %v12916 = vadd.f32 %v12875, %v12915
    %v12917 = vpop.f32.mrb[0].mxu0
    %v12918 = vadd.f32 %v12877, %v12917
    %v12919 = vpop.f32.mrb[0].mxu0
    %v12920 = vpop.f32.mrb[0].mxu0
    %12921 = vdwg.mxu0
    %12922 = vmatprep.subr.bf16.mxu0 %v11998
    %12923 = vmatpush1.bf16.msra.mxu0 %v11997
    %12924 = vmatprep.subr.bf16.mxu0 %v12006
    %12925 = vmatpush1.bf16.msra.mxu0 %v12005
    %12926 = vmatprep.subr.bf16.mxu0 %v12014
    %12927 = vmatpush1.bf16.msra.mxu0 %v12013
    %12928 = vmatprep.subr.bf16.mxu0 %v12022
    %12929 = vmatpush1.bf16.msra.mxu0 %v12021
    %12930 = vmatprep.subr.bf16.mxu0 %v12030
    %12931 = vmatpush1.bf16.msra.mxu0 %v12029
    %12932 = vmatprep.subr.bf16.mxu0 %v12038
    %12933 = vmatpush1.bf16.msra.mxu0 %v12037
    %12934 = vmatprep.subr.bf16.mxu0 %v12046
    %12935 = vmatpush1.bf16.msra.mxu0 %v12045
    %12936 = vmatprep.subr.bf16.mxu0 %v12054
    %12937 = vmatpush1.bf16.msra.mxu0 %v12053
    %12938 = vmatprep.subr.bf16.mxu0 %v12062
    %12939 = vmatpush1.bf16.msra.mxu0 %v12061
    %12940 = vmatprep.subr.bf16.mxu0 %v12070
    %12941 = vmatpush1.bf16.msra.mxu0 %v12069
    %12942 = vmatprep.subr.bf16.mxu0 %v12078
    %12943 = vmatpush1.bf16.msra.mxu0 %v12077
    %12944 = vmatprep.subr.bf16.mxu0 %v12086
    %12945 = vmatpush1.bf16.msra.mxu0 %v12085
    %12946 = vmatprep.subr.bf16.mxu0 %v12094
    %12947 = vmatpush1.bf16.msra.mxu0 %v12093
    %12948 = vmatprep.subr.bf16.mxu0 %v12102
    %12949 = vmatpush1.bf16.msra.mxu0 %v12101
    %12950 = vmatprep.subr.bf16.mxu0 %v12110
    %12951 = vmatpush1.bf16.msra.mxu0 %v12109
    %12952 = vmatprep.subr.bf16.mxu0 %v12118
    %12953 = vmatpush1.bf16.msra.mxu0 %v12117
    %12954 = vmatprep.mubr.bf16.mxu0 %v10066
    %12955 = vmatmul.mubr.bf16.gmra.mrb[0].mxu0 %v10065
    %v12956 = vpop.f32.mrb[0].mxu0
    %v12957 = vadd.f32 %v12916, %v12956
    %v12958 = vpop.f32.mrb[0].mxu0
    %v12959 = vadd.f32 %v12918, %v12958
    %v12960 = vpop.f32.mrb[0].mxu0
    %v12961 = vpop.f32.mrb[0].mxu0
    %12962 = vdwg.mxu0
    %12963 = vmatprep.subr.bf16.mxu0 %v11616
    %12964 = vmatpush1.bf16.msra.mxu0 %v11615
    %12965 = vmatprep.subr.bf16.mxu0 %v11624
    %12966 = vmatpush1.bf16.msra.mxu0 %v11623
    %12967 = vmatprep.subr.bf16.mxu0 %v11632
    %12968 = vmatpush1.bf16.msra.mxu0 %v11631
    %12969 = vmatprep.subr.bf16.mxu0 %v11640
    %12970 = vmatpush1.bf16.msra.mxu0 %v11639
    %12971 = vmatprep.subr.bf16.mxu0 %v11648
    %12972 = vmatpush1.bf16.msra.mxu0 %v11647
    %12973 = vmatprep.subr.bf16.mxu0 %v11656
    %12974 = vmatpush1.bf16.msra.mxu0 %v11655
    %12975 = vmatprep.subr.bf16.mxu0 %v11664
    %12976 = vmatpush1.bf16.msra.mxu0 %v11663
    %12977 = vmatprep.subr.bf16.mxu0 %v11672
    %12978 = vmatpush1.bf16.msra.mxu0 %v11671
    %12979 = vmatprep.subr.bf16.mxu0 %v11680
    %12980 = vmatpush1.bf16.msra.mxu0 %v11679
    %12981 = vmatprep.subr.bf16.mxu0 %v11688
    %12982 = vmatpush1.bf16.msra.mxu0 %v11687
    %12983 = vmatprep.subr.bf16.mxu0 %v11696
    %12984 = vmatpush1.bf16.msra.mxu0 %v11695
    %12985 = vmatprep.subr.bf16.mxu0 %v11704
    %12986 = vmatpush1.bf16.msra.mxu0 %v11703
    %12987 = vmatprep.subr.bf16.mxu0 %v11712
    %12988 = vmatpush1.bf16.msra.mxu0 %v11711
    %12989 = vmatprep.subr.bf16.mxu0 %v11720
    %12990 = vmatpush1.bf16.msra.mxu0 %v11719
    %12991 = vmatprep.subr.bf16.mxu0 %v11728
    %12992 = vmatpush1.bf16.msra.mxu0 %v11727
    %12993 = vmatprep.subr.bf16.mxu0 %v11736
    %12994 = vmatpush1.bf16.msra.mxu0 %v11735
    %12995 = vmatprep.mubr.bf16.mxu0 %v10060
    %12996 = vmatmul.mubr.bf16.gmra.mrb[0].mxu0 %v10059
    %v12997 = vpop.f32.mrb[0].mxu0
    %v12998 = vadd.f32 %v10026, %v12997
    %v12999 = vpop.f32.mrb[0].mxu0
    %v13000 = vadd.f32 %v10030, %v12999
    %v13001 = vpop.f32.mrb[0].mxu0
    %v13002 = vpop.f32.mrb[0].mxu0
    %13003 = vdwg.mxu0
    %13004 = vmatprep.subr.bf16.mxu0 %v11744
    %13005 = vmatpush1.bf16.msra.mxu0 %v11743
    %13006 = vmatprep.subr.bf16.mxu0 %v11752
    %13007 = vmatpush1.bf16.msra.mxu0 %v11751
    %13008 = vmatprep.subr.bf16.mxu0 %v11760
    %13009 = vmatpush1.bf16.msra.mxu0 %v11759
    %13010 = vmatprep.subr.bf16.mxu0 %v11768
    %13011 = vmatpush1.bf16.msra.mxu0 %v11767
    %13012 = vmatprep.subr.bf16.mxu0 %v11776
    %13013 = vmatpush1.bf16.msra.mxu0 %v11775
    %13014 = vmatprep.subr.bf16.mxu0 %v11784
    %13015 = vmatpush1.bf16.msra.mxu0 %v11783
    %13016 = vmatprep.subr.bf16.mxu0 %v11792
    %13017 = vmatpush1.bf16.msra.mxu0 %v11791
    %13018 = vmatprep.subr.bf16.mxu0 %v11800
    %13019 = vmatpush1.bf16.msra.mxu0 %v11799
    %13020 = vmatprep.subr.bf16.mxu0 %v11808
    %13021 = vmatpush1.bf16.msra.mxu0 %v11807
    %13022 = vmatprep.subr.bf16.mxu0 %v11816
    %13023 = vmatpush1.bf16.msra.mxu0 %v11815
    %13024 = vmatprep.subr.bf16.mxu0 %v11824
    %13025 = vmatpush1.bf16.msra.mxu0 %v11823
    %13026 = vmatprep.subr.bf16.mxu0 %v11832
    %13027 = vmatpush1.bf16.msra.mxu0 %v11831
    %13028 = vmatprep.subr.bf16.mxu0 %v11840
    %13029 = vmatpush1.bf16.msra.mxu0 %v11839
    %13030 = vmatprep.subr.bf16.mxu0 %v11848
    %13031 = vmatpush1.bf16.msra.mxu0 %v11847
    %13032 = vmatprep.subr.bf16.mxu0 %v11856
    %13033 = vmatpush1.bf16.msra.mxu0 %v11855
    %13034 = vmatprep.subr.bf16.mxu0 %v11864
    %13035 = vmatpush1.bf16.msra.mxu0 %v11863
    %13036 = vmatprep.mubr.bf16.mxu0 %v10062
    %13037 = vmatmul.mubr.bf16.gmra.mrb[0].mxu0 %v10061
    %v13038 = vpop.f32.mrb[0].mxu0
    %v13039 = vadd.f32 %v12998, %v13038
    %v13040 = vpop.f32.mrb[0].mxu0
    %v13041 = vadd.f32 %v13000, %v13040
    %v13042 = vpop.f32.mrb[0].mxu0
    %v13043 = vpop.f32.mrb[0].mxu0
    %13044 = vdwg.mxu0
    %13045 = vmatprep.subr.bf16.mxu0 %v11872
    %13046 = vmatpush1.bf16.msra.mxu0 %v11871
    %13047 = vmatprep.subr.bf16.mxu0 %v11880
    %13048 = vmatpush1.bf16.msra.mxu0 %v11879
    %13049 = vmatprep.subr.bf16.mxu0 %v11888
    %13050 = vmatpush1.bf16.msra.mxu0 %v11887
    %13051 = vmatprep.subr.bf16.mxu0 %v11896
    %13052 = vmatpush1.bf16.msra.mxu0 %v11895
    %13053 = vmatprep.subr.bf16.mxu0 %v11904
    %13054 = vmatpush1.bf16.msra.mxu0 %v11903
    %13055 = vmatprep.subr.bf16.mxu0 %v11912
    %13056 = vmatpush1.bf16.msra.mxu0 %v11911
    %13057 = vmatprep.subr.bf16.mxu0 %v11920
    %13058 = vmatpush1.bf16.msra.mxu0 %v11919
    %13059 = vmatprep.subr.bf16.mxu0 %v11928
    %13060 = vmatpush1.bf16.msra.mxu0 %v11927
    %13061 = vmatprep.subr.bf16.mxu0 %v11936
    %13062 = vmatpush1.bf16.msra.mxu0 %v11935
    %13063 = vmatprep.subr.bf16.mxu0 %v11944
    %13064 = vmatpush1.bf16.msra.mxu0 %v11943
    %13065 = vmatprep.subr.bf16.mxu0 %v11952
    %13066 = vmatpush1.bf16.msra.mxu0 %v11951
    %13067 = vmatprep.subr.bf16.mxu0 %v11960
    %13068 = vmatpush1.bf16.msra.mxu0 %v11959
    %13069 = vmatprep.subr.bf16.mxu0 %v11968
    %13070 = vmatpush1.bf16.msra.mxu0 %v11967
    %13071 = vmatprep.subr.bf16.mxu0 %v11976
    %13072 = vmatpush1.bf16.msra.mxu0 %v11975
    %13073 = vmatprep.subr.bf16.mxu0 %v11984
    %13074 = vmatpush1.bf16.msra.mxu0 %v11983
    %13075 = vmatprep.subr.bf16.mxu0 %v11992
    %13076 = vmatpush1.bf16.msra.mxu0 %v11991
    %13077 = vmatprep.mubr.bf16.mxu0 %v10064
    %13078 = vmatmul.mubr.bf16.gmra.mrb[0].mxu0 %v10063
    %v13079 = vpop.f32.mrb[0].mxu0
    %v13080 = vadd.f32 %v13039, %v13079
    %v13081 = vpop.f32.mrb[0].mxu0
    %v13082 = vadd.f32 %v13041, %v13081
    %v13083 = vpop.f32.mrb[0].mxu0
    %v13084 = vpop.f32.mrb[0].mxu0
    %13085 = vdwg.mxu0
    %13086 = vmatprep.subr.bf16.mxu0 %v12000
    %13087 = vmatpush1.bf16.msra.mxu0 %v11999
    %13088 = vmatprep.subr.bf16.mxu0 %v12008
    %13089 = vmatpush1.bf16.msra.mxu0 %v12007
    %13090 = vmatprep.subr.bf16.mxu0 %v12016
    %13091 = vmatpush1.bf16.msra.mxu0 %v12015
    %13092 = vmatprep.subr.bf16.mxu0 %v12024
    %13093 = vmatpush1.bf16.msra.mxu0 %v12023
    %13094 = vmatprep.subr.bf16.mxu0 %v12032
    %13095 = vmatpush1.bf16.msra.mxu0 %v12031
    %13096 = vmatprep.subr.bf16.mxu0 %v12040
    %13097 = vmatpush1.bf16.msra.mxu0 %v12039
    %13098 = vmatprep.subr.bf16.mxu0 %v12048
    %13099 = vmatpush1.bf16.msra.mxu0 %v12047
    %13100 = vmatprep.subr.bf16.mxu0 %v12056
    %13101 = vmatpush1.bf16.msra.mxu0 %v12055
    %13102 = vmatprep.subr.bf16.mxu0 %v12064
    %13103 = vmatpush1.bf16.msra.mxu0 %v12063
    %13104 = vmatprep.subr.bf16.mxu0 %v12072
    %13105 = vmatpush1.bf16.msra.mxu0 %v12071
    %13106 = vmatprep.subr.bf16.mxu0 %v12080
    %13107 = vmatpush1.bf16.msra.mxu0 %v12079
    %13108 = vmatprep.subr.bf16.mxu0 %v12088
    %13109 = vmatpush1.bf16.msra.mxu0 %v12087
    %13110 = vmatprep.subr.bf16.mxu0 %v12096
    %13111 = vmatpush1.bf16.msra.mxu0 %v12095
    %13112 = vmatprep.subr.bf16.mxu0 %v12104
    %13113 = vmatpush1.bf16.msra.mxu0 %v12103
    %13114 = vmatprep.subr.bf16.mxu0 %v12112
    %13115 = vmatpush1.bf16.msra.mxu0 %v12111
    %13116 = vmatprep.subr.bf16.mxu0 %v12120
    %13117 = vmatpush1.bf16.msra.mxu0 %v12119
    %13118 = vmatprep.mubr.bf16.mxu0 %v10066
    %13119 = vmatmul.mubr.bf16.gmra.mrb[0].mxu0 %v10065
    %v13120 = vpop.f32.mrb[0].mxu0
    %v13121 = vadd.f32 %v13080, %v13120
    %v13122 = vpop.f32.mrb[0].mxu0
    %v13123 = vadd.f32 %v13082, %v13122
    %v13124 = vpop.f32.mrb[0].mxu0
    %v13125 = vpop.f32.mrb[0].mxu0
    %13126 = vdwg.mxu0
    %13127 = vmatprep.subr.bf16.mxu0 %v11618
    %13128 = vmatpush1.bf16.msra.mxu0 %v11617
    %13129 = vmatprep.subr.bf16.mxu0 %v11626
    %13130 = vmatpush1.bf16.msra.mxu0 %v11625
    %13131 = vmatprep.subr.bf16.mxu0 %v11634
    %13132 = vmatpush1.bf16.msra.mxu0 %v11633
    %13133 = vmatprep.subr.bf16.mxu0 %v11642
    %13134 = vmatpush1.bf16.msra.mxu0 %v11641
    %13135 = vmatprep.subr.bf16.mxu0 %v11650
    %13136 = vmatpush1.bf16.msra.mxu0 %v11649
    %13137 = vmatprep.subr.bf16.mxu0 %v11658
    %13138 = vmatpush1.bf16.msra.mxu0 %v11657
    %13139 = vmatprep.subr.bf16.mxu0 %v11666
    %13140 = vmatpush1.bf16.msra.mxu0 %v11665
    %13141 = vmatprep.subr.bf16.mxu0 %v11674
    %13142 = vmatpush1.bf16.msra.mxu0 %v11673
    %13143 = vmatprep.subr.bf16.mxu0 %v11682
    %13144 = vmatpush1.bf16.msra.mxu0 %v11681
    %13145 = vmatprep.subr.bf16.mxu0 %v11690
    %13146 = vmatpush1.bf16.msra.mxu0 %v11689
    %13147 = vmatprep.subr.bf16.mxu0 %v11698
    %13148 = vmatpush1.bf16.msra.mxu0 %v11697
    %13149 = vmatprep.subr.bf16.mxu0 %v11706
    %13150 = vmatpush1.bf16.msra.mxu0 %v11705
    %13151 = vmatprep.subr.bf16.mxu0 %v11714
    %13152 = vmatpush1.bf16.msra.mxu0 %v11713
    %13153 = vmatprep.subr.bf16.mxu0 %v11722
    %13154 = vmatpush1.bf16.msra.mxu0 %v11721
    %13155 = vmatprep.subr.bf16.mxu0 %v11730
    %13156 = vmatpush1.bf16.msra.mxu0 %v11729
    %13157 = vmatprep.subr.bf16.mxu0 %v11738
    %13158 = vmatpush1.bf16.msra.mxu0 %v11737
    %13159 = vmatprep.mubr.bf16.mxu0 %v10060
    %13160 = vmatmul.mubr.bf16.gmra.mrb[0].mxu0 %v10059
    %v13161 = vpop.f32.mrb[0].mxu0
    %v13162 = vadd.f32 %v10034, %v13161
    %v13163 = vpop.f32.mrb[0].mxu0
    %v13164 = vadd.f32 %v10038, %v13163
    %v13165 = vpop.f32.mrb[0].mxu0
    %v13166 = vpop.f32.mrb[0].mxu0
    %13167 = vdwg.mxu0
    %13168 = vmatprep.subr.bf16.mxu0 %v11746
    %13169 = vmatpush1.bf16.msra.mxu0 %v11745
    %13170 = vmatprep.subr.bf16.mxu0 %v11754
    %13171 = vmatpush1.bf16.msra.mxu0 %v11753
    %13172 = vmatprep.subr.bf16.mxu0 %v11762
    %13173 = vmatpush1.bf16.msra.mxu0 %v11761
    %13174 = vmatprep.subr.bf16.mxu0 %v11770
    %13175 = vmatpush1.bf16.msra.mxu0 %v11769
    %13176 = vmatprep.subr.bf16.mxu0 %v11778
    %13177 = vmatpush1.bf16.msra.mxu0 %v11777
    %13178 = vmatprep.subr.bf16.mxu0 %v11786
    %13179 = vmatpush1.bf16.msra.mxu0 %v11785
    %13180 = vmatprep.subr.bf16.mxu0 %v11794
    %13181 = vmatpush1.bf16.msra.mxu0 %v11793
    %13182 = vmatprep.subr.bf16.mxu0 %v11802
    %13183 = vmatpush1.bf16.msra.mxu0 %v11801
    %13184 = vmatprep.subr.bf16.mxu0 %v11810
    %13185 = vmatpush1.bf16.msra.mxu0 %v11809
    %13186 = vmatprep.subr.bf16.mxu0 %v11818
    %13187 = vmatpush1.bf16.msra.mxu0 %v11817
    %13188 = vmatprep.subr.bf16.mxu0 %v11826
    %13189 = vmatpush1.bf16.msra.mxu0 %v11825
    %13190 = vmatprep.subr.bf16.mxu0 %v11834
    %13191 = vmatpush1.bf16.msra.mxu0 %v11833
    %13192 = vmatprep.subr.bf16.mxu0 %v11842
    %13193 = vmatpush1.bf16.msra.mxu0 %v11841
    %13194 = vmatprep.subr.bf16.mxu0 %v11850
    %13195 = vmatpush1.bf16.msra.mxu0 %v11849
    %13196 = vmatprep.subr.bf16.mxu0 %v11858
    %13197 = vmatpush1.bf16.msra.mxu0 %v11857
    %13198 = vmatprep.subr.bf16.mxu0 %v11866
    %13199 = vmatpush1.bf16.msra.mxu0 %v11865
    %13200 = vmatprep.mubr.bf16.mxu0 %v10062
    %13201 = vmatmul.mubr.bf16.gmra.mrb[0].mxu0 %v10061
    %v13202 = vpop.f32.mrb[0].mxu0
    %v13203 = vadd.f32 %v13162, %v13202
    %v13204 = vpop.f32.mrb[0].mxu0
    %v13205 = vadd.f32 %v13164, %v13204
    %v13206 = vpop.f32.mrb[0].mxu0
    %v13207 = vpop.f32.mrb[0].mxu0
    %13208 = vdwg.mxu0
    %13209 = vmatprep.subr.bf16.mxu0 %v11874
    %13210 = vmatpush1.bf16.msra.mxu0 %v11873
    %13211 = vmatprep.subr.bf16.mxu0 %v11882
    %13212 = vmatpush1.bf16.msra.mxu0 %v11881
    %13213 = vmatprep.subr.bf16.mxu0 %v11890
    %13214 = vmatpush1.bf16.msra.mxu0 %v11889
    %13215 = vmatprep.subr.bf16.mxu0 %v11898
    %13216 = vmatpush1.bf16.msra.mxu0 %v11897
    %13217 = vmatprep.subr.bf16.mxu0 %v11906
    %13218 = vmatpush1.bf16.msra.mxu0 %v11905
    %13219 = vmatprep.subr.bf16.mxu0 %v11914
    %13220 = vmatpush1.bf16.msra.mxu0 %v11913
    %13221 = vmatprep.subr.bf16.mxu0 %v11922
    %13222 = vmatpush1.bf16.msra.mxu0 %v11921
    %13223 = vmatprep.subr.bf16.mxu0 %v11930
    %13224 = vmatpush1.bf16.msra.mxu0 %v11929
    %13225 = vmatprep.subr.bf16.mxu0 %v11938
    %13226 = vmatpush1.bf16.msra.mxu0 %v11937
    %13227 = vmatprep.subr.bf16.mxu0 %v11946
    %13228 = vmatpush1.bf16.msra.mxu0 %v11945
    %13229 = vmatprep.subr.bf16.mxu0 %v11954
    %13230 = vmatpush1.bf16.msra.mxu0 %v11953
    %13231 = vmatprep.subr.bf16.mxu0 %v11962
    %13232 = vmatpush1.bf16.msra.mxu0 %v11961
    %13233 = vmatprep.subr.bf16.mxu0 %v11970
    %13234 = vmatpush1.bf16.msra.mxu0 %v11969
    %13235 = vmatprep.subr.bf16.mxu0 %v11978
    %13236 = vmatpush1.bf16.msra.mxu0 %v11977
    %13237 = vmatprep.subr.bf16.mxu0 %v11986
    %13238 = vmatpush1.bf16.msra.mxu0 %v11985
    %13239 = vmatprep.subr.bf16.mxu0 %v11994
    %13240 = vmatpush1.bf16.msra.mxu0 %v11993
    %13241 = vmatprep.mubr.bf16.mxu0 %v10064
    %13242 = vmatmul.mubr.bf16.gmra.mrb[0].mxu0 %v10063
    %v13243 = vpop.f32.mrb[0].mxu0
    %v13244 = vadd.f32 %v13203, %v13243
    %v13245 = vpop.f32.mrb[0].mxu0
    %v13246 = vadd.f32 %v13205, %v13245
    %v13247 = vpop.f32.mrb[0].mxu0
    %v13248 = vpop.f32.mrb[0].mxu0
    %13249 = vdwg.mxu0
    %13250 = vmatprep.subr.bf16.mxu0 %v12002
    %13251 = vmatpush1.bf16.msra.mxu0 %v12001
    %13252 = vmatprep.subr.bf16.mxu0 %v12010
    %13253 = vmatpush1.bf16.msra.mxu0 %v12009
    %13254 = vmatprep.subr.bf16.mxu0 %v12018
    %13255 = vmatpush1.bf16.msra.mxu0 %v12017
    %13256 = vmatprep.subr.bf16.mxu0 %v12026
    %13257 = vmatpush1.bf16.msra.mxu0 %v12025
    %13258 = vmatprep.subr.bf16.mxu0 %v12034
    %13259 = vmatpush1.bf16.msra.mxu0 %v12033
    %13260 = vmatprep.subr.bf16.mxu0 %v12042
    %13261 = vmatpush1.bf16.msra.mxu0 %v12041
    %13262 = vmatprep.subr.bf16.mxu0 %v12050
    %13263 = vmatpush1.bf16.msra.mxu0 %v12049
    %13264 = vmatprep.subr.bf16.mxu0 %v12058
    %13265 = vmatpush1.bf16.msra.mxu0 %v12057
    %13266 = vmatprep.subr.bf16.mxu0 %v12066
    %13267 = vmatpush1.bf16.msra.mxu0 %v12065
    %13268 = vmatprep.subr.bf16.mxu0 %v12074
    %13269 = vmatpush1.bf16.msra.mxu0 %v12073
    %13270 = vmatprep.subr.bf16.mxu0 %v12082
    %13271 = vmatpush1.bf16.msra.mxu0 %v12081
    %13272 = vmatprep.subr.bf16.mxu0 %v12090
    %13273 = vmatpush1.bf16.msra.mxu0 %v12089
    %13274 = vmatprep.subr.bf16.mxu0 %v12098
    %13275 = vmatpush1.bf16.msra.mxu0 %v12097
    %13276 = vmatprep.subr.bf16.mxu0 %v12106
    %13277 = vmatpush1.bf16.msra.mxu0 %v12105
    %13278 = vmatprep.subr.bf16.mxu0 %v12114
    %13279 = vmatpush1.bf16.msra.mxu0 %v12113
    %13280 = vmatprep.subr.bf16.mxu0 %v12122
    %13281 = vmatpush1.bf16.msra.mxu0 %v12121
    %13282 = vmatprep.mubr.bf16.mxu0 %v10066
    %13283 = vmatmul.mubr.bf16.gmra.mrb[0].mxu0 %v10065
    %v13284 = vpop.f32.mrb[0].mxu0
    %v13285 = vadd.f32 %v13244, %v13284
    %v13286 = vpop.f32.mrb[0].mxu0
    %v13287 = vadd.f32 %v13246, %v13286
    %v13288 = vpop.f32.mrb[0].mxu0
    %v13289 = vpop.f32.mrb[0].mxu0
    %13290 = vdwg.mxu0
    %v13291 = vmax.f32 %v12793, 0.0
    %v13292 = vmax.f32 %v12795, 0.0
    %v13293 = vmax.f32 %v12957, 0.0
    %v13294 = vmax.f32 %v12959, 0.0
    %v13295 = vmax.f32 %v13121, 0.0
    %v13296 = vmax.f32 %v13123, 0.0
    %v13297 = vmax.f32 %v13285, 0.0
    %v13298 = vmax.f32 %v13287, 0.0
    %v13299 = vpack.c.bf16 %v13291, %v13291
    %v13300 = vpack.c.bf16 %v13292, %v13292
    %v13301 = vpack.c.bf16 %v13293, %v13293
    %v13302 = vpack.c.bf16 %v13294, %v13294
    %v13303 = vpack.c.bf16 %v13295, %v13295
    %v13304 = vpack.c.bf16 %v13296, %v13296
    %v13305 = vpack.c.bf16 %v13297, %v13297
    %v13306 = vpack.c.bf16 %v13298, %v13298
    %v13307 = vld [vmem:[#allocation14] sm:$0xf]
    %v13308 = vld [vmem:[#allocation14 + $0x4] sm:$0xf]
    %v13309 = vld [vmem:[#allocation14 + $0x8] sm:$0xf]
    %v13310 = vld [vmem:[#allocation14 + $0xc] sm:$0xf]
    %v13311 = vld [vmem:[#allocation14 + $0x10] sm:$0xf]
    %v13312 = vld [vmem:[#allocation14 + $0x14] sm:$0xf]
    %v13313 = vld [vmem:[#allocation14 + $0x18] sm:$0xf]
    %v13314 = vld [vmem:[#allocation14 + $0x1c] sm:$0xf]
    %v13315 = vld [vmem:[#allocation14 + $0x20] sm:$0xf]
    %v13316 = vld [vmem:[#allocation14 + $0x24] sm:$0xf]
    %v13317 = vld [vmem:[#allocation14 + $0x28] sm:$0xf]
    %v13318 = vld [vmem:[#allocation14 + $0x2c] sm:$0xf]
    %v13319 = vld [vmem:[#allocation14 + $0x30] sm:$0xf]
    %v13320 = vld [vmem:[#allocation14 + $0x34] sm:$0xf]
    %v13321 = vld [vmem:[#allocation14 + $0x38] sm:$0xf]
    %v13322 = vld [vmem:[#allocation14 + $0x3c] sm:$0xf]
    %v13323 = vld [vmem:[#allocation14 + $0x40] sm:$0xf]
    %v13324 = vld [vmem:[#allocation14 + $0x44] sm:$0xf]
    %v13325 = vld [vmem:[#allocation14 + $0x48] sm:$0xf]
    %v13326 = vld [vmem:[#allocation14 + $0x4c] sm:$0xf]
    %v13327 = vld [vmem:[#allocation14 + $0x50] sm:$0xf]
    %v13328 = vld [vmem:[#allocation14 + $0x54] sm:$0xf]
    %v13329 = vld [vmem:[#allocation14 + $0x58] sm:$0xf]
    %v13330 = vld [vmem:[#allocation14 + $0x5c] sm:$0xf]
    %v13331 = vld [vmem:[#allocation14 + $0x60] sm:$0xf]
    %v13332 = vld [vmem:[#allocation14 + $0x64] sm:$0xf]
    %v13333 = vld [vmem:[#allocation14 + $0x68] sm:$0xf]
    %v13334 = vld [vmem:[#allocation14 + $0x6c] sm:$0xf]
    %v13335 = vld [vmem:[#allocation14 + $0x70] sm:$0xf]
    %v13336 = vld [vmem:[#allocation14 + $0x74] sm:$0xf]
    %v13337 = vld [vmem:[#allocation14 + $0x78] sm:$0xf]
    %v13338 = vld [vmem:[#allocation14 + $0x7c] sm:$0xf]
    %v13339 = vld [vmem:[#allocation14 + $0x80] sm:$0xf]
    %v13340 = vld [vmem:[#allocation14 + $0x84] sm:$0xf]
    %v13341 = vld [vmem:[#allocation14 + $0x88] sm:$0xf]
    %v13342 = vld [vmem:[#allocation14 + $0x8c] sm:$0xf]
    %v13343 = vld [vmem:[#allocation14 + $0x90] sm:$0xf]
    %v13344 = vld [vmem:[#allocation14 + $0x94] sm:$0xf]
    %v13345 = vld [vmem:[#allocation14 + $0x98] sm:$0xf]
    %v13346 = vld [vmem:[#allocation14 + $0x9c] sm:$0xf]
    %v13347 = vld [vmem:[#allocation14 + $0xa0] sm:$0xf]
    %v13348 = vld [vmem:[#allocation14 + $0xa4] sm:$0xf]
    %v13349 = vld [vmem:[#allocation14 + $0xa8] sm:$0xf]
    %v13350 = vld [vmem:[#allocation14 + $0xac] sm:$0xf]
    %v13351 = vld [vmem:[#allocation14 + $0xb0] sm:$0xf]
    %v13352 = vld [vmem:[#allocation14 + $0xb4] sm:$0xf]
    %v13353 = vld [vmem:[#allocation14 + $0xb8] sm:$0xf]
    %v13354 = vld [vmem:[#allocation14 + $0xbc] sm:$0xf]
    %v13355 = vld [vmem:[#allocation14 + $0xc0] sm:$0xf]
    %v13356 = vld [vmem:[#allocation14 + $0xc4] sm:$0xf]
    %v13357 = vld [vmem:[#allocation14 + $0xc8] sm:$0xf]
    %v13358 = vld [vmem:[#allocation14 + $0xcc] sm:$0xf]
    %v13359 = vld [vmem:[#allocation14 + $0xd0] sm:$0xf]
    %v13360 = vld [vmem:[#allocation14 + $0xd4] sm:$0xf]
    %v13361 = vld [vmem:[#allocation14 + $0xd8] sm:$0xf]
    %v13362 = vld [vmem:[#allocation14 + $0xdc] sm:$0xf]
    %v13363 = vld [vmem:[#allocation14 + $0xe0] sm:$0xf]
    %v13364 = vld [vmem:[#allocation14 + $0xe4] sm:$0xf]
    %v13365 = vld [vmem:[#allocation14 + $0xe8] sm:$0xf]
    %v13366 = vld [vmem:[#allocation14 + $0xec] sm:$0xf]
    %v13367 = vld [vmem:[#allocation14 + $0xf0] sm:$0xf]
    %v13368 = vld [vmem:[#allocation14 + $0xf4] sm:$0xf]
    %v13369 = vld [vmem:[#allocation14 + $0xf8] sm:$0xf]
    %v13370 = vld [vmem:[#allocation14 + $0xfc] sm:$0xf]
    %v13371 = vld [vmem:[#allocation14 + $0x100] sm:$0xf]
    %v13372 = vld [vmem:[#allocation14 + $0x104] sm:$0xf]
    %v13373 = vld [vmem:[#allocation14 + $0x108] sm:$0xf]
    %v13374 = vld [vmem:[#allocation14 + $0x10c] sm:$0xf]
    %v13375 = vld [vmem:[#allocation14 + $0x110] sm:$0xf]
    %v13376 = vld [vmem:[#allocation14 + $0x114] sm:$0xf]
    %v13377 = vld [vmem:[#allocation14 + $0x118] sm:$0xf]
    %v13378 = vld [vmem:[#allocation14 + $0x11c] sm:$0xf]
    %v13379 = vld [vmem:[#allocation14 + $0x120] sm:$0xf]
    %v13380 = vld [vmem:[#allocation14 + $0x124] sm:$0xf]
    %v13381 = vld [vmem:[#allocation14 + $0x128] sm:$0xf]
    %v13382 = vld [vmem:[#allocation14 + $0x12c] sm:$0xf]
    %v13383 = vld [vmem:[#allocation14 + $0x130] sm:$0xf]
    %v13384 = vld [vmem:[#allocation14 + $0x134] sm:$0xf]
    %v13385 = vld [vmem:[#allocation14 + $0x138] sm:$0xf]
    %v13386 = vld [vmem:[#allocation14 + $0x13c] sm:$0xf]
    %v13387 = vld [vmem:[#allocation14 + $0x140] sm:$0xf]
    %v13388 = vld [vmem:[#allocation14 + $0x144] sm:$0xf]
    %v13389 = vld [vmem:[#allocation14 + $0x148] sm:$0xf]
    %v13390 = vld [vmem:[#allocation14 + $0x14c] sm:$0xf]
    %v13391 = vld [vmem:[#allocation14 + $0x150] sm:$0xf]
    %v13392 = vld [vmem:[#allocation14 + $0x154] sm:$0xf]
    %v13393 = vld [vmem:[#allocation14 + $0x158] sm:$0xf]
    %v13394 = vld [vmem:[#allocation14 + $0x15c] sm:$0xf]
    %v13395 = vld [vmem:[#allocation14 + $0x160] sm:$0xf]
    %v13396 = vld [vmem:[#allocation14 + $0x164] sm:$0xf]
    %v13397 = vld [vmem:[#allocation14 + $0x168] sm:$0xf]
    %v13398 = vld [vmem:[#allocation14 + $0x16c] sm:$0xf]
    %v13399 = vld [vmem:[#allocation14 + $0x170] sm:$0xf]
    %v13400 = vld [vmem:[#allocation14 + $0x174] sm:$0xf]
    %v13401 = vld [vmem:[#allocation14 + $0x178] sm:$0xf]
    %v13402 = vld [vmem:[#allocation14 + $0x17c] sm:$0xf]
    %v13403 = vld [vmem:[#allocation14 + $0x180] sm:$0xf]
    %v13404 = vld [vmem:[#allocation14 + $0x184] sm:$0xf]
    %v13405 = vld [vmem:[#allocation14 + $0x188] sm:$0xf]
    %v13406 = vld [vmem:[#allocation14 + $0x18c] sm:$0xf]
    %v13407 = vld [vmem:[#allocation14 + $0x190] sm:$0xf]
    %v13408 = vld [vmem:[#allocation14 + $0x194] sm:$0xf]
    %v13409 = vld [vmem:[#allocation14 + $0x198] sm:$0xf]
    %v13410 = vld [vmem:[#allocation14 + $0x19c] sm:$0xf]
    %v13411 = vld [vmem:[#allocation14 + $0x1a0] sm:$0xf]
    %v13412 = vld [vmem:[#allocation14 + $0x1a4] sm:$0xf]
    %v13413 = vld [vmem:[#allocation14 + $0x1a8] sm:$0xf]
    %v13414 = vld [vmem:[#allocation14 + $0x1ac] sm:$0xf]
    %v13415 = vld [vmem:[#allocation14 + $0x1b0] sm:$0xf]
    %v13416 = vld [vmem:[#allocation14 + $0x1b4] sm:$0xf]
    %v13417 = vld [vmem:[#allocation14 + $0x1b8] sm:$0xf]
    %v13418 = vld [vmem:[#allocation14 + $0x1bc] sm:$0xf]
    %v13419 = vld [vmem:[#allocation14 + $0x1c0] sm:$0xf]
    %v13420 = vld [vmem:[#allocation14 + $0x1c4] sm:$0xf]
    %v13421 = vld [vmem:[#allocation14 + $0x1c8] sm:$0xf]
    %v13422 = vld [vmem:[#allocation14 + $0x1cc] sm:$0xf]
    %v13423 = vld [vmem:[#allocation14 + $0x1d0] sm:$0xf]
    %v13424 = vld [vmem:[#allocation14 + $0x1d4] sm:$0xf]
    %v13425 = vld [vmem:[#allocation14 + $0x1d8] sm:$0xf]
    %v13426 = vld [vmem:[#allocation14 + $0x1dc] sm:$0xf]
    %v13427 = vld [vmem:[#allocation14 + $0x1e0] sm:$0xf]
    %v13428 = vld [vmem:[#allocation14 + $0x1e4] sm:$0xf]
    %v13429 = vld [vmem:[#allocation14 + $0x1e8] sm:$0xf]
    %v13430 = vld [vmem:[#allocation14 + $0x1ec] sm:$0xf]
    %v13431 = vld [vmem:[#allocation14 + $0x1f0] sm:$0xf]
    %v13432 = vld [vmem:[#allocation14 + $0x1f4] sm:$0xf]
    %v13433 = vld [vmem:[#allocation14 + $0x1f8] sm:$0xf]
    %v13434 = vld [vmem:[#allocation14 + $0x1fc] sm:$0xf]
    %v13435 = vld [vmem:[#allocation15] sm:$0x1]
    %v13437 = vlaneseq
    %v13438 = vshrl.u32 %v13437, 7
    %v13439 = vsub.s32 0, %v13438
    %v13440 = vrot.slane %v13435, %v13439
    %v13570 = vunpack.c.l.b16 %v13307
    %v13571 = vunpack.c.l.b16 %v13308
    %v13572 = vunpack.c.l.b16 %v13309
    %v13573 = vunpack.c.l.b16 %v13310
    %v13574 = vunpack.c.l.b16 %v13311
    %v13575 = vunpack.c.l.b16 %v13312
    %v13576 = vunpack.c.l.b16 %v13313
    %v13577 = vunpack.c.l.b16 %v13314
    %v13578 = vunpack.c.l.b16 %v13315
    %v13579 = vunpack.c.l.b16 %v13316
    %v13580 = vunpack.c.l.b16 %v13317
    %v13581 = vunpack.c.l.b16 %v13318
    %v13582 = vunpack.c.l.b16 %v13319
    %v13583 = vunpack.c.l.b16 %v13320
    %v13584 = vunpack.c.l.b16 %v13321
    %v13585 = vunpack.c.l.b16 %v13322
    %v13586 = vunpack.c.l.b16 %v13323
    %v13587 = vunpack.c.l.b16 %v13324
    %v13588 = vunpack.c.l.b16 %v13325
    %v13589 = vunpack.c.l.b16 %v13326
    %v13590 = vunpack.c.l.b16 %v13327
    %v13591 = vunpack.c.l.b16 %v13328
    %v13592 = vunpack.c.l.b16 %v13329
    %v13593 = vunpack.c.l.b16 %v13330
    %v13594 = vunpack.c.l.b16 %v13331
    %v13595 = vunpack.c.l.b16 %v13332
    %v13596 = vunpack.c.l.b16 %v13333
    %v13597 = vunpack.c.l.b16 %v13334
    %v13598 = vunpack.c.l.b16 %v13335
    %v13599 = vunpack.c.l.b16 %v13336
    %v13600 = vunpack.c.l.b16 %v13337
    %v13601 = vunpack.c.l.b16 %v13338
    %v13602 = vunpack.c.l.b16 %v13339
    %v13603 = vunpack.c.l.b16 %v13340
    %v13604 = vunpack.c.l.b16 %v13341
    %v13605 = vunpack.c.l.b16 %v13342
    %v13606 = vunpack.c.l.b16 %v13343
    %v13607 = vunpack.c.l.b16 %v13344
    %v13608 = vunpack.c.l.b16 %v13345
    %v13609 = vunpack.c.l.b16 %v13346
    %v13610 = vunpack.c.l.b16 %v13347
    %v13611 = vunpack.c.l.b16 %v13348
    %v13612 = vunpack.c.l.b16 %v13349
    %v13613 = vunpack.c.l.b16 %v13350
    %v13614 = vunpack.c.l.b16 %v13351
    %v13615 = vunpack.c.l.b16 %v13352
    %v13616 = vunpack.c.l.b16 %v13353
    %v13617 = vunpack.c.l.b16 %v13354
    %v13618 = vunpack.c.l.b16 %v13355
    %v13619 = vunpack.c.l.b16 %v13356
    %v13620 = vunpack.c.l.b16 %v13357
    %v13621 = vunpack.c.l.b16 %v13358
    %v13622 = vunpack.c.l.b16 %v13359
    %v13623 = vunpack.c.l.b16 %v13360
    %v13624 = vunpack.c.l.b16 %v13361
    %v13625 = vunpack.c.l.b16 %v13362
    %v13626 = vunpack.c.l.b16 %v13363
    %v13627 = vunpack.c.l.b16 %v13364
    %v13628 = vunpack.c.l.b16 %v13365
    %v13629 = vunpack.c.l.b16 %v13366
    %v13630 = vunpack.c.l.b16 %v13367
    %v13631 = vunpack.c.l.b16 %v13368
    %v13632 = vunpack.c.l.b16 %v13369
    %v13633 = vunpack.c.l.b16 %v13370
    %v13634 = vunpack.c.l.b16 %v13371
    %v13635 = vunpack.c.l.b16 %v13372
    %v13636 = vunpack.c.l.b16 %v13373
    %v13637 = vunpack.c.l.b16 %v13374
    %v13638 = vunpack.c.l.b16 %v13375
    %v13639 = vunpack.c.l.b16 %v13376
    %v13640 = vunpack.c.l.b16 %v13377
    %v13641 = vunpack.c.l.b16 %v13378
    %v13642 = vunpack.c.l.b16 %v13379
    %v13643 = vunpack.c.l.b16 %v13380
    %v13644 = vunpack.c.l.b16 %v13381
    %v13645 = vunpack.c.l.b16 %v13382
    %v13646 = vunpack.c.l.b16 %v13383
    %v13647 = vunpack.c.l.b16 %v13384
    %v13648 = vunpack.c.l.b16 %v13385
    %v13649 = vunpack.c.l.b16 %v13386
    %v13650 = vunpack.c.l.b16 %v13387
    %v13651 = vunpack.c.l.b16 %v13388
    %v13652 = vunpack.c.l.b16 %v13389
    %v13653 = vunpack.c.l.b16 %v13390
    %v13654 = vunpack.c.l.b16 %v13391
    %v13655 = vunpack.c.l.b16 %v13392
    %v13656 = vunpack.c.l.b16 %v13393
    %v13657 = vunpack.c.l.b16 %v13394
    %v13658 = vunpack.c.l.b16 %v13395
    %v13659 = vunpack.c.l.b16 %v13396
    %v13660 = vunpack.c.l.b16 %v13397
    %v13661 = vunpack.c.l.b16 %v13398
    %v13662 = vunpack.c.l.b16 %v13399
    %v13663 = vunpack.c.l.b16 %v13400
    %v13664 = vunpack.c.l.b16 %v13401
    %v13665 = vunpack.c.l.b16 %v13402
    %v13666 = vunpack.c.l.b16 %v13403
    %v13667 = vunpack.c.l.b16 %v13404
    %v13668 = vunpack.c.l.b16 %v13405
    %v13669 = vunpack.c.l.b16 %v13406
    %v13670 = vunpack.c.l.b16 %v13407
    %v13671 = vunpack.c.l.b16 %v13408
    %v13672 = vunpack.c.l.b16 %v13409
    %v13673 = vunpack.c.l.b16 %v13410
    %v13674 = vunpack.c.l.b16 %v13411
    %v13675 = vunpack.c.l.b16 %v13412
    %v13676 = vunpack.c.l.b16 %v13413
    %v13677 = vunpack.c.l.b16 %v13414
    %v13678 = vunpack.c.l.b16 %v13415
    %v13679 = vunpack.c.l.b16 %v13416
    %v13680 = vunpack.c.l.b16 %v13417
    %v13681 = vunpack.c.l.b16 %v13418
    %v13682 = vunpack.c.l.b16 %v13419
    %v13683 = vunpack.c.l.b16 %v13420
    %v13684 = vunpack.c.l.b16 %v13421
    %v13685 = vunpack.c.l.b16 %v13422
    %v13686 = vunpack.c.l.b16 %v13423
    %v13687 = vunpack.c.l.b16 %v13424
    %v13688 = vunpack.c.l.b16 %v13425
    %v13689 = vunpack.c.l.b16 %v13426
    %v13690 = vunpack.c.l.b16 %v13427
    %v13691 = vunpack.c.l.b16 %v13428
    %v13692 = vunpack.c.l.b16 %v13429
    %v13693 = vunpack.c.l.b16 %v13430
    %v13694 = vunpack.c.l.b16 %v13431
    %v13695 = vunpack.c.l.b16 %v13432
    %v13696 = vunpack.c.l.b16 %v13433
    %v13697 = vunpack.c.l.b16 %v13434
    %v13698 = vpack.c.b16 %v13571, %v13570
    %v13699 = vpack.c.b16 %v13573, %v13572
    %v13700 = vpack.c.b16 %v13575, %v13574
    %v13701 = vpack.c.b16 %v13577, %v13576
    %v13702 = vpack.c.b16 %v13579, %v13578
    %v13703 = vpack.c.b16 %v13581, %v13580
    %v13704 = vpack.c.b16 %v13583, %v13582
    %v13705 = vpack.c.b16 %v13585, %v13584
    %v13706 = vpack.c.b16 %v13587, %v13586
    %v13707 = vpack.c.b16 %v13589, %v13588
    %v13708 = vpack.c.b16 %v13591, %v13590
    %v13709 = vpack.c.b16 %v13593, %v13592
    %v13710 = vpack.c.b16 %v13595, %v13594
    %v13711 = vpack.c.b16 %v13597, %v13596
    %v13712 = vpack.c.b16 %v13599, %v13598
    %v13713 = vpack.c.b16 %v13601, %v13600
    %v13714 = vpack.c.b16 %v13603, %v13602
    %v13715 = vpack.c.b16 %v13605, %v13604
    %v13716 = vpack.c.b16 %v13607, %v13606
    %v13717 = vpack.c.b16 %v13609, %v13608
    %v13718 = vpack.c.b16 %v13611, %v13610
    %v13719 = vpack.c.b16 %v13613, %v13612
    %v13720 = vpack.c.b16 %v13615, %v13614
    %v13721 = vpack.c.b16 %v13617, %v13616
    %v13722 = vpack.c.b16 %v13619, %v13618
    %v13723 = vpack.c.b16 %v13621, %v13620
    %v13724 = vpack.c.b16 %v13623, %v13622
    %v13725 = vpack.c.b16 %v13625, %v13624
    %v13726 = vpack.c.b16 %v13627, %v13626
    %v13727 = vpack.c.b16 %v13629, %v13628
    %v13728 = vpack.c.b16 %v13631, %v13630
    %v13729 = vpack.c.b16 %v13633, %v13632
    %v13730 = vpack.c.b16 %v13635, %v13634
    %v13731 = vpack.c.b16 %v13637, %v13636
    %v13732 = vpack.c.b16 %v13639, %v13638
    %v13733 = vpack.c.b16 %v13641, %v13640
    %v13734 = vpack.c.b16 %v13643, %v13642
    %v13735 = vpack.c.b16 %v13645, %v13644
    %v13736 = vpack.c.b16 %v13647, %v13646
    %v13737 = vpack.c.b16 %v13649, %v13648
    %v13738 = vpack.c.b16 %v13651, %v13650
    %v13739 = vpack.c.b16 %v13653, %v13652
    %v13740 = vpack.c.b16 %v13655, %v13654
    %v13741 = vpack.c.b16 %v13657, %v13656
    %v13742 = vpack.c.b16 %v13659, %v13658
    %v13743 = vpack.c.b16 %v13661, %v13660
    %v13744 = vpack.c.b16 %v13663, %v13662
    %v13745 = vpack.c.b16 %v13665, %v13664
    %v13746 = vpack.c.b16 %v13667, %v13666
    %v13747 = vpack.c.b16 %v13669, %v13668
    %v13748 = vpack.c.b16 %v13671, %v13670
    %v13749 = vpack.c.b16 %v13673, %v13672
    %v13750 = vpack.c.b16 %v13675, %v13674
    %v13751 = vpack.c.b16 %v13677, %v13676
    %v13752 = vpack.c.b16 %v13679, %v13678
    %v13753 = vpack.c.b16 %v13681, %v13680
    %v13754 = vpack.c.b16 %v13683, %v13682
    %v13755 = vpack.c.b16 %v13685, %v13684
    %v13756 = vpack.c.b16 %v13687, %v13686
    %v13757 = vpack.c.b16 %v13689, %v13688
    %v13758 = vpack.c.b16 %v13691, %v13690
    %v13759 = vpack.c.b16 %v13693, %v13692
    %v13760 = vpack.c.b16 %v13695, %v13694
    %v13761 = vpack.c.b16 %v13697, %v13696
    %13826 = vmatprep.subr.bf16.mxu0 0
    %13827 = vmatpush1.bf16.msra.mxu0 %v13698
    %13828 = vmatprep.subr.bf16.mxu0 0
    %13829 = vmatpush1.bf16.msra.mxu0 %v13699
    %13830 = vmatprep.subr.bf16.mxu0 0
    %13831 = vmatpush1.bf16.msra.mxu0 %v13700
    %13832 = vmatprep.subr.bf16.mxu0 0
    %13833 = vmatpush1.bf16.msra.mxu0 %v13701
    %13834 = vmatprep.subr.bf16.mxu0 0
    %13835 = vmatpush1.bf16.msra.mxu0 %v13702
    %13836 = vmatprep.subr.bf16.mxu0 0
    %13837 = vmatpush1.bf16.msra.mxu0 %v13703
    %13838 = vmatprep.subr.bf16.mxu0 0
    %13839 = vmatpush1.bf16.msra.mxu0 %v13704
    %13840 = vmatprep.subr.bf16.mxu0 0
    %13841 = vmatpush1.bf16.msra.mxu0 %v13705
    %13842 = vmatprep.subr.bf16.mxu0 0
    %13843 = vmatpush1.bf16.msra.mxu0 %v13706
    %13844 = vmatprep.subr.bf16.mxu0 0
    %13845 = vmatpush1.bf16.msra.mxu0 %v13707
    %13846 = vmatprep.subr.bf16.mxu0 0
    %13847 = vmatpush1.bf16.msra.mxu0 %v13708
    %13848 = vmatprep.subr.bf16.mxu0 0
    %13849 = vmatpush1.bf16.msra.mxu0 %v13709
    %13850 = vmatprep.subr.bf16.mxu0 0
    %13851 = vmatpush1.bf16.msra.mxu0 %v13710
    %13852 = vmatprep.subr.bf16.mxu0 0
    %13853 = vmatpush1.bf16.msra.mxu0 %v13711
    %13854 = vmatprep.subr.bf16.mxu0 0
    %13855 = vmatpush1.bf16.msra.mxu0 %v13712
    %13856 = vmatprep.subr.bf16.mxu0 0
    %13857 = vmatpush1.bf16.msra.mxu0 %v13713
    %13858 = vmatprep.mubr.bf16.mxu0 %v13300
    %13859 = vmatmul.mubr.bf16.gmra.mrb[0].mxu0 %v13299
    %v13860 = vpop.f32.mrb[0].mxu0
    %v13861 = vadd.f32 %v13440, %v13860
    %v13862 = vpop.f32.mrb[0].mxu0
    %v13863 = vpop.f32.mrb[0].mxu0
    %v13864 = vpop.f32.mrb[0].mxu0
    %13865 = vdwg.mxu0
    %13866 = vmatprep.subr.bf16.mxu0 0
    %13867 = vmatpush1.bf16.msra.mxu0 %v13714
    %13868 = vmatprep.subr.bf16.mxu0 0
    %13869 = vmatpush1.bf16.msra.mxu0 %v13715
    %13870 = vmatprep.subr.bf16.mxu0 0
    %13871 = vmatpush1.bf16.msra.mxu0 %v13716
    %13872 = vmatprep.subr.bf16.mxu0 0
    %13873 = vmatpush1.bf16.msra.mxu0 %v13717
    %13874 = vmatprep.subr.bf16.mxu0 0
    %13875 = vmatpush1.bf16.msra.mxu0 %v13718
    %13876 = vmatprep.subr.bf16.mxu0 0
    %13877 = vmatpush1.bf16.msra.mxu0 %v13719
    %13878 = vmatprep.subr.bf16.mxu0 0
    %13879 = vmatpush1.bf16.msra.mxu0 %v13720
    %13880 = vmatprep.subr.bf16.mxu0 0
    %13881 = vmatpush1.bf16.msra.mxu0 %v13721
    %13882 = vmatprep.subr.bf16.mxu0 0
    %13883 = vmatpush1.bf16.msra.mxu0 %v13722
    %13884 = vmatprep.subr.bf16.mxu0 0
    %13885 = vmatpush1.bf16.msra.mxu0 %v13723
    %13886 = vmatprep.subr.bf16.mxu0 0
    %13887 = vmatpush1.bf16.msra.mxu0 %v13724
    %13888 = vmatprep.subr.bf16.mxu0 0
    %13889 = vmatpush1.bf16.msra.mxu0 %v13725
    %13890 = vmatprep.subr.bf16.mxu0 0
    %13891 = vmatpush1.bf16.msra.mxu0 %v13726
    %13892 = vmatprep.subr.bf16.mxu0 0
    %13893 = vmatpush1.bf16.msra.mxu0 %v13727
    %13894 = vmatprep.subr.bf16.mxu0 0
    %13895 = vmatpush1.bf16.msra.mxu0 %v13728
    %13896 = vmatprep.subr.bf16.mxu0 0
    %13897 = vmatpush1.bf16.msra.mxu0 %v13729
    %13898 = vmatprep.mubr.bf16.mxu0 %v13302
    %13899 = vmatmul.mubr.bf16.gmra.mrb[0].mxu0 %v13301
    %v13900 = vpop.f32.mrb[0].mxu0
    %v13901 = vadd.f32 %v13861, %v13900
    %v13902 = vpop.f32.mrb[0].mxu0
    %v13903 = vpop.f32.mrb[0].mxu0
    %v13904 = vpop.f32.mrb[0].mxu0
    %13905 = vdwg.mxu0
    %13906 = vmatprep.subr.bf16.mxu0 0
    %13907 = vmatpush1.bf16.msra.mxu0 %v13730
    %13908 = vmatprep.subr.bf16.mxu0 0
    %13909 = vmatpush1.bf16.msra.mxu0 %v13731
    %13910 = vmatprep.subr.bf16.mxu0 0
    %13911 = vmatpush1.bf16.msra.mxu0 %v13732
    %13912 = vmatprep.subr.bf16.mxu0 0
    %13913 = vmatpush1.bf16.msra.mxu0 %v13733
    %13914 = vmatprep.subr.bf16.mxu0 0
    %13915 = vmatpush1.bf16.msra.mxu0 %v13734
    %13916 = vmatprep.subr.bf16.mxu0 0
    %13917 = vmatpush1.bf16.msra.mxu0 %v13735
    %13918 = vmatprep.subr.bf16.mxu0 0
    %13919 = vmatpush1.bf16.msra.mxu0 %v13736
    %13920 = vmatprep.subr.bf16.mxu0 0
    %13921 = vmatpush1.bf16.msra.mxu0 %v13737
    %13922 = vmatprep.subr.bf16.mxu0 0
    %13923 = vmatpush1.bf16.msra.mxu0 %v13738
    %13924 = vmatprep.subr.bf16.mxu0 0
    %13925 = vmatpush1.bf16.msra.mxu0 %v13739
    %13926 = vmatprep.subr.bf16.mxu0 0
    %13927 = vmatpush1.bf16.msra.mxu0 %v13740
    %13928 = vmatprep.subr.bf16.mxu0 0
    %13929 = vmatpush1.bf16.msra.mxu0 %v13741
    %13930 = vmatprep.subr.bf16.mxu0 0
    %13931 = vmatpush1.bf16.msra.mxu0 %v13742
    %13932 = vmatprep.subr.bf16.mxu0 0
    %13933 = vmatpush1.bf16.msra.mxu0 %v13743
    %13934 = vmatprep.subr.bf16.mxu0 0
    %13935 = vmatpush1.bf16.msra.mxu0 %v13744
    %13936 = vmatprep.subr.bf16.mxu0 0
    %13937 = vmatpush1.bf16.msra.mxu0 %v13745
    %13938 = vmatprep.mubr.bf16.mxu0 %v13304
    %13939 = vmatmul.mubr.bf16.gmra.mrb[0].mxu0 %v13303
    %v13940 = vpop.f32.mrb[0].mxu0
    %v13941 = vadd.f32 %v13901, %v13940
    %v13942 = vpop.f32.mrb[0].mxu0
    %v13943 = vpop.f32.mrb[0].mxu0
    %v13944 = vpop.f32.mrb[0].mxu0
    %13945 = vdwg.mxu0
    %13946 = vmatprep.subr.bf16.mxu0 0
    %13947 = vmatpush1.bf16.msra.mxu0 %v13746
    %13948 = vmatprep.subr.bf16.mxu0 0
    %13949 = vmatpush1.bf16.msra.mxu0 %v13747
    %13950 = vmatprep.subr.bf16.mxu0 0
    %13951 = vmatpush1.bf16.msra.mxu0 %v13748
    %13952 = vmatprep.subr.bf16.mxu0 0
    %13953 = vmatpush1.bf16.msra.mxu0 %v13749
    %13954 = vmatprep.subr.bf16.mxu0 0
    %13955 = vmatpush1.bf16.msra.mxu0 %v13750
    %13956 = vmatprep.subr.bf16.mxu0 0
    %13957 = vmatpush1.bf16.msra.mxu0 %v13751
    %13958 = vmatprep.subr.bf16.mxu0 0
    %13959 = vmatpush1.bf16.msra.mxu0 %v13752
    %13960 = vmatprep.subr.bf16.mxu0 0
    %13961 = vmatpush1.bf16.msra.mxu0 %v13753
    %13962 = vmatprep.subr.bf16.mxu0 0
    %13963 = vmatpush1.bf16.msra.mxu0 %v13754
    %13964 = vmatprep.subr.bf16.mxu0 0
    %13965 = vmatpush1.bf16.msra.mxu0 %v13755
    %13966 = vmatprep.subr.bf16.mxu0 0
    %13967 = vmatpush1.bf16.msra.mxu0 %v13756
    %13968 = vmatprep.subr.bf16.mxu0 0
    %13969 = vmatpush1.bf16.msra.mxu0 %v13757
    %13970 = vmatprep.subr.bf16.mxu0 0
    %13971 = vmatpush1.bf16.msra.mxu0 %v13758
    %13972 = vmatprep.subr.bf16.mxu0 0
    %13973 = vmatpush1.bf16.msra.mxu0 %v13759
    %13974 = vmatprep.subr.bf16.mxu0 0
    %13975 = vmatpush1.bf16.msra.mxu0 %v13760
    %13976 = vmatprep.subr.bf16.mxu0 0
    %13977 = vmatpush1.bf16.msra.mxu0 %v13761
    %13978 = vmatprep.mubr.bf16.mxu0 %v13306
    %13979 = vmatmul.mubr.bf16.gmra.mrb[0].mxu0 %v13305
    %v13980 = vpop.f32.mrb[0].mxu0
    %v13981 = vadd.f32 %v13941, %v13980
    %v13982 = vpop.f32.mrb[0].mxu0
    %v13983 = vpop.f32.mrb[0].mxu0
    %v13984 = vpop.f32.mrb[0].mxu0
    %13985 = vdwg.mxu0
    %13986 = vst [vmem:[%s9] sm:$0xff] %v13981
    // Predicated region
    $region70: #{cnn1_forward.1} parent=1 // pred_check
      _
    $region71: #{cnn1_forward.1} parent=1 // pred_check_branch
      %13988 = sbr.rel (0) target = $region73
    $region72: #{cnn1_forward.1} parent=1 // pred_region
      _
    $region73: #{cnn1_forward.1} parent=1 // pred_fallthru
      _
    // Predicated region
    $region74: #{cnn1_forward.1} parent=1 // pred_check
      _
    $region75: #{cnn1_forward.1} parent=1 // pred_check_branch
      %13990 = sbr.rel (0) target = $region77
    $region76: #{cnn1_forward.1} parent=1 // pred_region
      _
    $region77: #{cnn1_forward.1} parent=1 // pred_fallthru
      _
    %13991 = vsyncpa [#allocation5], 1
    %13992 = vsyncpa [#allocation7], 1
    %13993 = vsyncpa [#allocation10], 1
    %13994 = vsyncpa [#allocation13], 1
    %13995 = vsyncpa [#allocation16], 1

</llo_original>
